<compile_context>
chip_gen: v7x
topology: tpu7x:2x2x1
jax: 0.10.0
libtpu: 0.0.40
codegen_flags: <defaults>
</compile_context>

<pallas_src>
import math

import jax
import jax.numpy as jnp
from jax.experimental import pallas as pl
from jax.experimental.pallas import tpu as pltpu

IMG_SIZE = 16                            # small demo size (module default is 32)
IN_FEATURES = 3 * IMG_SIZE * IMG_SIZE    # 768
HIDDEN = 1024


def ae_kernel(x_ref,
              w1_ref, b1_ref,
              w2_ref, b2_ref,
              w3_ref, b3_ref,
              w4_ref, b4_ref,
              o_ref):
    """Fused 4-layer MLP. bf16 MXU matmuls, f32 accumulation + activations."""
    x = x_ref[...].astype(jnp.bfloat16)

    h = jnp.dot(x, w1_ref[...], preferred_element_type=jnp.float32) + b1_ref[...]
    h = jnp.maximum(h, 0.0)                               # encoder_hidden_layer + relu

    h = jnp.dot(h.astype(jnp.bfloat16), w2_ref[...],
                preferred_element_type=jnp.float32) + b2_ref[...]
    h = jnp.maximum(h, 0.0)                               # encoder_output_layer + relu

    h = jnp.dot(h.astype(jnp.bfloat16), w3_ref[...],
                preferred_element_type=jnp.float32) + b3_ref[...]
    h = jnp.maximum(h, 0.0)                               # decoder_hidden_layer + relu

    h = jnp.dot(h.astype(jnp.bfloat16), w4_ref[...],
                preferred_element_type=jnp.float32) + b4_ref[...]
    o_ref[...] = jnp.tanh(h).astype(o_ref.dtype)          # decoder_output_layer + tanh


def _round_up(x, m):
    return ((x + m - 1) // m) * m


def _tm_cap():
    """Batch-tile cap: 512 on 128-MiB-VMEM chips (v5e/v6e), 256 on v7x (64 MiB)."""
    try:
        vmem_bytes = pltpu.get_tpu_info().vmem_capacity_bytes
    except Exception:
        vmem_bytes = 64 << 20          # conservative fallback (v7x-sized)
    return 512 if vmem_bytes >= (100 << 20) else 256


def _pick_tile(b):
    """Batch tile choice.

    - b <= 64: one full-batch block (weight-DMA-bound regime; splitting would
      only duplicate the ~7 MiB weight load). Using tm == b keeps the
      second-to-last block dim equal to the full array dim, so no padding.
    - otherwise: at least 2 grid steps (both v7x TensorCores engaged), tile
      rounded to a sublane multiple and capped per-chip.
    """
    if b <= 64:
        return b
    return min(_tm_cap(), _round_up(pl.cdiv(b, 2), 8))


def ae_forward(features, params):
    """features: (B, IN_FEATURES) f32. params: bf16 (in,out) weights, f32 (1,out) biases."""
    B, F = features.shape
    assert F == IN_FEATURES

    tm = _pick_tile(B)

    w1, b1 = params["w1"], params["b1"]
    w2, b2 = params["w2"], params["b2"]
    w3, b3 = params["w3"], params["b3"]
    w4, b4 = params["w4"], params["b4"]

    # Constant block index -> weights/biases stay resident in VMEM across the
    # grid; Buffered(1) drops the dead second pipeline buffer (~14 -> ~7 MiB).
    resident = lambda shape: pl.BlockSpec(
        shape, lambda i: (0, 0), pipeline_mode=pl.Buffered(1))

    out = pl.pallas_call(
        ae_kernel,
        out_shape=jax.ShapeDtypeStruct((B, IN_FEATURES), jnp.float32),
        grid_spec=pltpu.PrefetchScalarGridSpec(
            num_scalar_prefetch=0,
            grid=(pl.cdiv(B, tm),),
            in_specs=[
                pl.BlockSpec((tm, IN_FEATURES), lambda i: (i, 0)),   # x tile
                resident(w1.shape), resident(b1.shape),
                resident(w2.shape), resident(b2.shape),
                resident(w3.shape), resident(b3.shape),
                resident(w4.shape), resident(b4.shape),
            ],
            out_specs=pl.BlockSpec((tm, IN_FEATURES), lambda i: (i, 0)),
        ),
        compiler_params=pltpu.CompilerParams(
            # Batch axis is embarrassingly parallel -> shard across the two
            # TensorCores on v7x; harmless on v5e/v6e.
            dimension_semantics=("parallel",),
            # Default scoped VMEM limit is sufficient (~10-20 MiB footprint).
        ),
    )(features, w1, b1, w2, b2, w3, b3, w4, b4)

    return out


def init_params(key):
    """PyTorch-style uniform(+/-1/sqrt(fan_in)) init; weights stored (in, out) in bf16."""
    dims = [
        (IN_FEATURES, HIDDEN),   # encoder_hidden_layer
        (HIDDEN, HIDDEN),        # encoder_output_layer
        (HIDDEN, HIDDEN),        # decoder_hidden_layer
        (HIDDEN, IN_FEATURES),   # decoder_output_layer
    ]
    params = {}
    for idx, (fin, fout) in enumerate(dims, start=1):
        key, kw, kb = jax.random.split(key, 3)
        bound = 1.0 / math.sqrt(fin)
        params[f"w{idx}"] = jax.random.uniform(
            kw, (fin, fout), jnp.float32, minval=-bound, maxval=bound
        ).astype(jnp.bfloat16)
        params[f"b{idx}"] = jax.random.uniform(
            kb, (1, fout), jnp.float32, minval=-bound, maxval=bound)
    return params


def ae_reference(features, params):
    """Pure-JAX reference at matching precision (bf16 operands, f32 accumulation).

    Note: this is an intentional precision downgrade vs the f32 PyTorch module
    (bf16 weights/activation operands) for MXU throughput; keep weights in f32
    if bit-level parity with the original module is required.
    """
    def layer(h, w, b):
        return jnp.dot(h.astype(jnp.bfloat16), w,
                       preferred_element_type=jnp.float32) + b

    h = jnp.maximum(layer(features, params["w1"], params["b1"]), 0.0)
    h = jnp.maximum(layer(h, params["w2"], params["b2"]), 0.0)
    h = jnp.maximum(layer(h, params["w3"], params["b3"]), 0.0)
    return jnp.tanh(layer(h, params["w4"], params["b4"]))


if __name__ == "__main__":
    key = jax.random.PRNGKey(0)
    key, kx, kp = jax.random.split(key, 3)

    B = 2
    # Synthetic "images" already flattened to the Linear input layout (B, 3*H*W).
    x = jax.random.normal(kx, (B, IN_FEATURES), jnp.float32)
    params = init_params(kp)

    out = ae_forward(x, params)
    out = jax.block_until_ready(out)

    ref = ae_reference(x, params)
    assert out.shape == (B, IN_FEATURES)
    # bf16 matmuls: tolerance loosened relative to an f32-exact comparison.
    assert jnp.allclose(out, ref, atol=2e-2, rtol=2e-2)

    print("KERNEL_OK")
</pallas_src>

<mosaic_0001>
module attributes {stable_mosaic.version = 11 : i64} {
  func.func @ae_kernel(%arg0: i32, %arg1: memref<2x768xf32, #tpu.memory_space<vmem>>, %arg2: memref<768x1024xbf16, #tpu.memory_space<vmem>>, %arg3: memref<1x1024xf32, #tpu.memory_space<vmem>>, %arg4: memref<1024x1024xbf16, #tpu.memory_space<vmem>>, %arg5: memref<1x1024xf32, #tpu.memory_space<vmem>>, %arg6: memref<1024x1024xbf16, #tpu.memory_space<vmem>>, %arg7: memref<1x1024xf32, #tpu.memory_space<vmem>>, %arg8: memref<1024x768xbf16, #tpu.memory_space<vmem>>, %arg9: memref<1x768xf32, #tpu.memory_space<vmem>>, %arg10: memref<2x768xf32, #tpu.memory_space<vmem>>) attributes {dimension_semantics = [#tpu.dimension_semantics<parallel>], iteration_bounds = array<i64: 1>, scalar_prefetch = 0 : i64, scratch_operands = 0 : i64, tpu.core_type = #tpu.core_type<tc>, window_params = [{transform_indices = @transform_0, window_bounds = array<i64: 2, 768>}, {pipeline_mode = #tpu.pipeline_mode<synchronous>, transform_indices = @transform_1, window_bounds = array<i64: 768, 1024>}, {pipeline_mode = #tpu.pipeline_mode<synchronous>, transform_indices = @transform_2, window_bounds = array<i64: 1, 1024>}, {pipeline_mode = #tpu.pipeline_mode<synchronous>, transform_indices = @transform_3, window_bounds = array<i64: 1024, 1024>}, {pipeline_mode = #tpu.pipeline_mode<synchronous>, transform_indices = @transform_4, window_bounds = array<i64: 1, 1024>}, {pipeline_mode = #tpu.pipeline_mode<synchronous>, transform_indices = @transform_5, window_bounds = array<i64: 1024, 1024>}, {pipeline_mode = #tpu.pipeline_mode<synchronous>, transform_indices = @transform_6, window_bounds = array<i64: 1, 1024>}, {pipeline_mode = #tpu.pipeline_mode<synchronous>, transform_indices = @transform_7, window_bounds = array<i64: 1024, 768>}, {pipeline_mode = #tpu.pipeline_mode<synchronous>, transform_indices = @transform_8, window_bounds = array<i64: 1, 768>}, {transform_indices = @transform_9, window_bounds = array<i64: 2, 768>}]} {
    %c0 = arith.constant 0 : index
    %c0_0 = arith.constant 0 : index
    %0 = vector.load %arg1[%c0, %c0_0] : memref<2x768xf32, #tpu.memory_space<vmem>>, vector<2x768xf32>
    %1 = arith.truncf %0 : vector<2x768xf32> to vector<2x768xbf16>
    %c0_1 = arith.constant 0 : index
    %c0_2 = arith.constant 0 : index
    %2 = vector.load %arg2[%c0_1, %c0_2] : memref<768x1024xbf16, #tpu.memory_space<vmem>>, vector<768x1024xbf16>
    %cst = arith.constant dense<0.000000e+00> : vector<2x1024xf32>
    %3 = tpu.matmul %1, %2, %cst {dimension_numbers = #tpu.dot_dimension_numbers<[1], [0], [0], [1], [0, 0, 1, 1], [], []>} : vector<2x768xbf16>, vector<768x1024xbf16>, vector<2x1024xf32> -> vector<2x1024xf32>
    %c0_3 = arith.constant 0 : index
    %c0_4 = arith.constant 0 : index
    %4 = vector.load %arg3[%c0_3, %c0_4] : memref<1x1024xf32, #tpu.memory_space<vmem>>, vector<1x1024xf32>
    %5 = vector.broadcast %4 : vector<1x1024xf32> to vector<2x1024xf32>
    %6 = arith.addf %3, %5 : vector<2x1024xf32>
    %cst_5 = arith.constant 0.000000e+00 : f32
    %7 = vector.broadcast %cst_5 : f32 to vector<2x1024xf32>
    %8 = arith.maximumf %6, %7 : vector<2x1024xf32>
    %9 = arith.truncf %8 : vector<2x1024xf32> to vector<2x1024xbf16>
    %c0_6 = arith.constant 0 : index
    %c0_7 = arith.constant 0 : index
    %10 = vector.load %arg4[%c0_6, %c0_7] : memref<1024x1024xbf16, #tpu.memory_space<vmem>>, vector<1024x1024xbf16>
    %cst_8 = arith.constant dense<0.000000e+00> : vector<2x1024xf32>
    %11 = tpu.matmul %9, %10, %cst_8 {dimension_numbers = #tpu.dot_dimension_numbers<[1], [0], [0], [1], [0, 0, 1, 1], [], []>} : vector<2x1024xbf16>, vector<1024x1024xbf16>, vector<2x1024xf32> -> vector<2x1024xf32>
    %c0_9 = arith.constant 0 : index
    %c0_10 = arith.constant 0 : index
    %12 = vector.load %arg5[%c0_9, %c0_10] : memref<1x1024xf32, #tpu.memory_space<vmem>>, vector<1x1024xf32>
    %13 = vector.broadcast %12 : vector<1x1024xf32> to vector<2x1024xf32>
    %14 = arith.addf %11, %13 : vector<2x1024xf32>
    %cst_11 = arith.constant 0.000000e+00 : f32
    %15 = vector.broadcast %cst_11 : f32 to vector<2x1024xf32>
    %16 = arith.maximumf %14, %15 : vector<2x1024xf32>
    %17 = arith.truncf %16 : vector<2x1024xf32> to vector<2x1024xbf16>
    %c0_12 = arith.constant 0 : index
    %c0_13 = arith.constant 0 : index
    %18 = vector.load %arg6[%c0_12, %c0_13] : memref<1024x1024xbf16, #tpu.memory_space<vmem>>, vector<1024x1024xbf16>
    %cst_14 = arith.constant dense<0.000000e+00> : vector<2x1024xf32>
    %19 = tpu.matmul %17, %18, %cst_14 {dimension_numbers = #tpu.dot_dimension_numbers<[1], [0], [0], [1], [0, 0, 1, 1], [], []>} : vector<2x1024xbf16>, vector<1024x1024xbf16>, vector<2x1024xf32> -> vector<2x1024xf32>
    %c0_15 = arith.constant 0 : index
    %c0_16 = arith.constant 0 : index
    %20 = vector.load %arg7[%c0_15, %c0_16] : memref<1x1024xf32, #tpu.memory_space<vmem>>, vector<1x1024xf32>
    %21 = vector.broadcast %20 : vector<1x1024xf32> to vector<2x1024xf32>
    %22 = arith.addf %19, %21 : vector<2x1024xf32>
    %cst_17 = arith.constant 0.000000e+00 : f32
    %23 = vector.broadcast %cst_17 : f32 to vector<2x1024xf32>
    %24 = arith.maximumf %22, %23 : vector<2x1024xf32>
    %25 = arith.truncf %24 : vector<2x1024xf32> to vector<2x1024xbf16>
    %c0_18 = arith.constant 0 : index
    %c0_19 = arith.constant 0 : index
    %26 = vector.load %arg8[%c0_18, %c0_19] : memref<1024x768xbf16, #tpu.memory_space<vmem>>, vector<1024x768xbf16>
    %cst_20 = arith.constant dense<0.000000e+00> : vector<2x768xf32>
    %27 = tpu.matmul %25, %26, %cst_20 {dimension_numbers = #tpu.dot_dimension_numbers<[1], [0], [0], [1], [0, 0, 1, 1], [], []>} : vector<2x1024xbf16>, vector<1024x768xbf16>, vector<2x768xf32> -> vector<2x768xf32>
    %c0_21 = arith.constant 0 : index
    %c0_22 = arith.constant 0 : index
    %28 = vector.load %arg9[%c0_21, %c0_22] : memref<1x768xf32, #tpu.memory_space<vmem>>, vector<1x768xf32>
    %29 = vector.broadcast %28 : vector<1x768xf32> to vector<2x768xf32>
    %30 = arith.addf %27, %29 : vector<2x768xf32>
    %31 = math.tanh %30 : vector<2x768xf32>
    %c0_23 = arith.constant 0 : index
    %c0_24 = arith.constant 0 : index
    %32 = vector.load %arg10[%c0_23, %c0_24] : memref<2x768xf32, #tpu.memory_space<vmem>>, vector<2x768xf32>
    tpu.vector_store %arg10[%c0_23, %c0_24], %31 {strides = array<i32>} : memref<2x768xf32, #tpu.memory_space<vmem>>, vector<2x768xf32>,
    return
  }
  func.func @transform_0(%arg0: i32) -> (i32, i32) {
    %c0_i32 = arith.constant 0 : i32
    %c0_i32_0 = arith.constant 0 : i32
    return %arg0, %c0_i32 : i32, i32
  }
  func.func @transform_1(%arg0: i32) -> (i32, i32) {
    %c0_i32 = arith.constant 0 : i32
    %c0_i32_0 = arith.constant 0 : i32
    %c0_i32_1 = arith.constant 0 : i32
    return %c0_i32, %c0_i32_0 : i32, i32
  }
  func.func @transform_2(%arg0: i32) -> (i32, i32) {
    %c0_i32 = arith.constant 0 : i32
    %c0_i32_0 = arith.constant 0 : i32
    %c0_i32_1 = arith.constant 0 : i32
    return %c0_i32, %c0_i32_0 : i32, i32
  }
  func.func @transform_3(%arg0: i32) -> (i32, i32) {
    %c0_i32 = arith.constant 0 : i32
    %c0_i32_0 = arith.constant 0 : i32
    %c0_i32_1 = arith.constant 0 : i32
    return %c0_i32, %c0_i32_0 : i32, i32
  }
  func.func @transform_4(%arg0: i32) -> (i32, i32) {
    %c0_i32 = arith.constant 0 : i32
    %c0_i32_0 = arith.constant 0 : i32
    %c0_i32_1 = arith.constant 0 : i32
    return %c0_i32, %c0_i32_0 : i32, i32
  }
  func.func @transform_5(%arg0: i32) -> (i32, i32) {
    %c0_i32 = arith.constant 0 : i32
    %c0_i32_0 = arith.constant 0 : i32
    %c0_i32_1 = arith.constant 0 : i32
    return %c0_i32, %c0_i32_0 : i32, i32
  }
  func.func @transform_6(%arg0: i32) -> (i32, i32) {
    %c0_i32 = arith.constant 0 : i32
    %c0_i32_0 = arith.constant 0 : i32
    %c0_i32_1 = arith.constant 0 : i32
    return %c0_i32, %c0_i32_0 : i32, i32
  }
  func.func @transform_7(%arg0: i32) -> (i32, i32) {
    %c0_i32 = arith.constant 0 : i32
    %c0_i32_0 = arith.constant 0 : i32
    %c0_i32_1 = arith.constant 0 : i32
    return %c0_i32, %c0_i32_0 : i32, i32
  }
  func.func @transform_8(%arg0: i32) -> (i32, i32) {
    %c0_i32 = arith.constant 0 : i32
    %c0_i32_0 = arith.constant 0 : i32
    %c0_i32_1 = arith.constant 0 : i32
    return %c0_i32, %c0_i32_0 : i32, i32
  }
  func.func @transform_9(%arg0: i32) -> (i32, i32) {
    %c0_i32 = arith.constant 0 : i32
    %c0_i32_0 = arith.constant 0 : i32
    return %arg0, %c0_i32 : i32, i32
  }
}

</mosaic_0001>

<llo_original>
// kernel: tpu_custom_call.1
$region0: #{tpu_custom_call.1}
  #allocation0 [shape = 'u32[]', space=smem, size = 0x4, offset = 0x4, fixed_abs, tag = 'smem constant byte address 0x4 - core index']
  #allocation1 [shape = 'u32[144,128]{1,0:T(1,128)}', space=vmem, size = 0x12000, scoped, tag = 'internal scratch']
  %s0 = inlined_call_operand.hbm [shape: f32[2,768], index: 0, kind: input, shape index: {}]
  %s1 = inlined_call_operand.hbm [shape: bf16[768,1024], index: 1, kind: input, shape index: {}]
  %s2 = inlined_call_operand.hbm [shape: f32[1,1024], index: 2, kind: input, shape index: {}]
  %s3 = inlined_call_operand.hbm [shape: bf16[1024,1024], index: 3, kind: input, shape index: {}]
  %s4 = inlined_call_operand.hbm [shape: f32[1,1024], index: 4, kind: input, shape index: {}]
  %s5 = inlined_call_operand.hbm [shape: bf16[1024,1024], index: 5, kind: input, shape index: {}]
  %s6 = inlined_call_operand.hbm [shape: f32[1,1024], index: 6, kind: input, shape index: {}]
  %s7 = inlined_call_operand.hbm [shape: bf16[1024,768], index: 7, kind: input, shape index: {}]
  %s8 = inlined_call_operand.hbm [shape: f32[1,768], index: 8, kind: input, shape index: {}]
  %s9 = inlined_call_operand.hbm [shape: f32[2,768], index: 9, kind: output, shape index: {}]
  %s10 = sld [smem:[#allocation0]]
  $region82: #{tpu_custom_call.1} parent=0
    _
  %s12 = ssub.s32 1, %s10
  %s13 = scalar_select 0, %s12, %s10
  $region1: #{tpu_custom_call.1} parent=0
    #allocation2 [shape = 'u8[6144]{0}', space=vmem, size = 0x1800, scoped, tag = 'input window, operand 0, single buffered']
    #allocation3 [shape = 's32[1]{0}', space=sflag, size = 0x4, scoped, tag = 'scoped memory for tpu_custom_call.1']
    #allocation4 [shape = 's32[1]{0}', space=sflag, size = 0x4, scoped, tag = 'scoped memory for tpu_custom_call.1']
    #allocation5 [shape = 'u8[1572864]{0}', space=vmem, size = 0x180000, scoped, tag = 'input window, operand 1, single buffered']
    #allocation6 [shape = 's32[1]{0}', space=sflag, size = 0x4, scoped, tag = 'scoped memory for tpu_custom_call.1']
    #allocation7 [shape = 'u8[4096]{0}', space=vmem, size = 0x1000, scoped, tag = 'input window, operand 2, single buffered']
    #allocation8 [shape = 'u8[2097152]{0}', space=vmem, size = 0x200000, scoped, tag = 'input window, operand 3, single buffered']
    #allocation9 [shape = 's32[1]{0}', space=sflag, size = 0x4, scoped, tag = 'scoped memory for tpu_custom_call.1']
    #allocation10 [shape = 'u8[4096]{0}', space=vmem, size = 0x1000, scoped, tag = 'input window, operand 4, single buffered']
    #allocation11 [shape = 'u8[2097152]{0}', space=vmem, size = 0x200000, scoped, tag = 'input window, operand 5, single buffered']
    #allocation12 [shape = 's32[1]{0}', space=sflag, size = 0x4, scoped, tag = 'scoped memory for tpu_custom_call.1']
    #allocation13 [shape = 'u8[4096]{0}', space=vmem, size = 0x1000, scoped, tag = 'input window, operand 6, single buffered']
    #allocation14 [shape = 'u8[1572864]{0}', space=vmem, size = 0x180000, scoped, tag = 'input window, operand 7, single buffered']
    #allocation15 [shape = 's32[1]{0}', space=sflag, size = 0x4, scoped, tag = 'scoped memory for tpu_custom_call.1']
    #allocation16 [shape = 'u8[3072]{0}', space=vmem, size = 0xc00, scoped, tag = 'input window, operand 8, single buffered']
    #allocation17 [shape = 'u8[6144]{0}', space=vmem, size = 0x1800, scoped, tag = 'output window, operand 0, single buffered']
    %14 = vsyncpa [#allocation3], 0
    %15 = vsyncpa [#allocation6], 0
    %16 = vsyncpa [#allocation9], 0
    %17 = vsyncpa [#allocation12], 0
    %18 = vsyncpa [#allocation15], 0
    %19 = vsyncpa [#allocation4], 0
    // Predicated region
    $region2: #{tpu_custom_call.1} parent=1 // pred_check
      _
    $region3: #{tpu_custom_call.1} parent=1 // pred_check_branch
      %21 = sbr.rel (0) target = $region5
    $region4: #{tpu_custom_call.1} parent=1 // pred_region
      %s23 = ssub.s32 192, 192
      %24 = vsyncadd [#allocation3], %s23
      %s26 = sshll.u32 [#allocation2], 4
      %s27 = int_to_ptr.vmem [resolvable:$true] %s26
      %29 = dma.hbm_to_vmem [thread:$0]  %s0, 192, %s27, [#allocation3]
    $region5: #{tpu_custom_call.1} parent=1 // pred_fallthru
      _
    // Predicated region
    $region6: #{tpu_custom_call.1} parent=1 // pred_check
      _
    $region7: #{tpu_custom_call.1} parent=1 // pred_check_branch
      %31 = sbr.rel (0) target = $region9
    $region8: #{tpu_custom_call.1} parent=1 // pred_region
      %s33 = ssub.s32 49152, 49152
      %34 = vsyncadd [#allocation6], %s33
      %s35 = sshll.u32 [#allocation5], 4
      %s36 = int_to_ptr.vmem [resolvable:$true] %s35
      %41 = dma.hbm_to_vmem [thread:$0]  %s1, 49152, %s36, [#allocation6], 512, 512, 32
    $region9: #{tpu_custom_call.1} parent=1 // pred_fallthru
      _
    // Predicated region
    $region10: #{tpu_custom_call.1} parent=1 // pred_check
      _
    $region11: #{tpu_custom_call.1} parent=1 // pred_check_branch
      %43 = sbr.rel (0) target = $region13
    $region12: #{tpu_custom_call.1} parent=1 // pred_region
      %s45 = ssub.s32 128, 128
      %46 = vsyncadd [#allocation6], %s45
      %s48 = sshll.u32 [#allocation7], 4
      %s49 = int_to_ptr.vmem [resolvable:$true] %s48
      %51 = dma.hbm_to_vmem [thread:$0]  %s2, 128, %s49, [#allocation6]
    $region13: #{tpu_custom_call.1} parent=1 // pred_fallthru
      _
    // Predicated region
    $region14: #{tpu_custom_call.1} parent=1 // pred_check
      _
    $region15: #{tpu_custom_call.1} parent=1 // pred_check_branch
      %53 = sbr.rel (0) target = $region17
    $region16: #{tpu_custom_call.1} parent=1 // pred_region
      %s55 = ssub.s32 65536, 65536
      %56 = vsyncadd [#allocation9], %s55
      %s57 = sshll.u32 [#allocation8], 4
      %s58 = int_to_ptr.vmem [resolvable:$true] %s57
      %63 = dma.hbm_to_vmem [thread:$0]  %s3, 65536, %s58, [#allocation9], 512, 512, 32
    $region17: #{tpu_custom_call.1} parent=1 // pred_fallthru
      _
    // Predicated region
    $region18: #{tpu_custom_call.1} parent=1 // pred_check
      _
    $region19: #{tpu_custom_call.1} parent=1 // pred_check_branch
      %65 = sbr.rel (0) target = $region21
    $region20: #{tpu_custom_call.1} parent=1 // pred_region
      %s67 = ssub.s32 128, 128
      %68 = vsyncadd [#allocation9], %s67
      %s70 = sshll.u32 [#allocation10], 4
      %s71 = int_to_ptr.vmem [resolvable:$true] %s70
      %73 = dma.hbm_to_vmem [thread:$0]  %s4, 128, %s71, [#allocation9]
    $region21: #{tpu_custom_call.1} parent=1 // pred_fallthru
      _
    // Predicated region
    $region22: #{tpu_custom_call.1} parent=1 // pred_check
      _
    $region23: #{tpu_custom_call.1} parent=1 // pred_check_branch
      %75 = sbr.rel (0) target = $region25
    $region24: #{tpu_custom_call.1} parent=1 // pred_region
      %s77 = ssub.s32 65536, 65536
      %78 = vsyncadd [#allocation12], %s77
      %s79 = sshll.u32 [#allocation11], 4
      %s80 = int_to_ptr.vmem [resolvable:$true] %s79
      %85 = dma.hbm_to_vmem [thread:$0]  %s5, 65536, %s80, [#allocation12], 512, 512, 32
    $region25: #{tpu_custom_call.1} parent=1 // pred_fallthru
      _
    // Predicated region
    $region26: #{tpu_custom_call.1} parent=1 // pred_check
      _
    $region27: #{tpu_custom_call.1} parent=1 // pred_check_branch
      %87 = sbr.rel (0) target = $region29
    $region28: #{tpu_custom_call.1} parent=1 // pred_region
      %s89 = ssub.s32 128, 128
      %90 = vsyncadd [#allocation12], %s89
      %s92 = sshll.u32 [#allocation13], 4
      %s93 = int_to_ptr.vmem [resolvable:$true] %s92
      %95 = dma.hbm_to_vmem [thread:$0]  %s6, 128, %s93, [#allocation12]
    $region29: #{tpu_custom_call.1} parent=1 // pred_fallthru
      _
    // Predicated region
    $region30: #{tpu_custom_call.1} parent=1 // pred_check
      _
    $region31: #{tpu_custom_call.1} parent=1 // pred_check_branch
      %97 = sbr.rel (0) target = $region33
    $region32: #{tpu_custom_call.1} parent=1 // pred_region
      %s99 = ssub.s32 49152, 49152
      %100 = vsyncadd [#allocation15], %s99
      %s101 = sshll.u32 [#allocation14], 4
      %s102 = int_to_ptr.vmem [resolvable:$true] %s101
      %107 = dma.hbm_to_vmem [thread:$0]  %s7, 49152, %s102, [#allocation15], 384, 384, 24
    $region33: #{tpu_custom_call.1} parent=1 // pred_fallthru
      _
    // Predicated region
    $region34: #{tpu_custom_call.1} parent=1 // pred_check
      _
    $region35: #{tpu_custom_call.1} parent=1 // pred_check_branch
      %109 = sbr.rel (0) target = $region37
    $region36: #{tpu_custom_call.1} parent=1 // pred_region
      %s111 = ssub.s32 96, 96
      %112 = vsyncadd [#allocation15], %s111
      %s114 = sshll.u32 [#allocation16], 4
      %s115 = int_to_ptr.vmem [resolvable:$true] %s114
      %117 = dma.hbm_to_vmem [thread:$0]  %s8, 96, %s115, [#allocation15]
    $region37: #{tpu_custom_call.1} parent=1 // pred_fallthru
      _
    // Predicated region
    $region38: #{tpu_custom_call.1} parent=1 // pred_check
      _
    $region39: #{tpu_custom_call.1} parent=1 // pred_check_branch
      %119 = sbr.rel (0) target = $region41
    $region40: #{tpu_custom_call.1} parent=1 // pred_region
      %120 = dma.done [#allocation3], 192
    $region41: #{tpu_custom_call.1} parent=1 // pred_fallthru
      _
    // Predicated region
    $region42: #{tpu_custom_call.1} parent=1 // pred_check
      _
    $region43: #{tpu_custom_call.1} parent=1 // pred_check_branch
      %122 = sbr.rel (0) target = $region45
    $region44: #{tpu_custom_call.1} parent=1 // pred_region
      %123 = dma.done [#allocation6], 49152
    $region45: #{tpu_custom_call.1} parent=1 // pred_fallthru
      _
    // Predicated region
    $region46: #{tpu_custom_call.1} parent=1 // pred_check
      _
    $region47: #{tpu_custom_call.1} parent=1 // pred_check_branch
      %125 = sbr.rel (0) target = $region49
    $region48: #{tpu_custom_call.1} parent=1 // pred_region
      %126 = dma.done [#allocation6], 128
    $region49: #{tpu_custom_call.1} parent=1 // pred_fallthru
      _
    // Predicated region
    $region50: #{tpu_custom_call.1} parent=1 // pred_check
      _
    $region51: #{tpu_custom_call.1} parent=1 // pred_check_branch
      %128 = sbr.rel (0) target = $region53
    $region52: #{tpu_custom_call.1} parent=1 // pred_region
      %129 = dma.done [#allocation9], 65536
    $region53: #{tpu_custom_call.1} parent=1 // pred_fallthru
      _
    // Predicated region
    $region54: #{tpu_custom_call.1} parent=1 // pred_check
      _
    $region55: #{tpu_custom_call.1} parent=1 // pred_check_branch
      %131 = sbr.rel (0) target = $region57
    $region56: #{tpu_custom_call.1} parent=1 // pred_region
      %132 = dma.done [#allocation9], 128
    $region57: #{tpu_custom_call.1} parent=1 // pred_fallthru
      _
    // Predicated region
    $region58: #{tpu_custom_call.1} parent=1 // pred_check
      _
    $region59: #{tpu_custom_call.1} parent=1 // pred_check_branch
      %134 = sbr.rel (0) target = $region61
    $region60: #{tpu_custom_call.1} parent=1 // pred_region
      %135 = dma.done [#allocation12], 65536
    $region61: #{tpu_custom_call.1} parent=1 // pred_fallthru
      _
    // Predicated region
    $region62: #{tpu_custom_call.1} parent=1 // pred_check
      _
    $region63: #{tpu_custom_call.1} parent=1 // pred_check_branch
      %137 = sbr.rel (0) target = $region65
    $region64: #{tpu_custom_call.1} parent=1 // pred_region
      %138 = dma.done [#allocation12], 128
    $region65: #{tpu_custom_call.1} parent=1 // pred_fallthru
      _
    // Predicated region
    $region66: #{tpu_custom_call.1} parent=1 // pred_check
      _
    $region67: #{tpu_custom_call.1} parent=1 // pred_check_branch
      %140 = sbr.rel (0) target = $region69
    $region68: #{tpu_custom_call.1} parent=1 // pred_region
      %141 = dma.done [#allocation15], 49152
    $region69: #{tpu_custom_call.1} parent=1 // pred_fallthru
      _
    // Predicated region
    $region70: #{tpu_custom_call.1} parent=1 // pred_check
      _
    $region71: #{tpu_custom_call.1} parent=1 // pred_check_branch
      %143 = sbr.rel (0) target = $region73
    $region72: #{tpu_custom_call.1} parent=1 // pred_region
      %144 = dma.done [#allocation15], 96
    $region73: #{tpu_custom_call.1} parent=1 // pred_fallthru
      _
    %v145 = vld [vmem:[#allocation2] sm:$0xff]
    %v146 = vld [vmem:[#allocation2 + $0x8] sm:$0xf]
    %v149 = vcombine.high %v145, %v145
    %v151 = vunpack.c.l.s4 1983009808
    %v152 = vunpack.c.0.s8 %v151
    %v153 = vlaneseq
    %v154 = vshrl.u32 %v153, 7
    %v155 = vsub.s32 %v152, %v154
    %v156 = vrot.slane %v145, %v155
    %v158 = vunpack.c.l.s4 1983009808
    %v159 = vunpack.c.0.s8 %v158
    %v160 = vlaneseq
    %v161 = vshrl.u32 %v160, 7
    %v162 = vsub.s32 %v159, %v161
    %v163 = vrot.slane %v149, %v162
    %v164 = vcombine.high %v156, %v156
    %v165 = vcombine.high %v163, %v163
    %v167 = vunpack.c.l.s4 1983009808
    %v168 = vunpack.c.0.s8 %v167
    %v169 = vlaneseq
    %v170 = vshrl.u32 %v169, 7
    %v171 = vsub.s32 %v168, %v170
    %v172 = vrot.slane %v146, %v171
    %v173 = vcombine.high %v172, %v172
    %v180 = vpack.c.bf16 %v156, %v156
    %v181 = vpack.c.bf16 %v164, %v164
    %v182 = vpack.c.bf16 %v163, %v163
    %v183 = vpack.c.bf16 %v165, %v165
    %v184 = vpack.c.bf16 %v172, %v172
    %v185 = vpack.c.bf16 %v173, %v173
    %v186 = vld [vmem:[#allocation5] sm:$0xff]
    %v187 = vld [vmem:[#allocation5 + $0x8] sm:$0xff]
    %v188 = vld [vmem:[#allocation5 + $0x10] sm:$0xff]
    %v189 = vld [vmem:[#allocation5 + $0x18] sm:$0xff]
    %v190 = vld [vmem:[#allocation5 + $0x20] sm:$0xff]
    %v191 = vld [vmem:[#allocation5 + $0x28] sm:$0xff]
    %v192 = vld [vmem:[#allocation5 + $0x30] sm:$0xff]
    %v193 = vld [vmem:[#allocation5 + $0x38] sm:$0xff]
    %v194 = vld [vmem:[#allocation5 + $0x40] sm:$0xff]
    %v195 = vld [vmem:[#allocation5 + $0x48] sm:$0xff]
    %v196 = vld [vmem:[#allocation5 + $0x50] sm:$0xff]
    %v197 = vld [vmem:[#allocation5 + $0x58] sm:$0xff]
    %v198 = vld [vmem:[#allocation5 + $0x60] sm:$0xff]
    %v199 = vld [vmem:[#allocation5 + $0x68] sm:$0xff]
    %v200 = vld [vmem:[#allocation5 + $0x70] sm:$0xff]
    %v201 = vld [vmem:[#allocation5 + $0x78] sm:$0xff]
    %v202 = vld [vmem:[#allocation5 + $0x80] sm:$0xff]
    %v203 = vld [vmem:[#allocation5 + $0x88] sm:$0xff]
    %v204 = vld [vmem:[#allocation5 + $0x90] sm:$0xff]
    %v205 = vld [vmem:[#allocation5 + $0x98] sm:$0xff]
    %v206 = vld [vmem:[#allocation5 + $0xa0] sm:$0xff]
    %v207 = vld [vmem:[#allocation5 + $0xa8] sm:$0xff]
    %v208 = vld [vmem:[#allocation5 + $0xb0] sm:$0xff]
    %v209 = vld [vmem:[#allocation5 + $0xb8] sm:$0xff]
    %v210 = vld [vmem:[#allocation5 + $0xc0] sm:$0xff]
    %v211 = vld [vmem:[#allocation5 + $0xc8] sm:$0xff]
    %v212 = vld [vmem:[#allocation5 + $0xd0] sm:$0xff]
    %v213 = vld [vmem:[#allocation5 + $0xd8] sm:$0xff]
    %v214 = vld [vmem:[#allocation5 + $0xe0] sm:$0xff]
    %v215 = vld [vmem:[#allocation5 + $0xe8] sm:$0xff]
    %v216 = vld [vmem:[#allocation5 + $0xf0] sm:$0xff]
    %v217 = vld [vmem:[#allocation5 + $0xf8] sm:$0xff]
    %v218 = vld [vmem:[#allocation5 + $0x100] sm:$0xff]
    %v219 = vld [vmem:[#allocation5 + $0x108] sm:$0xff]
    %v220 = vld [vmem:[#allocation5 + $0x110] sm:$0xff]
    %v221 = vld [vmem:[#allocation5 + $0x118] sm:$0xff]
    %v222 = vld [vmem:[#allocation5 + $0x120] sm:$0xff]
    %v223 = vld [vmem:[#allocation5 + $0x128] sm:$0xff]
    %v224 = vld [vmem:[#allocation5 + $0x130] sm:$0xff]
    %v225 = vld [vmem:[#allocation5 + $0x138] sm:$0xff]
    %v226 = vld [vmem:[#allocation5 + $0x140] sm:$0xff]
    %v227 = vld [vmem:[#allocation5 + $0x148] sm:$0xff]
    %v228 = vld [vmem:[#allocation5 + $0x150] sm:$0xff]
    %v229 = vld [vmem:[#allocation5 + $0x158] sm:$0xff]
    %v230 = vld [vmem:[#allocation5 + $0x160] sm:$0xff]
    %v231 = vld [vmem:[#allocation5 + $0x168] sm:$0xff]
    %v232 = vld [vmem:[#allocation5 + $0x170] sm:$0xff]
    %v233 = vld [vmem:[#allocation5 + $0x178] sm:$0xff]
    %v234 = vld [vmem:[#allocation5 + $0x180] sm:$0xff]
    %v235 = vld [vmem:[#allocation5 + $0x188] sm:$0xff]
    %v236 = vld [vmem:[#allocation5 + $0x190] sm:$0xff]
    %v237 = vld [vmem:[#allocation5 + $0x198] sm:$0xff]
    %v238 = vld [vmem:[#allocation5 + $0x1a0] sm:$0xff]
    %v239 = vld [vmem:[#allocation5 + $0x1a8] sm:$0xff]
    %v240 = vld [vmem:[#allocation5 + $0x1b0] sm:$0xff]
    %v241 = vld [vmem:[#allocation5 + $0x1b8] sm:$0xff]
    %v242 = vld [vmem:[#allocation5 + $0x1c0] sm:$0xff]
    %v243 = vld [vmem:[#allocation5 + $0x1c8] sm:$0xff]
    %v244 = vld [vmem:[#allocation5 + $0x1d0] sm:$0xff]
    %v245 = vld [vmem:[#allocation5 + $0x1d8] sm:$0xff]
    %v246 = vld [vmem:[#allocation5 + $0x1e0] sm:$0xff]
    %v247 = vld [vmem:[#allocation5 + $0x1e8] sm:$0xff]
    %v248 = vld [vmem:[#allocation5 + $0x1f0] sm:$0xff]
    %v249 = vld [vmem:[#allocation5 + $0x1f8] sm:$0xff]
    %v250 = vld [vmem:[#allocation5 + $0x200] sm:$0xff]
    %v251 = vld [vmem:[#allocation5 + $0x208] sm:$0xff]
    %v252 = vld [vmem:[#allocation5 + $0x210] sm:$0xff]
    %v253 = vld [vmem:[#allocation5 + $0x218] sm:$0xff]
    %v254 = vld [vmem:[#allocation5 + $0x220] sm:$0xff]
    %v255 = vld [vmem:[#allocation5 + $0x228] sm:$0xff]
    %v256 = vld [vmem:[#allocation5 + $0x230] sm:$0xff]
    %v257 = vld [vmem:[#allocation5 + $0x238] sm:$0xff]
    %v258 = vld [vmem:[#allocation5 + $0x240] sm:$0xff]
    %v259 = vld [vmem:[#allocation5 + $0x248] sm:$0xff]
    %v260 = vld [vmem:[#allocation5 + $0x250] sm:$0xff]
    %v261 = vld [vmem:[#allocation5 + $0x258] sm:$0xff]
    %v262 = vld [vmem:[#allocation5 + $0x260] sm:$0xff]
    %v263 = vld [vmem:[#allocation5 + $0x268] sm:$0xff]
    %v264 = vld [vmem:[#allocation5 + $0x270] sm:$0xff]
    %v265 = vld [vmem:[#allocation5 + $0x278] sm:$0xff]
    %v266 = vld [vmem:[#allocation5 + $0x280] sm:$0xff]
    %v267 = vld [vmem:[#allocation5 + $0x288] sm:$0xff]
    %v268 = vld [vmem:[#allocation5 + $0x290] sm:$0xff]
    %v269 = vld [vmem:[#allocation5 + $0x298] sm:$0xff]
    %v270 = vld [vmem:[#allocation5 + $0x2a0] sm:$0xff]
    %v271 = vld [vmem:[#allocation5 + $0x2a8] sm:$0xff]
    %v272 = vld [vmem:[#allocation5 + $0x2b0] sm:$0xff]
    %v273 = vld [vmem:[#allocation5 + $0x2b8] sm:$0xff]
    %v274 = vld [vmem:[#allocation5 + $0x2c0] sm:$0xff]
    %v275 = vld [vmem:[#allocation5 + $0x2c8] sm:$0xff]
    %v276 = vld [vmem:[#allocation5 + $0x2d0] sm:$0xff]
    %v277 = vld [vmem:[#allocation5 + $0x2d8] sm:$0xff]
    %v278 = vld [vmem:[#allocation5 + $0x2e0] sm:$0xff]
    %v279 = vld [vmem:[#allocation5 + $0x2e8] sm:$0xff]
    %v280 = vld [vmem:[#allocation5 + $0x2f0] sm:$0xff]
    %v281 = vld [vmem:[#allocation5 + $0x2f8] sm:$0xff]
    %v282 = vld [vmem:[#allocation5 + $0x300] sm:$0xff]
    %v283 = vld [vmem:[#allocation5 + $0x308] sm:$0xff]
    %v284 = vld [vmem:[#allocation5 + $0x310] sm:$0xff]
    %v285 = vld [vmem:[#allocation5 + $0x318] sm:$0xff]
    %v286 = vld [vmem:[#allocation5 + $0x320] sm:$0xff]
    %v287 = vld [vmem:[#allocation5 + $0x328] sm:$0xff]
    %v288 = vld [vmem:[#allocation5 + $0x330] sm:$0xff]
    %v289 = vld [vmem:[#allocation5 + $0x338] sm:$0xff]
    %v290 = vld [vmem:[#allocation5 + $0x340] sm:$0xff]
    %v291 = vld [vmem:[#allocation5 + $0x348] sm:$0xff]
    %v292 = vld [vmem:[#allocation5 + $0x350] sm:$0xff]
    %v293 = vld [vmem:[#allocation5 + $0x358] sm:$0xff]
    %v294 = vld [vmem:[#allocation5 + $0x360] sm:$0xff]
    %v295 = vld [vmem:[#allocation5 + $0x368] sm:$0xff]
    %v296 = vld [vmem:[#allocation5 + $0x370] sm:$0xff]
    %v297 = vld [vmem:[#allocation5 + $0x378] sm:$0xff]
    %v298 = vld [vmem:[#allocation5 + $0x380] sm:$0xff]
    %v299 = vld [vmem:[#allocation5 + $0x388] sm:$0xff]
    %v300 = vld [vmem:[#allocation5 + $0x390] sm:$0xff]
    %v301 = vld [vmem:[#allocation5 + $0x398] sm:$0xff]
    %v302 = vld [vmem:[#allocation5 + $0x3a0] sm:$0xff]
    %v303 = vld [vmem:[#allocation5 + $0x3a8] sm:$0xff]
    %v304 = vld [vmem:[#allocation5 + $0x3b0] sm:$0xff]
    %v305 = vld [vmem:[#allocation5 + $0x3b8] sm:$0xff]
    %v306 = vld [vmem:[#allocation5 + $0x3c0] sm:$0xff]
    %v307 = vld [vmem:[#allocation5 + $0x3c8] sm:$0xff]
    %v308 = vld [vmem:[#allocation5 + $0x3d0] sm:$0xff]
    %v309 = vld [vmem:[#allocation5 + $0x3d8] sm:$0xff]
    %v310 = vld [vmem:[#allocation5 + $0x3e0] sm:$0xff]
    %v311 = vld [vmem:[#allocation5 + $0x3e8] sm:$0xff]
    %v312 = vld [vmem:[#allocation5 + $0x3f0] sm:$0xff]
    %v313 = vld [vmem:[#allocation5 + $0x3f8] sm:$0xff]
    %v314 = vld [vmem:[#allocation5 + $0x400] sm:$0xff]
    %v315 = vld [vmem:[#allocation5 + $0x408] sm:$0xff]
    %v316 = vld [vmem:[#allocation5 + $0x410] sm:$0xff]
    %v317 = vld [vmem:[#allocation5 + $0x418] sm:$0xff]
    %v318 = vld [vmem:[#allocation5 + $0x420] sm:$0xff]
    %v319 = vld [vmem:[#allocation5 + $0x428] sm:$0xff]
    %v320 = vld [vmem:[#allocation5 + $0x430] sm:$0xff]
    %v321 = vld [vmem:[#allocation5 + $0x438] sm:$0xff]
    %v322 = vld [vmem:[#allocation5 + $0x440] sm:$0xff]
    %v323 = vld [vmem:[#allocation5 + $0x448] sm:$0xff]
    %v324 = vld [vmem:[#allocation5 + $0x450] sm:$0xff]
    %v325 = vld [vmem:[#allocation5 + $0x458] sm:$0xff]
    %v326 = vld [vmem:[#allocation5 + $0x460] sm:$0xff]
    %v327 = vld [vmem:[#allocation5 + $0x468] sm:$0xff]
    %v328 = vld [vmem:[#allocation5 + $0x470] sm:$0xff]
    %v329 = vld [vmem:[#allocation5 + $0x478] sm:$0xff]
    %v330 = vld [vmem:[#allocation5 + $0x480] sm:$0xff]
    %v331 = vld [vmem:[#allocation5 + $0x488] sm:$0xff]
    %v332 = vld [vmem:[#allocation5 + $0x490] sm:$0xff]
    %v333 = vld [vmem:[#allocation5 + $0x498] sm:$0xff]
    %v334 = vld [vmem:[#allocation5 + $0x4a0] sm:$0xff]
    %v335 = vld [vmem:[#allocation5 + $0x4a8] sm:$0xff]
    %v336 = vld [vmem:[#allocation5 + $0x4b0] sm:$0xff]
    %v337 = vld [vmem:[#allocation5 + $0x4b8] sm:$0xff]
    %v338 = vld [vmem:[#allocation5 + $0x4c0] sm:$0xff]
    %v339 = vld [vmem:[#allocation5 + $0x4c8] sm:$0xff]
    %v340 = vld [vmem:[#allocation5 + $0x4d0] sm:$0xff]
    %v341 = vld [vmem:[#allocation5 + $0x4d8] sm:$0xff]
    %v342 = vld [vmem:[#allocation5 + $0x4e0] sm:$0xff]
    %v343 = vld [vmem:[#allocation5 + $0x4e8] sm:$0xff]
    %v344 = vld [vmem:[#allocation5 + $0x4f0] sm:$0xff]
    %v345 = vld [vmem:[#allocation5 + $0x4f8] sm:$0xff]
    %v346 = vld [vmem:[#allocation5 + $0x500] sm:$0xff]
    %v347 = vld [vmem:[#allocation5 + $0x508] sm:$0xff]
    %v348 = vld [vmem:[#allocation5 + $0x510] sm:$0xff]
    %v349 = vld [vmem:[#allocation5 + $0x518] sm:$0xff]
    %v350 = vld [vmem:[#allocation5 + $0x520] sm:$0xff]
    %v351 = vld [vmem:[#allocation5 + $0x528] sm:$0xff]
    %v352 = vld [vmem:[#allocation5 + $0x530] sm:$0xff]
    %v353 = vld [vmem:[#allocation5 + $0x538] sm:$0xff]
    %v354 = vld [vmem:[#allocation5 + $0x540] sm:$0xff]
    %v355 = vld [vmem:[#allocation5 + $0x548] sm:$0xff]
    %v356 = vld [vmem:[#allocation5 + $0x550] sm:$0xff]
    %v357 = vld [vmem:[#allocation5 + $0x558] sm:$0xff]
    %v358 = vld [vmem:[#allocation5 + $0x560] sm:$0xff]
    %v359 = vld [vmem:[#allocation5 + $0x568] sm:$0xff]
    %v360 = vld [vmem:[#allocation5 + $0x570] sm:$0xff]
    %v361 = vld [vmem:[#allocation5 + $0x578] sm:$0xff]
    %v362 = vld [vmem:[#allocation5 + $0x580] sm:$0xff]
    %v363 = vld [vmem:[#allocation5 + $0x588] sm:$0xff]
    %v364 = vld [vmem:[#allocation5 + $0x590] sm:$0xff]
    %v365 = vld [vmem:[#allocation5 + $0x598] sm:$0xff]
    %v366 = vld [vmem:[#allocation5 + $0x5a0] sm:$0xff]
    %v367 = vld [vmem:[#allocation5 + $0x5a8] sm:$0xff]
    %v368 = vld [vmem:[#allocation5 + $0x5b0] sm:$0xff]
    %v369 = vld [vmem:[#allocation5 + $0x5b8] sm:$0xff]
    %v370 = vld [vmem:[#allocation5 + $0x5c0] sm:$0xff]
    %v371 = vld [vmem:[#allocation5 + $0x5c8] sm:$0xff]
    %v372 = vld [vmem:[#allocation5 + $0x5d0] sm:$0xff]
    %v373 = vld [vmem:[#allocation5 + $0x5d8] sm:$0xff]
    %v374 = vld [vmem:[#allocation5 + $0x5e0] sm:$0xff]
    %v375 = vld [vmem:[#allocation5 + $0x5e8] sm:$0xff]
    %v376 = vld [vmem:[#allocation5 + $0x5f0] sm:$0xff]
    %v377 = vld [vmem:[#allocation5 + $0x5f8] sm:$0xff]
    %v378 = vld [vmem:[#allocation5 + $0x600] sm:$0xff]
    %v379 = vld [vmem:[#allocation5 + $0x608] sm:$0xff]
    %v380 = vld [vmem:[#allocation5 + $0x610] sm:$0xff]
    %v381 = vld [vmem:[#allocation5 + $0x618] sm:$0xff]
    %v382 = vld [vmem:[#allocation5 + $0x620] sm:$0xff]
    %v383 = vld [vmem:[#allocation5 + $0x628] sm:$0xff]
    %v384 = vld [vmem:[#allocation5 + $0x630] sm:$0xff]
    %v385 = vld [vmem:[#allocation5 + $0x638] sm:$0xff]
    %v386 = vld [vmem:[#allocation5 + $0x640] sm:$0xff]
    %v387 = vld [vmem:[#allocation5 + $0x648] sm:$0xff]
    %v388 = vld [vmem:[#allocation5 + $0x650] sm:$0xff]
    %v389 = vld [vmem:[#allocation5 + $0x658] sm:$0xff]
    %v390 = vld [vmem:[#allocation5 + $0x660] sm:$0xff]
    %v391 = vld [vmem:[#allocation5 + $0x668] sm:$0xff]
    %v392 = vld [vmem:[#allocation5 + $0x670] sm:$0xff]
    %v393 = vld [vmem:[#allocation5 + $0x678] sm:$0xff]
    %v394 = vld [vmem:[#allocation5 + $0x680] sm:$0xff]
    %v395 = vld [vmem:[#allocation5 + $0x688] sm:$0xff]
    %v396 = vld [vmem:[#allocation5 + $0x690] sm:$0xff]
    %v397 = vld [vmem:[#allocation5 + $0x698] sm:$0xff]
    %v398 = vld [vmem:[#allocation5 + $0x6a0] sm:$0xff]
    %v399 = vld [vmem:[#allocation5 + $0x6a8] sm:$0xff]
    %v400 = vld [vmem:[#allocation5 + $0x6b0] sm:$0xff]
    %v401 = vld [vmem:[#allocation5 + $0x6b8] sm:$0xff]
    %v402 = vld [vmem:[#allocation5 + $0x6c0] sm:$0xff]
    %v403 = vld [vmem:[#allocation5 + $0x6c8] sm:$0xff]
    %v404 = vld [vmem:[#allocation5 + $0x6d0] sm:$0xff]
    %v405 = vld [vmem:[#allocation5 + $0x6d8] sm:$0xff]
    %v406 = vld [vmem:[#allocation5 + $0x6e0] sm:$0xff]
    %v407 = vld [vmem:[#allocation5 + $0x6e8] sm:$0xff]
    %v408 = vld [vmem:[#allocation5 + $0x6f0] sm:$0xff]
    %v409 = vld [vmem:[#allocation5 + $0x6f8] sm:$0xff]
    %v410 = vld [vmem:[#allocation5 + $0x700] sm:$0xff]
    %v411 = vld [vmem:[#allocation5 + $0x708] sm:$0xff]
    %v412 = vld [vmem:[#allocation5 + $0x710] sm:$0xff]
    %v413 = vld [vmem:[#allocation5 + $0x718] sm:$0xff]
    %v414 = vld [vmem:[#allocation5 + $0x720] sm:$0xff]
    %v415 = vld [vmem:[#allocation5 + $0x728] sm:$0xff]
    %v416 = vld [vmem:[#allocation5 + $0x730] sm:$0xff]
    %v417 = vld [vmem:[#allocation5 + $0x738] sm:$0xff]
    %v418 = vld [vmem:[#allocation5 + $0x740] sm:$0xff]
    %v419 = vld [vmem:[#allocation5 + $0x748] sm:$0xff]
    %v420 = vld [vmem:[#allocation5 + $0x750] sm:$0xff]
    %v421 = vld [vmem:[#allocation5 + $0x758] sm:$0xff]
    %v422 = vld [vmem:[#allocation5 + $0x760] sm:$0xff]
    %v423 = vld [vmem:[#allocation5 + $0x768] sm:$0xff]
    %v424 = vld [vmem:[#allocation5 + $0x770] sm:$0xff]
    %v425 = vld [vmem:[#allocation5 + $0x778] sm:$0xff]
    %v426 = vld [vmem:[#allocation5 + $0x780] sm:$0xff]
    %v427 = vld [vmem:[#allocation5 + $0x788] sm:$0xff]
    %v428 = vld [vmem:[#allocation5 + $0x790] sm:$0xff]
    %v429 = vld [vmem:[#allocation5 + $0x798] sm:$0xff]
    %v430 = vld [vmem:[#allocation5 + $0x7a0] sm:$0xff]
    %v431 = vld [vmem:[#allocation5 + $0x7a8] sm:$0xff]
    %v432 = vld [vmem:[#allocation5 + $0x7b0] sm:$0xff]
    %v433 = vld [vmem:[#allocation5 + $0x7b8] sm:$0xff]
    %v434 = vld [vmem:[#allocation5 + $0x7c0] sm:$0xff]
    %v435 = vld [vmem:[#allocation5 + $0x7c8] sm:$0xff]
    %v436 = vld [vmem:[#allocation5 + $0x7d0] sm:$0xff]
    %v437 = vld [vmem:[#allocation5 + $0x7d8] sm:$0xff]
    %v438 = vld [vmem:[#allocation5 + $0x7e0] sm:$0xff]
    %v439 = vld [vmem:[#allocation5 + $0x7e8] sm:$0xff]
    %v440 = vld [vmem:[#allocation5 + $0x7f0] sm:$0xff]
    %v441 = vld [vmem:[#allocation5 + $0x7f8] sm:$0xff]
    %v442 = vld [vmem:[#allocation5 + $0x800] sm:$0xff]
    %v443 = vld [vmem:[#allocation5 + $0x808] sm:$0xff]
    %v444 = vld [vmem:[#allocation5 + $0x810] sm:$0xff]
    %v445 = vld [vmem:[#allocation5 + $0x818] sm:$0xff]
    %v446 = vld [vmem:[#allocation5 + $0x820] sm:$0xff]
    %v447 = vld [vmem:[#allocation5 + $0x828] sm:$0xff]
    %v448 = vld [vmem:[#allocation5 + $0x830] sm:$0xff]
    %v449 = vld [vmem:[#allocation5 + $0x838] sm:$0xff]
    %v450 = vld [vmem:[#allocation5 + $0x840] sm:$0xff]
    %v451 = vld [vmem:[#allocation5 + $0x848] sm:$0xff]
    %v452 = vld [vmem:[#allocation5 + $0x850] sm:$0xff]
    %v453 = vld [vmem:[#allocation5 + $0x858] sm:$0xff]
    %v454 = vld [vmem:[#allocation5 + $0x860] sm:$0xff]
    %v455 = vld [vmem:[#allocation5 + $0x868] sm:$0xff]
    %v456 = vld [vmem:[#allocation5 + $0x870] sm:$0xff]
    %v457 = vld [vmem:[#allocation5 + $0x878] sm:$0xff]
    %v458 = vld [vmem:[#allocation5 + $0x880] sm:$0xff]
    %v459 = vld [vmem:[#allocation5 + $0x888] sm:$0xff]
    %v460 = vld [vmem:[#allocation5 + $0x890] sm:$0xff]
    %v461 = vld [vmem:[#allocation5 + $0x898] sm:$0xff]
    %v462 = vld [vmem:[#allocation5 + $0x8a0] sm:$0xff]
    %v463 = vld [vmem:[#allocation5 + $0x8a8] sm:$0xff]
    %v464 = vld [vmem:[#allocation5 + $0x8b0] sm:$0xff]
    %v465 = vld [vmem:[#allocation5 + $0x8b8] sm:$0xff]
    %v466 = vld [vmem:[#allocation5 + $0x8c0] sm:$0xff]
    %v467 = vld [vmem:[#allocation5 + $0x8c8] sm:$0xff]
    %v468 = vld [vmem:[#allocation5 + $0x8d0] sm:$0xff]
    %v469 = vld [vmem:[#allocation5 + $0x8d8] sm:$0xff]
    %v470 = vld [vmem:[#allocation5 + $0x8e0] sm:$0xff]
    %v471 = vld [vmem:[#allocation5 + $0x8e8] sm:$0xff]
    %v472 = vld [vmem:[#allocation5 + $0x8f0] sm:$0xff]
    %v473 = vld [vmem:[#allocation5 + $0x8f8] sm:$0xff]
    %v474 = vld [vmem:[#allocation5 + $0x900] sm:$0xff]
    %v475 = vld [vmem:[#allocation5 + $0x908] sm:$0xff]
    %v476 = vld [vmem:[#allocation5 + $0x910] sm:$0xff]
    %v477 = vld [vmem:[#allocation5 + $0x918] sm:$0xff]
    %v478 = vld [vmem:[#allocation5 + $0x920] sm:$0xff]
    %v479 = vld [vmem:[#allocation5 + $0x928] sm:$0xff]
    %v480 = vld [vmem:[#allocation5 + $0x930] sm:$0xff]
    %v481 = vld [vmem:[#allocation5 + $0x938] sm:$0xff]
    %v482 = vld [vmem:[#allocation5 + $0x940] sm:$0xff]
    %v483 = vld [vmem:[#allocation5 + $0x948] sm:$0xff]
    %v484 = vld [vmem:[#allocation5 + $0x950] sm:$0xff]
    %v485 = vld [vmem:[#allocation5 + $0x958] sm:$0xff]
    %v486 = vld [vmem:[#allocation5 + $0x960] sm:$0xff]
    %v487 = vld [vmem:[#allocation5 + $0x968] sm:$0xff]
    %v488 = vld [vmem:[#allocation5 + $0x970] sm:$0xff]
    %v489 = vld [vmem:[#allocation5 + $0x978] sm:$0xff]
    %v490 = vld [vmem:[#allocation5 + $0x980] sm:$0xff]
    %v491 = vld [vmem:[#allocation5 + $0x988] sm:$0xff]
    %v492 = vld [vmem:[#allocation5 + $0x990] sm:$0xff]
    %v493 = vld [vmem:[#allocation5 + $0x998] sm:$0xff]
    %v494 = vld [vmem:[#allocation5 + $0x9a0] sm:$0xff]
    %v495 = vld [vmem:[#allocation5 + $0x9a8] sm:$0xff]
    %v496 = vld [vmem:[#allocation5 + $0x9b0] sm:$0xff]
    %v497 = vld [vmem:[#allocation5 + $0x9b8] sm:$0xff]
    %v498 = vld [vmem:[#allocation5 + $0x9c0] sm:$0xff]
    %v499 = vld [vmem:[#allocation5 + $0x9c8] sm:$0xff]
    %v500 = vld [vmem:[#allocation5 + $0x9d0] sm:$0xff]
    %v501 = vld [vmem:[#allocation5 + $0x9d8] sm:$0xff]
    %v502 = vld [vmem:[#allocation5 + $0x9e0] sm:$0xff]
    %v503 = vld [vmem:[#allocation5 + $0x9e8] sm:$0xff]
    %v504 = vld [vmem:[#allocation5 + $0x9f0] sm:$0xff]
    %v505 = vld [vmem:[#allocation5 + $0x9f8] sm:$0xff]
    %v506 = vld [vmem:[#allocation5 + $0xa00] sm:$0xff]
    %v507 = vld [vmem:[#allocation5 + $0xa08] sm:$0xff]
    %v508 = vld [vmem:[#allocation5 + $0xa10] sm:$0xff]
    %v509 = vld [vmem:[#allocation5 + $0xa18] sm:$0xff]
    %v510 = vld [vmem:[#allocation5 + $0xa20] sm:$0xff]
    %v511 = vld [vmem:[#allocation5 + $0xa28] sm:$0xff]
    %v512 = vld [vmem:[#allocation5 + $0xa30] sm:$0xff]
    %v513 = vld [vmem:[#allocation5 + $0xa38] sm:$0xff]
    %v514 = vld [vmem:[#allocation5 + $0xa40] sm:$0xff]
    %v515 = vld [vmem:[#allocation5 + $0xa48] sm:$0xff]
    %v516 = vld [vmem:[#allocation5 + $0xa50] sm:$0xff]
    %v517 = vld [vmem:[#allocation5 + $0xa58] sm:$0xff]
    %v518 = vld [vmem:[#allocation5 + $0xa60] sm:$0xff]
    %v519 = vld [vmem:[#allocation5 + $0xa68] sm:$0xff]
    %v520 = vld [vmem:[#allocation5 + $0xa70] sm:$0xff]
    %v521 = vld [vmem:[#allocation5 + $0xa78] sm:$0xff]
    %v522 = vld [vmem:[#allocation5 + $0xa80] sm:$0xff]
    %v523 = vld [vmem:[#allocation5 + $0xa88] sm:$0xff]
    %v524 = vld [vmem:[#allocation5 + $0xa90] sm:$0xff]
    %v525 = vld [vmem:[#allocation5 + $0xa98] sm:$0xff]
    %v526 = vld [vmem:[#allocation5 + $0xaa0] sm:$0xff]
    %v527 = vld [vmem:[#allocation5 + $0xaa8] sm:$0xff]
    %v528 = vld [vmem:[#allocation5 + $0xab0] sm:$0xff]
    %v529 = vld [vmem:[#allocation5 + $0xab8] sm:$0xff]
    %v530 = vld [vmem:[#allocation5 + $0xac0] sm:$0xff]
    %v531 = vld [vmem:[#allocation5 + $0xac8] sm:$0xff]
    %v532 = vld [vmem:[#allocation5 + $0xad0] sm:$0xff]
    %v533 = vld [vmem:[#allocation5 + $0xad8] sm:$0xff]
    %v534 = vld [vmem:[#allocation5 + $0xae0] sm:$0xff]
    %v535 = vld [vmem:[#allocation5 + $0xae8] sm:$0xff]
    %v536 = vld [vmem:[#allocation5 + $0xaf0] sm:$0xff]
    %v537 = vld [vmem:[#allocation5 + $0xaf8] sm:$0xff]
    %v538 = vld [vmem:[#allocation5 + $0xb00] sm:$0xff]
    %v539 = vld [vmem:[#allocation5 + $0xb08] sm:$0xff]
    %v540 = vld [vmem:[#allocation5 + $0xb10] sm:$0xff]
    %v541 = vld [vmem:[#allocation5 + $0xb18] sm:$0xff]
    %v542 = vld [vmem:[#allocation5 + $0xb20] sm:$0xff]
    %v543 = vld [vmem:[#allocation5 + $0xb28] sm:$0xff]
    %v544 = vld [vmem:[#allocation5 + $0xb30] sm:$0xff]
    %v545 = vld [vmem:[#allocation5 + $0xb38] sm:$0xff]
    %v546 = vld [vmem:[#allocation5 + $0xb40] sm:$0xff]
    %v547 = vld [vmem:[#allocation5 + $0xb48] sm:$0xff]
    %v548 = vld [vmem:[#allocation5 + $0xb50] sm:$0xff]
    %v549 = vld [vmem:[#allocation5 + $0xb58] sm:$0xff]
    %v550 = vld [vmem:[#allocation5 + $0xb60] sm:$0xff]
    %v551 = vld [vmem:[#allocation5 + $0xb68] sm:$0xff]
    %v552 = vld [vmem:[#allocation5 + $0xb70] sm:$0xff]
    %v553 = vld [vmem:[#allocation5 + $0xb78] sm:$0xff]
    %v554 = vld [vmem:[#allocation5 + $0xb80] sm:$0xff]
    %v555 = vld [vmem:[#allocation5 + $0xb88] sm:$0xff]
    %v556 = vld [vmem:[#allocation5 + $0xb90] sm:$0xff]
    %v557 = vld [vmem:[#allocation5 + $0xb98] sm:$0xff]
    %v558 = vld [vmem:[#allocation5 + $0xba0] sm:$0xff]
    %v559 = vld [vmem:[#allocation5 + $0xba8] sm:$0xff]
    %v560 = vld [vmem:[#allocation5 + $0xbb0] sm:$0xff]
    %v561 = vld [vmem:[#allocation5 + $0xbb8] sm:$0xff]
    %v562 = vld [vmem:[#allocation5 + $0xbc0] sm:$0xff]
    %v563 = vld [vmem:[#allocation5 + $0xbc8] sm:$0xff]
    %v564 = vld [vmem:[#allocation5 + $0xbd0] sm:$0xff]
    %v565 = vld [vmem:[#allocation5 + $0xbd8] sm:$0xff]
    %v566 = vld [vmem:[#allocation5 + $0xbe0] sm:$0xff]
    %v567 = vld [vmem:[#allocation5 + $0xbe8] sm:$0xff]
    %v568 = vld [vmem:[#allocation5 + $0xbf0] sm:$0xff]
    %v569 = vld [vmem:[#allocation5 + $0xbf8] sm:$0xff]
    %v570 = vld [vmem:[#allocation7] sm:$0xff]
    %v572 = vlaneseq
    %v573 = vshrl.u32 %v572, 7
    %v574 = vsub.s32 0, %v573
    %v575 = vrot.slane %v570, %v574
    %v576 = vlaneseq
    %v577 = vshrl.u32 %v576, 7
    %v578 = vsub.s32 1, %v577
    %v579 = vrot.slane %v570, %v578
    %v580 = vlaneseq
    %v581 = vshrl.u32 %v580, 7
    %v582 = vsub.s32 2, %v581
    %v583 = vrot.slane %v570, %v582
    %v584 = vlaneseq
    %v585 = vshrl.u32 %v584, 7
    %v586 = vsub.s32 3, %v585
    %v587 = vrot.slane %v570, %v586
    %v588 = vlaneseq
    %v589 = vshrl.u32 %v588, 7
    %v590 = vsub.s32 4, %v589
    %v591 = vrot.slane %v570, %v590
    %v592 = vlaneseq
    %v593 = vshrl.u32 %v592, 7
    %v594 = vsub.s32 5, %v593
    %v595 = vrot.slane %v570, %v594
    %v596 = vlaneseq
    %v597 = vshrl.u32 %v596, 7
    %v598 = vsub.s32 6, %v597
    %v599 = vrot.slane %v570, %v598
    %v600 = vlaneseq
    %v601 = vshrl.u32 %v600, 7
    %v602 = vsub.s32 7, %v601
    %v603 = vrot.slane %v570, %v602
    %v996 = vunpack.c.l.b16 %v186
    %v997 = vunpack.c.h.b16 %v186
    %v998 = vunpack.c.l.b16 %v187
    %v999 = vunpack.c.h.b16 %v187
    %v1000 = vunpack.c.l.b16 %v188
    %v1001 = vunpack.c.h.b16 %v188
    %v1002 = vunpack.c.l.b16 %v189
    %v1003 = vunpack.c.h.b16 %v189
    %v1004 = vunpack.c.l.b16 %v190
    %v1005 = vunpack.c.h.b16 %v190
    %v1006 = vunpack.c.l.b16 %v191
    %v1007 = vunpack.c.h.b16 %v191
    %v1008 = vunpack.c.l.b16 %v192
    %v1009 = vunpack.c.h.b16 %v192
    %v1010 = vunpack.c.l.b16 %v193
    %v1011 = vunpack.c.h.b16 %v193
    %v1012 = vunpack.c.l.b16 %v194
    %v1013 = vunpack.c.h.b16 %v194
    %v1014 = vunpack.c.l.b16 %v195
    %v1015 = vunpack.c.h.b16 %v195
    %v1016 = vunpack.c.l.b16 %v196
    %v1017 = vunpack.c.h.b16 %v196
    %v1018 = vunpack.c.l.b16 %v197
    %v1019 = vunpack.c.h.b16 %v197
    %v1020 = vunpack.c.l.b16 %v198
    %v1021 = vunpack.c.h.b16 %v198
    %v1022 = vunpack.c.l.b16 %v199
    %v1023 = vunpack.c.h.b16 %v199
    %v1024 = vunpack.c.l.b16 %v200
    %v1025 = vunpack.c.h.b16 %v200
    %v1026 = vunpack.c.l.b16 %v201
    %v1027 = vunpack.c.h.b16 %v201
    %v1028 = vunpack.c.l.b16 %v202
    %v1029 = vunpack.c.h.b16 %v202
    %v1030 = vunpack.c.l.b16 %v203
    %v1031 = vunpack.c.h.b16 %v203
    %v1032 = vunpack.c.l.b16 %v204
    %v1033 = vunpack.c.h.b16 %v204
    %v1034 = vunpack.c.l.b16 %v205
    %v1035 = vunpack.c.h.b16 %v205
    %v1036 = vunpack.c.l.b16 %v206
    %v1037 = vunpack.c.h.b16 %v206
    %v1038 = vunpack.c.l.b16 %v207
    %v1039 = vunpack.c.h.b16 %v207
    %v1040 = vunpack.c.l.b16 %v208
    %v1041 = vunpack.c.h.b16 %v208
    %v1042 = vunpack.c.l.b16 %v209
    %v1043 = vunpack.c.h.b16 %v209
    %v1044 = vunpack.c.l.b16 %v210
    %v1045 = vunpack.c.h.b16 %v210
    %v1046 = vunpack.c.l.b16 %v211
    %v1047 = vunpack.c.h.b16 %v211
    %v1048 = vunpack.c.l.b16 %v212
    %v1049 = vunpack.c.h.b16 %v212
    %v1050 = vunpack.c.l.b16 %v213
    %v1051 = vunpack.c.h.b16 %v213
    %v1052 = vunpack.c.l.b16 %v214
    %v1053 = vunpack.c.h.b16 %v214
    %v1054 = vunpack.c.l.b16 %v215
    %v1055 = vunpack.c.h.b16 %v215
    %v1056 = vunpack.c.l.b16 %v216
    %v1057 = vunpack.c.h.b16 %v216
    %v1058 = vunpack.c.l.b16 %v217
    %v1059 = vunpack.c.h.b16 %v217
    %v1060 = vunpack.c.l.b16 %v218
    %v1061 = vunpack.c.h.b16 %v218
    %v1062 = vunpack.c.l.b16 %v219
    %v1063 = vunpack.c.h.b16 %v219
    %v1064 = vunpack.c.l.b16 %v220
    %v1065 = vunpack.c.h.b16 %v220
    %v1066 = vunpack.c.l.b16 %v221
    %v1067 = vunpack.c.h.b16 %v221
    %v1068 = vunpack.c.l.b16 %v222
    %v1069 = vunpack.c.h.b16 %v222
    %v1070 = vunpack.c.l.b16 %v223
    %v1071 = vunpack.c.h.b16 %v223
    %v1072 = vunpack.c.l.b16 %v224
    %v1073 = vunpack.c.h.b16 %v224
    %v1074 = vunpack.c.l.b16 %v225
    %v1075 = vunpack.c.h.b16 %v225
    %v1076 = vunpack.c.l.b16 %v226
    %v1077 = vunpack.c.h.b16 %v226
    %v1078 = vunpack.c.l.b16 %v227
    %v1079 = vunpack.c.h.b16 %v227
    %v1080 = vunpack.c.l.b16 %v228
    %v1081 = vunpack.c.h.b16 %v228
    %v1082 = vunpack.c.l.b16 %v229
    %v1083 = vunpack.c.h.b16 %v229
    %v1084 = vunpack.c.l.b16 %v230
    %v1085 = vunpack.c.h.b16 %v230
    %v1086 = vunpack.c.l.b16 %v231
    %v1087 = vunpack.c.h.b16 %v231
    %v1088 = vunpack.c.l.b16 %v232
    %v1089 = vunpack.c.h.b16 %v232
    %v1090 = vunpack.c.l.b16 %v233
    %v1091 = vunpack.c.h.b16 %v233
    %v1092 = vunpack.c.l.b16 %v234
    %v1093 = vunpack.c.h.b16 %v234
    %v1094 = vunpack.c.l.b16 %v235
    %v1095 = vunpack.c.h.b16 %v235
    %v1096 = vunpack.c.l.b16 %v236
    %v1097 = vunpack.c.h.b16 %v236
    %v1098 = vunpack.c.l.b16 %v237
    %v1099 = vunpack.c.h.b16 %v237
    %v1100 = vunpack.c.l.b16 %v238
    %v1101 = vunpack.c.h.b16 %v238
    %v1102 = vunpack.c.l.b16 %v239
    %v1103 = vunpack.c.h.b16 %v239
    %v1104 = vunpack.c.l.b16 %v240
    %v1105 = vunpack.c.h.b16 %v240
    %v1106 = vunpack.c.l.b16 %v241
    %v1107 = vunpack.c.h.b16 %v241
    %v1108 = vunpack.c.l.b16 %v242
    %v1109 = vunpack.c.h.b16 %v242
    %v1110 = vunpack.c.l.b16 %v243
    %v1111 = vunpack.c.h.b16 %v243
    %v1112 = vunpack.c.l.b16 %v244
    %v1113 = vunpack.c.h.b16 %v244
    %v1114 = vunpack.c.l.b16 %v245
    %v1115 = vunpack.c.h.b16 %v245
    %v1116 = vunpack.c.l.b16 %v246
    %v1117 = vunpack.c.h.b16 %v246
    %v1118 = vunpack.c.l.b16 %v247
    %v1119 = vunpack.c.h.b16 %v247
    %v1120 = vunpack.c.l.b16 %v248
    %v1121 = vunpack.c.h.b16 %v248
    %v1122 = vunpack.c.l.b16 %v249
    %v1123 = vunpack.c.h.b16 %v249
    %v1124 = vunpack.c.l.b16 %v250
    %v1125 = vunpack.c.h.b16 %v250
    %v1126 = vunpack.c.l.b16 %v251
    %v1127 = vunpack.c.h.b16 %v251
    %v1128 = vunpack.c.l.b16 %v252
    %v1129 = vunpack.c.h.b16 %v252
    %v1130 = vunpack.c.l.b16 %v253
    %v1131 = vunpack.c.h.b16 %v253
    %v1132 = vunpack.c.l.b16 %v254
    %v1133 = vunpack.c.h.b16 %v254
    %v1134 = vunpack.c.l.b16 %v255
    %v1135 = vunpack.c.h.b16 %v255
    %v1136 = vunpack.c.l.b16 %v256
    %v1137 = vunpack.c.h.b16 %v256
    %v1138 = vunpack.c.l.b16 %v257
    %v1139 = vunpack.c.h.b16 %v257
    %v1140 = vunpack.c.l.b16 %v258
    %v1141 = vunpack.c.h.b16 %v258
    %v1142 = vunpack.c.l.b16 %v259
    %v1143 = vunpack.c.h.b16 %v259
    %v1144 = vunpack.c.l.b16 %v260
    %v1145 = vunpack.c.h.b16 %v260
    %v1146 = vunpack.c.l.b16 %v261
    %v1147 = vunpack.c.h.b16 %v261
    %v1148 = vunpack.c.l.b16 %v262
    %v1149 = vunpack.c.h.b16 %v262
    %v1150 = vunpack.c.l.b16 %v263
    %v1151 = vunpack.c.h.b16 %v263
    %v1152 = vunpack.c.l.b16 %v264
    %v1153 = vunpack.c.h.b16 %v264
    %v1154 = vunpack.c.l.b16 %v265
    %v1155 = vunpack.c.h.b16 %v265
    %v1156 = vunpack.c.l.b16 %v266
    %v1157 = vunpack.c.h.b16 %v266
    %v1158 = vunpack.c.l.b16 %v267
    %v1159 = vunpack.c.h.b16 %v267
    %v1160 = vunpack.c.l.b16 %v268
    %v1161 = vunpack.c.h.b16 %v268
    %v1162 = vunpack.c.l.b16 %v269
    %v1163 = vunpack.c.h.b16 %v269
    %v1164 = vunpack.c.l.b16 %v270
    %v1165 = vunpack.c.h.b16 %v270
    %v1166 = vunpack.c.l.b16 %v271
    %v1167 = vunpack.c.h.b16 %v271
    %v1168 = vunpack.c.l.b16 %v272
    %v1169 = vunpack.c.h.b16 %v272
    %v1170 = vunpack.c.l.b16 %v273
    %v1171 = vunpack.c.h.b16 %v273
    %v1172 = vunpack.c.l.b16 %v274
    %v1173 = vunpack.c.h.b16 %v274
    %v1174 = vunpack.c.l.b16 %v275
    %v1175 = vunpack.c.h.b16 %v275
    %v1176 = vunpack.c.l.b16 %v276
    %v1177 = vunpack.c.h.b16 %v276
    %v1178 = vunpack.c.l.b16 %v277
    %v1179 = vunpack.c.h.b16 %v277
    %v1180 = vunpack.c.l.b16 %v278
    %v1181 = vunpack.c.h.b16 %v278
    %v1182 = vunpack.c.l.b16 %v279
    %v1183 = vunpack.c.h.b16 %v279
    %v1184 = vunpack.c.l.b16 %v280
    %v1185 = vunpack.c.h.b16 %v280
    %v1186 = vunpack.c.l.b16 %v281
    %v1187 = vunpack.c.h.b16 %v281
    %v1188 = vunpack.c.l.b16 %v282
    %v1189 = vunpack.c.h.b16 %v282
    %v1190 = vunpack.c.l.b16 %v283
    %v1191 = vunpack.c.h.b16 %v283
    %v1192 = vunpack.c.l.b16 %v284
    %v1193 = vunpack.c.h.b16 %v284
    %v1194 = vunpack.c.l.b16 %v285
    %v1195 = vunpack.c.h.b16 %v285
    %v1196 = vunpack.c.l.b16 %v286
    %v1197 = vunpack.c.h.b16 %v286
    %v1198 = vunpack.c.l.b16 %v287
    %v1199 = vunpack.c.h.b16 %v287
    %v1200 = vunpack.c.l.b16 %v288
    %v1201 = vunpack.c.h.b16 %v288
    %v1202 = vunpack.c.l.b16 %v289
    %v1203 = vunpack.c.h.b16 %v289
    %v1204 = vunpack.c.l.b16 %v290
    %v1205 = vunpack.c.h.b16 %v290
    %v1206 = vunpack.c.l.b16 %v291
    %v1207 = vunpack.c.h.b16 %v291
    %v1208 = vunpack.c.l.b16 %v292
    %v1209 = vunpack.c.h.b16 %v292
    %v1210 = vunpack.c.l.b16 %v293
    %v1211 = vunpack.c.h.b16 %v293
    %v1212 = vunpack.c.l.b16 %v294
    %v1213 = vunpack.c.h.b16 %v294
    %v1214 = vunpack.c.l.b16 %v295
    %v1215 = vunpack.c.h.b16 %v295
    %v1216 = vunpack.c.l.b16 %v296
    %v1217 = vunpack.c.h.b16 %v296
    %v1218 = vunpack.c.l.b16 %v297
    %v1219 = vunpack.c.h.b16 %v297
    %v1220 = vunpack.c.l.b16 %v298
    %v1221 = vunpack.c.h.b16 %v298
    %v1222 = vunpack.c.l.b16 %v299
    %v1223 = vunpack.c.h.b16 %v299
    %v1224 = vunpack.c.l.b16 %v300
    %v1225 = vunpack.c.h.b16 %v300
    %v1226 = vunpack.c.l.b16 %v301
    %v1227 = vunpack.c.h.b16 %v301
    %v1228 = vunpack.c.l.b16 %v302
    %v1229 = vunpack.c.h.b16 %v302
    %v1230 = vunpack.c.l.b16 %v303
    %v1231 = vunpack.c.h.b16 %v303
    %v1232 = vunpack.c.l.b16 %v304
    %v1233 = vunpack.c.h.b16 %v304
    %v1234 = vunpack.c.l.b16 %v305
    %v1235 = vunpack.c.h.b16 %v305
    %v1236 = vunpack.c.l.b16 %v306
    %v1237 = vunpack.c.h.b16 %v306
    %v1238 = vunpack.c.l.b16 %v307
    %v1239 = vunpack.c.h.b16 %v307
    %v1240 = vunpack.c.l.b16 %v308
    %v1241 = vunpack.c.h.b16 %v308
    %v1242 = vunpack.c.l.b16 %v309
    %v1243 = vunpack.c.h.b16 %v309
    %v1244 = vunpack.c.l.b16 %v310
    %v1245 = vunpack.c.h.b16 %v310
    %v1246 = vunpack.c.l.b16 %v311
    %v1247 = vunpack.c.h.b16 %v311
    %v1248 = vunpack.c.l.b16 %v312
    %v1249 = vunpack.c.h.b16 %v312
    %v1250 = vunpack.c.l.b16 %v313
    %v1251 = vunpack.c.h.b16 %v313
    %v1252 = vunpack.c.l.b16 %v314
    %v1253 = vunpack.c.h.b16 %v314
    %v1254 = vunpack.c.l.b16 %v315
    %v1255 = vunpack.c.h.b16 %v315
    %v1256 = vunpack.c.l.b16 %v316
    %v1257 = vunpack.c.h.b16 %v316
    %v1258 = vunpack.c.l.b16 %v317
    %v1259 = vunpack.c.h.b16 %v317
    %v1260 = vunpack.c.l.b16 %v318
    %v1261 = vunpack.c.h.b16 %v318
    %v1262 = vunpack.c.l.b16 %v319
    %v1263 = vunpack.c.h.b16 %v319
    %v1264 = vunpack.c.l.b16 %v320
    %v1265 = vunpack.c.h.b16 %v320
    %v1266 = vunpack.c.l.b16 %v321
    %v1267 = vunpack.c.h.b16 %v321
    %v1268 = vunpack.c.l.b16 %v322
    %v1269 = vunpack.c.h.b16 %v322
    %v1270 = vunpack.c.l.b16 %v323
    %v1271 = vunpack.c.h.b16 %v323
    %v1272 = vunpack.c.l.b16 %v324
    %v1273 = vunpack.c.h.b16 %v324
    %v1274 = vunpack.c.l.b16 %v325
    %v1275 = vunpack.c.h.b16 %v325
    %v1276 = vunpack.c.l.b16 %v326
    %v1277 = vunpack.c.h.b16 %v326
    %v1278 = vunpack.c.l.b16 %v327
    %v1279 = vunpack.c.h.b16 %v327
    %v1280 = vunpack.c.l.b16 %v328
    %v1281 = vunpack.c.h.b16 %v328
    %v1282 = vunpack.c.l.b16 %v329
    %v1283 = vunpack.c.h.b16 %v329
    %v1284 = vunpack.c.l.b16 %v330
    %v1285 = vunpack.c.h.b16 %v330
    %v1286 = vunpack.c.l.b16 %v331
    %v1287 = vunpack.c.h.b16 %v331
    %v1288 = vunpack.c.l.b16 %v332
    %v1289 = vunpack.c.h.b16 %v332
    %v1290 = vunpack.c.l.b16 %v333
    %v1291 = vunpack.c.h.b16 %v333
    %v1292 = vunpack.c.l.b16 %v334
    %v1293 = vunpack.c.h.b16 %v334
    %v1294 = vunpack.c.l.b16 %v335
    %v1295 = vunpack.c.h.b16 %v335
    %v1296 = vunpack.c.l.b16 %v336
    %v1297 = vunpack.c.h.b16 %v336
    %v1298 = vunpack.c.l.b16 %v337
    %v1299 = vunpack.c.h.b16 %v337
    %v1300 = vunpack.c.l.b16 %v338
    %v1301 = vunpack.c.h.b16 %v338
    %v1302 = vunpack.c.l.b16 %v339
    %v1303 = vunpack.c.h.b16 %v339
    %v1304 = vunpack.c.l.b16 %v340
    %v1305 = vunpack.c.h.b16 %v340
    %v1306 = vunpack.c.l.b16 %v341
    %v1307 = vunpack.c.h.b16 %v341
    %v1308 = vunpack.c.l.b16 %v342
    %v1309 = vunpack.c.h.b16 %v342
    %v1310 = vunpack.c.l.b16 %v343
    %v1311 = vunpack.c.h.b16 %v343
    %v1312 = vunpack.c.l.b16 %v344
    %v1313 = vunpack.c.h.b16 %v344
    %v1314 = vunpack.c.l.b16 %v345
    %v1315 = vunpack.c.h.b16 %v345
    %v1316 = vunpack.c.l.b16 %v346
    %v1317 = vunpack.c.h.b16 %v346
    %v1318 = vunpack.c.l.b16 %v347
    %v1319 = vunpack.c.h.b16 %v347
    %v1320 = vunpack.c.l.b16 %v348
    %v1321 = vunpack.c.h.b16 %v348
    %v1322 = vunpack.c.l.b16 %v349
    %v1323 = vunpack.c.h.b16 %v349
    %v1324 = vunpack.c.l.b16 %v350
    %v1325 = vunpack.c.h.b16 %v350
    %v1326 = vunpack.c.l.b16 %v351
    %v1327 = vunpack.c.h.b16 %v351
    %v1328 = vunpack.c.l.b16 %v352
    %v1329 = vunpack.c.h.b16 %v352
    %v1330 = vunpack.c.l.b16 %v353
    %v1331 = vunpack.c.h.b16 %v353
    %v1332 = vunpack.c.l.b16 %v354
    %v1333 = vunpack.c.h.b16 %v354
    %v1334 = vunpack.c.l.b16 %v355
    %v1335 = vunpack.c.h.b16 %v355
    %v1336 = vunpack.c.l.b16 %v356
    %v1337 = vunpack.c.h.b16 %v356
    %v1338 = vunpack.c.l.b16 %v357
    %v1339 = vunpack.c.h.b16 %v357
    %v1340 = vunpack.c.l.b16 %v358
    %v1341 = vunpack.c.h.b16 %v358
    %v1342 = vunpack.c.l.b16 %v359
    %v1343 = vunpack.c.h.b16 %v359
    %v1344 = vunpack.c.l.b16 %v360
    %v1345 = vunpack.c.h.b16 %v360
    %v1346 = vunpack.c.l.b16 %v361
    %v1347 = vunpack.c.h.b16 %v361
    %v1348 = vunpack.c.l.b16 %v362
    %v1349 = vunpack.c.h.b16 %v362
    %v1350 = vunpack.c.l.b16 %v363
    %v1351 = vunpack.c.h.b16 %v363
    %v1352 = vunpack.c.l.b16 %v364
    %v1353 = vunpack.c.h.b16 %v364
    %v1354 = vunpack.c.l.b16 %v365
    %v1355 = vunpack.c.h.b16 %v365
    %v1356 = vunpack.c.l.b16 %v366
    %v1357 = vunpack.c.h.b16 %v366
    %v1358 = vunpack.c.l.b16 %v367
    %v1359 = vunpack.c.h.b16 %v367
    %v1360 = vunpack.c.l.b16 %v368
    %v1361 = vunpack.c.h.b16 %v368
    %v1362 = vunpack.c.l.b16 %v369
    %v1363 = vunpack.c.h.b16 %v369
    %v1364 = vunpack.c.l.b16 %v370
    %v1365 = vunpack.c.h.b16 %v370
    %v1366 = vunpack.c.l.b16 %v371
    %v1367 = vunpack.c.h.b16 %v371
    %v1368 = vunpack.c.l.b16 %v372
    %v1369 = vunpack.c.h.b16 %v372
    %v1370 = vunpack.c.l.b16 %v373
    %v1371 = vunpack.c.h.b16 %v373
    %v1372 = vunpack.c.l.b16 %v374
    %v1373 = vunpack.c.h.b16 %v374
    %v1374 = vunpack.c.l.b16 %v375
    %v1375 = vunpack.c.h.b16 %v375
    %v1376 = vunpack.c.l.b16 %v376
    %v1377 = vunpack.c.h.b16 %v376
    %v1378 = vunpack.c.l.b16 %v377
    %v1379 = vunpack.c.h.b16 %v377
    %v1380 = vunpack.c.l.b16 %v378
    %v1381 = vunpack.c.h.b16 %v378
    %v1382 = vunpack.c.l.b16 %v379
    %v1383 = vunpack.c.h.b16 %v379
    %v1384 = vunpack.c.l.b16 %v380
    %v1385 = vunpack.c.h.b16 %v380
    %v1386 = vunpack.c.l.b16 %v381
    %v1387 = vunpack.c.h.b16 %v381
    %v1388 = vunpack.c.l.b16 %v382
    %v1389 = vunpack.c.h.b16 %v382
    %v1390 = vunpack.c.l.b16 %v383
    %v1391 = vunpack.c.h.b16 %v383
    %v1392 = vunpack.c.l.b16 %v384
    %v1393 = vunpack.c.h.b16 %v384
    %v1394 = vunpack.c.l.b16 %v385
    %v1395 = vunpack.c.h.b16 %v385
    %v1396 = vunpack.c.l.b16 %v386
    %v1397 = vunpack.c.h.b16 %v386
    %v1398 = vunpack.c.l.b16 %v387
    %v1399 = vunpack.c.h.b16 %v387
    %v1400 = vunpack.c.l.b16 %v388
    %v1401 = vunpack.c.h.b16 %v388
    %v1402 = vunpack.c.l.b16 %v389
    %v1403 = vunpack.c.h.b16 %v389
    %v1404 = vunpack.c.l.b16 %v390
    %v1405 = vunpack.c.h.b16 %v390
    %v1406 = vunpack.c.l.b16 %v391
    %v1407 = vunpack.c.h.b16 %v391
    %v1408 = vunpack.c.l.b16 %v392
    %v1409 = vunpack.c.h.b16 %v392
    %v1410 = vunpack.c.l.b16 %v393
    %v1411 = vunpack.c.h.b16 %v393
    %v1412 = vunpack.c.l.b16 %v394
    %v1413 = vunpack.c.h.b16 %v394
    %v1414 = vunpack.c.l.b16 %v395
    %v1415 = vunpack.c.h.b16 %v395
    %v1416 = vunpack.c.l.b16 %v396
    %v1417 = vunpack.c.h.b16 %v396
    %v1418 = vunpack.c.l.b16 %v397
    %v1419 = vunpack.c.h.b16 %v397
    %v1420 = vunpack.c.l.b16 %v398
    %v1421 = vunpack.c.h.b16 %v398
    %v1422 = vunpack.c.l.b16 %v399
    %v1423 = vunpack.c.h.b16 %v399
    %v1424 = vunpack.c.l.b16 %v400
    %v1425 = vunpack.c.h.b16 %v400
    %v1426 = vunpack.c.l.b16 %v401
    %v1427 = vunpack.c.h.b16 %v401
    %v1428 = vunpack.c.l.b16 %v402
    %v1429 = vunpack.c.h.b16 %v402
    %v1430 = vunpack.c.l.b16 %v403
    %v1431 = vunpack.c.h.b16 %v403
    %v1432 = vunpack.c.l.b16 %v404
    %v1433 = vunpack.c.h.b16 %v404
    %v1434 = vunpack.c.l.b16 %v405
    %v1435 = vunpack.c.h.b16 %v405
    %v1436 = vunpack.c.l.b16 %v406
    %v1437 = vunpack.c.h.b16 %v406
    %v1438 = vunpack.c.l.b16 %v407
    %v1439 = vunpack.c.h.b16 %v407
    %v1440 = vunpack.c.l.b16 %v408
    %v1441 = vunpack.c.h.b16 %v408
    %v1442 = vunpack.c.l.b16 %v409
    %v1443 = vunpack.c.h.b16 %v409
    %v1444 = vunpack.c.l.b16 %v410
    %v1445 = vunpack.c.h.b16 %v410
    %v1446 = vunpack.c.l.b16 %v411
    %v1447 = vunpack.c.h.b16 %v411
    %v1448 = vunpack.c.l.b16 %v412
    %v1449 = vunpack.c.h.b16 %v412
    %v1450 = vunpack.c.l.b16 %v413
    %v1451 = vunpack.c.h.b16 %v413
    %v1452 = vunpack.c.l.b16 %v414
    %v1453 = vunpack.c.h.b16 %v414
    %v1454 = vunpack.c.l.b16 %v415
    %v1455 = vunpack.c.h.b16 %v415
    %v1456 = vunpack.c.l.b16 %v416
    %v1457 = vunpack.c.h.b16 %v416
    %v1458 = vunpack.c.l.b16 %v417
    %v1459 = vunpack.c.h.b16 %v417
    %v1460 = vunpack.c.l.b16 %v418
    %v1461 = vunpack.c.h.b16 %v418
    %v1462 = vunpack.c.l.b16 %v419
    %v1463 = vunpack.c.h.b16 %v419
    %v1464 = vunpack.c.l.b16 %v420
    %v1465 = vunpack.c.h.b16 %v420
    %v1466 = vunpack.c.l.b16 %v421
    %v1467 = vunpack.c.h.b16 %v421
    %v1468 = vunpack.c.l.b16 %v422
    %v1469 = vunpack.c.h.b16 %v422
    %v1470 = vunpack.c.l.b16 %v423
    %v1471 = vunpack.c.h.b16 %v423
    %v1472 = vunpack.c.l.b16 %v424
    %v1473 = vunpack.c.h.b16 %v424
    %v1474 = vunpack.c.l.b16 %v425
    %v1475 = vunpack.c.h.b16 %v425
    %v1476 = vunpack.c.l.b16 %v426
    %v1477 = vunpack.c.h.b16 %v426
    %v1478 = vunpack.c.l.b16 %v427
    %v1479 = vunpack.c.h.b16 %v427
    %v1480 = vunpack.c.l.b16 %v428
    %v1481 = vunpack.c.h.b16 %v428
    %v1482 = vunpack.c.l.b16 %v429
    %v1483 = vunpack.c.h.b16 %v429
    %v1484 = vunpack.c.l.b16 %v430
    %v1485 = vunpack.c.h.b16 %v430
    %v1486 = vunpack.c.l.b16 %v431
    %v1487 = vunpack.c.h.b16 %v431
    %v1488 = vunpack.c.l.b16 %v432
    %v1489 = vunpack.c.h.b16 %v432
    %v1490 = vunpack.c.l.b16 %v433
    %v1491 = vunpack.c.h.b16 %v433
    %v1492 = vunpack.c.l.b16 %v434
    %v1493 = vunpack.c.h.b16 %v434
    %v1494 = vunpack.c.l.b16 %v435
    %v1495 = vunpack.c.h.b16 %v435
    %v1496 = vunpack.c.l.b16 %v436
    %v1497 = vunpack.c.h.b16 %v436
    %v1498 = vunpack.c.l.b16 %v437
    %v1499 = vunpack.c.h.b16 %v437
    %v1500 = vunpack.c.l.b16 %v438
    %v1501 = vunpack.c.h.b16 %v438
    %v1502 = vunpack.c.l.b16 %v439
    %v1503 = vunpack.c.h.b16 %v439
    %v1504 = vunpack.c.l.b16 %v440
    %v1505 = vunpack.c.h.b16 %v440
    %v1506 = vunpack.c.l.b16 %v441
    %v1507 = vunpack.c.h.b16 %v441
    %v1508 = vunpack.c.l.b16 %v442
    %v1509 = vunpack.c.h.b16 %v442
    %v1510 = vunpack.c.l.b16 %v443
    %v1511 = vunpack.c.h.b16 %v443
    %v1512 = vunpack.c.l.b16 %v444
    %v1513 = vunpack.c.h.b16 %v444
    %v1514 = vunpack.c.l.b16 %v445
    %v1515 = vunpack.c.h.b16 %v445
    %v1516 = vunpack.c.l.b16 %v446
    %v1517 = vunpack.c.h.b16 %v446
    %v1518 = vunpack.c.l.b16 %v447
    %v1519 = vunpack.c.h.b16 %v447
    %v1520 = vunpack.c.l.b16 %v448
    %v1521 = vunpack.c.h.b16 %v448
    %v1522 = vunpack.c.l.b16 %v449
    %v1523 = vunpack.c.h.b16 %v449
    %v1524 = vunpack.c.l.b16 %v450
    %v1525 = vunpack.c.h.b16 %v450
    %v1526 = vunpack.c.l.b16 %v451
    %v1527 = vunpack.c.h.b16 %v451
    %v1528 = vunpack.c.l.b16 %v452
    %v1529 = vunpack.c.h.b16 %v452
    %v1530 = vunpack.c.l.b16 %v453
    %v1531 = vunpack.c.h.b16 %v453
    %v1532 = vunpack.c.l.b16 %v454
    %v1533 = vunpack.c.h.b16 %v454
    %v1534 = vunpack.c.l.b16 %v455
    %v1535 = vunpack.c.h.b16 %v455
    %v1536 = vunpack.c.l.b16 %v456
    %v1537 = vunpack.c.h.b16 %v456
    %v1538 = vunpack.c.l.b16 %v457
    %v1539 = vunpack.c.h.b16 %v457
    %v1540 = vunpack.c.l.b16 %v458
    %v1541 = vunpack.c.h.b16 %v458
    %v1542 = vunpack.c.l.b16 %v459
    %v1543 = vunpack.c.h.b16 %v459
    %v1544 = vunpack.c.l.b16 %v460
    %v1545 = vunpack.c.h.b16 %v460
    %v1546 = vunpack.c.l.b16 %v461
    %v1547 = vunpack.c.h.b16 %v461
    %v1548 = vunpack.c.l.b16 %v462
    %v1549 = vunpack.c.h.b16 %v462
    %v1550 = vunpack.c.l.b16 %v463
    %v1551 = vunpack.c.h.b16 %v463
    %v1552 = vunpack.c.l.b16 %v464
    %v1553 = vunpack.c.h.b16 %v464
    %v1554 = vunpack.c.l.b16 %v465
    %v1555 = vunpack.c.h.b16 %v465
    %v1556 = vunpack.c.l.b16 %v466
    %v1557 = vunpack.c.h.b16 %v466
    %v1558 = vunpack.c.l.b16 %v467
    %v1559 = vunpack.c.h.b16 %v467
    %v1560 = vunpack.c.l.b16 %v468
    %v1561 = vunpack.c.h.b16 %v468
    %v1562 = vunpack.c.l.b16 %v469
    %v1563 = vunpack.c.h.b16 %v469
    %v1564 = vunpack.c.l.b16 %v470
    %v1565 = vunpack.c.h.b16 %v470
    %v1566 = vunpack.c.l.b16 %v471
    %v1567 = vunpack.c.h.b16 %v471
    %v1568 = vunpack.c.l.b16 %v472
    %v1569 = vunpack.c.h.b16 %v472
    %v1570 = vunpack.c.l.b16 %v473
    %v1571 = vunpack.c.h.b16 %v473
    %v1572 = vunpack.c.l.b16 %v474
    %v1573 = vunpack.c.h.b16 %v474
    %v1574 = vunpack.c.l.b16 %v475
    %v1575 = vunpack.c.h.b16 %v475
    %v1576 = vunpack.c.l.b16 %v476
    %v1577 = vunpack.c.h.b16 %v476
    %v1578 = vunpack.c.l.b16 %v477
    %v1579 = vunpack.c.h.b16 %v477
    %v1580 = vunpack.c.l.b16 %v478
    %v1581 = vunpack.c.h.b16 %v478
    %v1582 = vunpack.c.l.b16 %v479
    %v1583 = vunpack.c.h.b16 %v479
    %v1584 = vunpack.c.l.b16 %v480
    %v1585 = vunpack.c.h.b16 %v480
    %v1586 = vunpack.c.l.b16 %v481
    %v1587 = vunpack.c.h.b16 %v481
    %v1588 = vunpack.c.l.b16 %v482
    %v1589 = vunpack.c.h.b16 %v482
    %v1590 = vunpack.c.l.b16 %v483
    %v1591 = vunpack.c.h.b16 %v483
    %v1592 = vunpack.c.l.b16 %v484
    %v1593 = vunpack.c.h.b16 %v484
    %v1594 = vunpack.c.l.b16 %v485
    %v1595 = vunpack.c.h.b16 %v485
    %v1596 = vunpack.c.l.b16 %v486
    %v1597 = vunpack.c.h.b16 %v486
    %v1598 = vunpack.c.l.b16 %v487
    %v1599 = vunpack.c.h.b16 %v487
    %v1600 = vunpack.c.l.b16 %v488
    %v1601 = vunpack.c.h.b16 %v488
    %v1602 = vunpack.c.l.b16 %v489
    %v1603 = vunpack.c.h.b16 %v489
    %v1604 = vunpack.c.l.b16 %v490
    %v1605 = vunpack.c.h.b16 %v490
    %v1606 = vunpack.c.l.b16 %v491
    %v1607 = vunpack.c.h.b16 %v491
    %v1608 = vunpack.c.l.b16 %v492
    %v1609 = vunpack.c.h.b16 %v492
    %v1610 = vunpack.c.l.b16 %v493
    %v1611 = vunpack.c.h.b16 %v493
    %v1612 = vunpack.c.l.b16 %v494
    %v1613 = vunpack.c.h.b16 %v494
    %v1614 = vunpack.c.l.b16 %v495
    %v1615 = vunpack.c.h.b16 %v495
    %v1616 = vunpack.c.l.b16 %v496
    %v1617 = vunpack.c.h.b16 %v496
    %v1618 = vunpack.c.l.b16 %v497
    %v1619 = vunpack.c.h.b16 %v497
    %v1620 = vunpack.c.l.b16 %v498
    %v1621 = vunpack.c.h.b16 %v498
    %v1622 = vunpack.c.l.b16 %v499
    %v1623 = vunpack.c.h.b16 %v499
    %v1624 = vunpack.c.l.b16 %v500
    %v1625 = vunpack.c.h.b16 %v500
    %v1626 = vunpack.c.l.b16 %v501
    %v1627 = vunpack.c.h.b16 %v501
    %v1628 = vunpack.c.l.b16 %v502
    %v1629 = vunpack.c.h.b16 %v502
    %v1630 = vunpack.c.l.b16 %v503
    %v1631 = vunpack.c.h.b16 %v503
    %v1632 = vunpack.c.l.b16 %v504
    %v1633 = vunpack.c.h.b16 %v504
    %v1634 = vunpack.c.l.b16 %v505
    %v1635 = vunpack.c.h.b16 %v505
    %v1636 = vunpack.c.l.b16 %v506
    %v1637 = vunpack.c.h.b16 %v506
    %v1638 = vunpack.c.l.b16 %v507
    %v1639 = vunpack.c.h.b16 %v507
    %v1640 = vunpack.c.l.b16 %v508
    %v1641 = vunpack.c.h.b16 %v508
    %v1642 = vunpack.c.l.b16 %v509
    %v1643 = vunpack.c.h.b16 %v509
    %v1644 = vunpack.c.l.b16 %v510
    %v1645 = vunpack.c.h.b16 %v510
    %v1646 = vunpack.c.l.b16 %v511
    %v1647 = vunpack.c.h.b16 %v511
    %v1648 = vunpack.c.l.b16 %v512
    %v1649 = vunpack.c.h.b16 %v512
    %v1650 = vunpack.c.l.b16 %v513
    %v1651 = vunpack.c.h.b16 %v513
    %v1652 = vunpack.c.l.b16 %v514
    %v1653 = vunpack.c.h.b16 %v514
    %v1654 = vunpack.c.l.b16 %v515
    %v1655 = vunpack.c.h.b16 %v515
    %v1656 = vunpack.c.l.b16 %v516
    %v1657 = vunpack.c.h.b16 %v516
    %v1658 = vunpack.c.l.b16 %v517
    %v1659 = vunpack.c.h.b16 %v517
    %v1660 = vunpack.c.l.b16 %v518
    %v1661 = vunpack.c.h.b16 %v518
    %v1662 = vunpack.c.l.b16 %v519
    %v1663 = vunpack.c.h.b16 %v519
    %v1664 = vunpack.c.l.b16 %v520
    %v1665 = vunpack.c.h.b16 %v520
    %v1666 = vunpack.c.l.b16 %v521
    %v1667 = vunpack.c.h.b16 %v521
    %v1668 = vunpack.c.l.b16 %v522
    %v1669 = vunpack.c.h.b16 %v522
    %v1670 = vunpack.c.l.b16 %v523
    %v1671 = vunpack.c.h.b16 %v523
    %v1672 = vunpack.c.l.b16 %v524
    %v1673 = vunpack.c.h.b16 %v524
    %v1674 = vunpack.c.l.b16 %v525
    %v1675 = vunpack.c.h.b16 %v525
    %v1676 = vunpack.c.l.b16 %v526
    %v1677 = vunpack.c.h.b16 %v526
    %v1678 = vunpack.c.l.b16 %v527
    %v1679 = vunpack.c.h.b16 %v527
    %v1680 = vunpack.c.l.b16 %v528
    %v1681 = vunpack.c.h.b16 %v528
    %v1682 = vunpack.c.l.b16 %v529
    %v1683 = vunpack.c.h.b16 %v529
    %v1684 = vunpack.c.l.b16 %v530
    %v1685 = vunpack.c.h.b16 %v530
    %v1686 = vunpack.c.l.b16 %v531
    %v1687 = vunpack.c.h.b16 %v531
    %v1688 = vunpack.c.l.b16 %v532
    %v1689 = vunpack.c.h.b16 %v532
    %v1690 = vunpack.c.l.b16 %v533
    %v1691 = vunpack.c.h.b16 %v533
    %v1692 = vunpack.c.l.b16 %v534
    %v1693 = vunpack.c.h.b16 %v534
    %v1694 = vunpack.c.l.b16 %v535
    %v1695 = vunpack.c.h.b16 %v535
    %v1696 = vunpack.c.l.b16 %v536
    %v1697 = vunpack.c.h.b16 %v536
    %v1698 = vunpack.c.l.b16 %v537
    %v1699 = vunpack.c.h.b16 %v537
    %v1700 = vunpack.c.l.b16 %v538
    %v1701 = vunpack.c.h.b16 %v538
    %v1702 = vunpack.c.l.b16 %v539
    %v1703 = vunpack.c.h.b16 %v539
    %v1704 = vunpack.c.l.b16 %v540
    %v1705 = vunpack.c.h.b16 %v540
    %v1706 = vunpack.c.l.b16 %v541
    %v1707 = vunpack.c.h.b16 %v541
    %v1708 = vunpack.c.l.b16 %v542
    %v1709 = vunpack.c.h.b16 %v542
    %v1710 = vunpack.c.l.b16 %v543
    %v1711 = vunpack.c.h.b16 %v543
    %v1712 = vunpack.c.l.b16 %v544
    %v1713 = vunpack.c.h.b16 %v544
    %v1714 = vunpack.c.l.b16 %v545
    %v1715 = vunpack.c.h.b16 %v545
    %v1716 = vunpack.c.l.b16 %v546
    %v1717 = vunpack.c.h.b16 %v546
    %v1718 = vunpack.c.l.b16 %v547
    %v1719 = vunpack.c.h.b16 %v547
    %v1720 = vunpack.c.l.b16 %v548
    %v1721 = vunpack.c.h.b16 %v548
    %v1722 = vunpack.c.l.b16 %v549
    %v1723 = vunpack.c.h.b16 %v549
    %v1724 = vunpack.c.l.b16 %v550
    %v1725 = vunpack.c.h.b16 %v550
    %v1726 = vunpack.c.l.b16 %v551
    %v1727 = vunpack.c.h.b16 %v551
    %v1728 = vunpack.c.l.b16 %v552
    %v1729 = vunpack.c.h.b16 %v552
    %v1730 = vunpack.c.l.b16 %v553
    %v1731 = vunpack.c.h.b16 %v553
    %v1732 = vunpack.c.l.b16 %v554
    %v1733 = vunpack.c.h.b16 %v554
    %v1734 = vunpack.c.l.b16 %v555
    %v1735 = vunpack.c.h.b16 %v555
    %v1736 = vunpack.c.l.b16 %v556
    %v1737 = vunpack.c.h.b16 %v556
    %v1738 = vunpack.c.l.b16 %v557
    %v1739 = vunpack.c.h.b16 %v557
    %v1740 = vunpack.c.l.b16 %v558
    %v1741 = vunpack.c.h.b16 %v558
    %v1742 = vunpack.c.l.b16 %v559
    %v1743 = vunpack.c.h.b16 %v559
    %v1744 = vunpack.c.l.b16 %v560
    %v1745 = vunpack.c.h.b16 %v560
    %v1746 = vunpack.c.l.b16 %v561
    %v1747 = vunpack.c.h.b16 %v561
    %v1748 = vunpack.c.l.b16 %v562
    %v1749 = vunpack.c.h.b16 %v562
    %v1750 = vunpack.c.l.b16 %v563
    %v1751 = vunpack.c.h.b16 %v563
    %v1752 = vunpack.c.l.b16 %v564
    %v1753 = vunpack.c.h.b16 %v564
    %v1754 = vunpack.c.l.b16 %v565
    %v1755 = vunpack.c.h.b16 %v565
    %v1756 = vunpack.c.l.b16 %v566
    %v1757 = vunpack.c.h.b16 %v566
    %v1758 = vunpack.c.l.b16 %v567
    %v1759 = vunpack.c.h.b16 %v567
    %v1760 = vunpack.c.l.b16 %v568
    %v1761 = vunpack.c.h.b16 %v568
    %v1762 = vunpack.c.l.b16 %v569
    %v1763 = vunpack.c.h.b16 %v569
    %v1764 = vpack.c.b16 %v1004, %v996
    %v1765 = vpack.c.b16 %v1005, %v997
    %v1766 = vpack.c.b16 %v1006, %v998
    %v1767 = vpack.c.b16 %v1007, %v999
    %v1768 = vpack.c.b16 %v1008, %v1000
    %v1769 = vpack.c.b16 %v1009, %v1001
    %v1770 = vpack.c.b16 %v1010, %v1002
    %v1771 = vpack.c.b16 %v1011, %v1003
    %v1772 = vpack.c.b16 %v1020, %v1012
    %v1773 = vpack.c.b16 %v1021, %v1013
    %v1774 = vpack.c.b16 %v1022, %v1014
    %v1775 = vpack.c.b16 %v1023, %v1015
    %v1776 = vpack.c.b16 %v1024, %v1016
    %v1777 = vpack.c.b16 %v1025, %v1017
    %v1778 = vpack.c.b16 %v1026, %v1018
    %v1779 = vpack.c.b16 %v1027, %v1019
    %v1780 = vpack.c.b16 %v1036, %v1028
    %v1781 = vpack.c.b16 %v1037, %v1029
    %v1782 = vpack.c.b16 %v1038, %v1030
    %v1783 = vpack.c.b16 %v1039, %v1031
    %v1784 = vpack.c.b16 %v1040, %v1032
    %v1785 = vpack.c.b16 %v1041, %v1033
    %v1786 = vpack.c.b16 %v1042, %v1034
    %v1787 = vpack.c.b16 %v1043, %v1035
    %v1788 = vpack.c.b16 %v1052, %v1044
    %v1789 = vpack.c.b16 %v1053, %v1045
    %v1790 = vpack.c.b16 %v1054, %v1046
    %v1791 = vpack.c.b16 %v1055, %v1047
    %v1792 = vpack.c.b16 %v1056, %v1048
    %v1793 = vpack.c.b16 %v1057, %v1049
    %v1794 = vpack.c.b16 %v1058, %v1050
    %v1795 = vpack.c.b16 %v1059, %v1051
    %v1796 = vpack.c.b16 %v1068, %v1060
    %v1797 = vpack.c.b16 %v1069, %v1061
    %v1798 = vpack.c.b16 %v1070, %v1062
    %v1799 = vpack.c.b16 %v1071, %v1063
    %v1800 = vpack.c.b16 %v1072, %v1064
    %v1801 = vpack.c.b16 %v1073, %v1065
    %v1802 = vpack.c.b16 %v1074, %v1066
    %v1803 = vpack.c.b16 %v1075, %v1067
    %v1804 = vpack.c.b16 %v1084, %v1076
    %v1805 = vpack.c.b16 %v1085, %v1077
    %v1806 = vpack.c.b16 %v1086, %v1078
    %v1807 = vpack.c.b16 %v1087, %v1079
    %v1808 = vpack.c.b16 %v1088, %v1080
    %v1809 = vpack.c.b16 %v1089, %v1081
    %v1810 = vpack.c.b16 %v1090, %v1082
    %v1811 = vpack.c.b16 %v1091, %v1083
    %v1812 = vpack.c.b16 %v1100, %v1092
    %v1813 = vpack.c.b16 %v1101, %v1093
    %v1814 = vpack.c.b16 %v1102, %v1094
    %v1815 = vpack.c.b16 %v1103, %v1095
    %v1816 = vpack.c.b16 %v1104, %v1096
    %v1817 = vpack.c.b16 %v1105, %v1097
    %v1818 = vpack.c.b16 %v1106, %v1098
    %v1819 = vpack.c.b16 %v1107, %v1099
    %v1820 = vpack.c.b16 %v1116, %v1108
    %v1821 = vpack.c.b16 %v1117, %v1109
    %v1822 = vpack.c.b16 %v1118, %v1110
    %v1823 = vpack.c.b16 %v1119, %v1111
    %v1824 = vpack.c.b16 %v1120, %v1112
    %v1825 = vpack.c.b16 %v1121, %v1113
    %v1826 = vpack.c.b16 %v1122, %v1114
    %v1827 = vpack.c.b16 %v1123, %v1115
    %v1828 = vpack.c.b16 %v1132, %v1124
    %v1829 = vpack.c.b16 %v1133, %v1125
    %v1830 = vpack.c.b16 %v1134, %v1126
    %v1831 = vpack.c.b16 %v1135, %v1127
    %v1832 = vpack.c.b16 %v1136, %v1128
    %v1833 = vpack.c.b16 %v1137, %v1129
    %v1834 = vpack.c.b16 %v1138, %v1130
    %v1835 = vpack.c.b16 %v1139, %v1131
    %v1836 = vpack.c.b16 %v1148, %v1140
    %v1837 = vpack.c.b16 %v1149, %v1141
    %v1838 = vpack.c.b16 %v1150, %v1142
    %v1839 = vpack.c.b16 %v1151, %v1143
    %v1840 = vpack.c.b16 %v1152, %v1144
    %v1841 = vpack.c.b16 %v1153, %v1145
    %v1842 = vpack.c.b16 %v1154, %v1146
    %v1843 = vpack.c.b16 %v1155, %v1147
    %v1844 = vpack.c.b16 %v1164, %v1156
    %v1845 = vpack.c.b16 %v1165, %v1157
    %v1846 = vpack.c.b16 %v1166, %v1158
    %v1847 = vpack.c.b16 %v1167, %v1159
    %v1848 = vpack.c.b16 %v1168, %v1160
    %v1849 = vpack.c.b16 %v1169, %v1161
    %v1850 = vpack.c.b16 %v1170, %v1162
    %v1851 = vpack.c.b16 %v1171, %v1163
    %v1852 = vpack.c.b16 %v1180, %v1172
    %v1853 = vpack.c.b16 %v1181, %v1173
    %v1854 = vpack.c.b16 %v1182, %v1174
    %v1855 = vpack.c.b16 %v1183, %v1175
    %v1856 = vpack.c.b16 %v1184, %v1176
    %v1857 = vpack.c.b16 %v1185, %v1177
    %v1858 = vpack.c.b16 %v1186, %v1178
    %v1859 = vpack.c.b16 %v1187, %v1179
    %v1860 = vpack.c.b16 %v1196, %v1188
    %v1861 = vpack.c.b16 %v1197, %v1189
    %v1862 = vpack.c.b16 %v1198, %v1190
    %v1863 = vpack.c.b16 %v1199, %v1191
    %v1864 = vpack.c.b16 %v1200, %v1192
    %v1865 = vpack.c.b16 %v1201, %v1193
    %v1866 = vpack.c.b16 %v1202, %v1194
    %v1867 = vpack.c.b16 %v1203, %v1195
    %v1868 = vpack.c.b16 %v1212, %v1204
    %v1869 = vpack.c.b16 %v1213, %v1205
    %v1870 = vpack.c.b16 %v1214, %v1206
    %v1871 = vpack.c.b16 %v1215, %v1207
    %v1872 = vpack.c.b16 %v1216, %v1208
    %v1873 = vpack.c.b16 %v1217, %v1209
    %v1874 = vpack.c.b16 %v1218, %v1210
    %v1875 = vpack.c.b16 %v1219, %v1211
    %v1876 = vpack.c.b16 %v1228, %v1220
    %v1877 = vpack.c.b16 %v1229, %v1221
    %v1878 = vpack.c.b16 %v1230, %v1222
    %v1879 = vpack.c.b16 %v1231, %v1223
    %v1880 = vpack.c.b16 %v1232, %v1224
    %v1881 = vpack.c.b16 %v1233, %v1225
    %v1882 = vpack.c.b16 %v1234, %v1226
    %v1883 = vpack.c.b16 %v1235, %v1227
    %v1884 = vpack.c.b16 %v1244, %v1236
    %v1885 = vpack.c.b16 %v1245, %v1237
    %v1886 = vpack.c.b16 %v1246, %v1238
    %v1887 = vpack.c.b16 %v1247, %v1239
    %v1888 = vpack.c.b16 %v1248, %v1240
    %v1889 = vpack.c.b16 %v1249, %v1241
    %v1890 = vpack.c.b16 %v1250, %v1242
    %v1891 = vpack.c.b16 %v1251, %v1243
    %v1892 = vpack.c.b16 %v1260, %v1252
    %v1893 = vpack.c.b16 %v1261, %v1253
    %v1894 = vpack.c.b16 %v1262, %v1254
    %v1895 = vpack.c.b16 %v1263, %v1255
    %v1896 = vpack.c.b16 %v1264, %v1256
    %v1897 = vpack.c.b16 %v1265, %v1257
    %v1898 = vpack.c.b16 %v1266, %v1258
    %v1899 = vpack.c.b16 %v1267, %v1259
    %v1900 = vpack.c.b16 %v1276, %v1268
    %v1901 = vpack.c.b16 %v1277, %v1269
    %v1902 = vpack.c.b16 %v1278, %v1270
    %v1903 = vpack.c.b16 %v1279, %v1271
    %v1904 = vpack.c.b16 %v1280, %v1272
    %v1905 = vpack.c.b16 %v1281, %v1273
    %v1906 = vpack.c.b16 %v1282, %v1274
    %v1907 = vpack.c.b16 %v1283, %v1275
    %v1908 = vpack.c.b16 %v1292, %v1284
    %v1909 = vpack.c.b16 %v1293, %v1285
    %v1910 = vpack.c.b16 %v1294, %v1286
    %v1911 = vpack.c.b16 %v1295, %v1287
    %v1912 = vpack.c.b16 %v1296, %v1288
    %v1913 = vpack.c.b16 %v1297, %v1289
    %v1914 = vpack.c.b16 %v1298, %v1290
    %v1915 = vpack.c.b16 %v1299, %v1291
    %v1916 = vpack.c.b16 %v1308, %v1300
    %v1917 = vpack.c.b16 %v1309, %v1301
    %v1918 = vpack.c.b16 %v1310, %v1302
    %v1919 = vpack.c.b16 %v1311, %v1303
    %v1920 = vpack.c.b16 %v1312, %v1304
    %v1921 = vpack.c.b16 %v1313, %v1305
    %v1922 = vpack.c.b16 %v1314, %v1306
    %v1923 = vpack.c.b16 %v1315, %v1307
    %v1924 = vpack.c.b16 %v1324, %v1316
    %v1925 = vpack.c.b16 %v1325, %v1317
    %v1926 = vpack.c.b16 %v1326, %v1318
    %v1927 = vpack.c.b16 %v1327, %v1319
    %v1928 = vpack.c.b16 %v1328, %v1320
    %v1929 = vpack.c.b16 %v1329, %v1321
    %v1930 = vpack.c.b16 %v1330, %v1322
    %v1931 = vpack.c.b16 %v1331, %v1323
    %v1932 = vpack.c.b16 %v1340, %v1332
    %v1933 = vpack.c.b16 %v1341, %v1333
    %v1934 = vpack.c.b16 %v1342, %v1334
    %v1935 = vpack.c.b16 %v1343, %v1335
    %v1936 = vpack.c.b16 %v1344, %v1336
    %v1937 = vpack.c.b16 %v1345, %v1337
    %v1938 = vpack.c.b16 %v1346, %v1338
    %v1939 = vpack.c.b16 %v1347, %v1339
    %v1940 = vpack.c.b16 %v1356, %v1348
    %v1941 = vpack.c.b16 %v1357, %v1349
    %v1942 = vpack.c.b16 %v1358, %v1350
    %v1943 = vpack.c.b16 %v1359, %v1351
    %v1944 = vpack.c.b16 %v1360, %v1352
    %v1945 = vpack.c.b16 %v1361, %v1353
    %v1946 = vpack.c.b16 %v1362, %v1354
    %v1947 = vpack.c.b16 %v1363, %v1355
    %v1948 = vpack.c.b16 %v1372, %v1364
    %v1949 = vpack.c.b16 %v1373, %v1365
    %v1950 = vpack.c.b16 %v1374, %v1366
    %v1951 = vpack.c.b16 %v1375, %v1367
    %v1952 = vpack.c.b16 %v1376, %v1368
    %v1953 = vpack.c.b16 %v1377, %v1369
    %v1954 = vpack.c.b16 %v1378, %v1370
    %v1955 = vpack.c.b16 %v1379, %v1371
    %v1956 = vpack.c.b16 %v1388, %v1380
    %v1957 = vpack.c.b16 %v1389, %v1381
    %v1958 = vpack.c.b16 %v1390, %v1382
    %v1959 = vpack.c.b16 %v1391, %v1383
    %v1960 = vpack.c.b16 %v1392, %v1384
    %v1961 = vpack.c.b16 %v1393, %v1385
    %v1962 = vpack.c.b16 %v1394, %v1386
    %v1963 = vpack.c.b16 %v1395, %v1387
    %v1964 = vpack.c.b16 %v1404, %v1396
    %v1965 = vpack.c.b16 %v1405, %v1397
    %v1966 = vpack.c.b16 %v1406, %v1398
    %v1967 = vpack.c.b16 %v1407, %v1399
    %v1968 = vpack.c.b16 %v1408, %v1400
    %v1969 = vpack.c.b16 %v1409, %v1401
    %v1970 = vpack.c.b16 %v1410, %v1402
    %v1971 = vpack.c.b16 %v1411, %v1403
    %v1972 = vpack.c.b16 %v1420, %v1412
    %v1973 = vpack.c.b16 %v1421, %v1413
    %v1974 = vpack.c.b16 %v1422, %v1414
    %v1975 = vpack.c.b16 %v1423, %v1415
    %v1976 = vpack.c.b16 %v1424, %v1416
    %v1977 = vpack.c.b16 %v1425, %v1417
    %v1978 = vpack.c.b16 %v1426, %v1418
    %v1979 = vpack.c.b16 %v1427, %v1419
    %v1980 = vpack.c.b16 %v1436, %v1428
    %v1981 = vpack.c.b16 %v1437, %v1429
    %v1982 = vpack.c.b16 %v1438, %v1430
    %v1983 = vpack.c.b16 %v1439, %v1431
    %v1984 = vpack.c.b16 %v1440, %v1432
    %v1985 = vpack.c.b16 %v1441, %v1433
    %v1986 = vpack.c.b16 %v1442, %v1434
    %v1987 = vpack.c.b16 %v1443, %v1435
    %v1988 = vpack.c.b16 %v1452, %v1444
    %v1989 = vpack.c.b16 %v1453, %v1445
    %v1990 = vpack.c.b16 %v1454, %v1446
    %v1991 = vpack.c.b16 %v1455, %v1447
    %v1992 = vpack.c.b16 %v1456, %v1448
    %v1993 = vpack.c.b16 %v1457, %v1449
    %v1994 = vpack.c.b16 %v1458, %v1450
    %v1995 = vpack.c.b16 %v1459, %v1451
    %v1996 = vpack.c.b16 %v1468, %v1460
    %v1997 = vpack.c.b16 %v1469, %v1461
    %v1998 = vpack.c.b16 %v1470, %v1462
    %v1999 = vpack.c.b16 %v1471, %v1463
    %v2000 = vpack.c.b16 %v1472, %v1464
    %v2001 = vpack.c.b16 %v1473, %v1465
    %v2002 = vpack.c.b16 %v1474, %v1466
    %v2003 = vpack.c.b16 %v1475, %v1467
    %v2004 = vpack.c.b16 %v1484, %v1476
    %v2005 = vpack.c.b16 %v1485, %v1477
    %v2006 = vpack.c.b16 %v1486, %v1478
    %v2007 = vpack.c.b16 %v1487, %v1479
    %v2008 = vpack.c.b16 %v1488, %v1480
    %v2009 = vpack.c.b16 %v1489, %v1481
    %v2010 = vpack.c.b16 %v1490, %v1482
    %v2011 = vpack.c.b16 %v1491, %v1483
    %v2012 = vpack.c.b16 %v1500, %v1492
    %v2013 = vpack.c.b16 %v1501, %v1493
    %v2014 = vpack.c.b16 %v1502, %v1494
    %v2015 = vpack.c.b16 %v1503, %v1495
    %v2016 = vpack.c.b16 %v1504, %v1496
    %v2017 = vpack.c.b16 %v1505, %v1497
    %v2018 = vpack.c.b16 %v1506, %v1498
    %v2019 = vpack.c.b16 %v1507, %v1499
    %v2020 = vpack.c.b16 %v1516, %v1508
    %v2021 = vpack.c.b16 %v1517, %v1509
    %v2022 = vpack.c.b16 %v1518, %v1510
    %v2023 = vpack.c.b16 %v1519, %v1511
    %v2024 = vpack.c.b16 %v1520, %v1512
    %v2025 = vpack.c.b16 %v1521, %v1513
    %v2026 = vpack.c.b16 %v1522, %v1514
    %v2027 = vpack.c.b16 %v1523, %v1515
    %v2028 = vpack.c.b16 %v1532, %v1524
    %v2029 = vpack.c.b16 %v1533, %v1525
    %v2030 = vpack.c.b16 %v1534, %v1526
    %v2031 = vpack.c.b16 %v1535, %v1527
    %v2032 = vpack.c.b16 %v1536, %v1528
    %v2033 = vpack.c.b16 %v1537, %v1529
    %v2034 = vpack.c.b16 %v1538, %v1530
    %v2035 = vpack.c.b16 %v1539, %v1531
    %v2036 = vpack.c.b16 %v1548, %v1540
    %v2037 = vpack.c.b16 %v1549, %v1541
    %v2038 = vpack.c.b16 %v1550, %v1542
    %v2039 = vpack.c.b16 %v1551, %v1543
    %v2040 = vpack.c.b16 %v1552, %v1544
    %v2041 = vpack.c.b16 %v1553, %v1545
    %v2042 = vpack.c.b16 %v1554, %v1546
    %v2043 = vpack.c.b16 %v1555, %v1547
    %v2044 = vpack.c.b16 %v1564, %v1556
    %v2045 = vpack.c.b16 %v1565, %v1557
    %v2046 = vpack.c.b16 %v1566, %v1558
    %v2047 = vpack.c.b16 %v1567, %v1559
    %v2048 = vpack.c.b16 %v1568, %v1560
    %v2049 = vpack.c.b16 %v1569, %v1561
    %v2050 = vpack.c.b16 %v1570, %v1562
    %v2051 = vpack.c.b16 %v1571, %v1563
    %v2052 = vpack.c.b16 %v1580, %v1572
    %v2053 = vpack.c.b16 %v1581, %v1573
    %v2054 = vpack.c.b16 %v1582, %v1574
    %v2055 = vpack.c.b16 %v1583, %v1575
    %v2056 = vpack.c.b16 %v1584, %v1576
    %v2057 = vpack.c.b16 %v1585, %v1577
    %v2058 = vpack.c.b16 %v1586, %v1578
    %v2059 = vpack.c.b16 %v1587, %v1579
    %v2060 = vpack.c.b16 %v1596, %v1588
    %v2061 = vpack.c.b16 %v1597, %v1589
    %v2062 = vpack.c.b16 %v1598, %v1590
    %v2063 = vpack.c.b16 %v1599, %v1591
    %v2064 = vpack.c.b16 %v1600, %v1592
    %v2065 = vpack.c.b16 %v1601, %v1593
    %v2066 = vpack.c.b16 %v1602, %v1594
    %v2067 = vpack.c.b16 %v1603, %v1595
    %v2068 = vpack.c.b16 %v1612, %v1604
    %v2069 = vpack.c.b16 %v1613, %v1605
    %v2070 = vpack.c.b16 %v1614, %v1606
    %v2071 = vpack.c.b16 %v1615, %v1607
    %v2072 = vpack.c.b16 %v1616, %v1608
    %v2073 = vpack.c.b16 %v1617, %v1609
    %v2074 = vpack.c.b16 %v1618, %v1610
    %v2075 = vpack.c.b16 %v1619, %v1611
    %v2076 = vpack.c.b16 %v1628, %v1620
    %v2077 = vpack.c.b16 %v1629, %v1621
    %v2078 = vpack.c.b16 %v1630, %v1622
    %v2079 = vpack.c.b16 %v1631, %v1623
    %v2080 = vpack.c.b16 %v1632, %v1624
    %v2081 = vpack.c.b16 %v1633, %v1625
    %v2082 = vpack.c.b16 %v1634, %v1626
    %v2083 = vpack.c.b16 %v1635, %v1627
    %v2084 = vpack.c.b16 %v1644, %v1636
    %v2085 = vpack.c.b16 %v1645, %v1637
    %v2086 = vpack.c.b16 %v1646, %v1638
    %v2087 = vpack.c.b16 %v1647, %v1639
    %v2088 = vpack.c.b16 %v1648, %v1640
    %v2089 = vpack.c.b16 %v1649, %v1641
    %v2090 = vpack.c.b16 %v1650, %v1642
    %v2091 = vpack.c.b16 %v1651, %v1643
    %v2092 = vpack.c.b16 %v1660, %v1652
    %v2093 = vpack.c.b16 %v1661, %v1653
    %v2094 = vpack.c.b16 %v1662, %v1654
    %v2095 = vpack.c.b16 %v1663, %v1655
    %v2096 = vpack.c.b16 %v1664, %v1656
    %v2097 = vpack.c.b16 %v1665, %v1657
    %v2098 = vpack.c.b16 %v1666, %v1658
    %v2099 = vpack.c.b16 %v1667, %v1659
    %v2100 = vpack.c.b16 %v1676, %v1668
    %v2101 = vpack.c.b16 %v1677, %v1669
    %v2102 = vpack.c.b16 %v1678, %v1670
    %v2103 = vpack.c.b16 %v1679, %v1671
    %v2104 = vpack.c.b16 %v1680, %v1672
    %v2105 = vpack.c.b16 %v1681, %v1673
    %v2106 = vpack.c.b16 %v1682, %v1674
    %v2107 = vpack.c.b16 %v1683, %v1675
    %v2108 = vpack.c.b16 %v1692, %v1684
    %v2109 = vpack.c.b16 %v1693, %v1685
    %v2110 = vpack.c.b16 %v1694, %v1686
    %v2111 = vpack.c.b16 %v1695, %v1687
    %v2112 = vpack.c.b16 %v1696, %v1688
    %v2113 = vpack.c.b16 %v1697, %v1689
    %v2114 = vpack.c.b16 %v1698, %v1690
    %v2115 = vpack.c.b16 %v1699, %v1691
    %v2116 = vpack.c.b16 %v1708, %v1700
    %v2117 = vpack.c.b16 %v1709, %v1701
    %v2118 = vpack.c.b16 %v1710, %v1702
    %v2119 = vpack.c.b16 %v1711, %v1703
    %v2120 = vpack.c.b16 %v1712, %v1704
    %v2121 = vpack.c.b16 %v1713, %v1705
    %v2122 = vpack.c.b16 %v1714, %v1706
    %v2123 = vpack.c.b16 %v1715, %v1707
    %v2124 = vpack.c.b16 %v1724, %v1716
    %v2125 = vpack.c.b16 %v1725, %v1717
    %v2126 = vpack.c.b16 %v1726, %v1718
    %v2127 = vpack.c.b16 %v1727, %v1719
    %v2128 = vpack.c.b16 %v1728, %v1720
    %v2129 = vpack.c.b16 %v1729, %v1721
    %v2130 = vpack.c.b16 %v1730, %v1722
    %v2131 = vpack.c.b16 %v1731, %v1723
    %v2132 = vpack.c.b16 %v1740, %v1732
    %v2133 = vpack.c.b16 %v1741, %v1733
    %v2134 = vpack.c.b16 %v1742, %v1734
    %v2135 = vpack.c.b16 %v1743, %v1735
    %v2136 = vpack.c.b16 %v1744, %v1736
    %v2137 = vpack.c.b16 %v1745, %v1737
    %v2138 = vpack.c.b16 %v1746, %v1738
    %v2139 = vpack.c.b16 %v1747, %v1739
    %v2140 = vpack.c.b16 %v1756, %v1748
    %v2141 = vpack.c.b16 %v1757, %v1749
    %v2142 = vpack.c.b16 %v1758, %v1750
    %v2143 = vpack.c.b16 %v1759, %v1751
    %v2144 = vpack.c.b16 %v1760, %v1752
    %v2145 = vpack.c.b16 %v1761, %v1753
    %v2146 = vpack.c.b16 %v1762, %v1754
    %v2147 = vpack.c.b16 %v1763, %v1755
    %2532 = vmatprep.subr.bf16.mxu0 %v1765
    %2533 = vmatpush1.bf16.msra.mxu0 %v1764
    %2534 = vmatprep.subr.bf16.mxu0 %v1773
    %2535 = vmatpush1.bf16.msra.mxu0 %v1772
    %2536 = vmatprep.subr.bf16.mxu0 %v1781
    %2537 = vmatpush1.bf16.msra.mxu0 %v1780
    %2538 = vmatprep.subr.bf16.mxu0 %v1789
    %2539 = vmatpush1.bf16.msra.mxu0 %v1788
    %2540 = vmatprep.subr.bf16.mxu0 %v1797
    %2541 = vmatpush1.bf16.msra.mxu0 %v1796
    %2542 = vmatprep.subr.bf16.mxu0 %v1805
    %2543 = vmatpush1.bf16.msra.mxu0 %v1804
    %2544 = vmatprep.subr.bf16.mxu0 %v1813
    %2545 = vmatpush1.bf16.msra.mxu0 %v1812
    %2546 = vmatprep.subr.bf16.mxu0 %v1821
    %2547 = vmatpush1.bf16.msra.mxu0 %v1820
    %2548 = vmatprep.subr.bf16.mxu0 %v1829
    %2549 = vmatpush1.bf16.msra.mxu0 %v1828
    %2550 = vmatprep.subr.bf16.mxu0 %v1837
    %2551 = vmatpush1.bf16.msra.mxu0 %v1836
    %2552 = vmatprep.subr.bf16.mxu0 %v1845
    %2553 = vmatpush1.bf16.msra.mxu0 %v1844
    %2554 = vmatprep.subr.bf16.mxu0 %v1853
    %2555 = vmatpush1.bf16.msra.mxu0 %v1852
    %2556 = vmatprep.subr.bf16.mxu0 %v1861
    %2557 = vmatpush1.bf16.msra.mxu0 %v1860
    %2558 = vmatprep.subr.bf16.mxu0 %v1869
    %2559 = vmatpush1.bf16.msra.mxu0 %v1868
    %2560 = vmatprep.subr.bf16.mxu0 %v1877
    %2561 = vmatpush1.bf16.msra.mxu0 %v1876
    %2562 = vmatprep.subr.bf16.mxu0 %v1885
    %2563 = vmatpush1.bf16.msra.mxu0 %v1884
    %2564 = vmatprep.mubr.bf16.mxu0 %v181
    %2565 = vmatmul.mubr.bf16.gmra.mrb[0].mxu0 %v180
    %v2566 = vpop.f32.mrb[0].mxu0
    %v2567 = vadd.f32 %v575, %v2566
    %v2568 = vpop.f32.mrb[0].mxu0
    %v2569 = vadd.f32 %v579, %v2568
    %v2570 = vpop.f32.mrb[0].mxu0
    %v2571 = vpop.f32.mrb[0].mxu0
    %2572 = vdwg.mxu0
    %2573 = vmatprep.subr.bf16.mxu0 %v1893
    %2574 = vmatpush1.bf16.msra.mxu0 %v1892
    %2575 = vmatprep.subr.bf16.mxu0 %v1901
    %2576 = vmatpush1.bf16.msra.mxu0 %v1900
    %2577 = vmatprep.subr.bf16.mxu0 %v1909
    %2578 = vmatpush1.bf16.msra.mxu0 %v1908
    %2579 = vmatprep.subr.bf16.mxu0 %v1917
    %2580 = vmatpush1.bf16.msra.mxu0 %v1916
    %2581 = vmatprep.subr.bf16.mxu0 %v1925
    %2582 = vmatpush1.bf16.msra.mxu0 %v1924
    %2583 = vmatprep.subr.bf16.mxu0 %v1933
    %2584 = vmatpush1.bf16.msra.mxu0 %v1932
    %2585 = vmatprep.subr.bf16.mxu0 %v1941
    %2586 = vmatpush1.bf16.msra.mxu0 %v1940
    %2587 = vmatprep.subr.bf16.mxu0 %v1949
    %2588 = vmatpush1.bf16.msra.mxu0 %v1948
    %2589 = vmatprep.subr.bf16.mxu0 %v1957
    %2590 = vmatpush1.bf16.msra.mxu0 %v1956
    %2591 = vmatprep.subr.bf16.mxu0 %v1965
    %2592 = vmatpush1.bf16.msra.mxu0 %v1964
    %2593 = vmatprep.subr.bf16.mxu0 %v1973
    %2594 = vmatpush1.bf16.msra.mxu0 %v1972
    %2595 = vmatprep.subr.bf16.mxu0 %v1981
    %2596 = vmatpush1.bf16.msra.mxu0 %v1980
    %2597 = vmatprep.subr.bf16.mxu0 %v1989
    %2598 = vmatpush1.bf16.msra.mxu0 %v1988
    %2599 = vmatprep.subr.bf16.mxu0 %v1997
    %2600 = vmatpush1.bf16.msra.mxu0 %v1996
    %2601 = vmatprep.subr.bf16.mxu0 %v2005
    %2602 = vmatpush1.bf16.msra.mxu0 %v2004
    %2603 = vmatprep.subr.bf16.mxu0 %v2013
    %2604 = vmatpush1.bf16.msra.mxu0 %v2012
    %2605 = vmatprep.mubr.bf16.mxu0 %v183
    %2606 = vmatmul.mubr.bf16.gmra.mrb[0].mxu0 %v182
    %v2607 = vpop.f32.mrb[0].mxu0
    %v2608 = vadd.f32 %v2567, %v2607
    %v2609 = vpop.f32.mrb[0].mxu0
    %v2610 = vadd.f32 %v2569, %v2609
    %v2611 = vpop.f32.mrb[0].mxu0
    %v2612 = vpop.f32.mrb[0].mxu0
    %2613 = vdwg.mxu0
    %2614 = vmatprep.subr.bf16.mxu0 %v2021
    %2615 = vmatpush1.bf16.msra.mxu0 %v2020
    %2616 = vmatprep.subr.bf16.mxu0 %v2029
    %2617 = vmatpush1.bf16.msra.mxu0 %v2028
    %2618 = vmatprep.subr.bf16.mxu0 %v2037
    %2619 = vmatpush1.bf16.msra.mxu0 %v2036
    %2620 = vmatprep.subr.bf16.mxu0 %v2045
    %2621 = vmatpush1.bf16.msra.mxu0 %v2044
    %2622 = vmatprep.subr.bf16.mxu0 %v2053
    %2623 = vmatpush1.bf16.msra.mxu0 %v2052
    %2624 = vmatprep.subr.bf16.mxu0 %v2061
    %2625 = vmatpush1.bf16.msra.mxu0 %v2060
    %2626 = vmatprep.subr.bf16.mxu0 %v2069
    %2627 = vmatpush1.bf16.msra.mxu0 %v2068
    %2628 = vmatprep.subr.bf16.mxu0 %v2077
    %2629 = vmatpush1.bf16.msra.mxu0 %v2076
    %2630 = vmatprep.subr.bf16.mxu0 %v2085
    %2631 = vmatpush1.bf16.msra.mxu0 %v2084
    %2632 = vmatprep.subr.bf16.mxu0 %v2093
    %2633 = vmatpush1.bf16.msra.mxu0 %v2092
    %2634 = vmatprep.subr.bf16.mxu0 %v2101
    %2635 = vmatpush1.bf16.msra.mxu0 %v2100
    %2636 = vmatprep.subr.bf16.mxu0 %v2109
    %2637 = vmatpush1.bf16.msra.mxu0 %v2108
    %2638 = vmatprep.subr.bf16.mxu0 %v2117
    %2639 = vmatpush1.bf16.msra.mxu0 %v2116
    %2640 = vmatprep.subr.bf16.mxu0 %v2125
    %2641 = vmatpush1.bf16.msra.mxu0 %v2124
    %2642 = vmatprep.subr.bf16.mxu0 %v2133
    %2643 = vmatpush1.bf16.msra.mxu0 %v2132
    %2644 = vmatprep.subr.bf16.mxu0 %v2141
    %2645 = vmatpush1.bf16.msra.mxu0 %v2140
    %2646 = vmatprep.mubr.bf16.mxu0 %v185
    %2647 = vmatmul.mubr.bf16.gmra.mrb[0].mxu0 %v184
    %v2648 = vpop.f32.mrb[0].mxu0
    %v2649 = vadd.f32 %v2608, %v2648
    %v2650 = vpop.f32.mrb[0].mxu0
    %v2651 = vadd.f32 %v2610, %v2650
    %v2652 = vpop.f32.mrb[0].mxu0
    %v2653 = vpop.f32.mrb[0].mxu0
    %2654 = vdwg.mxu0
    %2655 = vmatprep.subr.bf16.mxu0 %v1767
    %2656 = vmatpush1.bf16.msra.mxu0 %v1766
    %2657 = vmatprep.subr.bf16.mxu0 %v1775
    %2658 = vmatpush1.bf16.msra.mxu0 %v1774
    %2659 = vmatprep.subr.bf16.mxu0 %v1783
    %2660 = vmatpush1.bf16.msra.mxu0 %v1782
    %2661 = vmatprep.subr.bf16.mxu0 %v1791
    %2662 = vmatpush1.bf16.msra.mxu0 %v1790
    %2663 = vmatprep.subr.bf16.mxu0 %v1799
    %2664 = vmatpush1.bf16.msra.mxu0 %v1798
    %2665 = vmatprep.subr.bf16.mxu0 %v1807
    %2666 = vmatpush1.bf16.msra.mxu0 %v1806
    %2667 = vmatprep.subr.bf16.mxu0 %v1815
    %2668 = vmatpush1.bf16.msra.mxu0 %v1814
    %2669 = vmatprep.subr.bf16.mxu0 %v1823
    %2670 = vmatpush1.bf16.msra.mxu0 %v1822
    %2671 = vmatprep.subr.bf16.mxu0 %v1831
    %2672 = vmatpush1.bf16.msra.mxu0 %v1830
    %2673 = vmatprep.subr.bf16.mxu0 %v1839
    %2674 = vmatpush1.bf16.msra.mxu0 %v1838
    %2675 = vmatprep.subr.bf16.mxu0 %v1847
    %2676 = vmatpush1.bf16.msra.mxu0 %v1846
    %2677 = vmatprep.subr.bf16.mxu0 %v1855
    %2678 = vmatpush1.bf16.msra.mxu0 %v1854
    %2679 = vmatprep.subr.bf16.mxu0 %v1863
    %2680 = vmatpush1.bf16.msra.mxu0 %v1862
    %2681 = vmatprep.subr.bf16.mxu0 %v1871
    %2682 = vmatpush1.bf16.msra.mxu0 %v1870
    %2683 = vmatprep.subr.bf16.mxu0 %v1879
    %2684 = vmatpush1.bf16.msra.mxu0 %v1878
    %2685 = vmatprep.subr.bf16.mxu0 %v1887
    %2686 = vmatpush1.bf16.msra.mxu0 %v1886
    %2687 = vmatprep.mubr.bf16.mxu0 %v181
    %2688 = vmatmul.mubr.bf16.gmra.mrb[0].mxu0 %v180
    %v2689 = vpop.f32.mrb[0].mxu0
    %v2690 = vadd.f32 %v583, %v2689
    %v2691 = vpop.f32.mrb[0].mxu0
    %v2692 = vadd.f32 %v587, %v2691
    %v2693 = vpop.f32.mrb[0].mxu0
    %v2694 = vpop.f32.mrb[0].mxu0
    %2695 = vdwg.mxu0
    %2696 = vmatprep.subr.bf16.mxu0 %v1895
    %2697 = vmatpush1.bf16.msra.mxu0 %v1894
    %2698 = vmatprep.subr.bf16.mxu0 %v1903
    %2699 = vmatpush1.bf16.msra.mxu0 %v1902
    %2700 = vmatprep.subr.bf16.mxu0 %v1911
    %2701 = vmatpush1.bf16.msra.mxu0 %v1910
    %2702 = vmatprep.subr.bf16.mxu0 %v1919
    %2703 = vmatpush1.bf16.msra.mxu0 %v1918
    %2704 = vmatprep.subr.bf16.mxu0 %v1927
    %2705 = vmatpush1.bf16.msra.mxu0 %v1926
    %2706 = vmatprep.subr.bf16.mxu0 %v1935
    %2707 = vmatpush1.bf16.msra.mxu0 %v1934
    %2708 = vmatprep.subr.bf16.mxu0 %v1943
    %2709 = vmatpush1.bf16.msra.mxu0 %v1942
    %2710 = vmatprep.subr.bf16.mxu0 %v1951
    %2711 = vmatpush1.bf16.msra.mxu0 %v1950
    %2712 = vmatprep.subr.bf16.mxu0 %v1959
    %2713 = vmatpush1.bf16.msra.mxu0 %v1958
    %2714 = vmatprep.subr.bf16.mxu0 %v1967
    %2715 = vmatpush1.bf16.msra.mxu0 %v1966
    %2716 = vmatprep.subr.bf16.mxu0 %v1975
    %2717 = vmatpush1.bf16.msra.mxu0 %v1974
    %2718 = vmatprep.subr.bf16.mxu0 %v1983
    %2719 = vmatpush1.bf16.msra.mxu0 %v1982
    %2720 = vmatprep.subr.bf16.mxu0 %v1991
    %2721 = vmatpush1.bf16.msra.mxu0 %v1990
    %2722 = vmatprep.subr.bf16.mxu0 %v1999
    %2723 = vmatpush1.bf16.msra.mxu0 %v1998
    %2724 = vmatprep.subr.bf16.mxu0 %v2007
    %2725 = vmatpush1.bf16.msra.mxu0 %v2006
    %2726 = vmatprep.subr.bf16.mxu0 %v2015
    %2727 = vmatpush1.bf16.msra.mxu0 %v2014
    %2728 = vmatprep.mubr.bf16.mxu0 %v183
    %2729 = vmatmul.mubr.bf16.gmra.mrb[0].mxu0 %v182
    %v2730 = vpop.f32.mrb[0].mxu0
    %v2731 = vadd.f32 %v2690, %v2730
    %v2732 = vpop.f32.mrb[0].mxu0
    %v2733 = vadd.f32 %v2692, %v2732
    %v2734 = vpop.f32.mrb[0].mxu0
    %v2735 = vpop.f32.mrb[0].mxu0
    %2736 = vdwg.mxu0
    %2737 = vmatprep.subr.bf16.mxu0 %v2023
    %2738 = vmatpush1.bf16.msra.mxu0 %v2022
    %2739 = vmatprep.subr.bf16.mxu0 %v2031
    %2740 = vmatpush1.bf16.msra.mxu0 %v2030
    %2741 = vmatprep.subr.bf16.mxu0 %v2039
    %2742 = vmatpush1.bf16.msra.mxu0 %v2038
    %2743 = vmatprep.subr.bf16.mxu0 %v2047
    %2744 = vmatpush1.bf16.msra.mxu0 %v2046
    %2745 = vmatprep.subr.bf16.mxu0 %v2055
    %2746 = vmatpush1.bf16.msra.mxu0 %v2054
    %2747 = vmatprep.subr.bf16.mxu0 %v2063
    %2748 = vmatpush1.bf16.msra.mxu0 %v2062
    %2749 = vmatprep.subr.bf16.mxu0 %v2071
    %2750 = vmatpush1.bf16.msra.mxu0 %v2070
    %2751 = vmatprep.subr.bf16.mxu0 %v2079
    %2752 = vmatpush1.bf16.msra.mxu0 %v2078
    %2753 = vmatprep.subr.bf16.mxu0 %v2087
    %2754 = vmatpush1.bf16.msra.mxu0 %v2086
    %2755 = vmatprep.subr.bf16.mxu0 %v2095
    %2756 = vmatpush1.bf16.msra.mxu0 %v2094
    %2757 = vmatprep.subr.bf16.mxu0 %v2103
    %2758 = vmatpush1.bf16.msra.mxu0 %v2102
    %2759 = vmatprep.subr.bf16.mxu0 %v2111
    %2760 = vmatpush1.bf16.msra.mxu0 %v2110
    %2761 = vmatprep.subr.bf16.mxu0 %v2119
    %2762 = vmatpush1.bf16.msra.mxu0 %v2118
    %2763 = vmatprep.subr.bf16.mxu0 %v2127
    %2764 = vmatpush1.bf16.msra.mxu0 %v2126
    %2765 = vmatprep.subr.bf16.mxu0 %v2135
    %2766 = vmatpush1.bf16.msra.mxu0 %v2134
    %2767 = vmatprep.subr.bf16.mxu0 %v2143
    %2768 = vmatpush1.bf16.msra.mxu0 %v2142
    %2769 = vmatprep.mubr.bf16.mxu0 %v185
    %2770 = vmatmul.mubr.bf16.gmra.mrb[0].mxu0 %v184
    %v2771 = vpop.f32.mrb[0].mxu0
    %v2772 = vadd.f32 %v2731, %v2771
    %v2773 = vpop.f32.mrb[0].mxu0
    %v2774 = vadd.f32 %v2733, %v2773
    %v2775 = vpop.f32.mrb[0].mxu0
    %v2776 = vpop.f32.mrb[0].mxu0
    %2777 = vdwg.mxu0
    %2778 = vmatprep.subr.bf16.mxu0 %v1769
    %2779 = vmatpush1.bf16.msra.mxu0 %v1768
    %2780 = vmatprep.subr.bf16.mxu0 %v1777
    %2781 = vmatpush1.bf16.msra.mxu0 %v1776
    %2782 = vmatprep.subr.bf16.mxu0 %v1785
    %2783 = vmatpush1.bf16.msra.mxu0 %v1784
    %2784 = vmatprep.subr.bf16.mxu0 %v1793
    %2785 = vmatpush1.bf16.msra.mxu0 %v1792
    %2786 = vmatprep.subr.bf16.mxu0 %v1801
    %2787 = vmatpush1.bf16.msra.mxu0 %v1800
    %2788 = vmatprep.subr.bf16.mxu0 %v1809
    %2789 = vmatpush1.bf16.msra.mxu0 %v1808
    %2790 = vmatprep.subr.bf16.mxu0 %v1817
    %2791 = vmatpush1.bf16.msra.mxu0 %v1816
    %2792 = vmatprep.subr.bf16.mxu0 %v1825
    %2793 = vmatpush1.bf16.msra.mxu0 %v1824
    %2794 = vmatprep.subr.bf16.mxu0 %v1833
    %2795 = vmatpush1.bf16.msra.mxu0 %v1832
    %2796 = vmatprep.subr.bf16.mxu0 %v1841
    %2797 = vmatpush1.bf16.msra.mxu0 %v1840
    %2798 = vmatprep.subr.bf16.mxu0 %v1849
    %2799 = vmatpush1.bf16.msra.mxu0 %v1848
    %2800 = vmatprep.subr.bf16.mxu0 %v1857
    %2801 = vmatpush1.bf16.msra.mxu0 %v1856
    %2802 = vmatprep.subr.bf16.mxu0 %v1865
    %2803 = vmatpush1.bf16.msra.mxu0 %v1864
    %2804 = vmatprep.subr.bf16.mxu0 %v1873
    %2805 = vmatpush1.bf16.msra.mxu0 %v1872
    %2806 = vmatprep.subr.bf16.mxu0 %v1881
    %2807 = vmatpush1.bf16.msra.mxu0 %v1880
    %2808 = vmatprep.subr.bf16.mxu0 %v1889
    %2809 = vmatpush1.bf16.msra.mxu0 %v1888
    %2810 = vmatprep.mubr.bf16.mxu0 %v181
    %2811 = vmatmul.mubr.bf16.gmra.mrb[0].mxu0 %v180
    %v2812 = vpop.f32.mrb[0].mxu0
    %v2813 = vadd.f32 %v591, %v2812
    %v2814 = vpop.f32.mrb[0].mxu0
    %v2815 = vadd.f32 %v595, %v2814
    %v2816 = vpop.f32.mrb[0].mxu0
    %v2817 = vpop.f32.mrb[0].mxu0
    %2818 = vdwg.mxu0
    %2819 = vmatprep.subr.bf16.mxu0 %v1897
    %2820 = vmatpush1.bf16.msra.mxu0 %v1896
    %2821 = vmatprep.subr.bf16.mxu0 %v1905
    %2822 = vmatpush1.bf16.msra.mxu0 %v1904
    %2823 = vmatprep.subr.bf16.mxu0 %v1913
    %2824 = vmatpush1.bf16.msra.mxu0 %v1912
    %2825 = vmatprep.subr.bf16.mxu0 %v1921
    %2826 = vmatpush1.bf16.msra.mxu0 %v1920
    %2827 = vmatprep.subr.bf16.mxu0 %v1929
    %2828 = vmatpush1.bf16.msra.mxu0 %v1928
    %2829 = vmatprep.subr.bf16.mxu0 %v1937
    %2830 = vmatpush1.bf16.msra.mxu0 %v1936
    %2831 = vmatprep.subr.bf16.mxu0 %v1945
    %2832 = vmatpush1.bf16.msra.mxu0 %v1944
    %2833 = vmatprep.subr.bf16.mxu0 %v1953
    %2834 = vmatpush1.bf16.msra.mxu0 %v1952
    %2835 = vmatprep.subr.bf16.mxu0 %v1961
    %2836 = vmatpush1.bf16.msra.mxu0 %v1960
    %2837 = vmatprep.subr.bf16.mxu0 %v1969
    %2838 = vmatpush1.bf16.msra.mxu0 %v1968
    %2839 = vmatprep.subr.bf16.mxu0 %v1977
    %2840 = vmatpush1.bf16.msra.mxu0 %v1976
    %2841 = vmatprep.subr.bf16.mxu0 %v1985
    %2842 = vmatpush1.bf16.msra.mxu0 %v1984
    %2843 = vmatprep.subr.bf16.mxu0 %v1993
    %2844 = vmatpush1.bf16.msra.mxu0 %v1992
    %2845 = vmatprep.subr.bf16.mxu0 %v2001
    %2846 = vmatpush1.bf16.msra.mxu0 %v2000
    %2847 = vmatprep.subr.bf16.mxu0 %v2009
    %2848 = vmatpush1.bf16.msra.mxu0 %v2008
    %2849 = vmatprep.subr.bf16.mxu0 %v2017
    %2850 = vmatpush1.bf16.msra.mxu0 %v2016
    %2851 = vmatprep.mubr.bf16.mxu0 %v183
    %2852 = vmatmul.mubr.bf16.gmra.mrb[0].mxu0 %v182
    %v2853 = vpop.f32.mrb[0].mxu0
    %v2854 = vadd.f32 %v2813, %v2853
    %v2855 = vpop.f32.mrb[0].mxu0
    %v2856 = vadd.f32 %v2815, %v2855
    %v2857 = vpop.f32.mrb[0].mxu0
    %v2858 = vpop.f32.mrb[0].mxu0
    %2859 = vdwg.mxu0
    %2860 = vmatprep.subr.bf16.mxu0 %v2025
    %2861 = vmatpush1.bf16.msra.mxu0 %v2024
    %2862 = vmatprep.subr.bf16.mxu0 %v2033
    %2863 = vmatpush1.bf16.msra.mxu0 %v2032
    %2864 = vmatprep.subr.bf16.mxu0 %v2041
    %2865 = vmatpush1.bf16.msra.mxu0 %v2040
    %2866 = vmatprep.subr.bf16.mxu0 %v2049
    %2867 = vmatpush1.bf16.msra.mxu0 %v2048
    %2868 = vmatprep.subr.bf16.mxu0 %v2057
    %2869 = vmatpush1.bf16.msra.mxu0 %v2056
    %2870 = vmatprep.subr.bf16.mxu0 %v2065
    %2871 = vmatpush1.bf16.msra.mxu0 %v2064
    %2872 = vmatprep.subr.bf16.mxu0 %v2073
    %2873 = vmatpush1.bf16.msra.mxu0 %v2072
    %2874 = vmatprep.subr.bf16.mxu0 %v2081
    %2875 = vmatpush1.bf16.msra.mxu0 %v2080
    %2876 = vmatprep.subr.bf16.mxu0 %v2089
    %2877 = vmatpush1.bf16.msra.mxu0 %v2088
    %2878 = vmatprep.subr.bf16.mxu0 %v2097
    %2879 = vmatpush1.bf16.msra.mxu0 %v2096
    %2880 = vmatprep.subr.bf16.mxu0 %v2105
    %2881 = vmatpush1.bf16.msra.mxu0 %v2104
    %2882 = vmatprep.subr.bf16.mxu0 %v2113
    %2883 = vmatpush1.bf16.msra.mxu0 %v2112
    %2884 = vmatprep.subr.bf16.mxu0 %v2121
    %2885 = vmatpush1.bf16.msra.mxu0 %v2120
    %2886 = vmatprep.subr.bf16.mxu0 %v2129
    %2887 = vmatpush1.bf16.msra.mxu0 %v2128
    %2888 = vmatprep.subr.bf16.mxu0 %v2137
    %2889 = vmatpush1.bf16.msra.mxu0 %v2136
    %2890 = vmatprep.subr.bf16.mxu0 %v2145
    %2891 = vmatpush1.bf16.msra.mxu0 %v2144
    %2892 = vmatprep.mubr.bf16.mxu0 %v185
    %2893 = vmatmul.mubr.bf16.gmra.mrb[0].mxu0 %v184
    %v2894 = vpop.f32.mrb[0].mxu0
    %v2895 = vadd.f32 %v2854, %v2894
    %v2896 = vpop.f32.mrb[0].mxu0
    %v2897 = vadd.f32 %v2856, %v2896
    %v2898 = vpop.f32.mrb[0].mxu0
    %v2899 = vpop.f32.mrb[0].mxu0
    %2900 = vdwg.mxu0
    %2901 = vmatprep.subr.bf16.mxu0 %v1771
    %2902 = vmatpush1.bf16.msra.mxu0 %v1770
    %2903 = vmatprep.subr.bf16.mxu0 %v1779
    %2904 = vmatpush1.bf16.msra.mxu0 %v1778
    %2905 = vmatprep.subr.bf16.mxu0 %v1787
    %2906 = vmatpush1.bf16.msra.mxu0 %v1786
    %2907 = vmatprep.subr.bf16.mxu0 %v1795
    %2908 = vmatpush1.bf16.msra.mxu0 %v1794
    %2909 = vmatprep.subr.bf16.mxu0 %v1803
    %2910 = vmatpush1.bf16.msra.mxu0 %v1802
    %2911 = vmatprep.subr.bf16.mxu0 %v1811
    %2912 = vmatpush1.bf16.msra.mxu0 %v1810
    %2913 = vmatprep.subr.bf16.mxu0 %v1819
    %2914 = vmatpush1.bf16.msra.mxu0 %v1818
    %2915 = vmatprep.subr.bf16.mxu0 %v1827
    %2916 = vmatpush1.bf16.msra.mxu0 %v1826
    %2917 = vmatprep.subr.bf16.mxu0 %v1835
    %2918 = vmatpush1.bf16.msra.mxu0 %v1834
    %2919 = vmatprep.subr.bf16.mxu0 %v1843
    %2920 = vmatpush1.bf16.msra.mxu0 %v1842
    %2921 = vmatprep.subr.bf16.mxu0 %v1851
    %2922 = vmatpush1.bf16.msra.mxu0 %v1850
    %2923 = vmatprep.subr.bf16.mxu0 %v1859
    %2924 = vmatpush1.bf16.msra.mxu0 %v1858
    %2925 = vmatprep.subr.bf16.mxu0 %v1867
    %2926 = vmatpush1.bf16.msra.mxu0 %v1866
    %2927 = vmatprep.subr.bf16.mxu0 %v1875
    %2928 = vmatpush1.bf16.msra.mxu0 %v1874
    %2929 = vmatprep.subr.bf16.mxu0 %v1883
    %2930 = vmatpush1.bf16.msra.mxu0 %v1882
    %2931 = vmatprep.subr.bf16.mxu0 %v1891
    %2932 = vmatpush1.bf16.msra.mxu0 %v1890
    %2933 = vmatprep.mubr.bf16.mxu0 %v181
    %2934 = vmatmul.mubr.bf16.gmra.mrb[0].mxu0 %v180
    %v2935 = vpop.f32.mrb[0].mxu0
    %v2936 = vadd.f32 %v599, %v2935
    %v2937 = vpop.f32.mrb[0].mxu0
    %v2938 = vadd.f32 %v603, %v2937
    %v2939 = vpop.f32.mrb[0].mxu0
    %v2940 = vpop.f32.mrb[0].mxu0
    %2941 = vdwg.mxu0
    %2942 = vmatprep.subr.bf16.mxu0 %v1899
    %2943 = vmatpush1.bf16.msra.mxu0 %v1898
    %2944 = vmatprep.subr.bf16.mxu0 %v1907
    %2945 = vmatpush1.bf16.msra.mxu0 %v1906
    %2946 = vmatprep.subr.bf16.mxu0 %v1915
    %2947 = vmatpush1.bf16.msra.mxu0 %v1914
    %2948 = vmatprep.subr.bf16.mxu0 %v1923
    %2949 = vmatpush1.bf16.msra.mxu0 %v1922
    %2950 = vmatprep.subr.bf16.mxu0 %v1931
    %2951 = vmatpush1.bf16.msra.mxu0 %v1930
    %2952 = vmatprep.subr.bf16.mxu0 %v1939
    %2953 = vmatpush1.bf16.msra.mxu0 %v1938
    %2954 = vmatprep.subr.bf16.mxu0 %v1947
    %2955 = vmatpush1.bf16.msra.mxu0 %v1946
    %2956 = vmatprep.subr.bf16.mxu0 %v1955
    %2957 = vmatpush1.bf16.msra.mxu0 %v1954
    %2958 = vmatprep.subr.bf16.mxu0 %v1963
    %2959 = vmatpush1.bf16.msra.mxu0 %v1962
    %2960 = vmatprep.subr.bf16.mxu0 %v1971
    %2961 = vmatpush1.bf16.msra.mxu0 %v1970
    %2962 = vmatprep.subr.bf16.mxu0 %v1979
    %2963 = vmatpush1.bf16.msra.mxu0 %v1978
    %2964 = vmatprep.subr.bf16.mxu0 %v1987
    %2965 = vmatpush1.bf16.msra.mxu0 %v1986
    %2966 = vmatprep.subr.bf16.mxu0 %v1995
    %2967 = vmatpush1.bf16.msra.mxu0 %v1994
    %2968 = vmatprep.subr.bf16.mxu0 %v2003
    %2969 = vmatpush1.bf16.msra.mxu0 %v2002
    %2970 = vmatprep.subr.bf16.mxu0 %v2011
    %2971 = vmatpush1.bf16.msra.mxu0 %v2010
    %2972 = vmatprep.subr.bf16.mxu0 %v2019
    %2973 = vmatpush1.bf16.msra.mxu0 %v2018
    %2974 = vmatprep.mubr.bf16.mxu0 %v183
    %2975 = vmatmul.mubr.bf16.gmra.mrb[0].mxu0 %v182
    %v2976 = vpop.f32.mrb[0].mxu0
    %v2977 = vadd.f32 %v2936, %v2976
    %v2978 = vpop.f32.mrb[0].mxu0
    %v2979 = vadd.f32 %v2938, %v2978
    %v2980 = vpop.f32.mrb[0].mxu0
    %v2981 = vpop.f32.mrb[0].mxu0
    %2982 = vdwg.mxu0
    %2983 = vmatprep.subr.bf16.mxu0 %v2027
    %2984 = vmatpush1.bf16.msra.mxu0 %v2026
    %2985 = vmatprep.subr.bf16.mxu0 %v2035
    %2986 = vmatpush1.bf16.msra.mxu0 %v2034
    %2987 = vmatprep.subr.bf16.mxu0 %v2043
    %2988 = vmatpush1.bf16.msra.mxu0 %v2042
    %2989 = vmatprep.subr.bf16.mxu0 %v2051
    %2990 = vmatpush1.bf16.msra.mxu0 %v2050
    %2991 = vmatprep.subr.bf16.mxu0 %v2059
    %2992 = vmatpush1.bf16.msra.mxu0 %v2058
    %2993 = vmatprep.subr.bf16.mxu0 %v2067
    %2994 = vmatpush1.bf16.msra.mxu0 %v2066
    %2995 = vmatprep.subr.bf16.mxu0 %v2075
    %2996 = vmatpush1.bf16.msra.mxu0 %v2074
    %2997 = vmatprep.subr.bf16.mxu0 %v2083
    %2998 = vmatpush1.bf16.msra.mxu0 %v2082
    %2999 = vmatprep.subr.bf16.mxu0 %v2091
    %3000 = vmatpush1.bf16.msra.mxu0 %v2090
    %3001 = vmatprep.subr.bf16.mxu0 %v2099
    %3002 = vmatpush1.bf16.msra.mxu0 %v2098
    %3003 = vmatprep.subr.bf16.mxu0 %v2107
    %3004 = vmatpush1.bf16.msra.mxu0 %v2106
    %3005 = vmatprep.subr.bf16.mxu0 %v2115
    %3006 = vmatpush1.bf16.msra.mxu0 %v2114
    %3007 = vmatprep.subr.bf16.mxu0 %v2123
    %3008 = vmatpush1.bf16.msra.mxu0 %v2122
    %3009 = vmatprep.subr.bf16.mxu0 %v2131
    %3010 = vmatpush1.bf16.msra.mxu0 %v2130
    %3011 = vmatprep.subr.bf16.mxu0 %v2139
    %3012 = vmatpush1.bf16.msra.mxu0 %v2138
    %3013 = vmatprep.subr.bf16.mxu0 %v2147
    %3014 = vmatpush1.bf16.msra.mxu0 %v2146
    %3015 = vmatprep.mubr.bf16.mxu0 %v185
    %3016 = vmatmul.mubr.bf16.gmra.mrb[0].mxu0 %v184
    %v3017 = vpop.f32.mrb[0].mxu0
    %v3018 = vadd.f32 %v2977, %v3017
    %v3019 = vpop.f32.mrb[0].mxu0
    %v3020 = vadd.f32 %v2979, %v3019
    %v3021 = vpop.f32.mrb[0].mxu0
    %v3022 = vpop.f32.mrb[0].mxu0
    %3023 = vdwg.mxu0
    %v3024 = vmax.f32 %v2649, 0.0
    %v3025 = vmax.f32 %v2651, 0.0
    %v3026 = vmax.f32 %v2772, 0.0
    %v3027 = vmax.f32 %v2774, 0.0
    %v3028 = vmax.f32 %v2895, 0.0
    %v3029 = vmax.f32 %v2897, 0.0
    %v3030 = vmax.f32 %v3018, 0.0
    %v3031 = vmax.f32 %v3020, 0.0
    %v3032 = vpack.c.bf16 %v3024, %v3024
    %v3033 = vpack.c.bf16 %v3025, %v3025
    %v3034 = vpack.c.bf16 %v3026, %v3026
    %v3035 = vpack.c.bf16 %v3027, %v3027
    %v3036 = vpack.c.bf16 %v3028, %v3028
    %v3037 = vpack.c.bf16 %v3029, %v3029
    %v3038 = vpack.c.bf16 %v3030, %v3030
    %v3039 = vpack.c.bf16 %v3031, %v3031
    %v3040 = vld [vmem:[#allocation8] sm:$0xff]
    %v3041 = vld [vmem:[#allocation8 + $0x8] sm:$0xff]
    %v3042 = vld [vmem:[#allocation8 + $0x10] sm:$0xff]
    %v3043 = vld [vmem:[#allocation8 + $0x18] sm:$0xff]
    %v3044 = vld [vmem:[#allocation8 + $0x20] sm:$0xff]
    %v3045 = vld [vmem:[#allocation8 + $0x28] sm:$0xff]
    %v3046 = vld [vmem:[#allocation8 + $0x30] sm:$0xff]
    %v3047 = vld [vmem:[#allocation8 + $0x38] sm:$0xff]
    %v3048 = vld [vmem:[#allocation8 + $0x40] sm:$0xff]
    %v3049 = vld [vmem:[#allocation8 + $0x48] sm:$0xff]
    %v3050 = vld [vmem:[#allocation8 + $0x50] sm:$0xff]
    %v3051 = vld [vmem:[#allocation8 + $0x58] sm:$0xff]
    %v3052 = vld [vmem:[#allocation8 + $0x60] sm:$0xff]
    %v3053 = vld [vmem:[#allocation8 + $0x68] sm:$0xff]
    %v3054 = vld [vmem:[#allocation8 + $0x70] sm:$0xff]
    %v3055 = vld [vmem:[#allocation8 + $0x78] sm:$0xff]
    %v3056 = vld [vmem:[#allocation8 + $0x80] sm:$0xff]
    %v3057 = vld [vmem:[#allocation8 + $0x88] sm:$0xff]
    %v3058 = vld [vmem:[#allocation8 + $0x90] sm:$0xff]
    %v3059 = vld [vmem:[#allocation8 + $0x98] sm:$0xff]
    %v3060 = vld [vmem:[#allocation8 + $0xa0] sm:$0xff]
    %v3061 = vld [vmem:[#allocation8 + $0xa8] sm:$0xff]
    %v3062 = vld [vmem:[#allocation8 + $0xb0] sm:$0xff]
    %v3063 = vld [vmem:[#allocation8 + $0xb8] sm:$0xff]
    %v3064 = vld [vmem:[#allocation8 + $0xc0] sm:$0xff]
    %v3065 = vld [vmem:[#allocation8 + $0xc8] sm:$0xff]
    %v3066 = vld [vmem:[#allocation8 + $0xd0] sm:$0xff]
    %v3067 = vld [vmem:[#allocation8 + $0xd8] sm:$0xff]
    %v3068 = vld [vmem:[#allocation8 + $0xe0] sm:$0xff]
    %v3069 = vld [vmem:[#allocation8 + $0xe8] sm:$0xff]
    %v3070 = vld [vmem:[#allocation8 + $0xf0] sm:$0xff]
    %v3071 = vld [vmem:[#allocation8 + $0xf8] sm:$0xff]
    %v3072 = vld [vmem:[#allocation8 + $0x100] sm:$0xff]
    %v3073 = vld [vmem:[#allocation8 + $0x108] sm:$0xff]
    %v3074 = vld [vmem:[#allocation8 + $0x110] sm:$0xff]
    %v3075 = vld [vmem:[#allocation8 + $0x118] sm:$0xff]
    %v3076 = vld [vmem:[#allocation8 + $0x120] sm:$0xff]
    %v3077 = vld [vmem:[#allocation8 + $0x128] sm:$0xff]
    %v3078 = vld [vmem:[#allocation8 + $0x130] sm:$0xff]
    %v3079 = vld [vmem:[#allocation8 + $0x138] sm:$0xff]
    %v3080 = vld [vmem:[#allocation8 + $0x140] sm:$0xff]
    %v3081 = vld [vmem:[#allocation8 + $0x148] sm:$0xff]
    %v3082 = vld [vmem:[#allocation8 + $0x150] sm:$0xff]
    %v3083 = vld [vmem:[#allocation8 + $0x158] sm:$0xff]
    %v3084 = vld [vmem:[#allocation8 + $0x160] sm:$0xff]
    %v3085 = vld [vmem:[#allocation8 + $0x168] sm:$0xff]
    %v3086 = vld [vmem:[#allocation8 + $0x170] sm:$0xff]
    %v3087 = vld [vmem:[#allocation8 + $0x178] sm:$0xff]
    %v3088 = vld [vmem:[#allocation8 + $0x180] sm:$0xff]
    %v3089 = vld [vmem:[#allocation8 + $0x188] sm:$0xff]
    %v3090 = vld [vmem:[#allocation8 + $0x190] sm:$0xff]
    %v3091 = vld [vmem:[#allocation8 + $0x198] sm:$0xff]
    %v3092 = vld [vmem:[#allocation8 + $0x1a0] sm:$0xff]
    %v3093 = vld [vmem:[#allocation8 + $0x1a8] sm:$0xff]
    %v3094 = vld [vmem:[#allocation8 + $0x1b0] sm:$0xff]
    %v3095 = vld [vmem:[#allocation8 + $0x1b8] sm:$0xff]
    %v3096 = vld [vmem:[#allocation8 + $0x1c0] sm:$0xff]
    %v3097 = vld [vmem:[#allocation8 + $0x1c8] sm:$0xff]
    %v3098 = vld [vmem:[#allocation8 + $0x1d0] sm:$0xff]
    %v3099 = vld [vmem:[#allocation8 + $0x1d8] sm:$0xff]
    %v3100 = vld [vmem:[#allocation8 + $0x1e0] sm:$0xff]
    %v3101 = vld [vmem:[#allocation8 + $0x1e8] sm:$0xff]
    %v3102 = vld [vmem:[#allocation8 + $0x1f0] sm:$0xff]
    %v3103 = vld [vmem:[#allocation8 + $0x1f8] sm:$0xff]
    %v3104 = vld [vmem:[#allocation8 + $0x200] sm:$0xff]
    %v3105 = vld [vmem:[#allocation8 + $0x208] sm:$0xff]
    %v3106 = vld [vmem:[#allocation8 + $0x210] sm:$0xff]
    %v3107 = vld [vmem:[#allocation8 + $0x218] sm:$0xff]
    %v3108 = vld [vmem:[#allocation8 + $0x220] sm:$0xff]
    %v3109 = vld [vmem:[#allocation8 + $0x228] sm:$0xff]
    %v3110 = vld [vmem:[#allocation8 + $0x230] sm:$0xff]
    %v3111 = vld [vmem:[#allocation8 + $0x238] sm:$0xff]
    %v3112 = vld [vmem:[#allocation8 + $0x240] sm:$0xff]
    %v3113 = vld [vmem:[#allocation8 + $0x248] sm:$0xff]
    %v3114 = vld [vmem:[#allocation8 + $0x250] sm:$0xff]
    %v3115 = vld [vmem:[#allocation8 + $0x258] sm:$0xff]
    %v3116 = vld [vmem:[#allocation8 + $0x260] sm:$0xff]
    %v3117 = vld [vmem:[#allocation8 + $0x268] sm:$0xff]
    %v3118 = vld [vmem:[#allocation8 + $0x270] sm:$0xff]
    %v3119 = vld [vmem:[#allocation8 + $0x278] sm:$0xff]
    %v3120 = vld [vmem:[#allocation8 + $0x280] sm:$0xff]
    %v3121 = vld [vmem:[#allocation8 + $0x288] sm:$0xff]
    %v3122 = vld [vmem:[#allocation8 + $0x290] sm:$0xff]
    %v3123 = vld [vmem:[#allocation8 + $0x298] sm:$0xff]
    %v3124 = vld [vmem:[#allocation8 + $0x2a0] sm:$0xff]
    %v3125 = vld [vmem:[#allocation8 + $0x2a8] sm:$0xff]
    %v3126 = vld [vmem:[#allocation8 + $0x2b0] sm:$0xff]
    %v3127 = vld [vmem:[#allocation8 + $0x2b8] sm:$0xff]
    %v3128 = vld [vmem:[#allocation8 + $0x2c0] sm:$0xff]
    %v3129 = vld [vmem:[#allocation8 + $0x2c8] sm:$0xff]
    %v3130 = vld [vmem:[#allocation8 + $0x2d0] sm:$0xff]
    %v3131 = vld [vmem:[#allocation8 + $0x2d8] sm:$0xff]
    %v3132 = vld [vmem:[#allocation8 + $0x2e0] sm:$0xff]
    %v3133 = vld [vmem:[#allocation8 + $0x2e8] sm:$0xff]
    %v3134 = vld [vmem:[#allocation8 + $0x2f0] sm:$0xff]
    %v3135 = vld [vmem:[#allocation8 + $0x2f8] sm:$0xff]
    %v3136 = vld [vmem:[#allocation8 + $0x300] sm:$0xff]
    %v3137 = vld [vmem:[#allocation8 + $0x308] sm:$0xff]
    %v3138 = vld [vmem:[#allocation8 + $0x310] sm:$0xff]
    %v3139 = vld [vmem:[#allocation8 + $0x318] sm:$0xff]
    %v3140 = vld [vmem:[#allocation8 + $0x320] sm:$0xff]
    %v3141 = vld [vmem:[#allocation8 + $0x328] sm:$0xff]
    %v3142 = vld [vmem:[#allocation8 + $0x330] sm:$0xff]
    %v3143 = vld [vmem:[#allocation8 + $0x338] sm:$0xff]
    %v3144 = vld [vmem:[#allocation8 + $0x340] sm:$0xff]
    %v3145 = vld [vmem:[#allocation8 + $0x348] sm:$0xff]
    %v3146 = vld [vmem:[#allocation8 + $0x350] sm:$0xff]
    %v3147 = vld [vmem:[#allocation8 + $0x358] sm:$0xff]
    %v3148 = vld [vmem:[#allocation8 + $0x360] sm:$0xff]
    %v3149 = vld [vmem:[#allocation8 + $0x368] sm:$0xff]
    %v3150 = vld [vmem:[#allocation8 + $0x370] sm:$0xff]
    %v3151 = vld [vmem:[#allocation8 + $0x378] sm:$0xff]
    %v3152 = vld [vmem:[#allocation8 + $0x380] sm:$0xff]
    %v3153 = vld [vmem:[#allocation8 + $0x388] sm:$0xff]
    %v3154 = vld [vmem:[#allocation8 + $0x390] sm:$0xff]
    %v3155 = vld [vmem:[#allocation8 + $0x398] sm:$0xff]
    %v3156 = vld [vmem:[#allocation8 + $0x3a0] sm:$0xff]
    %v3157 = vld [vmem:[#allocation8 + $0x3a8] sm:$0xff]
    %v3158 = vld [vmem:[#allocation8 + $0x3b0] sm:$0xff]
    %v3159 = vld [vmem:[#allocation8 + $0x3b8] sm:$0xff]
    %v3160 = vld [vmem:[#allocation8 + $0x3c0] sm:$0xff]
    %v3161 = vld [vmem:[#allocation8 + $0x3c8] sm:$0xff]
    %v3162 = vld [vmem:[#allocation8 + $0x3d0] sm:$0xff]
    %v3163 = vld [vmem:[#allocation8 + $0x3d8] sm:$0xff]
    %v3164 = vld [vmem:[#allocation8 + $0x3e0] sm:$0xff]
    %v3165 = vld [vmem:[#allocation8 + $0x3e8] sm:$0xff]
    %v3166 = vld [vmem:[#allocation8 + $0x3f0] sm:$0xff]
    %v3167 = vld [vmem:[#allocation8 + $0x3f8] sm:$0xff]
    %v3168 = vld [vmem:[#allocation8 + $0x400] sm:$0xff]
    %v3169 = vld [vmem:[#allocation8 + $0x408] sm:$0xff]
    %v3170 = vld [vmem:[#allocation8 + $0x410] sm:$0xff]
    %v3171 = vld [vmem:[#allocation8 + $0x418] sm:$0xff]
    %v3172 = vld [vmem:[#allocation8 + $0x420] sm:$0xff]
    %v3173 = vld [vmem:[#allocation8 + $0x428] sm:$0xff]
    %v3174 = vld [vmem:[#allocation8 + $0x430] sm:$0xff]
    %v3175 = vld [vmem:[#allocation8 + $0x438] sm:$0xff]
    %v3176 = vld [vmem:[#allocation8 + $0x440] sm:$0xff]
    %v3177 = vld [vmem:[#allocation8 + $0x448] sm:$0xff]
    %v3178 = vld [vmem:[#allocation8 + $0x450] sm:$0xff]
    %v3179 = vld [vmem:[#allocation8 + $0x458] sm:$0xff]
    %v3180 = vld [vmem:[#allocation8 + $0x460] sm:$0xff]
    %v3181 = vld [vmem:[#allocation8 + $0x468] sm:$0xff]
    %v3182 = vld [vmem:[#allocation8 + $0x470] sm:$0xff]
    %v3183 = vld [vmem:[#allocation8 + $0x478] sm:$0xff]
    %v3184 = vld [vmem:[#allocation8 + $0x480] sm:$0xff]
    %v3185 = vld [vmem:[#allocation8 + $0x488] sm:$0xff]
    %v3186 = vld [vmem:[#allocation8 + $0x490] sm:$0xff]
    %v3187 = vld [vmem:[#allocation8 + $0x498] sm:$0xff]
    %v3188 = vld [vmem:[#allocation8 + $0x4a0] sm:$0xff]
    %v3189 = vld [vmem:[#allocation8 + $0x4a8] sm:$0xff]
    %v3190 = vld [vmem:[#allocation8 + $0x4b0] sm:$0xff]
    %v3191 = vld [vmem:[#allocation8 + $0x4b8] sm:$0xff]
    %v3192 = vld [vmem:[#allocation8 + $0x4c0] sm:$0xff]
    %v3193 = vld [vmem:[#allocation8 + $0x4c8] sm:$0xff]
    %v3194 = vld [vmem:[#allocation8 + $0x4d0] sm:$0xff]
    %v3195 = vld [vmem:[#allocation8 + $0x4d8] sm:$0xff]
    %v3196 = vld [vmem:[#allocation8 + $0x4e0] sm:$0xff]
    %v3197 = vld [vmem:[#allocation8 + $0x4e8] sm:$0xff]
    %v3198 = vld [vmem:[#allocation8 + $0x4f0] sm:$0xff]
    %v3199 = vld [vmem:[#allocation8 + $0x4f8] sm:$0xff]
    %v3200 = vld [vmem:[#allocation8 + $0x500] sm:$0xff]
    %v3201 = vld [vmem:[#allocation8 + $0x508] sm:$0xff]
    %v3202 = vld [vmem:[#allocation8 + $0x510] sm:$0xff]
    %v3203 = vld [vmem:[#allocation8 + $0x518] sm:$0xff]
    %v3204 = vld [vmem:[#allocation8 + $0x520] sm:$0xff]
    %v3205 = vld [vmem:[#allocation8 + $0x528] sm:$0xff]
    %v3206 = vld [vmem:[#allocation8 + $0x530] sm:$0xff]
    %v3207 = vld [vmem:[#allocation8 + $0x538] sm:$0xff]
    %v3208 = vld [vmem:[#allocation8 + $0x540] sm:$0xff]
    %v3209 = vld [vmem:[#allocation8 + $0x548] sm:$0xff]
    %v3210 = vld [vmem:[#allocation8 + $0x550] sm:$0xff]
    %v3211 = vld [vmem:[#allocation8 + $0x558] sm:$0xff]
    %v3212 = vld [vmem:[#allocation8 + $0x560] sm:$0xff]
    %v3213 = vld [vmem:[#allocation8 + $0x568] sm:$0xff]
    %v3214 = vld [vmem:[#allocation8 + $0x570] sm:$0xff]
    %v3215 = vld [vmem:[#allocation8 + $0x578] sm:$0xff]
    %v3216 = vld [vmem:[#allocation8 + $0x580] sm:$0xff]
    %v3217 = vld [vmem:[#allocation8 + $0x588] sm:$0xff]
    %v3218 = vld [vmem:[#allocation8 + $0x590] sm:$0xff]
    %v3219 = vld [vmem:[#allocation8 + $0x598] sm:$0xff]
    %v3220 = vld [vmem:[#allocation8 + $0x5a0] sm:$0xff]
    %v3221 = vld [vmem:[#allocation8 + $0x5a8] sm:$0xff]
    %v3222 = vld [vmem:[#allocation8 + $0x5b0] sm:$0xff]
    %v3223 = vld [vmem:[#allocation8 + $0x5b8] sm:$0xff]
    %v3224 = vld [vmem:[#allocation8 + $0x5c0] sm:$0xff]
    %v3225 = vld [vmem:[#allocation8 + $0x5c8] sm:$0xff]
    %v3226 = vld [vmem:[#allocation8 + $0x5d0] sm:$0xff]
    %v3227 = vld [vmem:[#allocation8 + $0x5d8] sm:$0xff]
    %v3228 = vld [vmem:[#allocation8 + $0x5e0] sm:$0xff]
    %v3229 = vld [vmem:[#allocation8 + $0x5e8] sm:$0xff]
    %v3230 = vld [vmem:[#allocation8 + $0x5f0] sm:$0xff]
    %v3231 = vld [vmem:[#allocation8 + $0x5f8] sm:$0xff]
    %v3232 = vld [vmem:[#allocation8 + $0x600] sm:$0xff]
    %v3233 = vld [vmem:[#allocation8 + $0x608] sm:$0xff]
    %v3234 = vld [vmem:[#allocation8 + $0x610] sm:$0xff]
    %v3235 = vld [vmem:[#allocation8 + $0x618] sm:$0xff]
    %v3236 = vld [vmem:[#allocation8 + $0x620] sm:$0xff]
    %v3237 = vld [vmem:[#allocation8 + $0x628] sm:$0xff]
    %v3238 = vld [vmem:[#allocation8 + $0x630] sm:$0xff]
    %v3239 = vld [vmem:[#allocation8 + $0x638] sm:$0xff]
    %v3240 = vld [vmem:[#allocation8 + $0x640] sm:$0xff]
    %v3241 = vld [vmem:[#allocation8 + $0x648] sm:$0xff]
    %v3242 = vld [vmem:[#allocation8 + $0x650] sm:$0xff]
    %v3243 = vld [vmem:[#allocation8 + $0x658] sm:$0xff]
    %v3244 = vld [vmem:[#allocation8 + $0x660] sm:$0xff]
    %v3245 = vld [vmem:[#allocation8 + $0x668] sm:$0xff]
    %v3246 = vld [vmem:[#allocation8 + $0x670] sm:$0xff]
    %v3247 = vld [vmem:[#allocation8 + $0x678] sm:$0xff]
    %v3248 = vld [vmem:[#allocation8 + $0x680] sm:$0xff]
    %v3249 = vld [vmem:[#allocation8 + $0x688] sm:$0xff]
    %v3250 = vld [vmem:[#allocation8 + $0x690] sm:$0xff]
    %v3251 = vld [vmem:[#allocation8 + $0x698] sm:$0xff]
    %v3252 = vld [vmem:[#allocation8 + $0x6a0] sm:$0xff]
    %v3253 = vld [vmem:[#allocation8 + $0x6a8] sm:$0xff]
    %v3254 = vld [vmem:[#allocation8 + $0x6b0] sm:$0xff]
    %v3255 = vld [vmem:[#allocation8 + $0x6b8] sm:$0xff]
    %v3256 = vld [vmem:[#allocation8 + $0x6c0] sm:$0xff]
    %v3257 = vld [vmem:[#allocation8 + $0x6c8] sm:$0xff]
    %v3258 = vld [vmem:[#allocation8 + $0x6d0] sm:$0xff]
    %v3259 = vld [vmem:[#allocation8 + $0x6d8] sm:$0xff]
    %v3260 = vld [vmem:[#allocation8 + $0x6e0] sm:$0xff]
    %v3261 = vld [vmem:[#allocation8 + $0x6e8] sm:$0xff]
    %v3262 = vld [vmem:[#allocation8 + $0x6f0] sm:$0xff]
    %v3263 = vld [vmem:[#allocation8 + $0x6f8] sm:$0xff]
    %v3264 = vld [vmem:[#allocation8 + $0x700] sm:$0xff]
    %v3265 = vld [vmem:[#allocation8 + $0x708] sm:$0xff]
    %v3266 = vld [vmem:[#allocation8 + $0x710] sm:$0xff]
    %v3267 = vld [vmem:[#allocation8 + $0x718] sm:$0xff]
    %v3268 = vld [vmem:[#allocation8 + $0x720] sm:$0xff]
    %v3269 = vld [vmem:[#allocation8 + $0x728] sm:$0xff]
    %v3270 = vld [vmem:[#allocation8 + $0x730] sm:$0xff]
    %v3271 = vld [vmem:[#allocation8 + $0x738] sm:$0xff]
    %v3272 = vld [vmem:[#allocation8 + $0x740] sm:$0xff]
    %v3273 = vld [vmem:[#allocation8 + $0x748] sm:$0xff]
    %v3274 = vld [vmem:[#allocation8 + $0x750] sm:$0xff]
    %v3275 = vld [vmem:[#allocation8 + $0x758] sm:$0xff]
    %v3276 = vld [vmem:[#allocation8 + $0x760] sm:$0xff]
    %v3277 = vld [vmem:[#allocation8 + $0x768] sm:$0xff]
    %v3278 = vld [vmem:[#allocation8 + $0x770] sm:$0xff]
    %v3279 = vld [vmem:[#allocation8 + $0x778] sm:$0xff]
    %v3280 = vld [vmem:[#allocation8 + $0x780] sm:$0xff]
    %v3281 = vld [vmem:[#allocation8 + $0x788] sm:$0xff]
    %v3282 = vld [vmem:[#allocation8 + $0x790] sm:$0xff]
    %v3283 = vld [vmem:[#allocation8 + $0x798] sm:$0xff]
    %v3284 = vld [vmem:[#allocation8 + $0x7a0] sm:$0xff]
    %v3285 = vld [vmem:[#allocation8 + $0x7a8] sm:$0xff]
    %v3286 = vld [vmem:[#allocation8 + $0x7b0] sm:$0xff]
    %v3287 = vld [vmem:[#allocation8 + $0x7b8] sm:$0xff]
    %v3288 = vld [vmem:[#allocation8 + $0x7c0] sm:$0xff]
    %v3289 = vld [vmem:[#allocation8 + $0x7c8] sm:$0xff]
    %v3290 = vld [vmem:[#allocation8 + $0x7d0] sm:$0xff]
    %v3291 = vld [vmem:[#allocation8 + $0x7d8] sm:$0xff]
    %v3292 = vld [vmem:[#allocation8 + $0x7e0] sm:$0xff]
    %v3293 = vld [vmem:[#allocation8 + $0x7e8] sm:$0xff]
    %v3294 = vld [vmem:[#allocation8 + $0x7f0] sm:$0xff]
    %v3295 = vld [vmem:[#allocation8 + $0x7f8] sm:$0xff]
    %v3296 = vld [vmem:[#allocation8 + $0x800] sm:$0xff]
    %v3297 = vld [vmem:[#allocation8 + $0x808] sm:$0xff]
    %v3298 = vld [vmem:[#allocation8 + $0x810] sm:$0xff]
    %v3299 = vld [vmem:[#allocation8 + $0x818] sm:$0xff]
    %v3300 = vld [vmem:[#allocation8 + $0x820] sm:$0xff]
    %v3301 = vld [vmem:[#allocation8 + $0x828] sm:$0xff]
    %v3302 = vld [vmem:[#allocation8 + $0x830] sm:$0xff]
    %v3303 = vld [vmem:[#allocation8 + $0x838] sm:$0xff]
    %v3304 = vld [vmem:[#allocation8 + $0x840] sm:$0xff]
    %v3305 = vld [vmem:[#allocation8 + $0x848] sm:$0xff]
    %v3306 = vld [vmem:[#allocation8 + $0x850] sm:$0xff]
    %v3307 = vld [vmem:[#allocation8 + $0x858] sm:$0xff]
    %v3308 = vld [vmem:[#allocation8 + $0x860] sm:$0xff]
    %v3309 = vld [vmem:[#allocation8 + $0x868] sm:$0xff]
    %v3310 = vld [vmem:[#allocation8 + $0x870] sm:$0xff]
    %v3311 = vld [vmem:[#allocation8 + $0x878] sm:$0xff]
    %v3312 = vld [vmem:[#allocation8 + $0x880] sm:$0xff]
    %v3313 = vld [vmem:[#allocation8 + $0x888] sm:$0xff]
    %v3314 = vld [vmem:[#allocation8 + $0x890] sm:$0xff]
    %v3315 = vld [vmem:[#allocation8 + $0x898] sm:$0xff]
    %v3316 = vld [vmem:[#allocation8 + $0x8a0] sm:$0xff]
    %v3317 = vld [vmem:[#allocation8 + $0x8a8] sm:$0xff]
    %v3318 = vld [vmem:[#allocation8 + $0x8b0] sm:$0xff]
    %v3319 = vld [vmem:[#allocation8 + $0x8b8] sm:$0xff]
    %v3320 = vld [vmem:[#allocation8 + $0x8c0] sm:$0xff]
    %v3321 = vld [vmem:[#allocation8 + $0x8c8] sm:$0xff]
    %v3322 = vld [vmem:[#allocation8 + $0x8d0] sm:$0xff]
    %v3323 = vld [vmem:[#allocation8 + $0x8d8] sm:$0xff]
    %v3324 = vld [vmem:[#allocation8 + $0x8e0] sm:$0xff]
    %v3325 = vld [vmem:[#allocation8 + $0x8e8] sm:$0xff]
    %v3326 = vld [vmem:[#allocation8 + $0x8f0] sm:$0xff]
    %v3327 = vld [vmem:[#allocation8 + $0x8f8] sm:$0xff]
    %v3328 = vld [vmem:[#allocation8 + $0x900] sm:$0xff]
    %v3329 = vld [vmem:[#allocation8 + $0x908] sm:$0xff]
    %v3330 = vld [vmem:[#allocation8 + $0x910] sm:$0xff]
    %v3331 = vld [vmem:[#allocation8 + $0x918] sm:$0xff]
    %v3332 = vld [vmem:[#allocation8 + $0x920] sm:$0xff]
    %v3333 = vld [vmem:[#allocation8 + $0x928] sm:$0xff]
    %v3334 = vld [vmem:[#allocation8 + $0x930] sm:$0xff]
    %v3335 = vld [vmem:[#allocation8 + $0x938] sm:$0xff]
    %v3336 = vld [vmem:[#allocation8 + $0x940] sm:$0xff]
    %v3337 = vld [vmem:[#allocation8 + $0x948] sm:$0xff]
    %v3338 = vld [vmem:[#allocation8 + $0x950] sm:$0xff]
    %v3339 = vld [vmem:[#allocation8 + $0x958] sm:$0xff]
    %v3340 = vld [vmem:[#allocation8 + $0x960] sm:$0xff]
    %v3341 = vld [vmem:[#allocation8 + $0x968] sm:$0xff]
    %v3342 = vld [vmem:[#allocation8 + $0x970] sm:$0xff]
    %v3343 = vld [vmem:[#allocation8 + $0x978] sm:$0xff]
    %v3344 = vld [vmem:[#allocation8 + $0x980] sm:$0xff]
    %v3345 = vld [vmem:[#allocation8 + $0x988] sm:$0xff]
    %v3346 = vld [vmem:[#allocation8 + $0x990] sm:$0xff]
    %v3347 = vld [vmem:[#allocation8 + $0x998] sm:$0xff]
    %v3348 = vld [vmem:[#allocation8 + $0x9a0] sm:$0xff]
    %v3349 = vld [vmem:[#allocation8 + $0x9a8] sm:$0xff]
    %v3350 = vld [vmem:[#allocation8 + $0x9b0] sm:$0xff]
    %v3351 = vld [vmem:[#allocation8 + $0x9b8] sm:$0xff]
    %v3352 = vld [vmem:[#allocation8 + $0x9c0] sm:$0xff]
    %v3353 = vld [vmem:[#allocation8 + $0x9c8] sm:$0xff]
    %v3354 = vld [vmem:[#allocation8 + $0x9d0] sm:$0xff]
    %v3355 = vld [vmem:[#allocation8 + $0x9d8] sm:$0xff]
    %v3356 = vld [vmem:[#allocation8 + $0x9e0] sm:$0xff]
    %v3357 = vld [vmem:[#allocation8 + $0x9e8] sm:$0xff]
    %v3358 = vld [vmem:[#allocation8 + $0x9f0] sm:$0xff]
    %v3359 = vld [vmem:[#allocation8 + $0x9f8] sm:$0xff]
    %v3360 = vld [vmem:[#allocation8 + $0xa00] sm:$0xff]
    %v3361 = vld [vmem:[#allocation8 + $0xa08] sm:$0xff]
    %v3362 = vld [vmem:[#allocation8 + $0xa10] sm:$0xff]
    %v3363 = vld [vmem:[#allocation8 + $0xa18] sm:$0xff]
    %v3364 = vld [vmem:[#allocation8 + $0xa20] sm:$0xff]
    %v3365 = vld [vmem:[#allocation8 + $0xa28] sm:$0xff]
    %v3366 = vld [vmem:[#allocation8 + $0xa30] sm:$0xff]
    %v3367 = vld [vmem:[#allocation8 + $0xa38] sm:$0xff]
    %v3368 = vld [vmem:[#allocation8 + $0xa40] sm:$0xff]
    %v3369 = vld [vmem:[#allocation8 + $0xa48] sm:$0xff]
    %v3370 = vld [vmem:[#allocation8 + $0xa50] sm:$0xff]
    %v3371 = vld [vmem:[#allocation8 + $0xa58] sm:$0xff]
    %v3372 = vld [vmem:[#allocation8 + $0xa60] sm:$0xff]
    %v3373 = vld [vmem:[#allocation8 + $0xa68] sm:$0xff]
    %v3374 = vld [vmem:[#allocation8 + $0xa70] sm:$0xff]
    %v3375 = vld [vmem:[#allocation8 + $0xa78] sm:$0xff]
    %v3376 = vld [vmem:[#allocation8 + $0xa80] sm:$0xff]
    %v3377 = vld [vmem:[#allocation8 + $0xa88] sm:$0xff]
    %v3378 = vld [vmem:[#allocation8 + $0xa90] sm:$0xff]
    %v3379 = vld [vmem:[#allocation8 + $0xa98] sm:$0xff]
    %v3380 = vld [vmem:[#allocation8 + $0xaa0] sm:$0xff]
    %v3381 = vld [vmem:[#allocation8 + $0xaa8] sm:$0xff]
    %v3382 = vld [vmem:[#allocation8 + $0xab0] sm:$0xff]
    %v3383 = vld [vmem:[#allocation8 + $0xab8] sm:$0xff]
    %v3384 = vld [vmem:[#allocation8 + $0xac0] sm:$0xff]
    %v3385 = vld [vmem:[#allocation8 + $0xac8] sm:$0xff]
    %v3386 = vld [vmem:[#allocation8 + $0xad0] sm:$0xff]
    %v3387 = vld [vmem:[#allocation8 + $0xad8] sm:$0xff]
    %v3388 = vld [vmem:[#allocation8 + $0xae0] sm:$0xff]
    %v3389 = vld [vmem:[#allocation8 + $0xae8] sm:$0xff]
    %v3390 = vld [vmem:[#allocation8 + $0xaf0] sm:$0xff]
    %v3391 = vld [vmem:[#allocation8 + $0xaf8] sm:$0xff]
    %v3392 = vld [vmem:[#allocation8 + $0xb00] sm:$0xff]
    %v3393 = vld [vmem:[#allocation8 + $0xb08] sm:$0xff]
    %v3394 = vld [vmem:[#allocation8 + $0xb10] sm:$0xff]
    %v3395 = vld [vmem:[#allocation8 + $0xb18] sm:$0xff]
    %v3396 = vld [vmem:[#allocation8 + $0xb20] sm:$0xff]
    %v3397 = vld [vmem:[#allocation8 + $0xb28] sm:$0xff]
    %v3398 = vld [vmem:[#allocation8 + $0xb30] sm:$0xff]
    %v3399 = vld [vmem:[#allocation8 + $0xb38] sm:$0xff]
    %v3400 = vld [vmem:[#allocation8 + $0xb40] sm:$0xff]
    %v3401 = vld [vmem:[#allocation8 + $0xb48] sm:$0xff]
    %v3402 = vld [vmem:[#allocation8 + $0xb50] sm:$0xff]
    %v3403 = vld [vmem:[#allocation8 + $0xb58] sm:$0xff]
    %v3404 = vld [vmem:[#allocation8 + $0xb60] sm:$0xff]
    %v3405 = vld [vmem:[#allocation8 + $0xb68] sm:$0xff]
    %v3406 = vld [vmem:[#allocation8 + $0xb70] sm:$0xff]
    %v3407 = vld [vmem:[#allocation8 + $0xb78] sm:$0xff]
    %v3408 = vld [vmem:[#allocation8 + $0xb80] sm:$0xff]
    %v3409 = vld [vmem:[#allocation8 + $0xb88] sm:$0xff]
    %v3410 = vld [vmem:[#allocation8 + $0xb90] sm:$0xff]
    %v3411 = vld [vmem:[#allocation8 + $0xb98] sm:$0xff]
    %v3412 = vld [vmem:[#allocation8 + $0xba0] sm:$0xff]
    %v3413 = vld [vmem:[#allocation8 + $0xba8] sm:$0xff]
    %v3414 = vld [vmem:[#allocation8 + $0xbb0] sm:$0xff]
    %v3415 = vld [vmem:[#allocation8 + $0xbb8] sm:$0xff]
    %v3416 = vld [vmem:[#allocation8 + $0xbc0] sm:$0xff]
    %v3417 = vld [vmem:[#allocation8 + $0xbc8] sm:$0xff]
    %v3418 = vld [vmem:[#allocation8 + $0xbd0] sm:$0xff]
    %v3419 = vld [vmem:[#allocation8 + $0xbd8] sm:$0xff]
    %v3420 = vld [vmem:[#allocation8 + $0xbe0] sm:$0xff]
    %v3421 = vld [vmem:[#allocation8 + $0xbe8] sm:$0xff]
    %v3422 = vld [vmem:[#allocation8 + $0xbf0] sm:$0xff]
    %v3423 = vld [vmem:[#allocation8 + $0xbf8] sm:$0xff]
    %v3424 = vld [vmem:[#allocation8 + $0xc00] sm:$0xff]
    %v3425 = vld [vmem:[#allocation8 + $0xc08] sm:$0xff]
    %v3426 = vld [vmem:[#allocation8 + $0xc10] sm:$0xff]
    %v3427 = vld [vmem:[#allocation8 + $0xc18] sm:$0xff]
    %v3428 = vld [vmem:[#allocation8 + $0xc20] sm:$0xff]
    %v3429 = vld [vmem:[#allocation8 + $0xc28] sm:$0xff]
    %v3430 = vld [vmem:[#allocation8 + $0xc30] sm:$0xff]
    %v3431 = vld [vmem:[#allocation8 + $0xc38] sm:$0xff]
    %v3432 = vld [vmem:[#allocation8 + $0xc40] sm:$0xff]
    %v3433 = vld [vmem:[#allocation8 + $0xc48] sm:$0xff]
    %v3434 = vld [vmem:[#allocation8 + $0xc50] sm:$0xff]
    %v3435 = vld [vmem:[#allocation8 + $0xc58] sm:$0xff]
    %v3436 = vld [vmem:[#allocation8 + $0xc60] sm:$0xff]
    %v3437 = vld [vmem:[#allocation8 + $0xc68] sm:$0xff]
    %v3438 = vld [vmem:[#allocation8 + $0xc70] sm:$0xff]
    %v3439 = vld [vmem:[#allocation8 + $0xc78] sm:$0xff]
    %v3440 = vld [vmem:[#allocation8 + $0xc80] sm:$0xff]
    %v3441 = vld [vmem:[#allocation8 + $0xc88] sm:$0xff]
    %v3442 = vld [vmem:[#allocation8 + $0xc90] sm:$0xff]
    %v3443 = vld [vmem:[#allocation8 + $0xc98] sm:$0xff]
    %v3444 = vld [vmem:[#allocation8 + $0xca0] sm:$0xff]
    %v3445 = vld [vmem:[#allocation8 + $0xca8] sm:$0xff]
    %v3446 = vld [vmem:[#allocation8 + $0xcb0] sm:$0xff]
    %v3447 = vld [vmem:[#allocation8 + $0xcb8] sm:$0xff]
    %v3448 = vld [vmem:[#allocation8 + $0xcc0] sm:$0xff]
    %v3449 = vld [vmem:[#allocation8 + $0xcc8] sm:$0xff]
    %v3450 = vld [vmem:[#allocation8 + $0xcd0] sm:$0xff]
    %v3451 = vld [vmem:[#allocation8 + $0xcd8] sm:$0xff]
    %v3452 = vld [vmem:[#allocation8 + $0xce0] sm:$0xff]
    %v3453 = vld [vmem:[#allocation8 + $0xce8] sm:$0xff]
    %v3454 = vld [vmem:[#allocation8 + $0xcf0] sm:$0xff]
    %v3455 = vld [vmem:[#allocation8 + $0xcf8] sm:$0xff]
    %v3456 = vld [vmem:[#allocation8 + $0xd00] sm:$0xff]
    %v3457 = vld [vmem:[#allocation8 + $0xd08] sm:$0xff]
    %v3458 = vld [vmem:[#allocation8 + $0xd10] sm:$0xff]
    %v3459 = vld [vmem:[#allocation8 + $0xd18] sm:$0xff]
    %v3460 = vld [vmem:[#allocation8 + $0xd20] sm:$0xff]
    %v3461 = vld [vmem:[#allocation8 + $0xd28] sm:$0xff]
    %v3462 = vld [vmem:[#allocation8 + $0xd30] sm:$0xff]
    %v3463 = vld [vmem:[#allocation8 + $0xd38] sm:$0xff]
    %v3464 = vld [vmem:[#allocation8 + $0xd40] sm:$0xff]
    %v3465 = vld [vmem:[#allocation8 + $0xd48] sm:$0xff]
    %v3466 = vld [vmem:[#allocation8 + $0xd50] sm:$0xff]
    %v3467 = vld [vmem:[#allocation8 + $0xd58] sm:$0xff]
    %v3468 = vld [vmem:[#allocation8 + $0xd60] sm:$0xff]
    %v3469 = vld [vmem:[#allocation8 + $0xd68] sm:$0xff]
    %v3470 = vld [vmem:[#allocation8 + $0xd70] sm:$0xff]
    %v3471 = vld [vmem:[#allocation8 + $0xd78] sm:$0xff]
    %v3472 = vld [vmem:[#allocation8 + $0xd80] sm:$0xff]
    %v3473 = vld [vmem:[#allocation8 + $0xd88] sm:$0xff]
    %v3474 = vld [vmem:[#allocation8 + $0xd90] sm:$0xff]
    %v3475 = vld [vmem:[#allocation8 + $0xd98] sm:$0xff]
    %v3476 = vld [vmem:[#allocation8 + $0xda0] sm:$0xff]
    %v3477 = vld [vmem:[#allocation8 + $0xda8] sm:$0xff]
    %v3478 = vld [vmem:[#allocation8 + $0xdb0] sm:$0xff]
    %v3479 = vld [vmem:[#allocation8 + $0xdb8] sm:$0xff]
    %v3480 = vld [vmem:[#allocation8 + $0xdc0] sm:$0xff]
    %v3481 = vld [vmem:[#allocation8 + $0xdc8] sm:$0xff]
    %v3482 = vld [vmem:[#allocation8 + $0xdd0] sm:$0xff]
    %v3483 = vld [vmem:[#allocation8 + $0xdd8] sm:$0xff]
    %v3484 = vld [vmem:[#allocation8 + $0xde0] sm:$0xff]
    %v3485 = vld [vmem:[#allocation8 + $0xde8] sm:$0xff]
    %v3486 = vld [vmem:[#allocation8 + $0xdf0] sm:$0xff]
    %v3487 = vld [vmem:[#allocation8 + $0xdf8] sm:$0xff]
    %v3488 = vld [vmem:[#allocation8 + $0xe00] sm:$0xff]
    %v3489 = vld [vmem:[#allocation8 + $0xe08] sm:$0xff]
    %v3490 = vld [vmem:[#allocation8 + $0xe10] sm:$0xff]
    %v3491 = vld [vmem:[#allocation8 + $0xe18] sm:$0xff]
    %v3492 = vld [vmem:[#allocation8 + $0xe20] sm:$0xff]
    %v3493 = vld [vmem:[#allocation8 + $0xe28] sm:$0xff]
    %v3494 = vld [vmem:[#allocation8 + $0xe30] sm:$0xff]
    %v3495 = vld [vmem:[#allocation8 + $0xe38] sm:$0xff]
    %v3496 = vld [vmem:[#allocation8 + $0xe40] sm:$0xff]
    %v3497 = vld [vmem:[#allocation8 + $0xe48] sm:$0xff]
    %v3498 = vld [vmem:[#allocation8 + $0xe50] sm:$0xff]
    %v3499 = vld [vmem:[#allocation8 + $0xe58] sm:$0xff]
    %v3500 = vld [vmem:[#allocation8 + $0xe60] sm:$0xff]
    %v3501 = vld [vmem:[#allocation8 + $0xe68] sm:$0xff]
    %v3502 = vld [vmem:[#allocation8 + $0xe70] sm:$0xff]
    %v3503 = vld [vmem:[#allocation8 + $0xe78] sm:$0xff]
    %v3504 = vld [vmem:[#allocation8 + $0xe80] sm:$0xff]
    %v3505 = vld [vmem:[#allocation8 + $0xe88] sm:$0xff]
    %v3506 = vld [vmem:[#allocation8 + $0xe90] sm:$0xff]
    %v3507 = vld [vmem:[#allocation8 + $0xe98] sm:$0xff]
    %v3508 = vld [vmem:[#allocation8 + $0xea0] sm:$0xff]
    %v3509 = vld [vmem:[#allocation8 + $0xea8] sm:$0xff]
    %v3510 = vld [vmem:[#allocation8 + $0xeb0] sm:$0xff]
    %v3511 = vld [vmem:[#allocation8 + $0xeb8] sm:$0xff]
    %v3512 = vld [vmem:[#allocation8 + $0xec0] sm:$0xff]
    %v3513 = vld [vmem:[#allocation8 + $0xec8] sm:$0xff]
    %v3514 = vld [vmem:[#allocation8 + $0xed0] sm:$0xff]
    %v3515 = vld [vmem:[#allocation8 + $0xed8] sm:$0xff]
    %v3516 = vld [vmem:[#allocation8 + $0xee0] sm:$0xff]
    %v3517 = vld [vmem:[#allocation8 + $0xee8] sm:$0xff]
    %v3518 = vld [vmem:[#allocation8 + $0xef0] sm:$0xff]
    %v3519 = vld [vmem:[#allocation8 + $0xef8] sm:$0xff]
    %v3520 = vld [vmem:[#allocation8 + $0xf00] sm:$0xff]
    %v3521 = vld [vmem:[#allocation8 + $0xf08] sm:$0xff]
    %v3522 = vld [vmem:[#allocation8 + $0xf10] sm:$0xff]
    %v3523 = vld [vmem:[#allocation8 + $0xf18] sm:$0xff]
    %v3524 = vld [vmem:[#allocation8 + $0xf20] sm:$0xff]
    %v3525 = vld [vmem:[#allocation8 + $0xf28] sm:$0xff]
    %v3526 = vld [vmem:[#allocation8 + $0xf30] sm:$0xff]
    %v3527 = vld [vmem:[#allocation8 + $0xf38] sm:$0xff]
    %v3528 = vld [vmem:[#allocation8 + $0xf40] sm:$0xff]
    %v3529 = vld [vmem:[#allocation8 + $0xf48] sm:$0xff]
    %v3530 = vld [vmem:[#allocation8 + $0xf50] sm:$0xff]
    %v3531 = vld [vmem:[#allocation8 + $0xf58] sm:$0xff]
    %v3532 = vld [vmem:[#allocation8 + $0xf60] sm:$0xff]
    %v3533 = vld [vmem:[#allocation8 + $0xf68] sm:$0xff]
    %v3534 = vld [vmem:[#allocation8 + $0xf70] sm:$0xff]
    %v3535 = vld [vmem:[#allocation8 + $0xf78] sm:$0xff]
    %v3536 = vld [vmem:[#allocation8 + $0xf80] sm:$0xff]
    %v3537 = vld [vmem:[#allocation8 + $0xf88] sm:$0xff]
    %v3538 = vld [vmem:[#allocation8 + $0xf90] sm:$0xff]
    %v3539 = vld [vmem:[#allocation8 + $0xf98] sm:$0xff]
    %v3540 = vld [vmem:[#allocation8 + $0xfa0] sm:$0xff]
    %v3541 = vld [vmem:[#allocation8 + $0xfa8] sm:$0xff]
    %v3542 = vld [vmem:[#allocation8 + $0xfb0] sm:$0xff]
    %v3543 = vld [vmem:[#allocation8 + $0xfb8] sm:$0xff]
    %v3544 = vld [vmem:[#allocation8 + $0xfc0] sm:$0xff]
    %v3545 = vld [vmem:[#allocation8 + $0xfc8] sm:$0xff]
    %v3546 = vld [vmem:[#allocation8 + $0xfd0] sm:$0xff]
    %v3547 = vld [vmem:[#allocation8 + $0xfd8] sm:$0xff]
    %v3548 = vld [vmem:[#allocation8 + $0xfe0] sm:$0xff]
    %v3549 = vld [vmem:[#allocation8 + $0xfe8] sm:$0xff]
    %v3550 = vld [vmem:[#allocation8 + $0xff0] sm:$0xff]
    %v3551 = vld [vmem:[#allocation8 + $0xff8] sm:$0xff]
    %v3552 = vld [vmem:[#allocation10] sm:$0xff]
    %v3554 = vlaneseq
    %v3555 = vshrl.u32 %v3554, 7
    %v3556 = vsub.s32 0, %v3555
    %v3557 = vrot.slane %v3552, %v3556
    %v3558 = vlaneseq
    %v3559 = vshrl.u32 %v3558, 7
    %v3560 = vsub.s32 1, %v3559
    %v3561 = vrot.slane %v3552, %v3560
    %v3562 = vlaneseq
    %v3563 = vshrl.u32 %v3562, 7
    %v3564 = vsub.s32 2, %v3563
    %v3565 = vrot.slane %v3552, %v3564
    %v3566 = vlaneseq
    %v3567 = vshrl.u32 %v3566, 7
    %v3568 = vsub.s32 3, %v3567
    %v3569 = vrot.slane %v3552, %v3568
    %v3570 = vlaneseq
    %v3571 = vshrl.u32 %v3570, 7
    %v3572 = vsub.s32 4, %v3571
    %v3573 = vrot.slane %v3552, %v3572
    %v3574 = vlaneseq
    %v3575 = vshrl.u32 %v3574, 7
    %v3576 = vsub.s32 5, %v3575
    %v3577 = vrot.slane %v3552, %v3576
    %v3578 = vlaneseq
    %v3579 = vshrl.u32 %v3578, 7
    %v3580 = vsub.s32 6, %v3579
    %v3581 = vrot.slane %v3552, %v3580
    %v3582 = vlaneseq
    %v3583 = vshrl.u32 %v3582, 7
    %v3584 = vsub.s32 7, %v3583
    %v3585 = vrot.slane %v3552, %v3584
    %v4106 = vunpack.c.l.b16 %v3040
    %v4107 = vunpack.c.h.b16 %v3040
    %v4108 = vunpack.c.l.b16 %v3041
    %v4109 = vunpack.c.h.b16 %v3041
    %v4110 = vunpack.c.l.b16 %v3042
    %v4111 = vunpack.c.h.b16 %v3042
    %v4112 = vunpack.c.l.b16 %v3043
    %v4113 = vunpack.c.h.b16 %v3043
    %v4114 = vunpack.c.l.b16 %v3044
    %v4115 = vunpack.c.h.b16 %v3044
    %v4116 = vunpack.c.l.b16 %v3045
    %v4117 = vunpack.c.h.b16 %v3045
    %v4118 = vunpack.c.l.b16 %v3046
    %v4119 = vunpack.c.h.b16 %v3046
    %v4120 = vunpack.c.l.b16 %v3047
    %v4121 = vunpack.c.h.b16 %v3047
    %v4122 = vunpack.c.l.b16 %v3048
    %v4123 = vunpack.c.h.b16 %v3048
    %v4124 = vunpack.c.l.b16 %v3049
    %v4125 = vunpack.c.h.b16 %v3049
    %v4126 = vunpack.c.l.b16 %v3050
    %v4127 = vunpack.c.h.b16 %v3050
    %v4128 = vunpack.c.l.b16 %v3051
    %v4129 = vunpack.c.h.b16 %v3051
    %v4130 = vunpack.c.l.b16 %v3052
    %v4131 = vunpack.c.h.b16 %v3052
    %v4132 = vunpack.c.l.b16 %v3053
    %v4133 = vunpack.c.h.b16 %v3053
    %v4134 = vunpack.c.l.b16 %v3054
    %v4135 = vunpack.c.h.b16 %v3054
    %v4136 = vunpack.c.l.b16 %v3055
    %v4137 = vunpack.c.h.b16 %v3055
    %v4138 = vunpack.c.l.b16 %v3056
    %v4139 = vunpack.c.h.b16 %v3056
    %v4140 = vunpack.c.l.b16 %v3057
    %v4141 = vunpack.c.h.b16 %v3057
    %v4142 = vunpack.c.l.b16 %v3058
    %v4143 = vunpack.c.h.b16 %v3058
    %v4144 = vunpack.c.l.b16 %v3059
    %v4145 = vunpack.c.h.b16 %v3059
    %v4146 = vunpack.c.l.b16 %v3060
    %v4147 = vunpack.c.h.b16 %v3060
    %v4148 = vunpack.c.l.b16 %v3061
    %v4149 = vunpack.c.h.b16 %v3061
    %v4150 = vunpack.c.l.b16 %v3062
    %v4151 = vunpack.c.h.b16 %v3062
    %v4152 = vunpack.c.l.b16 %v3063
    %v4153 = vunpack.c.h.b16 %v3063
    %v4154 = vunpack.c.l.b16 %v3064
    %v4155 = vunpack.c.h.b16 %v3064
    %v4156 = vunpack.c.l.b16 %v3065
    %v4157 = vunpack.c.h.b16 %v3065
    %v4158 = vunpack.c.l.b16 %v3066
    %v4159 = vunpack.c.h.b16 %v3066
    %v4160 = vunpack.c.l.b16 %v3067
    %v4161 = vunpack.c.h.b16 %v3067
    %v4162 = vunpack.c.l.b16 %v3068
    %v4163 = vunpack.c.h.b16 %v3068
    %v4164 = vunpack.c.l.b16 %v3069
    %v4165 = vunpack.c.h.b16 %v3069
    %v4166 = vunpack.c.l.b16 %v3070
    %v4167 = vunpack.c.h.b16 %v3070
    %v4168 = vunpack.c.l.b16 %v3071
    %v4169 = vunpack.c.h.b16 %v3071
    %v4170 = vunpack.c.l.b16 %v3072
    %v4171 = vunpack.c.h.b16 %v3072
    %v4172 = vunpack.c.l.b16 %v3073
    %v4173 = vunpack.c.h.b16 %v3073
    %v4174 = vunpack.c.l.b16 %v3074
    %v4175 = vunpack.c.h.b16 %v3074
    %v4176 = vunpack.c.l.b16 %v3075
    %v4177 = vunpack.c.h.b16 %v3075
    %v4178 = vunpack.c.l.b16 %v3076
    %v4179 = vunpack.c.h.b16 %v3076
    %v4180 = vunpack.c.l.b16 %v3077
    %v4181 = vunpack.c.h.b16 %v3077
    %v4182 = vunpack.c.l.b16 %v3078
    %v4183 = vunpack.c.h.b16 %v3078
    %v4184 = vunpack.c.l.b16 %v3079
    %v4185 = vunpack.c.h.b16 %v3079
    %v4186 = vunpack.c.l.b16 %v3080
    %v4187 = vunpack.c.h.b16 %v3080
    %v4188 = vunpack.c.l.b16 %v3081
    %v4189 = vunpack.c.h.b16 %v3081
    %v4190 = vunpack.c.l.b16 %v3082
    %v4191 = vunpack.c.h.b16 %v3082
    %v4192 = vunpack.c.l.b16 %v3083
    %v4193 = vunpack.c.h.b16 %v3083
    %v4194 = vunpack.c.l.b16 %v3084
    %v4195 = vunpack.c.h.b16 %v3084
    %v4196 = vunpack.c.l.b16 %v3085
    %v4197 = vunpack.c.h.b16 %v3085
    %v4198 = vunpack.c.l.b16 %v3086
    %v4199 = vunpack.c.h.b16 %v3086
    %v4200 = vunpack.c.l.b16 %v3087
    %v4201 = vunpack.c.h.b16 %v3087
    %v4202 = vunpack.c.l.b16 %v3088
    %v4203 = vunpack.c.h.b16 %v3088
    %v4204 = vunpack.c.l.b16 %v3089
    %v4205 = vunpack.c.h.b16 %v3089
    %v4206 = vunpack.c.l.b16 %v3090
    %v4207 = vunpack.c.h.b16 %v3090
    %v4208 = vunpack.c.l.b16 %v3091
    %v4209 = vunpack.c.h.b16 %v3091
    %v4210 = vunpack.c.l.b16 %v3092
    %v4211 = vunpack.c.h.b16 %v3092
    %v4212 = vunpack.c.l.b16 %v3093
    %v4213 = vunpack.c.h.b16 %v3093
    %v4214 = vunpack.c.l.b16 %v3094
    %v4215 = vunpack.c.h.b16 %v3094
    %v4216 = vunpack.c.l.b16 %v3095
    %v4217 = vunpack.c.h.b16 %v3095
    %v4218 = vunpack.c.l.b16 %v3096
    %v4219 = vunpack.c.h.b16 %v3096
    %v4220 = vunpack.c.l.b16 %v3097
    %v4221 = vunpack.c.h.b16 %v3097
    %v4222 = vunpack.c.l.b16 %v3098
    %v4223 = vunpack.c.h.b16 %v3098
    %v4224 = vunpack.c.l.b16 %v3099
    %v4225 = vunpack.c.h.b16 %v3099
    %v4226 = vunpack.c.l.b16 %v3100
    %v4227 = vunpack.c.h.b16 %v3100
    %v4228 = vunpack.c.l.b16 %v3101
    %v4229 = vunpack.c.h.b16 %v3101
    %v4230 = vunpack.c.l.b16 %v3102
    %v4231 = vunpack.c.h.b16 %v3102
    %v4232 = vunpack.c.l.b16 %v3103
    %v4233 = vunpack.c.h.b16 %v3103
    %v4234 = vunpack.c.l.b16 %v3104
    %v4235 = vunpack.c.h.b16 %v3104
    %v4236 = vunpack.c.l.b16 %v3105
    %v4237 = vunpack.c.h.b16 %v3105
    %v4238 = vunpack.c.l.b16 %v3106
    %v4239 = vunpack.c.h.b16 %v3106
    %v4240 = vunpack.c.l.b16 %v3107
    %v4241 = vunpack.c.h.b16 %v3107
    %v4242 = vunpack.c.l.b16 %v3108
    %v4243 = vunpack.c.h.b16 %v3108
    %v4244 = vunpack.c.l.b16 %v3109
    %v4245 = vunpack.c.h.b16 %v3109
    %v4246 = vunpack.c.l.b16 %v3110
    %v4247 = vunpack.c.h.b16 %v3110
    %v4248 = vunpack.c.l.b16 %v3111
    %v4249 = vunpack.c.h.b16 %v3111
    %v4250 = vunpack.c.l.b16 %v3112
    %v4251 = vunpack.c.h.b16 %v3112
    %v4252 = vunpack.c.l.b16 %v3113
    %v4253 = vunpack.c.h.b16 %v3113
    %v4254 = vunpack.c.l.b16 %v3114
    %v4255 = vunpack.c.h.b16 %v3114
    %v4256 = vunpack.c.l.b16 %v3115
    %v4257 = vunpack.c.h.b16 %v3115
    %v4258 = vunpack.c.l.b16 %v3116
    %v4259 = vunpack.c.h.b16 %v3116
    %v4260 = vunpack.c.l.b16 %v3117
    %v4261 = vunpack.c.h.b16 %v3117
    %v4262 = vunpack.c.l.b16 %v3118
    %v4263 = vunpack.c.h.b16 %v3118
    %v4264 = vunpack.c.l.b16 %v3119
    %v4265 = vunpack.c.h.b16 %v3119
    %v4266 = vunpack.c.l.b16 %v3120
    %v4267 = vunpack.c.h.b16 %v3120
    %v4268 = vunpack.c.l.b16 %v3121
    %v4269 = vunpack.c.h.b16 %v3121
    %v4270 = vunpack.c.l.b16 %v3122
    %v4271 = vunpack.c.h.b16 %v3122
    %v4272 = vunpack.c.l.b16 %v3123
    %v4273 = vunpack.c.h.b16 %v3123
    %v4274 = vunpack.c.l.b16 %v3124
    %v4275 = vunpack.c.h.b16 %v3124
    %v4276 = vunpack.c.l.b16 %v3125
    %v4277 = vunpack.c.h.b16 %v3125
    %v4278 = vunpack.c.l.b16 %v3126
    %v4279 = vunpack.c.h.b16 %v3126
    %v4280 = vunpack.c.l.b16 %v3127
    %v4281 = vunpack.c.h.b16 %v3127
    %v4282 = vunpack.c.l.b16 %v3128
    %v4283 = vunpack.c.h.b16 %v3128
    %v4284 = vunpack.c.l.b16 %v3129
    %v4285 = vunpack.c.h.b16 %v3129
    %v4286 = vunpack.c.l.b16 %v3130
    %v4287 = vunpack.c.h.b16 %v3130
    %v4288 = vunpack.c.l.b16 %v3131
    %v4289 = vunpack.c.h.b16 %v3131
    %v4290 = vunpack.c.l.b16 %v3132
    %v4291 = vunpack.c.h.b16 %v3132
    %v4292 = vunpack.c.l.b16 %v3133
    %v4293 = vunpack.c.h.b16 %v3133
    %v4294 = vunpack.c.l.b16 %v3134
    %v4295 = vunpack.c.h.b16 %v3134
    %v4296 = vunpack.c.l.b16 %v3135
    %v4297 = vunpack.c.h.b16 %v3135
    %v4298 = vunpack.c.l.b16 %v3136
    %v4299 = vunpack.c.h.b16 %v3136
    %v4300 = vunpack.c.l.b16 %v3137
    %v4301 = vunpack.c.h.b16 %v3137
    %v4302 = vunpack.c.l.b16 %v3138
    %v4303 = vunpack.c.h.b16 %v3138
    %v4304 = vunpack.c.l.b16 %v3139
    %v4305 = vunpack.c.h.b16 %v3139
    %v4306 = vunpack.c.l.b16 %v3140
    %v4307 = vunpack.c.h.b16 %v3140
    %v4308 = vunpack.c.l.b16 %v3141
    %v4309 = vunpack.c.h.b16 %v3141
    %v4310 = vunpack.c.l.b16 %v3142
    %v4311 = vunpack.c.h.b16 %v3142
    %v4312 = vunpack.c.l.b16 %v3143
    %v4313 = vunpack.c.h.b16 %v3143
    %v4314 = vunpack.c.l.b16 %v3144
    %v4315 = vunpack.c.h.b16 %v3144
    %v4316 = vunpack.c.l.b16 %v3145
    %v4317 = vunpack.c.h.b16 %v3145
    %v4318 = vunpack.c.l.b16 %v3146
    %v4319 = vunpack.c.h.b16 %v3146
    %v4320 = vunpack.c.l.b16 %v3147
    %v4321 = vunpack.c.h.b16 %v3147
    %v4322 = vunpack.c.l.b16 %v3148
    %v4323 = vunpack.c.h.b16 %v3148
    %v4324 = vunpack.c.l.b16 %v3149
    %v4325 = vunpack.c.h.b16 %v3149
    %v4326 = vunpack.c.l.b16 %v3150
    %v4327 = vunpack.c.h.b16 %v3150
    %v4328 = vunpack.c.l.b16 %v3151
    %v4329 = vunpack.c.h.b16 %v3151
    %v4330 = vunpack.c.l.b16 %v3152
    %v4331 = vunpack.c.h.b16 %v3152
    %v4332 = vunpack.c.l.b16 %v3153
    %v4333 = vunpack.c.h.b16 %v3153
    %v4334 = vunpack.c.l.b16 %v3154
    %v4335 = vunpack.c.h.b16 %v3154
    %v4336 = vunpack.c.l.b16 %v3155
    %v4337 = vunpack.c.h.b16 %v3155
    %v4338 = vunpack.c.l.b16 %v3156
    %v4339 = vunpack.c.h.b16 %v3156
    %v4340 = vunpack.c.l.b16 %v3157
    %v4341 = vunpack.c.h.b16 %v3157
    %v4342 = vunpack.c.l.b16 %v3158
    %v4343 = vunpack.c.h.b16 %v3158
    %v4344 = vunpack.c.l.b16 %v3159
    %v4345 = vunpack.c.h.b16 %v3159
    %v4346 = vunpack.c.l.b16 %v3160
    %v4347 = vunpack.c.h.b16 %v3160
    %v4348 = vunpack.c.l.b16 %v3161
    %v4349 = vunpack.c.h.b16 %v3161
    %v4350 = vunpack.c.l.b16 %v3162
    %v4351 = vunpack.c.h.b16 %v3162
    %v4352 = vunpack.c.l.b16 %v3163
    %v4353 = vunpack.c.h.b16 %v3163
    %v4354 = vunpack.c.l.b16 %v3164
    %v4355 = vunpack.c.h.b16 %v3164
    %v4356 = vunpack.c.l.b16 %v3165
    %v4357 = vunpack.c.h.b16 %v3165
    %v4358 = vunpack.c.l.b16 %v3166
    %v4359 = vunpack.c.h.b16 %v3166
    %v4360 = vunpack.c.l.b16 %v3167
    %v4361 = vunpack.c.h.b16 %v3167
    %v4362 = vunpack.c.l.b16 %v3168
    %v4363 = vunpack.c.h.b16 %v3168
    %v4364 = vunpack.c.l.b16 %v3169
    %v4365 = vunpack.c.h.b16 %v3169
    %v4366 = vunpack.c.l.b16 %v3170
    %v4367 = vunpack.c.h.b16 %v3170
    %v4368 = vunpack.c.l.b16 %v3171
    %v4369 = vunpack.c.h.b16 %v3171
    %v4370 = vunpack.c.l.b16 %v3172
    %v4371 = vunpack.c.h.b16 %v3172
    %v4372 = vunpack.c.l.b16 %v3173
    %v4373 = vunpack.c.h.b16 %v3173
    %v4374 = vunpack.c.l.b16 %v3174
    %v4375 = vunpack.c.h.b16 %v3174
    %v4376 = vunpack.c.l.b16 %v3175
    %v4377 = vunpack.c.h.b16 %v3175
    %v4378 = vunpack.c.l.b16 %v3176
    %v4379 = vunpack.c.h.b16 %v3176
    %v4380 = vunpack.c.l.b16 %v3177
    %v4381 = vunpack.c.h.b16 %v3177
    %v4382 = vunpack.c.l.b16 %v3178
    %v4383 = vunpack.c.h.b16 %v3178
    %v4384 = vunpack.c.l.b16 %v3179
    %v4385 = vunpack.c.h.b16 %v3179
    %v4386 = vunpack.c.l.b16 %v3180
    %v4387 = vunpack.c.h.b16 %v3180
    %v4388 = vunpack.c.l.b16 %v3181
    %v4389 = vunpack.c.h.b16 %v3181
    %v4390 = vunpack.c.l.b16 %v3182
    %v4391 = vunpack.c.h.b16 %v3182
    %v4392 = vunpack.c.l.b16 %v3183
    %v4393 = vunpack.c.h.b16 %v3183
    %v4394 = vunpack.c.l.b16 %v3184
    %v4395 = vunpack.c.h.b16 %v3184
    %v4396 = vunpack.c.l.b16 %v3185
    %v4397 = vunpack.c.h.b16 %v3185
    %v4398 = vunpack.c.l.b16 %v3186
    %v4399 = vunpack.c.h.b16 %v3186
    %v4400 = vunpack.c.l.b16 %v3187
    %v4401 = vunpack.c.h.b16 %v3187
    %v4402 = vunpack.c.l.b16 %v3188
    %v4403 = vunpack.c.h.b16 %v3188
    %v4404 = vunpack.c.l.b16 %v3189
    %v4405 = vunpack.c.h.b16 %v3189
    %v4406 = vunpack.c.l.b16 %v3190
    %v4407 = vunpack.c.h.b16 %v3190
    %v4408 = vunpack.c.l.b16 %v3191
    %v4409 = vunpack.c.h.b16 %v3191
    %v4410 = vunpack.c.l.b16 %v3192
    %v4411 = vunpack.c.h.b16 %v3192
    %v4412 = vunpack.c.l.b16 %v3193
    %v4413 = vunpack.c.h.b16 %v3193
    %v4414 = vunpack.c.l.b16 %v3194
    %v4415 = vunpack.c.h.b16 %v3194
    %v4416 = vunpack.c.l.b16 %v3195
    %v4417 = vunpack.c.h.b16 %v3195
    %v4418 = vunpack.c.l.b16 %v3196
    %v4419 = vunpack.c.h.b16 %v3196
    %v4420 = vunpack.c.l.b16 %v3197
    %v4421 = vunpack.c.h.b16 %v3197
    %v4422 = vunpack.c.l.b16 %v3198
    %v4423 = vunpack.c.h.b16 %v3198
    %v4424 = vunpack.c.l.b16 %v3199
    %v4425 = vunpack.c.h.b16 %v3199
    %v4426 = vunpack.c.l.b16 %v3200
    %v4427 = vunpack.c.h.b16 %v3200
    %v4428 = vunpack.c.l.b16 %v3201
    %v4429 = vunpack.c.h.b16 %v3201
    %v4430 = vunpack.c.l.b16 %v3202
    %v4431 = vunpack.c.h.b16 %v3202
    %v4432 = vunpack.c.l.b16 %v3203
    %v4433 = vunpack.c.h.b16 %v3203
    %v4434 = vunpack.c.l.b16 %v3204
    %v4435 = vunpack.c.h.b16 %v3204
    %v4436 = vunpack.c.l.b16 %v3205
    %v4437 = vunpack.c.h.b16 %v3205
    %v4438 = vunpack.c.l.b16 %v3206
    %v4439 = vunpack.c.h.b16 %v3206
    %v4440 = vunpack.c.l.b16 %v3207
    %v4441 = vunpack.c.h.b16 %v3207
    %v4442 = vunpack.c.l.b16 %v3208
    %v4443 = vunpack.c.h.b16 %v3208
    %v4444 = vunpack.c.l.b16 %v3209
    %v4445 = vunpack.c.h.b16 %v3209
    %v4446 = vunpack.c.l.b16 %v3210
    %v4447 = vunpack.c.h.b16 %v3210
    %v4448 = vunpack.c.l.b16 %v3211
    %v4449 = vunpack.c.h.b16 %v3211
    %v4450 = vunpack.c.l.b16 %v3212
    %v4451 = vunpack.c.h.b16 %v3212
    %v4452 = vunpack.c.l.b16 %v3213
    %v4453 = vunpack.c.h.b16 %v3213
    %v4454 = vunpack.c.l.b16 %v3214
    %v4455 = vunpack.c.h.b16 %v3214
    %v4456 = vunpack.c.l.b16 %v3215
    %v4457 = vunpack.c.h.b16 %v3215
    %v4458 = vunpack.c.l.b16 %v3216
    %v4459 = vunpack.c.h.b16 %v3216
    %v4460 = vunpack.c.l.b16 %v3217
    %v4461 = vunpack.c.h.b16 %v3217
    %v4462 = vunpack.c.l.b16 %v3218
    %v4463 = vunpack.c.h.b16 %v3218
    %v4464 = vunpack.c.l.b16 %v3219
    %v4465 = vunpack.c.h.b16 %v3219
    %v4466 = vunpack.c.l.b16 %v3220
    %v4467 = vunpack.c.h.b16 %v3220
    %v4468 = vunpack.c.l.b16 %v3221
    %v4469 = vunpack.c.h.b16 %v3221
    %v4470 = vunpack.c.l.b16 %v3222
    %v4471 = vunpack.c.h.b16 %v3222
    %v4472 = vunpack.c.l.b16 %v3223
    %v4473 = vunpack.c.h.b16 %v3223
    %v4474 = vunpack.c.l.b16 %v3224
    %v4475 = vunpack.c.h.b16 %v3224
    %v4476 = vunpack.c.l.b16 %v3225
    %v4477 = vunpack.c.h.b16 %v3225
    %v4478 = vunpack.c.l.b16 %v3226
    %v4479 = vunpack.c.h.b16 %v3226
    %v4480 = vunpack.c.l.b16 %v3227
    %v4481 = vunpack.c.h.b16 %v3227
    %v4482 = vunpack.c.l.b16 %v3228
    %v4483 = vunpack.c.h.b16 %v3228
    %v4484 = vunpack.c.l.b16 %v3229
    %v4485 = vunpack.c.h.b16 %v3229
    %v4486 = vunpack.c.l.b16 %v3230
    %v4487 = vunpack.c.h.b16 %v3230
    %v4488 = vunpack.c.l.b16 %v3231
    %v4489 = vunpack.c.h.b16 %v3231
    %v4490 = vunpack.c.l.b16 %v3232
    %v4491 = vunpack.c.h.b16 %v3232
    %v4492 = vunpack.c.l.b16 %v3233
    %v4493 = vunpack.c.h.b16 %v3233
    %v4494 = vunpack.c.l.b16 %v3234
    %v4495 = vunpack.c.h.b16 %v3234
    %v4496 = vunpack.c.l.b16 %v3235
    %v4497 = vunpack.c.h.b16 %v3235
    %v4498 = vunpack.c.l.b16 %v3236
    %v4499 = vunpack.c.h.b16 %v3236
    %v4500 = vunpack.c.l.b16 %v3237
    %v4501 = vunpack.c.h.b16 %v3237
    %v4502 = vunpack.c.l.b16 %v3238
    %v4503 = vunpack.c.h.b16 %v3238
    %v4504 = vunpack.c.l.b16 %v3239
    %v4505 = vunpack.c.h.b16 %v3239
    %v4506 = vunpack.c.l.b16 %v3240
    %v4507 = vunpack.c.h.b16 %v3240
    %v4508 = vunpack.c.l.b16 %v3241
    %v4509 = vunpack.c.h.b16 %v3241
    %v4510 = vunpack.c.l.b16 %v3242
    %v4511 = vunpack.c.h.b16 %v3242
    %v4512 = vunpack.c.l.b16 %v3243
    %v4513 = vunpack.c.h.b16 %v3243
    %v4514 = vunpack.c.l.b16 %v3244
    %v4515 = vunpack.c.h.b16 %v3244
    %v4516 = vunpack.c.l.b16 %v3245
    %v4517 = vunpack.c.h.b16 %v3245
    %v4518 = vunpack.c.l.b16 %v3246
    %v4519 = vunpack.c.h.b16 %v3246
    %v4520 = vunpack.c.l.b16 %v3247
    %v4521 = vunpack.c.h.b16 %v3247
    %v4522 = vunpack.c.l.b16 %v3248
    %v4523 = vunpack.c.h.b16 %v3248
    %v4524 = vunpack.c.l.b16 %v3249
    %v4525 = vunpack.c.h.b16 %v3249
    %v4526 = vunpack.c.l.b16 %v3250
    %v4527 = vunpack.c.h.b16 %v3250
    %v4528 = vunpack.c.l.b16 %v3251
    %v4529 = vunpack.c.h.b16 %v3251
    %v4530 = vunpack.c.l.b16 %v3252
    %v4531 = vunpack.c.h.b16 %v3252
    %v4532 = vunpack.c.l.b16 %v3253
    %v4533 = vunpack.c.h.b16 %v3253
    %v4534 = vunpack.c.l.b16 %v3254
    %v4535 = vunpack.c.h.b16 %v3254
    %v4536 = vunpack.c.l.b16 %v3255
    %v4537 = vunpack.c.h.b16 %v3255
    %v4538 = vunpack.c.l.b16 %v3256
    %v4539 = vunpack.c.h.b16 %v3256
    %v4540 = vunpack.c.l.b16 %v3257
    %v4541 = vunpack.c.h.b16 %v3257
    %v4542 = vunpack.c.l.b16 %v3258
    %v4543 = vunpack.c.h.b16 %v3258
    %v4544 = vunpack.c.l.b16 %v3259
    %v4545 = vunpack.c.h.b16 %v3259
    %v4546 = vunpack.c.l.b16 %v3260
    %v4547 = vunpack.c.h.b16 %v3260
    %v4548 = vunpack.c.l.b16 %v3261
    %v4549 = vunpack.c.h.b16 %v3261
    %v4550 = vunpack.c.l.b16 %v3262
    %v4551 = vunpack.c.h.b16 %v3262
    %v4552 = vunpack.c.l.b16 %v3263
    %v4553 = vunpack.c.h.b16 %v3263
    %v4554 = vunpack.c.l.b16 %v3264
    %v4555 = vunpack.c.h.b16 %v3264
    %v4556 = vunpack.c.l.b16 %v3265
    %v4557 = vunpack.c.h.b16 %v3265
    %v4558 = vunpack.c.l.b16 %v3266
    %v4559 = vunpack.c.h.b16 %v3266
    %v4560 = vunpack.c.l.b16 %v3267
    %v4561 = vunpack.c.h.b16 %v3267
    %v4562 = vunpack.c.l.b16 %v3268
    %v4563 = vunpack.c.h.b16 %v3268
    %v4564 = vunpack.c.l.b16 %v3269
    %v4565 = vunpack.c.h.b16 %v3269
    %v4566 = vunpack.c.l.b16 %v3270
    %v4567 = vunpack.c.h.b16 %v3270
    %v4568 = vunpack.c.l.b16 %v3271
    %v4569 = vunpack.c.h.b16 %v3271
    %v4570 = vunpack.c.l.b16 %v3272
    %v4571 = vunpack.c.h.b16 %v3272
    %v4572 = vunpack.c.l.b16 %v3273
    %v4573 = vunpack.c.h.b16 %v3273
    %v4574 = vunpack.c.l.b16 %v3274
    %v4575 = vunpack.c.h.b16 %v3274
    %v4576 = vunpack.c.l.b16 %v3275
    %v4577 = vunpack.c.h.b16 %v3275
    %v4578 = vunpack.c.l.b16 %v3276
    %v4579 = vunpack.c.h.b16 %v3276
    %v4580 = vunpack.c.l.b16 %v3277
    %v4581 = vunpack.c.h.b16 %v3277
    %v4582 = vunpack.c.l.b16 %v3278
    %v4583 = vunpack.c.h.b16 %v3278
    %v4584 = vunpack.c.l.b16 %v3279
    %v4585 = vunpack.c.h.b16 %v3279
    %v4586 = vunpack.c.l.b16 %v3280
    %v4587 = vunpack.c.h.b16 %v3280
    %v4588 = vunpack.c.l.b16 %v3281
    %v4589 = vunpack.c.h.b16 %v3281
    %v4590 = vunpack.c.l.b16 %v3282
    %v4591 = vunpack.c.h.b16 %v3282
    %v4592 = vunpack.c.l.b16 %v3283
    %v4593 = vunpack.c.h.b16 %v3283
    %v4594 = vunpack.c.l.b16 %v3284
    %v4595 = vunpack.c.h.b16 %v3284
    %v4596 = vunpack.c.l.b16 %v3285
    %v4597 = vunpack.c.h.b16 %v3285
    %v4598 = vunpack.c.l.b16 %v3286
    %v4599 = vunpack.c.h.b16 %v3286
    %v4600 = vunpack.c.l.b16 %v3287
    %v4601 = vunpack.c.h.b16 %v3287
    %v4602 = vunpack.c.l.b16 %v3288
    %v4603 = vunpack.c.h.b16 %v3288
    %v4604 = vunpack.c.l.b16 %v3289
    %v4605 = vunpack.c.h.b16 %v3289
    %v4606 = vunpack.c.l.b16 %v3290
    %v4607 = vunpack.c.h.b16 %v3290
    %v4608 = vunpack.c.l.b16 %v3291
    %v4609 = vunpack.c.h.b16 %v3291
    %v4610 = vunpack.c.l.b16 %v3292
    %v4611 = vunpack.c.h.b16 %v3292
    %v4612 = vunpack.c.l.b16 %v3293
    %v4613 = vunpack.c.h.b16 %v3293
    %v4614 = vunpack.c.l.b16 %v3294
    %v4615 = vunpack.c.h.b16 %v3294
    %v4616 = vunpack.c.l.b16 %v3295
    %v4617 = vunpack.c.h.b16 %v3295
    %v4618 = vunpack.c.l.b16 %v3296
    %v4619 = vunpack.c.h.b16 %v3296
    %v4620 = vunpack.c.l.b16 %v3297
    %v4621 = vunpack.c.h.b16 %v3297
    %v4622 = vunpack.c.l.b16 %v3298
    %v4623 = vunpack.c.h.b16 %v3298
    %v4624 = vunpack.c.l.b16 %v3299
    %v4625 = vunpack.c.h.b16 %v3299
    %v4626 = vunpack.c.l.b16 %v3300
    %v4627 = vunpack.c.h.b16 %v3300
    %v4628 = vunpack.c.l.b16 %v3301
    %v4629 = vunpack.c.h.b16 %v3301
    %v4630 = vunpack.c.l.b16 %v3302
    %v4631 = vunpack.c.h.b16 %v3302
    %v4632 = vunpack.c.l.b16 %v3303
    %v4633 = vunpack.c.h.b16 %v3303
    %v4634 = vunpack.c.l.b16 %v3304
    %v4635 = vunpack.c.h.b16 %v3304
    %v4636 = vunpack.c.l.b16 %v3305
    %v4637 = vunpack.c.h.b16 %v3305
    %v4638 = vunpack.c.l.b16 %v3306
    %v4639 = vunpack.c.h.b16 %v3306
    %v4640 = vunpack.c.l.b16 %v3307
    %v4641 = vunpack.c.h.b16 %v3307
    %v4642 = vunpack.c.l.b16 %v3308
    %v4643 = vunpack.c.h.b16 %v3308
    %v4644 = vunpack.c.l.b16 %v3309
    %v4645 = vunpack.c.h.b16 %v3309
    %v4646 = vunpack.c.l.b16 %v3310
    %v4647 = vunpack.c.h.b16 %v3310
    %v4648 = vunpack.c.l.b16 %v3311
    %v4649 = vunpack.c.h.b16 %v3311
    %v4650 = vunpack.c.l.b16 %v3312
    %v4651 = vunpack.c.h.b16 %v3312
    %v4652 = vunpack.c.l.b16 %v3313
    %v4653 = vunpack.c.h.b16 %v3313
    %v4654 = vunpack.c.l.b16 %v3314
    %v4655 = vunpack.c.h.b16 %v3314
    %v4656 = vunpack.c.l.b16 %v3315
    %v4657 = vunpack.c.h.b16 %v3315
    %v4658 = vunpack.c.l.b16 %v3316
    %v4659 = vunpack.c.h.b16 %v3316
    %v4660 = vunpack.c.l.b16 %v3317
    %v4661 = vunpack.c.h.b16 %v3317
    %v4662 = vunpack.c.l.b16 %v3318
    %v4663 = vunpack.c.h.b16 %v3318
    %v4664 = vunpack.c.l.b16 %v3319
    %v4665 = vunpack.c.h.b16 %v3319
    %v4666 = vunpack.c.l.b16 %v3320
    %v4667 = vunpack.c.h.b16 %v3320
    %v4668 = vunpack.c.l.b16 %v3321
    %v4669 = vunpack.c.h.b16 %v3321
    %v4670 = vunpack.c.l.b16 %v3322
    %v4671 = vunpack.c.h.b16 %v3322
    %v4672 = vunpack.c.l.b16 %v3323
    %v4673 = vunpack.c.h.b16 %v3323
    %v4674 = vunpack.c.l.b16 %v3324
    %v4675 = vunpack.c.h.b16 %v3324
    %v4676 = vunpack.c.l.b16 %v3325
    %v4677 = vunpack.c.h.b16 %v3325
    %v4678 = vunpack.c.l.b16 %v3326
    %v4679 = vunpack.c.h.b16 %v3326
    %v4680 = vunpack.c.l.b16 %v3327
    %v4681 = vunpack.c.h.b16 %v3327
    %v4682 = vunpack.c.l.b16 %v3328
    %v4683 = vunpack.c.h.b16 %v3328
    %v4684 = vunpack.c.l.b16 %v3329
    %v4685 = vunpack.c.h.b16 %v3329
    %v4686 = vunpack.c.l.b16 %v3330
    %v4687 = vunpack.c.h.b16 %v3330
    %v4688 = vunpack.c.l.b16 %v3331
    %v4689 = vunpack.c.h.b16 %v3331
    %v4690 = vunpack.c.l.b16 %v3332
    %v4691 = vunpack.c.h.b16 %v3332
    %v4692 = vunpack.c.l.b16 %v3333
    %v4693 = vunpack.c.h.b16 %v3333
    %v4694 = vunpack.c.l.b16 %v3334
    %v4695 = vunpack.c.h.b16 %v3334
    %v4696 = vunpack.c.l.b16 %v3335
    %v4697 = vunpack.c.h.b16 %v3335
    %v4698 = vunpack.c.l.b16 %v3336
    %v4699 = vunpack.c.h.b16 %v3336
    %v4700 = vunpack.c.l.b16 %v3337
    %v4701 = vunpack.c.h.b16 %v3337
    %v4702 = vunpack.c.l.b16 %v3338
    %v4703 = vunpack.c.h.b16 %v3338
    %v4704 = vunpack.c.l.b16 %v3339
    %v4705 = vunpack.c.h.b16 %v3339
    %v4706 = vunpack.c.l.b16 %v3340
    %v4707 = vunpack.c.h.b16 %v3340
    %v4708 = vunpack.c.l.b16 %v3341
    %v4709 = vunpack.c.h.b16 %v3341
    %v4710 = vunpack.c.l.b16 %v3342
    %v4711 = vunpack.c.h.b16 %v3342
    %v4712 = vunpack.c.l.b16 %v3343
    %v4713 = vunpack.c.h.b16 %v3343
    %v4714 = vunpack.c.l.b16 %v3344
    %v4715 = vunpack.c.h.b16 %v3344
    %v4716 = vunpack.c.l.b16 %v3345
    %v4717 = vunpack.c.h.b16 %v3345
    %v4718 = vunpack.c.l.b16 %v3346
    %v4719 = vunpack.c.h.b16 %v3346
    %v4720 = vunpack.c.l.b16 %v3347
    %v4721 = vunpack.c.h.b16 %v3347
    %v4722 = vunpack.c.l.b16 %v3348
    %v4723 = vunpack.c.h.b16 %v3348
    %v4724 = vunpack.c.l.b16 %v3349
    %v4725 = vunpack.c.h.b16 %v3349
    %v4726 = vunpack.c.l.b16 %v3350
    %v4727 = vunpack.c.h.b16 %v3350
    %v4728 = vunpack.c.l.b16 %v3351
    %v4729 = vunpack.c.h.b16 %v3351
    %v4730 = vunpack.c.l.b16 %v3352
    %v4731 = vunpack.c.h.b16 %v3352
    %v4732 = vunpack.c.l.b16 %v3353
    %v4733 = vunpack.c.h.b16 %v3353
    %v4734 = vunpack.c.l.b16 %v3354
    %v4735 = vunpack.c.h.b16 %v3354
    %v4736 = vunpack.c.l.b16 %v3355
    %v4737 = vunpack.c.h.b16 %v3355
    %v4738 = vunpack.c.l.b16 %v3356
    %v4739 = vunpack.c.h.b16 %v3356
    %v4740 = vunpack.c.l.b16 %v3357
    %v4741 = vunpack.c.h.b16 %v3357
    %v4742 = vunpack.c.l.b16 %v3358
    %v4743 = vunpack.c.h.b16 %v3358
    %v4744 = vunpack.c.l.b16 %v3359
    %v4745 = vunpack.c.h.b16 %v3359
    %v4746 = vunpack.c.l.b16 %v3360
    %v4747 = vunpack.c.h.b16 %v3360
    %v4748 = vunpack.c.l.b16 %v3361
    %v4749 = vunpack.c.h.b16 %v3361
    %v4750 = vunpack.c.l.b16 %v3362
    %v4751 = vunpack.c.h.b16 %v3362
    %v4752 = vunpack.c.l.b16 %v3363
    %v4753 = vunpack.c.h.b16 %v3363
    %v4754 = vunpack.c.l.b16 %v3364
    %v4755 = vunpack.c.h.b16 %v3364
    %v4756 = vunpack.c.l.b16 %v3365
    %v4757 = vunpack.c.h.b16 %v3365
    %v4758 = vunpack.c.l.b16 %v3366
    %v4759 = vunpack.c.h.b16 %v3366
    %v4760 = vunpack.c.l.b16 %v3367
    %v4761 = vunpack.c.h.b16 %v3367
    %v4762 = vunpack.c.l.b16 %v3368
    %v4763 = vunpack.c.h.b16 %v3368
    %v4764 = vunpack.c.l.b16 %v3369
    %v4765 = vunpack.c.h.b16 %v3369
    %v4766 = vunpack.c.l.b16 %v3370
    %v4767 = vunpack.c.h.b16 %v3370
    %v4768 = vunpack.c.l.b16 %v3371
    %v4769 = vunpack.c.h.b16 %v3371
    %v4770 = vunpack.c.l.b16 %v3372
    %v4771 = vunpack.c.h.b16 %v3372
    %v4772 = vunpack.c.l.b16 %v3373
    %v4773 = vunpack.c.h.b16 %v3373
    %v4774 = vunpack.c.l.b16 %v3374
    %v4775 = vunpack.c.h.b16 %v3374
    %v4776 = vunpack.c.l.b16 %v3375
    %v4777 = vunpack.c.h.b16 %v3375
    %v4778 = vunpack.c.l.b16 %v3376
    %v4779 = vunpack.c.h.b16 %v3376
    %v4780 = vunpack.c.l.b16 %v3377
    %v4781 = vunpack.c.h.b16 %v3377
    %v4782 = vunpack.c.l.b16 %v3378
    %v4783 = vunpack.c.h.b16 %v3378
    %v4784 = vunpack.c.l.b16 %v3379
    %v4785 = vunpack.c.h.b16 %v3379
    %v4786 = vunpack.c.l.b16 %v3380
    %v4787 = vunpack.c.h.b16 %v3380
    %v4788 = vunpack.c.l.b16 %v3381
    %v4789 = vunpack.c.h.b16 %v3381
    %v4790 = vunpack.c.l.b16 %v3382
    %v4791 = vunpack.c.h.b16 %v3382
    %v4792 = vunpack.c.l.b16 %v3383
    %v4793 = vunpack.c.h.b16 %v3383
    %v4794 = vunpack.c.l.b16 %v3384
    %v4795 = vunpack.c.h.b16 %v3384
    %v4796 = vunpack.c.l.b16 %v3385
    %v4797 = vunpack.c.h.b16 %v3385
    %v4798 = vunpack.c.l.b16 %v3386
    %v4799 = vunpack.c.h.b16 %v3386
    %v4800 = vunpack.c.l.b16 %v3387
    %v4801 = vunpack.c.h.b16 %v3387
    %v4802 = vunpack.c.l.b16 %v3388
    %v4803 = vunpack.c.h.b16 %v3388
    %v4804 = vunpack.c.l.b16 %v3389
    %v4805 = vunpack.c.h.b16 %v3389
    %v4806 = vunpack.c.l.b16 %v3390
    %v4807 = vunpack.c.h.b16 %v3390
    %v4808 = vunpack.c.l.b16 %v3391
    %v4809 = vunpack.c.h.b16 %v3391
    %v4810 = vunpack.c.l.b16 %v3392
    %v4811 = vunpack.c.h.b16 %v3392
    %v4812 = vunpack.c.l.b16 %v3393
    %v4813 = vunpack.c.h.b16 %v3393
    %v4814 = vunpack.c.l.b16 %v3394
    %v4815 = vunpack.c.h.b16 %v3394
    %v4816 = vunpack.c.l.b16 %v3395
    %v4817 = vunpack.c.h.b16 %v3395
    %v4818 = vunpack.c.l.b16 %v3396
    %v4819 = vunpack.c.h.b16 %v3396
    %v4820 = vunpack.c.l.b16 %v3397
    %v4821 = vunpack.c.h.b16 %v3397
    %v4822 = vunpack.c.l.b16 %v3398
    %v4823 = vunpack.c.h.b16 %v3398
    %v4824 = vunpack.c.l.b16 %v3399
    %v4825 = vunpack.c.h.b16 %v3399
    %v4826 = vunpack.c.l.b16 %v3400
    %v4827 = vunpack.c.h.b16 %v3400
    %v4828 = vunpack.c.l.b16 %v3401
    %v4829 = vunpack.c.h.b16 %v3401
    %v4830 = vunpack.c.l.b16 %v3402
    %v4831 = vunpack.c.h.b16 %v3402
    %v4832 = vunpack.c.l.b16 %v3403
    %v4833 = vunpack.c.h.b16 %v3403
    %v4834 = vunpack.c.l.b16 %v3404
    %v4835 = vunpack.c.h.b16 %v3404
    %v4836 = vunpack.c.l.b16 %v3405
    %v4837 = vunpack.c.h.b16 %v3405
    %v4838 = vunpack.c.l.b16 %v3406
    %v4839 = vunpack.c.h.b16 %v3406
    %v4840 = vunpack.c.l.b16 %v3407
    %v4841 = vunpack.c.h.b16 %v3407
    %v4842 = vunpack.c.l.b16 %v3408
    %v4843 = vunpack.c.h.b16 %v3408
    %v4844 = vunpack.c.l.b16 %v3409
    %v4845 = vunpack.c.h.b16 %v3409
    %v4846 = vunpack.c.l.b16 %v3410
    %v4847 = vunpack.c.h.b16 %v3410
    %v4848 = vunpack.c.l.b16 %v3411
    %v4849 = vunpack.c.h.b16 %v3411
    %v4850 = vunpack.c.l.b16 %v3412
    %v4851 = vunpack.c.h.b16 %v3412
    %v4852 = vunpack.c.l.b16 %v3413
    %v4853 = vunpack.c.h.b16 %v3413
    %v4854 = vunpack.c.l.b16 %v3414
    %v4855 = vunpack.c.h.b16 %v3414
    %v4856 = vunpack.c.l.b16 %v3415
    %v4857 = vunpack.c.h.b16 %v3415
    %v4858 = vunpack.c.l.b16 %v3416
    %v4859 = vunpack.c.h.b16 %v3416
    %v4860 = vunpack.c.l.b16 %v3417
    %v4861 = vunpack.c.h.b16 %v3417
    %v4862 = vunpack.c.l.b16 %v3418
    %v4863 = vunpack.c.h.b16 %v3418
    %v4864 = vunpack.c.l.b16 %v3419
    %v4865 = vunpack.c.h.b16 %v3419
    %v4866 = vunpack.c.l.b16 %v3420
    %v4867 = vunpack.c.h.b16 %v3420
    %v4868 = vunpack.c.l.b16 %v3421
    %v4869 = vunpack.c.h.b16 %v3421
    %v4870 = vunpack.c.l.b16 %v3422
    %v4871 = vunpack.c.h.b16 %v3422
    %v4872 = vunpack.c.l.b16 %v3423
    %v4873 = vunpack.c.h.b16 %v3423
    %v4874 = vunpack.c.l.b16 %v3424
    %v4875 = vunpack.c.h.b16 %v3424
    %v4876 = vunpack.c.l.b16 %v3425
    %v4877 = vunpack.c.h.b16 %v3425
    %v4878 = vunpack.c.l.b16 %v3426
    %v4879 = vunpack.c.h.b16 %v3426
    %v4880 = vunpack.c.l.b16 %v3427
    %v4881 = vunpack.c.h.b16 %v3427
    %v4882 = vunpack.c.l.b16 %v3428
    %v4883 = vunpack.c.h.b16 %v3428
    %v4884 = vunpack.c.l.b16 %v3429
    %v4885 = vunpack.c.h.b16 %v3429
    %v4886 = vunpack.c.l.b16 %v3430
    %v4887 = vunpack.c.h.b16 %v3430
    %v4888 = vunpack.c.l.b16 %v3431
    %v4889 = vunpack.c.h.b16 %v3431
    %v4890 = vunpack.c.l.b16 %v3432
    %v4891 = vunpack.c.h.b16 %v3432
    %v4892 = vunpack.c.l.b16 %v3433
    %v4893 = vunpack.c.h.b16 %v3433
    %v4894 = vunpack.c.l.b16 %v3434
    %v4895 = vunpack.c.h.b16 %v3434
    %v4896 = vunpack.c.l.b16 %v3435
    %v4897 = vunpack.c.h.b16 %v3435
    %v4898 = vunpack.c.l.b16 %v3436
    %v4899 = vunpack.c.h.b16 %v3436
    %v4900 = vunpack.c.l.b16 %v3437
    %v4901 = vunpack.c.h.b16 %v3437
    %v4902 = vunpack.c.l.b16 %v3438
    %v4903 = vunpack.c.h.b16 %v3438
    %v4904 = vunpack.c.l.b16 %v3439
    %v4905 = vunpack.c.h.b16 %v3439
    %v4906 = vunpack.c.l.b16 %v3440
    %v4907 = vunpack.c.h.b16 %v3440
    %v4908 = vunpack.c.l.b16 %v3441
    %v4909 = vunpack.c.h.b16 %v3441
    %v4910 = vunpack.c.l.b16 %v3442
    %v4911 = vunpack.c.h.b16 %v3442
    %v4912 = vunpack.c.l.b16 %v3443
    %v4913 = vunpack.c.h.b16 %v3443
    %v4914 = vunpack.c.l.b16 %v3444
    %v4915 = vunpack.c.h.b16 %v3444
    %v4916 = vunpack.c.l.b16 %v3445
    %v4917 = vunpack.c.h.b16 %v3445
    %v4918 = vunpack.c.l.b16 %v3446
    %v4919 = vunpack.c.h.b16 %v3446
    %v4920 = vunpack.c.l.b16 %v3447
    %v4921 = vunpack.c.h.b16 %v3447
    %v4922 = vunpack.c.l.b16 %v3448
    %v4923 = vunpack.c.h.b16 %v3448
    %v4924 = vunpack.c.l.b16 %v3449
    %v4925 = vunpack.c.h.b16 %v3449
    %v4926 = vunpack.c.l.b16 %v3450
    %v4927 = vunpack.c.h.b16 %v3450
    %v4928 = vunpack.c.l.b16 %v3451
    %v4929 = vunpack.c.h.b16 %v3451
    %v4930 = vunpack.c.l.b16 %v3452
    %v4931 = vunpack.c.h.b16 %v3452
    %v4932 = vunpack.c.l.b16 %v3453
    %v4933 = vunpack.c.h.b16 %v3453
    %v4934 = vunpack.c.l.b16 %v3454
    %v4935 = vunpack.c.h.b16 %v3454
    %v4936 = vunpack.c.l.b16 %v3455
    %v4937 = vunpack.c.h.b16 %v3455
    %v4938 = vunpack.c.l.b16 %v3456
    %v4939 = vunpack.c.h.b16 %v3456
    %v4940 = vunpack.c.l.b16 %v3457
    %v4941 = vunpack.c.h.b16 %v3457
    %v4942 = vunpack.c.l.b16 %v3458
    %v4943 = vunpack.c.h.b16 %v3458
    %v4944 = vunpack.c.l.b16 %v3459
    %v4945 = vunpack.c.h.b16 %v3459
    %v4946 = vunpack.c.l.b16 %v3460
    %v4947 = vunpack.c.h.b16 %v3460
    %v4948 = vunpack.c.l.b16 %v3461
    %v4949 = vunpack.c.h.b16 %v3461
    %v4950 = vunpack.c.l.b16 %v3462
    %v4951 = vunpack.c.h.b16 %v3462
    %v4952 = vunpack.c.l.b16 %v3463
    %v4953 = vunpack.c.h.b16 %v3463
    %v4954 = vunpack.c.l.b16 %v3464
    %v4955 = vunpack.c.h.b16 %v3464
    %v4956 = vunpack.c.l.b16 %v3465
    %v4957 = vunpack.c.h.b16 %v3465
    %v4958 = vunpack.c.l.b16 %v3466
    %v4959 = vunpack.c.h.b16 %v3466
    %v4960 = vunpack.c.l.b16 %v3467
    %v4961 = vunpack.c.h.b16 %v3467
    %v4962 = vunpack.c.l.b16 %v3468
    %v4963 = vunpack.c.h.b16 %v3468
    %v4964 = vunpack.c.l.b16 %v3469
    %v4965 = vunpack.c.h.b16 %v3469
    %v4966 = vunpack.c.l.b16 %v3470
    %v4967 = vunpack.c.h.b16 %v3470
    %v4968 = vunpack.c.l.b16 %v3471
    %v4969 = vunpack.c.h.b16 %v3471
    %v4970 = vunpack.c.l.b16 %v3472
    %v4971 = vunpack.c.h.b16 %v3472
    %v4972 = vunpack.c.l.b16 %v3473
    %v4973 = vunpack.c.h.b16 %v3473
    %v4974 = vunpack.c.l.b16 %v3474
    %v4975 = vunpack.c.h.b16 %v3474
    %v4976 = vunpack.c.l.b16 %v3475
    %v4977 = vunpack.c.h.b16 %v3475
    %v4978 = vunpack.c.l.b16 %v3476
    %v4979 = vunpack.c.h.b16 %v3476
    %v4980 = vunpack.c.l.b16 %v3477
    %v4981 = vunpack.c.h.b16 %v3477
    %v4982 = vunpack.c.l.b16 %v3478
    %v4983 = vunpack.c.h.b16 %v3478
    %v4984 = vunpack.c.l.b16 %v3479
    %v4985 = vunpack.c.h.b16 %v3479
    %v4986 = vunpack.c.l.b16 %v3480
    %v4987 = vunpack.c.h.b16 %v3480
    %v4988 = vunpack.c.l.b16 %v3481
    %v4989 = vunpack.c.h.b16 %v3481
    %v4990 = vunpack.c.l.b16 %v3482
    %v4991 = vunpack.c.h.b16 %v3482
    %v4992 = vunpack.c.l.b16 %v3483
    %v4993 = vunpack.c.h.b16 %v3483
    %v4994 = vunpack.c.l.b16 %v3484
    %v4995 = vunpack.c.h.b16 %v3484
    %v4996 = vunpack.c.l.b16 %v3485
    %v4997 = vunpack.c.h.b16 %v3485
    %v4998 = vunpack.c.l.b16 %v3486
    %v4999 = vunpack.c.h.b16 %v3486
    %v5000 = vunpack.c.l.b16 %v3487
    %v5001 = vunpack.c.h.b16 %v3487
    %v5002 = vunpack.c.l.b16 %v3488
    %v5003 = vunpack.c.h.b16 %v3488
    %v5004 = vunpack.c.l.b16 %v3489
    %v5005 = vunpack.c.h.b16 %v3489
    %v5006 = vunpack.c.l.b16 %v3490
    %v5007 = vunpack.c.h.b16 %v3490
    %v5008 = vunpack.c.l.b16 %v3491
    %v5009 = vunpack.c.h.b16 %v3491
    %v5010 = vunpack.c.l.b16 %v3492
    %v5011 = vunpack.c.h.b16 %v3492
    %v5012 = vunpack.c.l.b16 %v3493
    %v5013 = vunpack.c.h.b16 %v3493
    %v5014 = vunpack.c.l.b16 %v3494
    %v5015 = vunpack.c.h.b16 %v3494
    %v5016 = vunpack.c.l.b16 %v3495
    %v5017 = vunpack.c.h.b16 %v3495
    %v5018 = vunpack.c.l.b16 %v3496
    %v5019 = vunpack.c.h.b16 %v3496
    %v5020 = vunpack.c.l.b16 %v3497
    %v5021 = vunpack.c.h.b16 %v3497
    %v5022 = vunpack.c.l.b16 %v3498
    %v5023 = vunpack.c.h.b16 %v3498
    %v5024 = vunpack.c.l.b16 %v3499
    %v5025 = vunpack.c.h.b16 %v3499
    %v5026 = vunpack.c.l.b16 %v3500
    %v5027 = vunpack.c.h.b16 %v3500
    %v5028 = vunpack.c.l.b16 %v3501
    %v5029 = vunpack.c.h.b16 %v3501
    %v5030 = vunpack.c.l.b16 %v3502
    %v5031 = vunpack.c.h.b16 %v3502
    %v5032 = vunpack.c.l.b16 %v3503
    %v5033 = vunpack.c.h.b16 %v3503
    %v5034 = vunpack.c.l.b16 %v3504
    %v5035 = vunpack.c.h.b16 %v3504
    %v5036 = vunpack.c.l.b16 %v3505
    %v5037 = vunpack.c.h.b16 %v3505
    %v5038 = vunpack.c.l.b16 %v3506
    %v5039 = vunpack.c.h.b16 %v3506
    %v5040 = vunpack.c.l.b16 %v3507
    %v5041 = vunpack.c.h.b16 %v3507
    %v5042 = vunpack.c.l.b16 %v3508
    %v5043 = vunpack.c.h.b16 %v3508
    %v5044 = vunpack.c.l.b16 %v3509
    %v5045 = vunpack.c.h.b16 %v3509
    %v5046 = vunpack.c.l.b16 %v3510
    %v5047 = vunpack.c.h.b16 %v3510
    %v5048 = vunpack.c.l.b16 %v3511
    %v5049 = vunpack.c.h.b16 %v3511
    %v5050 = vunpack.c.l.b16 %v3512
    %v5051 = vunpack.c.h.b16 %v3512
    %v5052 = vunpack.c.l.b16 %v3513
    %v5053 = vunpack.c.h.b16 %v3513
    %v5054 = vunpack.c.l.b16 %v3514
    %v5055 = vunpack.c.h.b16 %v3514
    %v5056 = vunpack.c.l.b16 %v3515
    %v5057 = vunpack.c.h.b16 %v3515
    %v5058 = vunpack.c.l.b16 %v3516
    %v5059 = vunpack.c.h.b16 %v3516
    %v5060 = vunpack.c.l.b16 %v3517
    %v5061 = vunpack.c.h.b16 %v3517
    %v5062 = vunpack.c.l.b16 %v3518
    %v5063 = vunpack.c.h.b16 %v3518
    %v5064 = vunpack.c.l.b16 %v3519
    %v5065 = vunpack.c.h.b16 %v3519
    %v5066 = vunpack.c.l.b16 %v3520
    %v5067 = vunpack.c.h.b16 %v3520
    %v5068 = vunpack.c.l.b16 %v3521
    %v5069 = vunpack.c.h.b16 %v3521
    %v5070 = vunpack.c.l.b16 %v3522
    %v5071 = vunpack.c.h.b16 %v3522
    %v5072 = vunpack.c.l.b16 %v3523
    %v5073 = vunpack.c.h.b16 %v3523
    %v5074 = vunpack.c.l.b16 %v3524
    %v5075 = vunpack.c.h.b16 %v3524
    %v5076 = vunpack.c.l.b16 %v3525
    %v5077 = vunpack.c.h.b16 %v3525
    %v5078 = vunpack.c.l.b16 %v3526
    %v5079 = vunpack.c.h.b16 %v3526
    %v5080 = vunpack.c.l.b16 %v3527
    %v5081 = vunpack.c.h.b16 %v3527
    %v5082 = vunpack.c.l.b16 %v3528
    %v5083 = vunpack.c.h.b16 %v3528
    %v5084 = vunpack.c.l.b16 %v3529
    %v5085 = vunpack.c.h.b16 %v3529
    %v5086 = vunpack.c.l.b16 %v3530
    %v5087 = vunpack.c.h.b16 %v3530
    %v5088 = vunpack.c.l.b16 %v3531
    %v5089 = vunpack.c.h.b16 %v3531
    %v5090 = vunpack.c.l.b16 %v3532
    %v5091 = vunpack.c.h.b16 %v3532
    %v5092 = vunpack.c.l.b16 %v3533
    %v5093 = vunpack.c.h.b16 %v3533
    %v5094 = vunpack.c.l.b16 %v3534
    %v5095 = vunpack.c.h.b16 %v3534
    %v5096 = vunpack.c.l.b16 %v3535
    %v5097 = vunpack.c.h.b16 %v3535
    %v5098 = vunpack.c.l.b16 %v3536
    %v5099 = vunpack.c.h.b16 %v3536
    %v5100 = vunpack.c.l.b16 %v3537
    %v5101 = vunpack.c.h.b16 %v3537
    %v5102 = vunpack.c.l.b16 %v3538
    %v5103 = vunpack.c.h.b16 %v3538
    %v5104 = vunpack.c.l.b16 %v3539
    %v5105 = vunpack.c.h.b16 %v3539
    %v5106 = vunpack.c.l.b16 %v3540
    %v5107 = vunpack.c.h.b16 %v3540
    %v5108 = vunpack.c.l.b16 %v3541
    %v5109 = vunpack.c.h.b16 %v3541
    %v5110 = vunpack.c.l.b16 %v3542
    %v5111 = vunpack.c.h.b16 %v3542
    %v5112 = vunpack.c.l.b16 %v3543
    %v5113 = vunpack.c.h.b16 %v3543
    %v5114 = vunpack.c.l.b16 %v3544
    %v5115 = vunpack.c.h.b16 %v3544
    %v5116 = vunpack.c.l.b16 %v3545
    %v5117 = vunpack.c.h.b16 %v3545
    %v5118 = vunpack.c.l.b16 %v3546
    %v5119 = vunpack.c.h.b16 %v3546
    %v5120 = vunpack.c.l.b16 %v3547
    %v5121 = vunpack.c.h.b16 %v3547
    %v5122 = vunpack.c.l.b16 %v3548
    %v5123 = vunpack.c.h.b16 %v3548
    %v5124 = vunpack.c.l.b16 %v3549
    %v5125 = vunpack.c.h.b16 %v3549
    %v5126 = vunpack.c.l.b16 %v3550
    %v5127 = vunpack.c.h.b16 %v3550
    %v5128 = vunpack.c.l.b16 %v3551
    %v5129 = vunpack.c.h.b16 %v3551
    %v5130 = vpack.c.b16 %v4114, %v4106
    %v5131 = vpack.c.b16 %v4115, %v4107
    %v5132 = vpack.c.b16 %v4116, %v4108
    %v5133 = vpack.c.b16 %v4117, %v4109
    %v5134 = vpack.c.b16 %v4118, %v4110
    %v5135 = vpack.c.b16 %v4119, %v4111
    %v5136 = vpack.c.b16 %v4120, %v4112
    %v5137 = vpack.c.b16 %v4121, %v4113
    %v5138 = vpack.c.b16 %v4130, %v4122
    %v5139 = vpack.c.b16 %v4131, %v4123
    %v5140 = vpack.c.b16 %v4132, %v4124
    %v5141 = vpack.c.b16 %v4133, %v4125
    %v5142 = vpack.c.b16 %v4134, %v4126
    %v5143 = vpack.c.b16 %v4135, %v4127
    %v5144 = vpack.c.b16 %v4136, %v4128
    %v5145 = vpack.c.b16 %v4137, %v4129
    %v5146 = vpack.c.b16 %v4146, %v4138
    %v5147 = vpack.c.b16 %v4147, %v4139
    %v5148 = vpack.c.b16 %v4148, %v4140
    %v5149 = vpack.c.b16 %v4149, %v4141
    %v5150 = vpack.c.b16 %v4150, %v4142
    %v5151 = vpack.c.b16 %v4151, %v4143
    %v5152 = vpack.c.b16 %v4152, %v4144
    %v5153 = vpack.c.b16 %v4153, %v4145
    %v5154 = vpack.c.b16 %v4162, %v4154
    %v5155 = vpack.c.b16 %v4163, %v4155
    %v5156 = vpack.c.b16 %v4164, %v4156
    %v5157 = vpack.c.b16 %v4165, %v4157
    %v5158 = vpack.c.b16 %v4166, %v4158
    %v5159 = vpack.c.b16 %v4167, %v4159
    %v5160 = vpack.c.b16 %v4168, %v4160
    %v5161 = vpack.c.b16 %v4169, %v4161
    %v5162 = vpack.c.b16 %v4178, %v4170
    %v5163 = vpack.c.b16 %v4179, %v4171
    %v5164 = vpack.c.b16 %v4180, %v4172
    %v5165 = vpack.c.b16 %v4181, %v4173
    %v5166 = vpack.c.b16 %v4182, %v4174
    %v5167 = vpack.c.b16 %v4183, %v4175
    %v5168 = vpack.c.b16 %v4184, %v4176
    %v5169 = vpack.c.b16 %v4185, %v4177
    %v5170 = vpack.c.b16 %v4194, %v4186
    %v5171 = vpack.c.b16 %v4195, %v4187
    %v5172 = vpack.c.b16 %v4196, %v4188
    %v5173 = vpack.c.b16 %v4197, %v4189
    %v5174 = vpack.c.b16 %v4198, %v4190
    %v5175 = vpack.c.b16 %v4199, %v4191
    %v5176 = vpack.c.b16 %v4200, %v4192
    %v5177 = vpack.c.b16 %v4201, %v4193
    %v5178 = vpack.c.b16 %v4210, %v4202
    %v5179 = vpack.c.b16 %v4211, %v4203
    %v5180 = vpack.c.b16 %v4212, %v4204
    %v5181 = vpack.c.b16 %v4213, %v4205
    %v5182 = vpack.c.b16 %v4214, %v4206
    %v5183 = vpack.c.b16 %v4215, %v4207
    %v5184 = vpack.c.b16 %v4216, %v4208
    %v5185 = vpack.c.b16 %v4217, %v4209
    %v5186 = vpack.c.b16 %v4226, %v4218
    %v5187 = vpack.c.b16 %v4227, %v4219
    %v5188 = vpack.c.b16 %v4228, %v4220
    %v5189 = vpack.c.b16 %v4229, %v4221
    %v5190 = vpack.c.b16 %v4230, %v4222
    %v5191 = vpack.c.b16 %v4231, %v4223
    %v5192 = vpack.c.b16 %v4232, %v4224
    %v5193 = vpack.c.b16 %v4233, %v4225
    %v5194 = vpack.c.b16 %v4242, %v4234
    %v5195 = vpack.c.b16 %v4243, %v4235
    %v5196 = vpack.c.b16 %v4244, %v4236
    %v5197 = vpack.c.b16 %v4245, %v4237
    %v5198 = vpack.c.b16 %v4246, %v4238
    %v5199 = vpack.c.b16 %v4247, %v4239
    %v5200 = vpack.c.b16 %v4248, %v4240
    %v5201 = vpack.c.b16 %v4249, %v4241
    %v5202 = vpack.c.b16 %v4258, %v4250
    %v5203 = vpack.c.b16 %v4259, %v4251
    %v5204 = vpack.c.b16 %v4260, %v4252
    %v5205 = vpack.c.b16 %v4261, %v4253
    %v5206 = vpack.c.b16 %v4262, %v4254
    %v5207 = vpack.c.b16 %v4263, %v4255
    %v5208 = vpack.c.b16 %v4264, %v4256
    %v5209 = vpack.c.b16 %v4265, %v4257
    %v5210 = vpack.c.b16 %v4274, %v4266
    %v5211 = vpack.c.b16 %v4275, %v4267
    %v5212 = vpack.c.b16 %v4276, %v4268
    %v5213 = vpack.c.b16 %v4277, %v4269
    %v5214 = vpack.c.b16 %v4278, %v4270
    %v5215 = vpack.c.b16 %v4279, %v4271
    %v5216 = vpack.c.b16 %v4280, %v4272
    %v5217 = vpack.c.b16 %v4281, %v4273
    %v5218 = vpack.c.b16 %v4290, %v4282
    %v5219 = vpack.c.b16 %v4291, %v4283
    %v5220 = vpack.c.b16 %v4292, %v4284
    %v5221 = vpack.c.b16 %v4293, %v4285
    %v5222 = vpack.c.b16 %v4294, %v4286
    %v5223 = vpack.c.b16 %v4295, %v4287
    %v5224 = vpack.c.b16 %v4296, %v4288
    %v5225 = vpack.c.b16 %v4297, %v4289
    %v5226 = vpack.c.b16 %v4306, %v4298
    %v5227 = vpack.c.b16 %v4307, %v4299
    %v5228 = vpack.c.b16 %v4308, %v4300
    %v5229 = vpack.c.b16 %v4309, %v4301
    %v5230 = vpack.c.b16 %v4310, %v4302
    %v5231 = vpack.c.b16 %v4311, %v4303
    %v5232 = vpack.c.b16 %v4312, %v4304
    %v5233 = vpack.c.b16 %v4313, %v4305
    %v5234 = vpack.c.b16 %v4322, %v4314
    %v5235 = vpack.c.b16 %v4323, %v4315
    %v5236 = vpack.c.b16 %v4324, %v4316
    %v5237 = vpack.c.b16 %v4325, %v4317
    %v5238 = vpack.c.b16 %v4326, %v4318
    %v5239 = vpack.c.b16 %v4327, %v4319
    %v5240 = vpack.c.b16 %v4328, %v4320
    %v5241 = vpack.c.b16 %v4329, %v4321
    %v5242 = vpack.c.b16 %v4338, %v4330
    %v5243 = vpack.c.b16 %v4339, %v4331
    %v5244 = vpack.c.b16 %v4340, %v4332
    %v5245 = vpack.c.b16 %v4341, %v4333
    %v5246 = vpack.c.b16 %v4342, %v4334
    %v5247 = vpack.c.b16 %v4343, %v4335
    %v5248 = vpack.c.b16 %v4344, %v4336
    %v5249 = vpack.c.b16 %v4345, %v4337
    %v5250 = vpack.c.b16 %v4354, %v4346
    %v5251 = vpack.c.b16 %v4355, %v4347
    %v5252 = vpack.c.b16 %v4356, %v4348
    %v5253 = vpack.c.b16 %v4357, %v4349
    %v5254 = vpack.c.b16 %v4358, %v4350
    %v5255 = vpack.c.b16 %v4359, %v4351
    %v5256 = vpack.c.b16 %v4360, %v4352
    %v5257 = vpack.c.b16 %v4361, %v4353
    %v5258 = vpack.c.b16 %v4370, %v4362
    %v5259 = vpack.c.b16 %v4371, %v4363
    %v5260 = vpack.c.b16 %v4372, %v4364
    %v5261 = vpack.c.b16 %v4373, %v4365
    %v5262 = vpack.c.b16 %v4374, %v4366
    %v5263 = vpack.c.b16 %v4375, %v4367
    %v5264 = vpack.c.b16 %v4376, %v4368
    %v5265 = vpack.c.b16 %v4377, %v4369
    %v5266 = vpack.c.b16 %v4386, %v4378
    %v5267 = vpack.c.b16 %v4387, %v4379
    %v5268 = vpack.c.b16 %v4388, %v4380
    %v5269 = vpack.c.b16 %v4389, %v4381
    %v5270 = vpack.c.b16 %v4390, %v4382
    %v5271 = vpack.c.b16 %v4391, %v4383
    %v5272 = vpack.c.b16 %v4392, %v4384
    %v5273 = vpack.c.b16 %v4393, %v4385
    %v5274 = vpack.c.b16 %v4402, %v4394
    %v5275 = vpack.c.b16 %v4403, %v4395
    %v5276 = vpack.c.b16 %v4404, %v4396
    %v5277 = vpack.c.b16 %v4405, %v4397
    %v5278 = vpack.c.b16 %v4406, %v4398
    %v5279 = vpack.c.b16 %v4407, %v4399
    %v5280 = vpack.c.b16 %v4408, %v4400
    %v5281 = vpack.c.b16 %v4409, %v4401
    %v5282 = vpack.c.b16 %v4418, %v4410
    %v5283 = vpack.c.b16 %v4419, %v4411
    %v5284 = vpack.c.b16 %v4420, %v4412
    %v5285 = vpack.c.b16 %v4421, %v4413
    %v5286 = vpack.c.b16 %v4422, %v4414
    %v5287 = vpack.c.b16 %v4423, %v4415
    %v5288 = vpack.c.b16 %v4424, %v4416
    %v5289 = vpack.c.b16 %v4425, %v4417
    %v5290 = vpack.c.b16 %v4434, %v4426
    %v5291 = vpack.c.b16 %v4435, %v4427
    %v5292 = vpack.c.b16 %v4436, %v4428
    %v5293 = vpack.c.b16 %v4437, %v4429
    %v5294 = vpack.c.b16 %v4438, %v4430
    %v5295 = vpack.c.b16 %v4439, %v4431
    %v5296 = vpack.c.b16 %v4440, %v4432
    %v5297 = vpack.c.b16 %v4441, %v4433
    %v5298 = vpack.c.b16 %v4450, %v4442
    %v5299 = vpack.c.b16 %v4451, %v4443
    %v5300 = vpack.c.b16 %v4452, %v4444
    %v5301 = vpack.c.b16 %v4453, %v4445
    %v5302 = vpack.c.b16 %v4454, %v4446
    %v5303 = vpack.c.b16 %v4455, %v4447
    %v5304 = vpack.c.b16 %v4456, %v4448
    %v5305 = vpack.c.b16 %v4457, %v4449
    %v5306 = vpack.c.b16 %v4466, %v4458
    %v5307 = vpack.c.b16 %v4467, %v4459
    %v5308 = vpack.c.b16 %v4468, %v4460
    %v5309 = vpack.c.b16 %v4469, %v4461
    %v5310 = vpack.c.b16 %v4470, %v4462
    %v5311 = vpack.c.b16 %v4471, %v4463
    %v5312 = vpack.c.b16 %v4472, %v4464
    %v5313 = vpack.c.b16 %v4473, %v4465
    %v5314 = vpack.c.b16 %v4482, %v4474
    %v5315 = vpack.c.b16 %v4483, %v4475
    %v5316 = vpack.c.b16 %v4484, %v4476
    %v5317 = vpack.c.b16 %v4485, %v4477
    %v5318 = vpack.c.b16 %v4486, %v4478
    %v5319 = vpack.c.b16 %v4487, %v4479
    %v5320 = vpack.c.b16 %v4488, %v4480
    %v5321 = vpack.c.b16 %v4489, %v4481
    %v5322 = vpack.c.b16 %v4498, %v4490
    %v5323 = vpack.c.b16 %v4499, %v4491
    %v5324 = vpack.c.b16 %v4500, %v4492
    %v5325 = vpack.c.b16 %v4501, %v4493
    %v5326 = vpack.c.b16 %v4502, %v4494
    %v5327 = vpack.c.b16 %v4503, %v4495
    %v5328 = vpack.c.b16 %v4504, %v4496
    %v5329 = vpack.c.b16 %v4505, %v4497
    %v5330 = vpack.c.b16 %v4514, %v4506
    %v5331 = vpack.c.b16 %v4515, %v4507
    %v5332 = vpack.c.b16 %v4516, %v4508
    %v5333 = vpack.c.b16 %v4517, %v4509
    %v5334 = vpack.c.b16 %v4518, %v4510
    %v5335 = vpack.c.b16 %v4519, %v4511
    %v5336 = vpack.c.b16 %v4520, %v4512
    %v5337 = vpack.c.b16 %v4521, %v4513
    %v5338 = vpack.c.b16 %v4530, %v4522
    %v5339 = vpack.c.b16 %v4531, %v4523
    %v5340 = vpack.c.b16 %v4532, %v4524
    %v5341 = vpack.c.b16 %v4533, %v4525
    %v5342 = vpack.c.b16 %v4534, %v4526
    %v5343 = vpack.c.b16 %v4535, %v4527
    %v5344 = vpack.c.b16 %v4536, %v4528
    %v5345 = vpack.c.b16 %v4537, %v4529
    %v5346 = vpack.c.b16 %v4546, %v4538
    %v5347 = vpack.c.b16 %v4547, %v4539
    %v5348 = vpack.c.b16 %v4548, %v4540
    %v5349 = vpack.c.b16 %v4549, %v4541
    %v5350 = vpack.c.b16 %v4550, %v4542
    %v5351 = vpack.c.b16 %v4551, %v4543
    %v5352 = vpack.c.b16 %v4552, %v4544
    %v5353 = vpack.c.b16 %v4553, %v4545
    %v5354 = vpack.c.b16 %v4562, %v4554
    %v5355 = vpack.c.b16 %v4563, %v4555
    %v5356 = vpack.c.b16 %v4564, %v4556
    %v5357 = vpack.c.b16 %v4565, %v4557
    %v5358 = vpack.c.b16 %v4566, %v4558
    %v5359 = vpack.c.b16 %v4567, %v4559
    %v5360 = vpack.c.b16 %v4568, %v4560
    %v5361 = vpack.c.b16 %v4569, %v4561
    %v5362 = vpack.c.b16 %v4578, %v4570
    %v5363 = vpack.c.b16 %v4579, %v4571
    %v5364 = vpack.c.b16 %v4580, %v4572
    %v5365 = vpack.c.b16 %v4581, %v4573
    %v5366 = vpack.c.b16 %v4582, %v4574
    %v5367 = vpack.c.b16 %v4583, %v4575
    %v5368 = vpack.c.b16 %v4584, %v4576
    %v5369 = vpack.c.b16 %v4585, %v4577
    %v5370 = vpack.c.b16 %v4594, %v4586
    %v5371 = vpack.c.b16 %v4595, %v4587
    %v5372 = vpack.c.b16 %v4596, %v4588
    %v5373 = vpack.c.b16 %v4597, %v4589
    %v5374 = vpack.c.b16 %v4598, %v4590
    %v5375 = vpack.c.b16 %v4599, %v4591
    %v5376 = vpack.c.b16 %v4600, %v4592
    %v5377 = vpack.c.b16 %v4601, %v4593
    %v5378 = vpack.c.b16 %v4610, %v4602
    %v5379 = vpack.c.b16 %v4611, %v4603
    %v5380 = vpack.c.b16 %v4612, %v4604
    %v5381 = vpack.c.b16 %v4613, %v4605
    %v5382 = vpack.c.b16 %v4614, %v4606
    %v5383 = vpack.c.b16 %v4615, %v4607
    %v5384 = vpack.c.b16 %v4616, %v4608
    %v5385 = vpack.c.b16 %v4617, %v4609
    %v5386 = vpack.c.b16 %v4626, %v4618
    %v5387 = vpack.c.b16 %v4627, %v4619
    %v5388 = vpack.c.b16 %v4628, %v4620
    %v5389 = vpack.c.b16 %v4629, %v4621
    %v5390 = vpack.c.b16 %v4630, %v4622
    %v5391 = vpack.c.b16 %v4631, %v4623
    %v5392 = vpack.c.b16 %v4632, %v4624
    %v5393 = vpack.c.b16 %v4633, %v4625
    %v5394 = vpack.c.b16 %v4642, %v4634
    %v5395 = vpack.c.b16 %v4643, %v4635
    %v5396 = vpack.c.b16 %v4644, %v4636
    %v5397 = vpack.c.b16 %v4645, %v4637
    %v5398 = vpack.c.b16 %v4646, %v4638
    %v5399 = vpack.c.b16 %v4647, %v4639
    %v5400 = vpack.c.b16 %v4648, %v4640
    %v5401 = vpack.c.b16 %v4649, %v4641
    %v5402 = vpack.c.b16 %v4658, %v4650
    %v5403 = vpack.c.b16 %v4659, %v4651
    %v5404 = vpack.c.b16 %v4660, %v4652
    %v5405 = vpack.c.b16 %v4661, %v4653
    %v5406 = vpack.c.b16 %v4662, %v4654
    %v5407 = vpack.c.b16 %v4663, %v4655
    %v5408 = vpack.c.b16 %v4664, %v4656
    %v5409 = vpack.c.b16 %v4665, %v4657
    %v5410 = vpack.c.b16 %v4674, %v4666
    %v5411 = vpack.c.b16 %v4675, %v4667
    %v5412 = vpack.c.b16 %v4676, %v4668
    %v5413 = vpack.c.b16 %v4677, %v4669
    %v5414 = vpack.c.b16 %v4678, %v4670
    %v5415 = vpack.c.b16 %v4679, %v4671
    %v5416 = vpack.c.b16 %v4680, %v4672
    %v5417 = vpack.c.b16 %v4681, %v4673
    %v5418 = vpack.c.b16 %v4690, %v4682
    %v5419 = vpack.c.b16 %v4691, %v4683
    %v5420 = vpack.c.b16 %v4692, %v4684
    %v5421 = vpack.c.b16 %v4693, %v4685
    %v5422 = vpack.c.b16 %v4694, %v4686
    %v5423 = vpack.c.b16 %v4695, %v4687
    %v5424 = vpack.c.b16 %v4696, %v4688
    %v5425 = vpack.c.b16 %v4697, %v4689
    %v5426 = vpack.c.b16 %v4706, %v4698
    %v5427 = vpack.c.b16 %v4707, %v4699
    %v5428 = vpack.c.b16 %v4708, %v4700
    %v5429 = vpack.c.b16 %v4709, %v4701
    %v5430 = vpack.c.b16 %v4710, %v4702
    %v5431 = vpack.c.b16 %v4711, %v4703
    %v5432 = vpack.c.b16 %v4712, %v4704
    %v5433 = vpack.c.b16 %v4713, %v4705
    %v5434 = vpack.c.b16 %v4722, %v4714
    %v5435 = vpack.c.b16 %v4723, %v4715
    %v5436 = vpack.c.b16 %v4724, %v4716
    %v5437 = vpack.c.b16 %v4725, %v4717
    %v5438 = vpack.c.b16 %v4726, %v4718
    %v5439 = vpack.c.b16 %v4727, %v4719
    %v5440 = vpack.c.b16 %v4728, %v4720
    %v5441 = vpack.c.b16 %v4729, %v4721
    %v5442 = vpack.c.b16 %v4738, %v4730
    %v5443 = vpack.c.b16 %v4739, %v4731
    %v5444 = vpack.c.b16 %v4740, %v4732
    %v5445 = vpack.c.b16 %v4741, %v4733
    %v5446 = vpack.c.b16 %v4742, %v4734
    %v5447 = vpack.c.b16 %v4743, %v4735
    %v5448 = vpack.c.b16 %v4744, %v4736
    %v5449 = vpack.c.b16 %v4745, %v4737
    %v5450 = vpack.c.b16 %v4754, %v4746
    %v5451 = vpack.c.b16 %v4755, %v4747
    %v5452 = vpack.c.b16 %v4756, %v4748
    %v5453 = vpack.c.b16 %v4757, %v4749
    %v5454 = vpack.c.b16 %v4758, %v4750
    %v5455 = vpack.c.b16 %v4759, %v4751
    %v5456 = vpack.c.b16 %v4760, %v4752
    %v5457 = vpack.c.b16 %v4761, %v4753
    %v5458 = vpack.c.b16 %v4770, %v4762
    %v5459 = vpack.c.b16 %v4771, %v4763
    %v5460 = vpack.c.b16 %v4772, %v4764
    %v5461 = vpack.c.b16 %v4773, %v4765
    %v5462 = vpack.c.b16 %v4774, %v4766
    %v5463 = vpack.c.b16 %v4775, %v4767
    %v5464 = vpack.c.b16 %v4776, %v4768
    %v5465 = vpack.c.b16 %v4777, %v4769
    %v5466 = vpack.c.b16 %v4786, %v4778
    %v5467 = vpack.c.b16 %v4787, %v4779
    %v5468 = vpack.c.b16 %v4788, %v4780
    %v5469 = vpack.c.b16 %v4789, %v4781
    %v5470 = vpack.c.b16 %v4790, %v4782
    %v5471 = vpack.c.b16 %v4791, %v4783
    %v5472 = vpack.c.b16 %v4792, %v4784
    %v5473 = vpack.c.b16 %v4793, %v4785
    %v5474 = vpack.c.b16 %v4802, %v4794
    %v5475 = vpack.c.b16 %v4803, %v4795
    %v5476 = vpack.c.b16 %v4804, %v4796
    %v5477 = vpack.c.b16 %v4805, %v4797
    %v5478 = vpack.c.b16 %v4806, %v4798
    %v5479 = vpack.c.b16 %v4807, %v4799
    %v5480 = vpack.c.b16 %v4808, %v4800
    %v5481 = vpack.c.b16 %v4809, %v4801
    %v5482 = vpack.c.b16 %v4818, %v4810
    %v5483 = vpack.c.b16 %v4819, %v4811
    %v5484 = vpack.c.b16 %v4820, %v4812
    %v5485 = vpack.c.b16 %v4821, %v4813
    %v5486 = vpack.c.b16 %v4822, %v4814
    %v5487 = vpack.c.b16 %v4823, %v4815
    %v5488 = vpack.c.b16 %v4824, %v4816
    %v5489 = vpack.c.b16 %v4825, %v4817
    %v5490 = vpack.c.b16 %v4834, %v4826
    %v5491 = vpack.c.b16 %v4835, %v4827
    %v5492 = vpack.c.b16 %v4836, %v4828
    %v5493 = vpack.c.b16 %v4837, %v4829
    %v5494 = vpack.c.b16 %v4838, %v4830
    %v5495 = vpack.c.b16 %v4839, %v4831
    %v5496 = vpack.c.b16 %v4840, %v4832
    %v5497 = vpack.c.b16 %v4841, %v4833
    %v5498 = vpack.c.b16 %v4850, %v4842
    %v5499 = vpack.c.b16 %v4851, %v4843
    %v5500 = vpack.c.b16 %v4852, %v4844
    %v5501 = vpack.c.b16 %v4853, %v4845
    %v5502 = vpack.c.b16 %v4854, %v4846
    %v5503 = vpack.c.b16 %v4855, %v4847
    %v5504 = vpack.c.b16 %v4856, %v4848
    %v5505 = vpack.c.b16 %v4857, %v4849
    %v5506 = vpack.c.b16 %v4866, %v4858
    %v5507 = vpack.c.b16 %v4867, %v4859
    %v5508 = vpack.c.b16 %v4868, %v4860
    %v5509 = vpack.c.b16 %v4869, %v4861
    %v5510 = vpack.c.b16 %v4870, %v4862
    %v5511 = vpack.c.b16 %v4871, %v4863
    %v5512 = vpack.c.b16 %v4872, %v4864
    %v5513 = vpack.c.b16 %v4873, %v4865
    %v5514 = vpack.c.b16 %v4882, %v4874
    %v5515 = vpack.c.b16 %v4883, %v4875
    %v5516 = vpack.c.b16 %v4884, %v4876
    %v5517 = vpack.c.b16 %v4885, %v4877
    %v5518 = vpack.c.b16 %v4886, %v4878
    %v5519 = vpack.c.b16 %v4887, %v4879
    %v5520 = vpack.c.b16 %v4888, %v4880
    %v5521 = vpack.c.b16 %v4889, %v4881
    %v5522 = vpack.c.b16 %v4898, %v4890
    %v5523 = vpack.c.b16 %v4899, %v4891
    %v5524 = vpack.c.b16 %v4900, %v4892
    %v5525 = vpack.c.b16 %v4901, %v4893
    %v5526 = vpack.c.b16 %v4902, %v4894
    %v5527 = vpack.c.b16 %v4903, %v4895
    %v5528 = vpack.c.b16 %v4904, %v4896
    %v5529 = vpack.c.b16 %v4905, %v4897
    %v5530 = vpack.c.b16 %v4914, %v4906
    %v5531 = vpack.c.b16 %v4915, %v4907
    %v5532 = vpack.c.b16 %v4916, %v4908
    %v5533 = vpack.c.b16 %v4917, %v4909
    %v5534 = vpack.c.b16 %v4918, %v4910
    %v5535 = vpack.c.b16 %v4919, %v4911
    %v5536 = vpack.c.b16 %v4920, %v4912
    %v5537 = vpack.c.b16 %v4921, %v4913
    %v5538 = vpack.c.b16 %v4930, %v4922
    %v5539 = vpack.c.b16 %v4931, %v4923
    %v5540 = vpack.c.b16 %v4932, %v4924
    %v5541 = vpack.c.b16 %v4933, %v4925
    %v5542 = vpack.c.b16 %v4934, %v4926
    %v5543 = vpack.c.b16 %v4935, %v4927
    %v5544 = vpack.c.b16 %v4936, %v4928
    %v5545 = vpack.c.b16 %v4937, %v4929
    %v5546 = vpack.c.b16 %v4946, %v4938
    %v5547 = vpack.c.b16 %v4947, %v4939
    %v5548 = vpack.c.b16 %v4948, %v4940
    %v5549 = vpack.c.b16 %v4949, %v4941
    %v5550 = vpack.c.b16 %v4950, %v4942
    %v5551 = vpack.c.b16 %v4951, %v4943
    %v5552 = vpack.c.b16 %v4952, %v4944
    %v5553 = vpack.c.b16 %v4953, %v4945
    %v5554 = vpack.c.b16 %v4962, %v4954
    %v5555 = vpack.c.b16 %v4963, %v4955
    %v5556 = vpack.c.b16 %v4964, %v4956
    %v5557 = vpack.c.b16 %v4965, %v4957
    %v5558 = vpack.c.b16 %v4966, %v4958
    %v5559 = vpack.c.b16 %v4967, %v4959
    %v5560 = vpack.c.b16 %v4968, %v4960
    %v5561 = vpack.c.b16 %v4969, %v4961
    %v5562 = vpack.c.b16 %v4978, %v4970
    %v5563 = vpack.c.b16 %v4979, %v4971
    %v5564 = vpack.c.b16 %v4980, %v4972
    %v5565 = vpack.c.b16 %v4981, %v4973
    %v5566 = vpack.c.b16 %v4982, %v4974
    %v5567 = vpack.c.b16 %v4983, %v4975
    %v5568 = vpack.c.b16 %v4984, %v4976
    %v5569 = vpack.c.b16 %v4985, %v4977
    %v5570 = vpack.c.b16 %v4994, %v4986
    %v5571 = vpack.c.b16 %v4995, %v4987
    %v5572 = vpack.c.b16 %v4996, %v4988
    %v5573 = vpack.c.b16 %v4997, %v4989
    %v5574 = vpack.c.b16 %v4998, %v4990
    %v5575 = vpack.c.b16 %v4999, %v4991
    %v5576 = vpack.c.b16 %v5000, %v4992
    %v5577 = vpack.c.b16 %v5001, %v4993
    %v5578 = vpack.c.b16 %v5010, %v5002
    %v5579 = vpack.c.b16 %v5011, %v5003
    %v5580 = vpack.c.b16 %v5012, %v5004
    %v5581 = vpack.c.b16 %v5013, %v5005
    %v5582 = vpack.c.b16 %v5014, %v5006
    %v5583 = vpack.c.b16 %v5015, %v5007
    %v5584 = vpack.c.b16 %v5016, %v5008
    %v5585 = vpack.c.b16 %v5017, %v5009
    %v5586 = vpack.c.b16 %v5026, %v5018
    %v5587 = vpack.c.b16 %v5027, %v5019
    %v5588 = vpack.c.b16 %v5028, %v5020
    %v5589 = vpack.c.b16 %v5029, %v5021
    %v5590 = vpack.c.b16 %v5030, %v5022
    %v5591 = vpack.c.b16 %v5031, %v5023
    %v5592 = vpack.c.b16 %v5032, %v5024
    %v5593 = vpack.c.b16 %v5033, %v5025
    %v5594 = vpack.c.b16 %v5042, %v5034
    %v5595 = vpack.c.b16 %v5043, %v5035
    %v5596 = vpack.c.b16 %v5044, %v5036
    %v5597 = vpack.c.b16 %v5045, %v5037
    %v5598 = vpack.c.b16 %v5046, %v5038
    %v5599 = vpack.c.b16 %v5047, %v5039
    %v5600 = vpack.c.b16 %v5048, %v5040
    %v5601 = vpack.c.b16 %v5049, %v5041
    %v5602 = vpack.c.b16 %v5058, %v5050
    %v5603 = vpack.c.b16 %v5059, %v5051
    %v5604 = vpack.c.b16 %v5060, %v5052
    %v5605 = vpack.c.b16 %v5061, %v5053
    %v5606 = vpack.c.b16 %v5062, %v5054
    %v5607 = vpack.c.b16 %v5063, %v5055
    %v5608 = vpack.c.b16 %v5064, %v5056
    %v5609 = vpack.c.b16 %v5065, %v5057
    %v5610 = vpack.c.b16 %v5074, %v5066
    %v5611 = vpack.c.b16 %v5075, %v5067
    %v5612 = vpack.c.b16 %v5076, %v5068
    %v5613 = vpack.c.b16 %v5077, %v5069
    %v5614 = vpack.c.b16 %v5078, %v5070
    %v5615 = vpack.c.b16 %v5079, %v5071
    %v5616 = vpack.c.b16 %v5080, %v5072
    %v5617 = vpack.c.b16 %v5081, %v5073
    %v5618 = vpack.c.b16 %v5090, %v5082
    %v5619 = vpack.c.b16 %v5091, %v5083
    %v5620 = vpack.c.b16 %v5092, %v5084
    %v5621 = vpack.c.b16 %v5093, %v5085
    %v5622 = vpack.c.b16 %v5094, %v5086
    %v5623 = vpack.c.b16 %v5095, %v5087
    %v5624 = vpack.c.b16 %v5096, %v5088
    %v5625 = vpack.c.b16 %v5097, %v5089
    %v5626 = vpack.c.b16 %v5106, %v5098
    %v5627 = vpack.c.b16 %v5107, %v5099
    %v5628 = vpack.c.b16 %v5108, %v5100
    %v5629 = vpack.c.b16 %v5109, %v5101
    %v5630 = vpack.c.b16 %v5110, %v5102
    %v5631 = vpack.c.b16 %v5111, %v5103
    %v5632 = vpack.c.b16 %v5112, %v5104
    %v5633 = vpack.c.b16 %v5113, %v5105
    %v5634 = vpack.c.b16 %v5122, %v5114
    %v5635 = vpack.c.b16 %v5123, %v5115
    %v5636 = vpack.c.b16 %v5124, %v5116
    %v5637 = vpack.c.b16 %v5125, %v5117
    %v5638 = vpack.c.b16 %v5126, %v5118
    %v5639 = vpack.c.b16 %v5127, %v5119
    %v5640 = vpack.c.b16 %v5128, %v5120
    %v5641 = vpack.c.b16 %v5129, %v5121
    %6154 = vmatprep.subr.bf16.mxu0 %v5131
    %6155 = vmatpush1.bf16.msra.mxu0 %v5130
    %6156 = vmatprep.subr.bf16.mxu0 %v5139
    %6157 = vmatpush1.bf16.msra.mxu0 %v5138
    %6158 = vmatprep.subr.bf16.mxu0 %v5147
    %6159 = vmatpush1.bf16.msra.mxu0 %v5146
    %6160 = vmatprep.subr.bf16.mxu0 %v5155
    %6161 = vmatpush1.bf16.msra.mxu0 %v5154
    %6162 = vmatprep.subr.bf16.mxu0 %v5163
    %6163 = vmatpush1.bf16.msra.mxu0 %v5162
    %6164 = vmatprep.subr.bf16.mxu0 %v5171
    %6165 = vmatpush1.bf16.msra.mxu0 %v5170
    %6166 = vmatprep.subr.bf16.mxu0 %v5179
    %6167 = vmatpush1.bf16.msra.mxu0 %v5178
    %6168 = vmatprep.subr.bf16.mxu0 %v5187
    %6169 = vmatpush1.bf16.msra.mxu0 %v5186
    %6170 = vmatprep.subr.bf16.mxu0 %v5195
    %6171 = vmatpush1.bf16.msra.mxu0 %v5194
    %6172 = vmatprep.subr.bf16.mxu0 %v5203
    %6173 = vmatpush1.bf16.msra.mxu0 %v5202
    %6174 = vmatprep.subr.bf16.mxu0 %v5211
    %6175 = vmatpush1.bf16.msra.mxu0 %v5210
    %6176 = vmatprep.subr.bf16.mxu0 %v5219
    %6177 = vmatpush1.bf16.msra.mxu0 %v5218
    %6178 = vmatprep.subr.bf16.mxu0 %v5227
    %6179 = vmatpush1.bf16.msra.mxu0 %v5226
    %6180 = vmatprep.subr.bf16.mxu0 %v5235
    %6181 = vmatpush1.bf16.msra.mxu0 %v5234
    %6182 = vmatprep.subr.bf16.mxu0 %v5243
    %6183 = vmatpush1.bf16.msra.mxu0 %v5242
    %6184 = vmatprep.subr.bf16.mxu0 %v5251
    %6185 = vmatpush1.bf16.msra.mxu0 %v5250
    %6186 = vmatprep.mubr.bf16.mxu0 %v3033
    %6187 = vmatmul.mubr.bf16.gmra.mrb[0].mxu0 %v3032
    %v6188 = vpop.f32.mrb[0].mxu0
    %v6189 = vadd.f32 %v3557, %v6188
    %v6190 = vpop.f32.mrb[0].mxu0
    %v6191 = vadd.f32 %v3561, %v6190
    %v6192 = vpop.f32.mrb[0].mxu0
    %v6193 = vpop.f32.mrb[0].mxu0
    %6194 = vdwg.mxu0
    %6195 = vmatprep.subr.bf16.mxu0 %v5259
    %6196 = vmatpush1.bf16.msra.mxu0 %v5258
    %6197 = vmatprep.subr.bf16.mxu0 %v5267
    %6198 = vmatpush1.bf16.msra.mxu0 %v5266
    %6199 = vmatprep.subr.bf16.mxu0 %v5275
    %6200 = vmatpush1.bf16.msra.mxu0 %v5274
    %6201 = vmatprep.subr.bf16.mxu0 %v5283
    %6202 = vmatpush1.bf16.msra.mxu0 %v5282
    %6203 = vmatprep.subr.bf16.mxu0 %v5291
    %6204 = vmatpush1.bf16.msra.mxu0 %v5290
    %6205 = vmatprep.subr.bf16.mxu0 %v5299
    %6206 = vmatpush1.bf16.msra.mxu0 %v5298
    %6207 = vmatprep.subr.bf16.mxu0 %v5307
    %6208 = vmatpush1.bf16.msra.mxu0 %v5306
    %6209 = vmatprep.subr.bf16.mxu0 %v5315
    %6210 = vmatpush1.bf16.msra.mxu0 %v5314
    %6211 = vmatprep.subr.bf16.mxu0 %v5323
    %6212 = vmatpush1.bf16.msra.mxu0 %v5322
    %6213 = vmatprep.subr.bf16.mxu0 %v5331
    %6214 = vmatpush1.bf16.msra.mxu0 %v5330
    %6215 = vmatprep.subr.bf16.mxu0 %v5339
    %6216 = vmatpush1.bf16.msra.mxu0 %v5338
    %6217 = vmatprep.subr.bf16.mxu0 %v5347
    %6218 = vmatpush1.bf16.msra.mxu0 %v5346
    %6219 = vmatprep.subr.bf16.mxu0 %v5355
    %6220 = vmatpush1.bf16.msra.mxu0 %v5354
    %6221 = vmatprep.subr.bf16.mxu0 %v5363
    %6222 = vmatpush1.bf16.msra.mxu0 %v5362
    %6223 = vmatprep.subr.bf16.mxu0 %v5371
    %6224 = vmatpush1.bf16.msra.mxu0 %v5370
    %6225 = vmatprep.subr.bf16.mxu0 %v5379
    %6226 = vmatpush1.bf16.msra.mxu0 %v5378
    %6227 = vmatprep.mubr.bf16.mxu0 %v3035
    %6228 = vmatmul.mubr.bf16.gmra.mrb[0].mxu0 %v3034
    %v6229 = vpop.f32.mrb[0].mxu0
    %v6230 = vadd.f32 %v6189, %v6229
    %v6231 = vpop.f32.mrb[0].mxu0
    %v6232 = vadd.f32 %v6191, %v6231
    %v6233 = vpop.f32.mrb[0].mxu0
    %v6234 = vpop.f32.mrb[0].mxu0
    %6235 = vdwg.mxu0
    %6236 = vmatprep.subr.bf16.mxu0 %v5387
    %6237 = vmatpush1.bf16.msra.mxu0 %v5386
    %6238 = vmatprep.subr.bf16.mxu0 %v5395
    %6239 = vmatpush1.bf16.msra.mxu0 %v5394
    %6240 = vmatprep.subr.bf16.mxu0 %v5403
    %6241 = vmatpush1.bf16.msra.mxu0 %v5402
    %6242 = vmatprep.subr.bf16.mxu0 %v5411
    %6243 = vmatpush1.bf16.msra.mxu0 %v5410
    %6244 = vmatprep.subr.bf16.mxu0 %v5419
    %6245 = vmatpush1.bf16.msra.mxu0 %v5418
    %6246 = vmatprep.subr.bf16.mxu0 %v5427
    %6247 = vmatpush1.bf16.msra.mxu0 %v5426
    %6248 = vmatprep.subr.bf16.mxu0 %v5435
    %6249 = vmatpush1.bf16.msra.mxu0 %v5434
    %6250 = vmatprep.subr.bf16.mxu0 %v5443
    %6251 = vmatpush1.bf16.msra.mxu0 %v5442
    %6252 = vmatprep.subr.bf16.mxu0 %v5451
    %6253 = vmatpush1.bf16.msra.mxu0 %v5450
    %6254 = vmatprep.subr.bf16.mxu0 %v5459
    %6255 = vmatpush1.bf16.msra.mxu0 %v5458
    %6256 = vmatprep.subr.bf16.mxu0 %v5467
    %6257 = vmatpush1.bf16.msra.mxu0 %v5466
    %6258 = vmatprep.subr.bf16.mxu0 %v5475
    %6259 = vmatpush1.bf16.msra.mxu0 %v5474
    %6260 = vmatprep.subr.bf16.mxu0 %v5483
    %6261 = vmatpush1.bf16.msra.mxu0 %v5482
    %6262 = vmatprep.subr.bf16.mxu0 %v5491
    %6263 = vmatpush1.bf16.msra.mxu0 %v5490
    %6264 = vmatprep.subr.bf16.mxu0 %v5499
    %6265 = vmatpush1.bf16.msra.mxu0 %v5498
    %6266 = vmatprep.subr.bf16.mxu0 %v5507
    %6267 = vmatpush1.bf16.msra.mxu0 %v5506
    %6268 = vmatprep.mubr.bf16.mxu0 %v3037
    %6269 = vmatmul.mubr.bf16.gmra.mrb[0].mxu0 %v3036
    %v6270 = vpop.f32.mrb[0].mxu0
    %v6271 = vadd.f32 %v6230, %v6270
    %v6272 = vpop.f32.mrb[0].mxu0
    %v6273 = vadd.f32 %v6232, %v6272
    %v6274 = vpop.f32.mrb[0].mxu0
    %v6275 = vpop.f32.mrb[0].mxu0
    %6276 = vdwg.mxu0
    %6277 = vmatprep.subr.bf16.mxu0 %v5515
    %6278 = vmatpush1.bf16.msra.mxu0 %v5514
    %6279 = vmatprep.subr.bf16.mxu0 %v5523
    %6280 = vmatpush1.bf16.msra.mxu0 %v5522
    %6281 = vmatprep.subr.bf16.mxu0 %v5531
    %6282 = vmatpush1.bf16.msra.mxu0 %v5530
    %6283 = vmatprep.subr.bf16.mxu0 %v5539
    %6284 = vmatpush1.bf16.msra.mxu0 %v5538
    %6285 = vmatprep.subr.bf16.mxu0 %v5547
    %6286 = vmatpush1.bf16.msra.mxu0 %v5546
    %6287 = vmatprep.subr.bf16.mxu0 %v5555
    %6288 = vmatpush1.bf16.msra.mxu0 %v5554
    %6289 = vmatprep.subr.bf16.mxu0 %v5563
    %6290 = vmatpush1.bf16.msra.mxu0 %v5562
    %6291 = vmatprep.subr.bf16.mxu0 %v5571
    %6292 = vmatpush1.bf16.msra.mxu0 %v5570
    %6293 = vmatprep.subr.bf16.mxu0 %v5579
    %6294 = vmatpush1.bf16.msra.mxu0 %v5578
    %6295 = vmatprep.subr.bf16.mxu0 %v5587
    %6296 = vmatpush1.bf16.msra.mxu0 %v5586
    %6297 = vmatprep.subr.bf16.mxu0 %v5595
    %6298 = vmatpush1.bf16.msra.mxu0 %v5594
    %6299 = vmatprep.subr.bf16.mxu0 %v5603
    %6300 = vmatpush1.bf16.msra.mxu0 %v5602
    %6301 = vmatprep.subr.bf16.mxu0 %v5611
    %6302 = vmatpush1.bf16.msra.mxu0 %v5610
    %6303 = vmatprep.subr.bf16.mxu0 %v5619
    %6304 = vmatpush1.bf16.msra.mxu0 %v5618
    %6305 = vmatprep.subr.bf16.mxu0 %v5627
    %6306 = vmatpush1.bf16.msra.mxu0 %v5626
    %6307 = vmatprep.subr.bf16.mxu0 %v5635
    %6308 = vmatpush1.bf16.msra.mxu0 %v5634
    %6309 = vmatprep.mubr.bf16.mxu0 %v3039
    %6310 = vmatmul.mubr.bf16.gmra.mrb[0].mxu0 %v3038
    %v6311 = vpop.f32.mrb[0].mxu0
    %v6312 = vadd.f32 %v6271, %v6311
    %v6313 = vpop.f32.mrb[0].mxu0
    %v6314 = vadd.f32 %v6273, %v6313
    %v6315 = vpop.f32.mrb[0].mxu0
    %v6316 = vpop.f32.mrb[0].mxu0
    %6317 = vdwg.mxu0
    %6318 = vmatprep.subr.bf16.mxu0 %v5133
    %6319 = vmatpush1.bf16.msra.mxu0 %v5132
    %6320 = vmatprep.subr.bf16.mxu0 %v5141
    %6321 = vmatpush1.bf16.msra.mxu0 %v5140
    %6322 = vmatprep.subr.bf16.mxu0 %v5149
    %6323 = vmatpush1.bf16.msra.mxu0 %v5148
    %6324 = vmatprep.subr.bf16.mxu0 %v5157
    %6325 = vmatpush1.bf16.msra.mxu0 %v5156
    %6326 = vmatprep.subr.bf16.mxu0 %v5165
    %6327 = vmatpush1.bf16.msra.mxu0 %v5164
    %6328 = vmatprep.subr.bf16.mxu0 %v5173
    %6329 = vmatpush1.bf16.msra.mxu0 %v5172
    %6330 = vmatprep.subr.bf16.mxu0 %v5181
    %6331 = vmatpush1.bf16.msra.mxu0 %v5180
    %6332 = vmatprep.subr.bf16.mxu0 %v5189
    %6333 = vmatpush1.bf16.msra.mxu0 %v5188
    %6334 = vmatprep.subr.bf16.mxu0 %v5197
    %6335 = vmatpush1.bf16.msra.mxu0 %v5196
    %6336 = vmatprep.subr.bf16.mxu0 %v5205
    %6337 = vmatpush1.bf16.msra.mxu0 %v5204
    %6338 = vmatprep.subr.bf16.mxu0 %v5213
    %6339 = vmatpush1.bf16.msra.mxu0 %v5212
    %6340 = vmatprep.subr.bf16.mxu0 %v5221
    %6341 = vmatpush1.bf16.msra.mxu0 %v5220
    %6342 = vmatprep.subr.bf16.mxu0 %v5229
    %6343 = vmatpush1.bf16.msra.mxu0 %v5228
    %6344 = vmatprep.subr.bf16.mxu0 %v5237
    %6345 = vmatpush1.bf16.msra.mxu0 %v5236
    %6346 = vmatprep.subr.bf16.mxu0 %v5245
    %6347 = vmatpush1.bf16.msra.mxu0 %v5244
    %6348 = vmatprep.subr.bf16.mxu0 %v5253
    %6349 = vmatpush1.bf16.msra.mxu0 %v5252
    %6350 = vmatprep.mubr.bf16.mxu0 %v3033
    %6351 = vmatmul.mubr.bf16.gmra.mrb[0].mxu0 %v3032
    %v6352 = vpop.f32.mrb[0].mxu0
    %v6353 = vadd.f32 %v3565, %v6352
    %v6354 = vpop.f32.mrb[0].mxu0
    %v6355 = vadd.f32 %v3569, %v6354
    %v6356 = vpop.f32.mrb[0].mxu0
    %v6357 = vpop.f32.mrb[0].mxu0
    %6358 = vdwg.mxu0
    %6359 = vmatprep.subr.bf16.mxu0 %v5261
    %6360 = vmatpush1.bf16.msra.mxu0 %v5260
    %6361 = vmatprep.subr.bf16.mxu0 %v5269
    %6362 = vmatpush1.bf16.msra.mxu0 %v5268
    %6363 = vmatprep.subr.bf16.mxu0 %v5277
    %6364 = vmatpush1.bf16.msra.mxu0 %v5276
    %6365 = vmatprep.subr.bf16.mxu0 %v5285
    %6366 = vmatpush1.bf16.msra.mxu0 %v5284
    %6367 = vmatprep.subr.bf16.mxu0 %v5293
    %6368 = vmatpush1.bf16.msra.mxu0 %v5292
    %6369 = vmatprep.subr.bf16.mxu0 %v5301
    %6370 = vmatpush1.bf16.msra.mxu0 %v5300
    %6371 = vmatprep.subr.bf16.mxu0 %v5309
    %6372 = vmatpush1.bf16.msra.mxu0 %v5308
    %6373 = vmatprep.subr.bf16.mxu0 %v5317
    %6374 = vmatpush1.bf16.msra.mxu0 %v5316
    %6375 = vmatprep.subr.bf16.mxu0 %v5325
    %6376 = vmatpush1.bf16.msra.mxu0 %v5324
    %6377 = vmatprep.subr.bf16.mxu0 %v5333
    %6378 = vmatpush1.bf16.msra.mxu0 %v5332
    %6379 = vmatprep.subr.bf16.mxu0 %v5341
    %6380 = vmatpush1.bf16.msra.mxu0 %v5340
    %6381 = vmatprep.subr.bf16.mxu0 %v5349
    %6382 = vmatpush1.bf16.msra.mxu0 %v5348
    %6383 = vmatprep.subr.bf16.mxu0 %v5357
    %6384 = vmatpush1.bf16.msra.mxu0 %v5356
    %6385 = vmatprep.subr.bf16.mxu0 %v5365
    %6386 = vmatpush1.bf16.msra.mxu0 %v5364
    %6387 = vmatprep.subr.bf16.mxu0 %v5373
    %6388 = vmatpush1.bf16.msra.mxu0 %v5372
    %6389 = vmatprep.subr.bf16.mxu0 %v5381
    %6390 = vmatpush1.bf16.msra.mxu0 %v5380
    %6391 = vmatprep.mubr.bf16.mxu0 %v3035
    %6392 = vmatmul.mubr.bf16.gmra.mrb[0].mxu0 %v3034
    %v6393 = vpop.f32.mrb[0].mxu0
    %v6394 = vadd.f32 %v6353, %v6393
    %v6395 = vpop.f32.mrb[0].mxu0
    %v6396 = vadd.f32 %v6355, %v6395
    %v6397 = vpop.f32.mrb[0].mxu0
    %v6398 = vpop.f32.mrb[0].mxu0
    %6399 = vdwg.mxu0
    %6400 = vmatprep.subr.bf16.mxu0 %v5389
    %6401 = vmatpush1.bf16.msra.mxu0 %v5388
    %6402 = vmatprep.subr.bf16.mxu0 %v5397
    %6403 = vmatpush1.bf16.msra.mxu0 %v5396
    %6404 = vmatprep.subr.bf16.mxu0 %v5405
    %6405 = vmatpush1.bf16.msra.mxu0 %v5404
    %6406 = vmatprep.subr.bf16.mxu0 %v5413
    %6407 = vmatpush1.bf16.msra.mxu0 %v5412
    %6408 = vmatprep.subr.bf16.mxu0 %v5421
    %6409 = vmatpush1.bf16.msra.mxu0 %v5420
    %6410 = vmatprep.subr.bf16.mxu0 %v5429
    %6411 = vmatpush1.bf16.msra.mxu0 %v5428
    %6412 = vmatprep.subr.bf16.mxu0 %v5437
    %6413 = vmatpush1.bf16.msra.mxu0 %v5436
    %6414 = vmatprep.subr.bf16.mxu0 %v5445
    %6415 = vmatpush1.bf16.msra.mxu0 %v5444
    %6416 = vmatprep.subr.bf16.mxu0 %v5453
    %6417 = vmatpush1.bf16.msra.mxu0 %v5452
    %6418 = vmatprep.subr.bf16.mxu0 %v5461
    %6419 = vmatpush1.bf16.msra.mxu0 %v5460
    %6420 = vmatprep.subr.bf16.mxu0 %v5469
    %6421 = vmatpush1.bf16.msra.mxu0 %v5468
    %6422 = vmatprep.subr.bf16.mxu0 %v5477
    %6423 = vmatpush1.bf16.msra.mxu0 %v5476
    %6424 = vmatprep.subr.bf16.mxu0 %v5485
    %6425 = vmatpush1.bf16.msra.mxu0 %v5484
    %6426 = vmatprep.subr.bf16.mxu0 %v5493
    %6427 = vmatpush1.bf16.msra.mxu0 %v5492
    %6428 = vmatprep.subr.bf16.mxu0 %v5501
    %6429 = vmatpush1.bf16.msra.mxu0 %v5500
    %6430 = vmatprep.subr.bf16.mxu0 %v5509
    %6431 = vmatpush1.bf16.msra.mxu0 %v5508
    %6432 = vmatprep.mubr.bf16.mxu0 %v3037
    %6433 = vmatmul.mubr.bf16.gmra.mrb[0].mxu0 %v3036
    %v6434 = vpop.f32.mrb[0].mxu0
    %v6435 = vadd.f32 %v6394, %v6434
    %v6436 = vpop.f32.mrb[0].mxu0
    %v6437 = vadd.f32 %v6396, %v6436
    %v6438 = vpop.f32.mrb[0].mxu0
    %v6439 = vpop.f32.mrb[0].mxu0
    %6440 = vdwg.mxu0
    %6441 = vmatprep.subr.bf16.mxu0 %v5517
    %6442 = vmatpush1.bf16.msra.mxu0 %v5516
    %6443 = vmatprep.subr.bf16.mxu0 %v5525
    %6444 = vmatpush1.bf16.msra.mxu0 %v5524
    %6445 = vmatprep.subr.bf16.mxu0 %v5533
    %6446 = vmatpush1.bf16.msra.mxu0 %v5532
    %6447 = vmatprep.subr.bf16.mxu0 %v5541
    %6448 = vmatpush1.bf16.msra.mxu0 %v5540
    %6449 = vmatprep.subr.bf16.mxu0 %v5549
    %6450 = vmatpush1.bf16.msra.mxu0 %v5548
    %6451 = vmatprep.subr.bf16.mxu0 %v5557
    %6452 = vmatpush1.bf16.msra.mxu0 %v5556
    %6453 = vmatprep.subr.bf16.mxu0 %v5565
    %6454 = vmatpush1.bf16.msra.mxu0 %v5564
    %6455 = vmatprep.subr.bf16.mxu0 %v5573
    %6456 = vmatpush1.bf16.msra.mxu0 %v5572
    %6457 = vmatprep.subr.bf16.mxu0 %v5581
    %6458 = vmatpush1.bf16.msra.mxu0 %v5580
    %6459 = vmatprep.subr.bf16.mxu0 %v5589
    %6460 = vmatpush1.bf16.msra.mxu0 %v5588
    %6461 = vmatprep.subr.bf16.mxu0 %v5597
    %6462 = vmatpush1.bf16.msra.mxu0 %v5596
    %6463 = vmatprep.subr.bf16.mxu0 %v5605
    %6464 = vmatpush1.bf16.msra.mxu0 %v5604
    %6465 = vmatprep.subr.bf16.mxu0 %v5613
    %6466 = vmatpush1.bf16.msra.mxu0 %v5612
    %6467 = vmatprep.subr.bf16.mxu0 %v5621
    %6468 = vmatpush1.bf16.msra.mxu0 %v5620
    %6469 = vmatprep.subr.bf16.mxu0 %v5629
    %6470 = vmatpush1.bf16.msra.mxu0 %v5628
    %6471 = vmatprep.subr.bf16.mxu0 %v5637
    %6472 = vmatpush1.bf16.msra.mxu0 %v5636
    %6473 = vmatprep.mubr.bf16.mxu0 %v3039
    %6474 = vmatmul.mubr.bf16.gmra.mrb[0].mxu0 %v3038
    %v6475 = vpop.f32.mrb[0].mxu0
    %v6476 = vadd.f32 %v6435, %v6475
    %v6477 = vpop.f32.mrb[0].mxu0
    %v6478 = vadd.f32 %v6437, %v6477
    %v6479 = vpop.f32.mrb[0].mxu0
    %v6480 = vpop.f32.mrb[0].mxu0
    %6481 = vdwg.mxu0
    %6482 = vmatprep.subr.bf16.mxu0 %v5135
    %6483 = vmatpush1.bf16.msra.mxu0 %v5134
    %6484 = vmatprep.subr.bf16.mxu0 %v5143
    %6485 = vmatpush1.bf16.msra.mxu0 %v5142
    %6486 = vmatprep.subr.bf16.mxu0 %v5151
    %6487 = vmatpush1.bf16.msra.mxu0 %v5150
    %6488 = vmatprep.subr.bf16.mxu0 %v5159
    %6489 = vmatpush1.bf16.msra.mxu0 %v5158
    %6490 = vmatprep.subr.bf16.mxu0 %v5167
    %6491 = vmatpush1.bf16.msra.mxu0 %v5166
    %6492 = vmatprep.subr.bf16.mxu0 %v5175
    %6493 = vmatpush1.bf16.msra.mxu0 %v5174
    %6494 = vmatprep.subr.bf16.mxu0 %v5183
    %6495 = vmatpush1.bf16.msra.mxu0 %v5182
    %6496 = vmatprep.subr.bf16.mxu0 %v5191
    %6497 = vmatpush1.bf16.msra.mxu0 %v5190
    %6498 = vmatprep.subr.bf16.mxu0 %v5199
    %6499 = vmatpush1.bf16.msra.mxu0 %v5198
    %6500 = vmatprep.subr.bf16.mxu0 %v5207
    %6501 = vmatpush1.bf16.msra.mxu0 %v5206
    %6502 = vmatprep.subr.bf16.mxu0 %v5215
    %6503 = vmatpush1.bf16.msra.mxu0 %v5214
    %6504 = vmatprep.subr.bf16.mxu0 %v5223
    %6505 = vmatpush1.bf16.msra.mxu0 %v5222
    %6506 = vmatprep.subr.bf16.mxu0 %v5231
    %6507 = vmatpush1.bf16.msra.mxu0 %v5230
    %6508 = vmatprep.subr.bf16.mxu0 %v5239
    %6509 = vmatpush1.bf16.msra.mxu0 %v5238
    %6510 = vmatprep.subr.bf16.mxu0 %v5247
    %6511 = vmatpush1.bf16.msra.mxu0 %v5246
    %6512 = vmatprep.subr.bf16.mxu0 %v5255
    %6513 = vmatpush1.bf16.msra.mxu0 %v5254
    %6514 = vmatprep.mubr.bf16.mxu0 %v3033
    %6515 = vmatmul.mubr.bf16.gmra.mrb[0].mxu0 %v3032
    %v6516 = vpop.f32.mrb[0].mxu0
    %v6517 = vadd.f32 %v3573, %v6516
    %v6518 = vpop.f32.mrb[0].mxu0
    %v6519 = vadd.f32 %v3577, %v6518
    %v6520 = vpop.f32.mrb[0].mxu0
    %v6521 = vpop.f32.mrb[0].mxu0
    %6522 = vdwg.mxu0
    %6523 = vmatprep.subr.bf16.mxu0 %v5263
    %6524 = vmatpush1.bf16.msra.mxu0 %v5262
    %6525 = vmatprep.subr.bf16.mxu0 %v5271
    %6526 = vmatpush1.bf16.msra.mxu0 %v5270
    %6527 = vmatprep.subr.bf16.mxu0 %v5279
    %6528 = vmatpush1.bf16.msra.mxu0 %v5278
    %6529 = vmatprep.subr.bf16.mxu0 %v5287
    %6530 = vmatpush1.bf16.msra.mxu0 %v5286
    %6531 = vmatprep.subr.bf16.mxu0 %v5295
    %6532 = vmatpush1.bf16.msra.mxu0 %v5294
    %6533 = vmatprep.subr.bf16.mxu0 %v5303
    %6534 = vmatpush1.bf16.msra.mxu0 %v5302
    %6535 = vmatprep.subr.bf16.mxu0 %v5311
    %6536 = vmatpush1.bf16.msra.mxu0 %v5310
    %6537 = vmatprep.subr.bf16.mxu0 %v5319
    %6538 = vmatpush1.bf16.msra.mxu0 %v5318
    %6539 = vmatprep.subr.bf16.mxu0 %v5327
    %6540 = vmatpush1.bf16.msra.mxu0 %v5326
    %6541 = vmatprep.subr.bf16.mxu0 %v5335
    %6542 = vmatpush1.bf16.msra.mxu0 %v5334
    %6543 = vmatprep.subr.bf16.mxu0 %v5343
    %6544 = vmatpush1.bf16.msra.mxu0 %v5342
    %6545 = vmatprep.subr.bf16.mxu0 %v5351
    %6546 = vmatpush1.bf16.msra.mxu0 %v5350
    %6547 = vmatprep.subr.bf16.mxu0 %v5359
    %6548 = vmatpush1.bf16.msra.mxu0 %v5358
    %6549 = vmatprep.subr.bf16.mxu0 %v5367
    %6550 = vmatpush1.bf16.msra.mxu0 %v5366
    %6551 = vmatprep.subr.bf16.mxu0 %v5375
    %6552 = vmatpush1.bf16.msra.mxu0 %v5374
    %6553 = vmatprep.subr.bf16.mxu0 %v5383
    %6554 = vmatpush1.bf16.msra.mxu0 %v5382
    %6555 = vmatprep.mubr.bf16.mxu0 %v3035
    %6556 = vmatmul.mubr.bf16.gmra.mrb[0].mxu0 %v3034
    %v6557 = vpop.f32.mrb[0].mxu0
    %v6558 = vadd.f32 %v6517, %v6557
    %v6559 = vpop.f32.mrb[0].mxu0
    %v6560 = vadd.f32 %v6519, %v6559
    %v6561 = vpop.f32.mrb[0].mxu0
    %v6562 = vpop.f32.mrb[0].mxu0
    %6563 = vdwg.mxu0
    %6564 = vmatprep.subr.bf16.mxu0 %v5391
    %6565 = vmatpush1.bf16.msra.mxu0 %v5390
    %6566 = vmatprep.subr.bf16.mxu0 %v5399
    %6567 = vmatpush1.bf16.msra.mxu0 %v5398
    %6568 = vmatprep.subr.bf16.mxu0 %v5407
    %6569 = vmatpush1.bf16.msra.mxu0 %v5406
    %6570 = vmatprep.subr.bf16.mxu0 %v5415
    %6571 = vmatpush1.bf16.msra.mxu0 %v5414
    %6572 = vmatprep.subr.bf16.mxu0 %v5423
    %6573 = vmatpush1.bf16.msra.mxu0 %v5422
    %6574 = vmatprep.subr.bf16.mxu0 %v5431
    %6575 = vmatpush1.bf16.msra.mxu0 %v5430
    %6576 = vmatprep.subr.bf16.mxu0 %v5439
    %6577 = vmatpush1.bf16.msra.mxu0 %v5438
    %6578 = vmatprep.subr.bf16.mxu0 %v5447
    %6579 = vmatpush1.bf16.msra.mxu0 %v5446
    %6580 = vmatprep.subr.bf16.mxu0 %v5455
    %6581 = vmatpush1.bf16.msra.mxu0 %v5454
    %6582 = vmatprep.subr.bf16.mxu0 %v5463
    %6583 = vmatpush1.bf16.msra.mxu0 %v5462
    %6584 = vmatprep.subr.bf16.mxu0 %v5471
    %6585 = vmatpush1.bf16.msra.mxu0 %v5470
    %6586 = vmatprep.subr.bf16.mxu0 %v5479
    %6587 = vmatpush1.bf16.msra.mxu0 %v5478
    %6588 = vmatprep.subr.bf16.mxu0 %v5487
    %6589 = vmatpush1.bf16.msra.mxu0 %v5486
    %6590 = vmatprep.subr.bf16.mxu0 %v5495
    %6591 = vmatpush1.bf16.msra.mxu0 %v5494
    %6592 = vmatprep.subr.bf16.mxu0 %v5503
    %6593 = vmatpush1.bf16.msra.mxu0 %v5502
    %6594 = vmatprep.subr.bf16.mxu0 %v5511
    %6595 = vmatpush1.bf16.msra.mxu0 %v5510
    %6596 = vmatprep.mubr.bf16.mxu0 %v3037
    %6597 = vmatmul.mubr.bf16.gmra.mrb[0].mxu0 %v3036
    %v6598 = vpop.f32.mrb[0].mxu0
    %v6599 = vadd.f32 %v6558, %v6598
    %v6600 = vpop.f32.mrb[0].mxu0
    %v6601 = vadd.f32 %v6560, %v6600
    %v6602 = vpop.f32.mrb[0].mxu0
    %v6603 = vpop.f32.mrb[0].mxu0
    %6604 = vdwg.mxu0
    %6605 = vmatprep.subr.bf16.mxu0 %v5519
    %6606 = vmatpush1.bf16.msra.mxu0 %v5518
    %6607 = vmatprep.subr.bf16.mxu0 %v5527
    %6608 = vmatpush1.bf16.msra.mxu0 %v5526
    %6609 = vmatprep.subr.bf16.mxu0 %v5535
    %6610 = vmatpush1.bf16.msra.mxu0 %v5534
    %6611 = vmatprep.subr.bf16.mxu0 %v5543
    %6612 = vmatpush1.bf16.msra.mxu0 %v5542
    %6613 = vmatprep.subr.bf16.mxu0 %v5551
    %6614 = vmatpush1.bf16.msra.mxu0 %v5550
    %6615 = vmatprep.subr.bf16.mxu0 %v5559
    %6616 = vmatpush1.bf16.msra.mxu0 %v5558
    %6617 = vmatprep.subr.bf16.mxu0 %v5567
    %6618 = vmatpush1.bf16.msra.mxu0 %v5566
    %6619 = vmatprep.subr.bf16.mxu0 %v5575
    %6620 = vmatpush1.bf16.msra.mxu0 %v5574
    %6621 = vmatprep.subr.bf16.mxu0 %v5583
    %6622 = vmatpush1.bf16.msra.mxu0 %v5582
    %6623 = vmatprep.subr.bf16.mxu0 %v5591
    %6624 = vmatpush1.bf16.msra.mxu0 %v5590
    %6625 = vmatprep.subr.bf16.mxu0 %v5599
    %6626 = vmatpush1.bf16.msra.mxu0 %v5598
    %6627 = vmatprep.subr.bf16.mxu0 %v5607
    %6628 = vmatpush1.bf16.msra.mxu0 %v5606
    %6629 = vmatprep.subr.bf16.mxu0 %v5615
    %6630 = vmatpush1.bf16.msra.mxu0 %v5614
    %6631 = vmatprep.subr.bf16.mxu0 %v5623
    %6632 = vmatpush1.bf16.msra.mxu0 %v5622
    %6633 = vmatprep.subr.bf16.mxu0 %v5631
    %6634 = vmatpush1.bf16.msra.mxu0 %v5630
    %6635 = vmatprep.subr.bf16.mxu0 %v5639
    %6636 = vmatpush1.bf16.msra.mxu0 %v5638
    %6637 = vmatprep.mubr.bf16.mxu0 %v3039
    %6638 = vmatmul.mubr.bf16.gmra.mrb[0].mxu0 %v3038
    %v6639 = vpop.f32.mrb[0].mxu0
    %v6640 = vadd.f32 %v6599, %v6639
    %v6641 = vpop.f32.mrb[0].mxu0
    %v6642 = vadd.f32 %v6601, %v6641
    %v6643 = vpop.f32.mrb[0].mxu0
    %v6644 = vpop.f32.mrb[0].mxu0
    %6645 = vdwg.mxu0
    %6646 = vmatprep.subr.bf16.mxu0 %v5137
    %6647 = vmatpush1.bf16.msra.mxu0 %v5136
    %6648 = vmatprep.subr.bf16.mxu0 %v5145
    %6649 = vmatpush1.bf16.msra.mxu0 %v5144
    %6650 = vmatprep.subr.bf16.mxu0 %v5153
    %6651 = vmatpush1.bf16.msra.mxu0 %v5152
    %6652 = vmatprep.subr.bf16.mxu0 %v5161
    %6653 = vmatpush1.bf16.msra.mxu0 %v5160
    %6654 = vmatprep.subr.bf16.mxu0 %v5169
    %6655 = vmatpush1.bf16.msra.mxu0 %v5168
    %6656 = vmatprep.subr.bf16.mxu0 %v5177
    %6657 = vmatpush1.bf16.msra.mxu0 %v5176
    %6658 = vmatprep.subr.bf16.mxu0 %v5185
    %6659 = vmatpush1.bf16.msra.mxu0 %v5184
    %6660 = vmatprep.subr.bf16.mxu0 %v5193
    %6661 = vmatpush1.bf16.msra.mxu0 %v5192
    %6662 = vmatprep.subr.bf16.mxu0 %v5201
    %6663 = vmatpush1.bf16.msra.mxu0 %v5200
    %6664 = vmatprep.subr.bf16.mxu0 %v5209
    %6665 = vmatpush1.bf16.msra.mxu0 %v5208
    %6666 = vmatprep.subr.bf16.mxu0 %v5217
    %6667 = vmatpush1.bf16.msra.mxu0 %v5216
    %6668 = vmatprep.subr.bf16.mxu0 %v5225
    %6669 = vmatpush1.bf16.msra.mxu0 %v5224
    %6670 = vmatprep.subr.bf16.mxu0 %v5233
    %6671 = vmatpush1.bf16.msra.mxu0 %v5232
    %6672 = vmatprep.subr.bf16.mxu0 %v5241
    %6673 = vmatpush1.bf16.msra.mxu0 %v5240
    %6674 = vmatprep.subr.bf16.mxu0 %v5249
    %6675 = vmatpush1.bf16.msra.mxu0 %v5248
    %6676 = vmatprep.subr.bf16.mxu0 %v5257
    %6677 = vmatpush1.bf16.msra.mxu0 %v5256
    %6678 = vmatprep.mubr.bf16.mxu0 %v3033
    %6679 = vmatmul.mubr.bf16.gmra.mrb[0].mxu0 %v3032
    %v6680 = vpop.f32.mrb[0].mxu0
    %v6681 = vadd.f32 %v3581, %v6680
    %v6682 = vpop.f32.mrb[0].mxu0
    %v6683 = vadd.f32 %v3585, %v6682
    %v6684 = vpop.f32.mrb[0].mxu0
    %v6685 = vpop.f32.mrb[0].mxu0
    %6686 = vdwg.mxu0
    %6687 = vmatprep.subr.bf16.mxu0 %v5265
    %6688 = vmatpush1.bf16.msra.mxu0 %v5264
    %6689 = vmatprep.subr.bf16.mxu0 %v5273
    %6690 = vmatpush1.bf16.msra.mxu0 %v5272
    %6691 = vmatprep.subr.bf16.mxu0 %v5281
    %6692 = vmatpush1.bf16.msra.mxu0 %v5280
    %6693 = vmatprep.subr.bf16.mxu0 %v5289
    %6694 = vmatpush1.bf16.msra.mxu0 %v5288
    %6695 = vmatprep.subr.bf16.mxu0 %v5297
    %6696 = vmatpush1.bf16.msra.mxu0 %v5296
    %6697 = vmatprep.subr.bf16.mxu0 %v5305
    %6698 = vmatpush1.bf16.msra.mxu0 %v5304
    %6699 = vmatprep.subr.bf16.mxu0 %v5313
    %6700 = vmatpush1.bf16.msra.mxu0 %v5312
    %6701 = vmatprep.subr.bf16.mxu0 %v5321
    %6702 = vmatpush1.bf16.msra.mxu0 %v5320
    %6703 = vmatprep.subr.bf16.mxu0 %v5329
    %6704 = vmatpush1.bf16.msra.mxu0 %v5328
    %6705 = vmatprep.subr.bf16.mxu0 %v5337
    %6706 = vmatpush1.bf16.msra.mxu0 %v5336
    %6707 = vmatprep.subr.bf16.mxu0 %v5345
    %6708 = vmatpush1.bf16.msra.mxu0 %v5344
    %6709 = vmatprep.subr.bf16.mxu0 %v5353
    %6710 = vmatpush1.bf16.msra.mxu0 %v5352
    %6711 = vmatprep.subr.bf16.mxu0 %v5361
    %6712 = vmatpush1.bf16.msra.mxu0 %v5360
    %6713 = vmatprep.subr.bf16.mxu0 %v5369
    %6714 = vmatpush1.bf16.msra.mxu0 %v5368
    %6715 = vmatprep.subr.bf16.mxu0 %v5377
    %6716 = vmatpush1.bf16.msra.mxu0 %v5376
    %6717 = vmatprep.subr.bf16.mxu0 %v5385
    %6718 = vmatpush1.bf16.msra.mxu0 %v5384
    %6719 = vmatprep.mubr.bf16.mxu0 %v3035
    %6720 = vmatmul.mubr.bf16.gmra.mrb[0].mxu0 %v3034
    %v6721 = vpop.f32.mrb[0].mxu0
    %v6722 = vadd.f32 %v6681, %v6721
    %v6723 = vpop.f32.mrb[0].mxu0
    %v6724 = vadd.f32 %v6683, %v6723
    %v6725 = vpop.f32.mrb[0].mxu0
    %v6726 = vpop.f32.mrb[0].mxu0
    %6727 = vdwg.mxu0
    %6728 = vmatprep.subr.bf16.mxu0 %v5393
    %6729 = vmatpush1.bf16.msra.mxu0 %v5392
    %6730 = vmatprep.subr.bf16.mxu0 %v5401
    %6731 = vmatpush1.bf16.msra.mxu0 %v5400
    %6732 = vmatprep.subr.bf16.mxu0 %v5409
    %6733 = vmatpush1.bf16.msra.mxu0 %v5408
    %6734 = vmatprep.subr.bf16.mxu0 %v5417
    %6735 = vmatpush1.bf16.msra.mxu0 %v5416
    %6736 = vmatprep.subr.bf16.mxu0 %v5425
    %6737 = vmatpush1.bf16.msra.mxu0 %v5424
    %6738 = vmatprep.subr.bf16.mxu0 %v5433
    %6739 = vmatpush1.bf16.msra.mxu0 %v5432
    %6740 = vmatprep.subr.bf16.mxu0 %v5441
    %6741 = vmatpush1.bf16.msra.mxu0 %v5440
    %6742 = vmatprep.subr.bf16.mxu0 %v5449
    %6743 = vmatpush1.bf16.msra.mxu0 %v5448
    %6744 = vmatprep.subr.bf16.mxu0 %v5457
    %6745 = vmatpush1.bf16.msra.mxu0 %v5456
    %6746 = vmatprep.subr.bf16.mxu0 %v5465
    %6747 = vmatpush1.bf16.msra.mxu0 %v5464
    %6748 = vmatprep.subr.bf16.mxu0 %v5473
    %6749 = vmatpush1.bf16.msra.mxu0 %v5472
    %6750 = vmatprep.subr.bf16.mxu0 %v5481
    %6751 = vmatpush1.bf16.msra.mxu0 %v5480
    %6752 = vmatprep.subr.bf16.mxu0 %v5489
    %6753 = vmatpush1.bf16.msra.mxu0 %v5488
    %6754 = vmatprep.subr.bf16.mxu0 %v5497
    %6755 = vmatpush1.bf16.msra.mxu0 %v5496
    %6756 = vmatprep.subr.bf16.mxu0 %v5505
    %6757 = vmatpush1.bf16.msra.mxu0 %v5504
    %6758 = vmatprep.subr.bf16.mxu0 %v5513
    %6759 = vmatpush1.bf16.msra.mxu0 %v5512
    %6760 = vmatprep.mubr.bf16.mxu0 %v3037
    %6761 = vmatmul.mubr.bf16.gmra.mrb[0].mxu0 %v3036
    %v6762 = vpop.f32.mrb[0].mxu0
    %v6763 = vadd.f32 %v6722, %v6762
    %v6764 = vpop.f32.mrb[0].mxu0
    %v6765 = vadd.f32 %v6724, %v6764
    %v6766 = vpop.f32.mrb[0].mxu0
    %v6767 = vpop.f32.mrb[0].mxu0
    %6768 = vdwg.mxu0
    %6769 = vmatprep.subr.bf16.mxu0 %v5521
    %6770 = vmatpush1.bf16.msra.mxu0 %v5520
    %6771 = vmatprep.subr.bf16.mxu0 %v5529
    %6772 = vmatpush1.bf16.msra.mxu0 %v5528
    %6773 = vmatprep.subr.bf16.mxu0 %v5537
    %6774 = vmatpush1.bf16.msra.mxu0 %v5536
    %6775 = vmatprep.subr.bf16.mxu0 %v5545
    %6776 = vmatpush1.bf16.msra.mxu0 %v5544
    %6777 = vmatprep.subr.bf16.mxu0 %v5553
    %6778 = vmatpush1.bf16.msra.mxu0 %v5552
    %6779 = vmatprep.subr.bf16.mxu0 %v5561
    %6780 = vmatpush1.bf16.msra.mxu0 %v5560
    %6781 = vmatprep.subr.bf16.mxu0 %v5569
    %6782 = vmatpush1.bf16.msra.mxu0 %v5568
    %6783 = vmatprep.subr.bf16.mxu0 %v5577
    %6784 = vmatpush1.bf16.msra.mxu0 %v5576
    %6785 = vmatprep.subr.bf16.mxu0 %v5585
    %6786 = vmatpush1.bf16.msra.mxu0 %v5584
    %6787 = vmatprep.subr.bf16.mxu0 %v5593
    %6788 = vmatpush1.bf16.msra.mxu0 %v5592
    %6789 = vmatprep.subr.bf16.mxu0 %v5601
    %6790 = vmatpush1.bf16.msra.mxu0 %v5600
    %6791 = vmatprep.subr.bf16.mxu0 %v5609
    %6792 = vmatpush1.bf16.msra.mxu0 %v5608
    %6793 = vmatprep.subr.bf16.mxu0 %v5617
    %6794 = vmatpush1.bf16.msra.mxu0 %v5616
    %6795 = vmatprep.subr.bf16.mxu0 %v5625
    %6796 = vmatpush1.bf16.msra.mxu0 %v5624
    %6797 = vmatprep.subr.bf16.mxu0 %v5633
    %6798 = vmatpush1.bf16.msra.mxu0 %v5632
    %6799 = vmatprep.subr.bf16.mxu0 %v5641
    %6800 = vmatpush1.bf16.msra.mxu0 %v5640
    %6801 = vmatprep.mubr.bf16.mxu0 %v3039
    %6802 = vmatmul.mubr.bf16.gmra.mrb[0].mxu0 %v3038
    %v6803 = vpop.f32.mrb[0].mxu0
    %v6804 = vadd.f32 %v6763, %v6803
    %v6805 = vpop.f32.mrb[0].mxu0
    %v6806 = vadd.f32 %v6765, %v6805
    %v6807 = vpop.f32.mrb[0].mxu0
    %v6808 = vpop.f32.mrb[0].mxu0
    %6809 = vdwg.mxu0
    %v6810 = vmax.f32 %v6312, 0.0
    %v6811 = vmax.f32 %v6314, 0.0
    %v6812 = vmax.f32 %v6476, 0.0
    %v6813 = vmax.f32 %v6478, 0.0
    %v6814 = vmax.f32 %v6640, 0.0
    %v6815 = vmax.f32 %v6642, 0.0
    %v6816 = vmax.f32 %v6804, 0.0
    %v6817 = vmax.f32 %v6806, 0.0
    %v6818 = vpack.c.bf16 %v6810, %v6810
    %v6819 = vpack.c.bf16 %v6811, %v6811
    %v6820 = vpack.c.bf16 %v6812, %v6812
    %v6821 = vpack.c.bf16 %v6813, %v6813
    %v6822 = vpack.c.bf16 %v6814, %v6814
    %v6823 = vpack.c.bf16 %v6815, %v6815
    %v6824 = vpack.c.bf16 %v6816, %v6816
    %v6825 = vpack.c.bf16 %v6817, %v6817
    %v6826 = vld [vmem:[#allocation11] sm:$0xff]
    %v6827 = vld [vmem:[#allocation11 + $0x8] sm:$0xff]
    %v6828 = vld [vmem:[#allocation11 + $0x10] sm:$0xff]
    %v6829 = vld [vmem:[#allocation11 + $0x18] sm:$0xff]
    %v6830 = vld [vmem:[#allocation11 + $0x20] sm:$0xff]
    %v6831 = vld [vmem:[#allocation11 + $0x28] sm:$0xff]
    %v6832 = vld [vmem:[#allocation11 + $0x30] sm:$0xff]
    %v6833 = vld [vmem:[#allocation11 + $0x38] sm:$0xff]
    %v6834 = vld [vmem:[#allocation11 + $0x40] sm:$0xff]
    %v6835 = vld [vmem:[#allocation11 + $0x48] sm:$0xff]
    %v6836 = vld [vmem:[#allocation11 + $0x50] sm:$0xff]
    %v6837 = vld [vmem:[#allocation11 + $0x58] sm:$0xff]
    %v6838 = vld [vmem:[#allocation11 + $0x60] sm:$0xff]
    %v6839 = vld [vmem:[#allocation11 + $0x68] sm:$0xff]
    %v6840 = vld [vmem:[#allocation11 + $0x70] sm:$0xff]
    %v6841 = vld [vmem:[#allocation11 + $0x78] sm:$0xff]
    %v6842 = vld [vmem:[#allocation11 + $0x80] sm:$0xff]
    %v6843 = vld [vmem:[#allocation11 + $0x88] sm:$0xff]
    %v6844 = vld [vmem:[#allocation11 + $0x90] sm:$0xff]
    %v6845 = vld [vmem:[#allocation11 + $0x98] sm:$0xff]
    %v6846 = vld [vmem:[#allocation11 + $0xa0] sm:$0xff]
    %v6847 = vld [vmem:[#allocation11 + $0xa8] sm:$0xff]
    %v6848 = vld [vmem:[#allocation11 + $0xb0] sm:$0xff]
    %v6849 = vld [vmem:[#allocation11 + $0xb8] sm:$0xff]
    %v6850 = vld [vmem:[#allocation11 + $0xc0] sm:$0xff]
    %v6851 = vld [vmem:[#allocation11 + $0xc8] sm:$0xff]
    %v6852 = vld [vmem:[#allocation11 + $0xd0] sm:$0xff]
    %v6853 = vld [vmem:[#allocation11 + $0xd8] sm:$0xff]
    %v6854 = vld [vmem:[#allocation11 + $0xe0] sm:$0xff]
    %v6855 = vld [vmem:[#allocation11 + $0xe8] sm:$0xff]
    %v6856 = vld [vmem:[#allocation11 + $0xf0] sm:$0xff]
    %v6857 = vld [vmem:[#allocation11 + $0xf8] sm:$0xff]
    %v6858 = vld [vmem:[#allocation11 + $0x100] sm:$0xff]
    %v6859 = vld [vmem:[#allocation11 + $0x108] sm:$0xff]
    %v6860 = vld [vmem:[#allocation11 + $0x110] sm:$0xff]
    %v6861 = vld [vmem:[#allocation11 + $0x118] sm:$0xff]
    %v6862 = vld [vmem:[#allocation11 + $0x120] sm:$0xff]
    %v6863 = vld [vmem:[#allocation11 + $0x128] sm:$0xff]
    %v6864 = vld [vmem:[#allocation11 + $0x130] sm:$0xff]
    %v6865 = vld [vmem:[#allocation11 + $0x138] sm:$0xff]
    %v6866 = vld [vmem:[#allocation11 + $0x140] sm:$0xff]
    %v6867 = vld [vmem:[#allocation11 + $0x148] sm:$0xff]
    %v6868 = vld [vmem:[#allocation11 + $0x150] sm:$0xff]
    %v6869 = vld [vmem:[#allocation11 + $0x158] sm:$0xff]
    %v6870 = vld [vmem:[#allocation11 + $0x160] sm:$0xff]
    %v6871 = vld [vmem:[#allocation11 + $0x168] sm:$0xff]
    %v6872 = vld [vmem:[#allocation11 + $0x170] sm:$0xff]
    %v6873 = vld [vmem:[#allocation11 + $0x178] sm:$0xff]
    %v6874 = vld [vmem:[#allocation11 + $0x180] sm:$0xff]
    %v6875 = vld [vmem:[#allocation11 + $0x188] sm:$0xff]
    %v6876 = vld [vmem:[#allocation11 + $0x190] sm:$0xff]
    %v6877 = vld [vmem:[#allocation11 + $0x198] sm:$0xff]
    %v6878 = vld [vmem:[#allocation11 + $0x1a0] sm:$0xff]
    %v6879 = vld [vmem:[#allocation11 + $0x1a8] sm:$0xff]
    %v6880 = vld [vmem:[#allocation11 + $0x1b0] sm:$0xff]
    %v6881 = vld [vmem:[#allocation11 + $0x1b8] sm:$0xff]
    %v6882 = vld [vmem:[#allocation11 + $0x1c0] sm:$0xff]
    %v6883 = vld [vmem:[#allocation11 + $0x1c8] sm:$0xff]
    %v6884 = vld [vmem:[#allocation11 + $0x1d0] sm:$0xff]
    %v6885 = vld [vmem:[#allocation11 + $0x1d8] sm:$0xff]
    %v6886 = vld [vmem:[#allocation11 + $0x1e0] sm:$0xff]
    %v6887 = vld [vmem:[#allocation11 + $0x1e8] sm:$0xff]
    %v6888 = vld [vmem:[#allocation11 + $0x1f0] sm:$0xff]
    %v6889 = vld [vmem:[#allocation11 + $0x1f8] sm:$0xff]
    %v6890 = vld [vmem:[#allocation11 + $0x200] sm:$0xff]
    %v6891 = vld [vmem:[#allocation11 + $0x208] sm:$0xff]
    %v6892 = vld [vmem:[#allocation11 + $0x210] sm:$0xff]
    %v6893 = vld [vmem:[#allocation11 + $0x218] sm:$0xff]
    %v6894 = vld [vmem:[#allocation11 + $0x220] sm:$0xff]
    %v6895 = vld [vmem:[#allocation11 + $0x228] sm:$0xff]
    %v6896 = vld [vmem:[#allocation11 + $0x230] sm:$0xff]
    %v6897 = vld [vmem:[#allocation11 + $0x238] sm:$0xff]
    %v6898 = vld [vmem:[#allocation11 + $0x240] sm:$0xff]
    %v6899 = vld [vmem:[#allocation11 + $0x248] sm:$0xff]
    %v6900 = vld [vmem:[#allocation11 + $0x250] sm:$0xff]
    %v6901 = vld [vmem:[#allocation11 + $0x258] sm:$0xff]
    %v6902 = vld [vmem:[#allocation11 + $0x260] sm:$0xff]
    %v6903 = vld [vmem:[#allocation11 + $0x268] sm:$0xff]
    %v6904 = vld [vmem:[#allocation11 + $0x270] sm:$0xff]
    %v6905 = vld [vmem:[#allocation11 + $0x278] sm:$0xff]
    %v6906 = vld [vmem:[#allocation11 + $0x280] sm:$0xff]
    %v6907 = vld [vmem:[#allocation11 + $0x288] sm:$0xff]
    %v6908 = vld [vmem:[#allocation11 + $0x290] sm:$0xff]
    %v6909 = vld [vmem:[#allocation11 + $0x298] sm:$0xff]
    %v6910 = vld [vmem:[#allocation11 + $0x2a0] sm:$0xff]
    %v6911 = vld [vmem:[#allocation11 + $0x2a8] sm:$0xff]
    %v6912 = vld [vmem:[#allocation11 + $0x2b0] sm:$0xff]
    %v6913 = vld [vmem:[#allocation11 + $0x2b8] sm:$0xff]
    %v6914 = vld [vmem:[#allocation11 + $0x2c0] sm:$0xff]
    %v6915 = vld [vmem:[#allocation11 + $0x2c8] sm:$0xff]
    %v6916 = vld [vmem:[#allocation11 + $0x2d0] sm:$0xff]
    %v6917 = vld [vmem:[#allocation11 + $0x2d8] sm:$0xff]
    %v6918 = vld [vmem:[#allocation11 + $0x2e0] sm:$0xff]
    %v6919 = vld [vmem:[#allocation11 + $0x2e8] sm:$0xff]
    %v6920 = vld [vmem:[#allocation11 + $0x2f0] sm:$0xff]
    %v6921 = vld [vmem:[#allocation11 + $0x2f8] sm:$0xff]
    %v6922 = vld [vmem:[#allocation11 + $0x300] sm:$0xff]
    %v6923 = vld [vmem:[#allocation11 + $0x308] sm:$0xff]
    %v6924 = vld [vmem:[#allocation11 + $0x310] sm:$0xff]
    %v6925 = vld [vmem:[#allocation11 + $0x318] sm:$0xff]
    %v6926 = vld [vmem:[#allocation11 + $0x320] sm:$0xff]
    %v6927 = vld [vmem:[#allocation11 + $0x328] sm:$0xff]
    %v6928 = vld [vmem:[#allocation11 + $0x330] sm:$0xff]
    %v6929 = vld [vmem:[#allocation11 + $0x338] sm:$0xff]
    %v6930 = vld [vmem:[#allocation11 + $0x340] sm:$0xff]
    %v6931 = vld [vmem:[#allocation11 + $0x348] sm:$0xff]
    %v6932 = vld [vmem:[#allocation11 + $0x350] sm:$0xff]
    %v6933 = vld [vmem:[#allocation11 + $0x358] sm:$0xff]
    %v6934 = vld [vmem:[#allocation11 + $0x360] sm:$0xff]
    %v6935 = vld [vmem:[#allocation11 + $0x368] sm:$0xff]
    %v6936 = vld [vmem:[#allocation11 + $0x370] sm:$0xff]
    %v6937 = vld [vmem:[#allocation11 + $0x378] sm:$0xff]
    %v6938 = vld [vmem:[#allocation11 + $0x380] sm:$0xff]
    %v6939 = vld [vmem:[#allocation11 + $0x388] sm:$0xff]
    %v6940 = vld [vmem:[#allocation11 + $0x390] sm:$0xff]
    %v6941 = vld [vmem:[#allocation11 + $0x398] sm:$0xff]
    %v6942 = vld [vmem:[#allocation11 + $0x3a0] sm:$0xff]
    %v6943 = vld [vmem:[#allocation11 + $0x3a8] sm:$0xff]
    %v6944 = vld [vmem:[#allocation11 + $0x3b0] sm:$0xff]
    %v6945 = vld [vmem:[#allocation11 + $0x3b8] sm:$0xff]
    %v6946 = vld [vmem:[#allocation11 + $0x3c0] sm:$0xff]
    %v6947 = vld [vmem:[#allocation11 + $0x3c8] sm:$0xff]
    %v6948 = vld [vmem:[#allocation11 + $0x3d0] sm:$0xff]
    %v6949 = vld [vmem:[#allocation11 + $0x3d8] sm:$0xff]
    %v6950 = vld [vmem:[#allocation11 + $0x3e0] sm:$0xff]
    %v6951 = vld [vmem:[#allocation11 + $0x3e8] sm:$0xff]
    %v6952 = vld [vmem:[#allocation11 + $0x3f0] sm:$0xff]
    %v6953 = vld [vmem:[#allocation11 + $0x3f8] sm:$0xff]
    %v6954 = vld [vmem:[#allocation11 + $0x400] sm:$0xff]
    %v6955 = vld [vmem:[#allocation11 + $0x408] sm:$0xff]
    %v6956 = vld [vmem:[#allocation11 + $0x410] sm:$0xff]
    %v6957 = vld [vmem:[#allocation11 + $0x418] sm:$0xff]
    %v6958 = vld [vmem:[#allocation11 + $0x420] sm:$0xff]
    %v6959 = vld [vmem:[#allocation11 + $0x428] sm:$0xff]
    %v6960 = vld [vmem:[#allocation11 + $0x430] sm:$0xff]
    %v6961 = vld [vmem:[#allocation11 + $0x438] sm:$0xff]
    %v6962 = vld [vmem:[#allocation11 + $0x440] sm:$0xff]
    %v6963 = vld [vmem:[#allocation11 + $0x448] sm:$0xff]
    %v6964 = vld [vmem:[#allocation11 + $0x450] sm:$0xff]
    %v6965 = vld [vmem:[#allocation11 + $0x458] sm:$0xff]
    %v6966 = vld [vmem:[#allocation11 + $0x460] sm:$0xff]
    %v6967 = vld [vmem:[#allocation11 + $0x468] sm:$0xff]
    %v6968 = vld [vmem:[#allocation11 + $0x470] sm:$0xff]
    %v6969 = vld [vmem:[#allocation11 + $0x478] sm:$0xff]
    %v6970 = vld [vmem:[#allocation11 + $0x480] sm:$0xff]
    %v6971 = vld [vmem:[#allocation11 + $0x488] sm:$0xff]
    %v6972 = vld [vmem:[#allocation11 + $0x490] sm:$0xff]
    %v6973 = vld [vmem:[#allocation11 + $0x498] sm:$0xff]
    %v6974 = vld [vmem:[#allocation11 + $0x4a0] sm:$0xff]
    %v6975 = vld [vmem:[#allocation11 + $0x4a8] sm:$0xff]
    %v6976 = vld [vmem:[#allocation11 + $0x4b0] sm:$0xff]
    %v6977 = vld [vmem:[#allocation11 + $0x4b8] sm:$0xff]
    %v6978 = vld [vmem:[#allocation11 + $0x4c0] sm:$0xff]
    %v6979 = vld [vmem:[#allocation11 + $0x4c8] sm:$0xff]
    %v6980 = vld [vmem:[#allocation11 + $0x4d0] sm:$0xff]
    %v6981 = vld [vmem:[#allocation11 + $0x4d8] sm:$0xff]
    %v6982 = vld [vmem:[#allocation11 + $0x4e0] sm:$0xff]
    %v6983 = vld [vmem:[#allocation11 + $0x4e8] sm:$0xff]
    %v6984 = vld [vmem:[#allocation11 + $0x4f0] sm:$0xff]
    %v6985 = vld [vmem:[#allocation11 + $0x4f8] sm:$0xff]
    %v6986 = vld [vmem:[#allocation11 + $0x500] sm:$0xff]
    %v6987 = vld [vmem:[#allocation11 + $0x508] sm:$0xff]
    %v6988 = vld [vmem:[#allocation11 + $0x510] sm:$0xff]
    %v6989 = vld [vmem:[#allocation11 + $0x518] sm:$0xff]
    %v6990 = vld [vmem:[#allocation11 + $0x520] sm:$0xff]
    %v6991 = vld [vmem:[#allocation11 + $0x528] sm:$0xff]
    %v6992 = vld [vmem:[#allocation11 + $0x530] sm:$0xff]
    %v6993 = vld [vmem:[#allocation11 + $0x538] sm:$0xff]
    %v6994 = vld [vmem:[#allocation11 + $0x540] sm:$0xff]
    %v6995 = vld [vmem:[#allocation11 + $0x548] sm:$0xff]
    %v6996 = vld [vmem:[#allocation11 + $0x550] sm:$0xff]
    %v6997 = vld [vmem:[#allocation11 + $0x558] sm:$0xff]
    %v6998 = vld [vmem:[#allocation11 + $0x560] sm:$0xff]
    %v6999 = vld [vmem:[#allocation11 + $0x568] sm:$0xff]
    %v7000 = vld [vmem:[#allocation11 + $0x570] sm:$0xff]
    %v7001 = vld [vmem:[#allocation11 + $0x578] sm:$0xff]
    %v7002 = vld [vmem:[#allocation11 + $0x580] sm:$0xff]
    %v7003 = vld [vmem:[#allocation11 + $0x588] sm:$0xff]
    %v7004 = vld [vmem:[#allocation11 + $0x590] sm:$0xff]
    %v7005 = vld [vmem:[#allocation11 + $0x598] sm:$0xff]
    %v7006 = vld [vmem:[#allocation11 + $0x5a0] sm:$0xff]
    %v7007 = vld [vmem:[#allocation11 + $0x5a8] sm:$0xff]
    %v7008 = vld [vmem:[#allocation11 + $0x5b0] sm:$0xff]
    %v7009 = vld [vmem:[#allocation11 + $0x5b8] sm:$0xff]
    %v7010 = vld [vmem:[#allocation11 + $0x5c0] sm:$0xff]
    %v7011 = vld [vmem:[#allocation11 + $0x5c8] sm:$0xff]
    %v7012 = vld [vmem:[#allocation11 + $0x5d0] sm:$0xff]
    %v7013 = vld [vmem:[#allocation11 + $0x5d8] sm:$0xff]
    %v7014 = vld [vmem:[#allocation11 + $0x5e0] sm:$0xff]
    %v7015 = vld [vmem:[#allocation11 + $0x5e8] sm:$0xff]
    %v7016 = vld [vmem:[#allocation11 + $0x5f0] sm:$0xff]
    %v7017 = vld [vmem:[#allocation11 + $0x5f8] sm:$0xff]
    %v7018 = vld [vmem:[#allocation11 + $0x600] sm:$0xff]
    %v7019 = vld [vmem:[#allocation11 + $0x608] sm:$0xff]
    %v7020 = vld [vmem:[#allocation11 + $0x610] sm:$0xff]
    %v7021 = vld [vmem:[#allocation11 + $0x618] sm:$0xff]
    %v7022 = vld [vmem:[#allocation11 + $0x620] sm:$0xff]
    %v7023 = vld [vmem:[#allocation11 + $0x628] sm:$0xff]
    %v7024 = vld [vmem:[#allocation11 + $0x630] sm:$0xff]
    %v7025 = vld [vmem:[#allocation11 + $0x638] sm:$0xff]
    %v7026 = vld [vmem:[#allocation11 + $0x640] sm:$0xff]
    %v7027 = vld [vmem:[#allocation11 + $0x648] sm:$0xff]
    %v7028 = vld [vmem:[#allocation11 + $0x650] sm:$0xff]
    %v7029 = vld [vmem:[#allocation11 + $0x658] sm:$0xff]
    %v7030 = vld [vmem:[#allocation11 + $0x660] sm:$0xff]
    %v7031 = vld [vmem:[#allocation11 + $0x668] sm:$0xff]
    %v7032 = vld [vmem:[#allocation11 + $0x670] sm:$0xff]
    %v7033 = vld [vmem:[#allocation11 + $0x678] sm:$0xff]
    %v7034 = vld [vmem:[#allocation11 + $0x680] sm:$0xff]
    %v7035 = vld [vmem:[#allocation11 + $0x688] sm:$0xff]
    %v7036 = vld [vmem:[#allocation11 + $0x690] sm:$0xff]
    %v7037 = vld [vmem:[#allocation11 + $0x698] sm:$0xff]
    %v7038 = vld [vmem:[#allocation11 + $0x6a0] sm:$0xff]
    %v7039 = vld [vmem:[#allocation11 + $0x6a8] sm:$0xff]
    %v7040 = vld [vmem:[#allocation11 + $0x6b0] sm:$0xff]
    %v7041 = vld [vmem:[#allocation11 + $0x6b8] sm:$0xff]
    %v7042 = vld [vmem:[#allocation11 + $0x6c0] sm:$0xff]
    %v7043 = vld [vmem:[#allocation11 + $0x6c8] sm:$0xff]
    %v7044 = vld [vmem:[#allocation11 + $0x6d0] sm:$0xff]
    %v7045 = vld [vmem:[#allocation11 + $0x6d8] sm:$0xff]
    %v7046 = vld [vmem:[#allocation11 + $0x6e0] sm:$0xff]
    %v7047 = vld [vmem:[#allocation11 + $0x6e8] sm:$0xff]
    %v7048 = vld [vmem:[#allocation11 + $0x6f0] sm:$0xff]
    %v7049 = vld [vmem:[#allocation11 + $0x6f8] sm:$0xff]
    %v7050 = vld [vmem:[#allocation11 + $0x700] sm:$0xff]
    %v7051 = vld [vmem:[#allocation11 + $0x708] sm:$0xff]
    %v7052 = vld [vmem:[#allocation11 + $0x710] sm:$0xff]
    %v7053 = vld [vmem:[#allocation11 + $0x718] sm:$0xff]
    %v7054 = vld [vmem:[#allocation11 + $0x720] sm:$0xff]
    %v7055 = vld [vmem:[#allocation11 + $0x728] sm:$0xff]
    %v7056 = vld [vmem:[#allocation11 + $0x730] sm:$0xff]
    %v7057 = vld [vmem:[#allocation11 + $0x738] sm:$0xff]
    %v7058 = vld [vmem:[#allocation11 + $0x740] sm:$0xff]
    %v7059 = vld [vmem:[#allocation11 + $0x748] sm:$0xff]
    %v7060 = vld [vmem:[#allocation11 + $0x750] sm:$0xff]
    %v7061 = vld [vmem:[#allocation11 + $0x758] sm:$0xff]
    %v7062 = vld [vmem:[#allocation11 + $0x760] sm:$0xff]
    %v7063 = vld [vmem:[#allocation11 + $0x768] sm:$0xff]
    %v7064 = vld [vmem:[#allocation11 + $0x770] sm:$0xff]
    %v7065 = vld [vmem:[#allocation11 + $0x778] sm:$0xff]
    %v7066 = vld [vmem:[#allocation11 + $0x780] sm:$0xff]
    %v7067 = vld [vmem:[#allocation11 + $0x788] sm:$0xff]
    %v7068 = vld [vmem:[#allocation11 + $0x790] sm:$0xff]
    %v7069 = vld [vmem:[#allocation11 + $0x798] sm:$0xff]
    %v7070 = vld [vmem:[#allocation11 + $0x7a0] sm:$0xff]
    %v7071 = vld [vmem:[#allocation11 + $0x7a8] sm:$0xff]
    %v7072 = vld [vmem:[#allocation11 + $0x7b0] sm:$0xff]
    %v7073 = vld [vmem:[#allocation11 + $0x7b8] sm:$0xff]
    %v7074 = vld [vmem:[#allocation11 + $0x7c0] sm:$0xff]
    %v7075 = vld [vmem:[#allocation11 + $0x7c8] sm:$0xff]
    %v7076 = vld [vmem:[#allocation11 + $0x7d0] sm:$0xff]
    %v7077 = vld [vmem:[#allocation11 + $0x7d8] sm:$0xff]
    %v7078 = vld [vmem:[#allocation11 + $0x7e0] sm:$0xff]
    %v7079 = vld [vmem:[#allocation11 + $0x7e8] sm:$0xff]
    %v7080 = vld [vmem:[#allocation11 + $0x7f0] sm:$0xff]
    %v7081 = vld [vmem:[#allocation11 + $0x7f8] sm:$0xff]
    %v7082 = vld [vmem:[#allocation11 + $0x800] sm:$0xff]
    %v7083 = vld [vmem:[#allocation11 + $0x808] sm:$0xff]
    %v7084 = vld [vmem:[#allocation11 + $0x810] sm:$0xff]
    %v7085 = vld [vmem:[#allocation11 + $0x818] sm:$0xff]
    %v7086 = vld [vmem:[#allocation11 + $0x820] sm:$0xff]
    %v7087 = vld [vmem:[#allocation11 + $0x828] sm:$0xff]
    %v7088 = vld [vmem:[#allocation11 + $0x830] sm:$0xff]
    %v7089 = vld [vmem:[#allocation11 + $0x838] sm:$0xff]
    %v7090 = vld [vmem:[#allocation11 + $0x840] sm:$0xff]
    %v7091 = vld [vmem:[#allocation11 + $0x848] sm:$0xff]
    %v7092 = vld [vmem:[#allocation11 + $0x850] sm:$0xff]
    %v7093 = vld [vmem:[#allocation11 + $0x858] sm:$0xff]
    %v7094 = vld [vmem:[#allocation11 + $0x860] sm:$0xff]
    %v7095 = vld [vmem:[#allocation11 + $0x868] sm:$0xff]
    %v7096 = vld [vmem:[#allocation11 + $0x870] sm:$0xff]
    %v7097 = vld [vmem:[#allocation11 + $0x878] sm:$0xff]
    %v7098 = vld [vmem:[#allocation11 + $0x880] sm:$0xff]
    %v7099 = vld [vmem:[#allocation11 + $0x888] sm:$0xff]
    %v7100 = vld [vmem:[#allocation11 + $0x890] sm:$0xff]
    %v7101 = vld [vmem:[#allocation11 + $0x898] sm:$0xff]
    %v7102 = vld [vmem:[#allocation11 + $0x8a0] sm:$0xff]
    %v7103 = vld [vmem:[#allocation11 + $0x8a8] sm:$0xff]
    %v7104 = vld [vmem:[#allocation11 + $0x8b0] sm:$0xff]
    %v7105 = vld [vmem:[#allocation11 + $0x8b8] sm:$0xff]
    %v7106 = vld [vmem:[#allocation11 + $0x8c0] sm:$0xff]
    %v7107 = vld [vmem:[#allocation11 + $0x8c8] sm:$0xff]
    %v7108 = vld [vmem:[#allocation11 + $0x8d0] sm:$0xff]
    %v7109 = vld [vmem:[#allocation11 + $0x8d8] sm:$0xff]
    %v7110 = vld [vmem:[#allocation11 + $0x8e0] sm:$0xff]
    %v7111 = vld [vmem:[#allocation11 + $0x8e8] sm:$0xff]
    %v7112 = vld [vmem:[#allocation11 + $0x8f0] sm:$0xff]
    %v7113 = vld [vmem:[#allocation11 + $0x8f8] sm:$0xff]
    %v7114 = vld [vmem:[#allocation11 + $0x900] sm:$0xff]
    %v7115 = vld [vmem:[#allocation11 + $0x908] sm:$0xff]
    %v7116 = vld [vmem:[#allocation11 + $0x910] sm:$0xff]
    %v7117 = vld [vmem:[#allocation11 + $0x918] sm:$0xff]
    %v7118 = vld [vmem:[#allocation11 + $0x920] sm:$0xff]
    %v7119 = vld [vmem:[#allocation11 + $0x928] sm:$0xff]
    %v7120 = vld [vmem:[#allocation11 + $0x930] sm:$0xff]
    %v7121 = vld [vmem:[#allocation11 + $0x938] sm:$0xff]
    %v7122 = vld [vmem:[#allocation11 + $0x940] sm:$0xff]
    %v7123 = vld [vmem:[#allocation11 + $0x948] sm:$0xff]
    %v7124 = vld [vmem:[#allocation11 + $0x950] sm:$0xff]
    %v7125 = vld [vmem:[#allocation11 + $0x958] sm:$0xff]
    %v7126 = vld [vmem:[#allocation11 + $0x960] sm:$0xff]
    %v7127 = vld [vmem:[#allocation11 + $0x968] sm:$0xff]
    %v7128 = vld [vmem:[#allocation11 + $0x970] sm:$0xff]
    %v7129 = vld [vmem:[#allocation11 + $0x978] sm:$0xff]
    %v7130 = vld [vmem:[#allocation11 + $0x980] sm:$0xff]
    %v7131 = vld [vmem:[#allocation11 + $0x988] sm:$0xff]
    %v7132 = vld [vmem:[#allocation11 + $0x990] sm:$0xff]
    %v7133 = vld [vmem:[#allocation11 + $0x998] sm:$0xff]
    %v7134 = vld [vmem:[#allocation11 + $0x9a0] sm:$0xff]
    %v7135 = vld [vmem:[#allocation11 + $0x9a8] sm:$0xff]
    %v7136 = vld [vmem:[#allocation11 + $0x9b0] sm:$0xff]
    %v7137 = vld [vmem:[#allocation11 + $0x9b8] sm:$0xff]
    %v7138 = vld [vmem:[#allocation11 + $0x9c0] sm:$0xff]
    %v7139 = vld [vmem:[#allocation11 + $0x9c8] sm:$0xff]
    %v7140 = vld [vmem:[#allocation11 + $0x9d0] sm:$0xff]
    %v7141 = vld [vmem:[#allocation11 + $0x9d8] sm:$0xff]
    %v7142 = vld [vmem:[#allocation11 + $0x9e0] sm:$0xff]
    %v7143 = vld [vmem:[#allocation11 + $0x9e8] sm:$0xff]
    %v7144 = vld [vmem:[#allocation11 + $0x9f0] sm:$0xff]
    %v7145 = vld [vmem:[#allocation11 + $0x9f8] sm:$0xff]
    %v7146 = vld [vmem:[#allocation11 + $0xa00] sm:$0xff]
    %v7147 = vld [vmem:[#allocation11 + $0xa08] sm:$0xff]
    %v7148 = vld [vmem:[#allocation11 + $0xa10] sm:$0xff]
    %v7149 = vld [vmem:[#allocation11 + $0xa18] sm:$0xff]
    %v7150 = vld [vmem:[#allocation11 + $0xa20] sm:$0xff]
    %v7151 = vld [vmem:[#allocation11 + $0xa28] sm:$0xff]
    %v7152 = vld [vmem:[#allocation11 + $0xa30] sm:$0xff]
    %v7153 = vld [vmem:[#allocation11 + $0xa38] sm:$0xff]
    %v7154 = vld [vmem:[#allocation11 + $0xa40] sm:$0xff]
    %v7155 = vld [vmem:[#allocation11 + $0xa48] sm:$0xff]
    %v7156 = vld [vmem:[#allocation11 + $0xa50] sm:$0xff]
    %v7157 = vld [vmem:[#allocation11 + $0xa58] sm:$0xff]
    %v7158 = vld [vmem:[#allocation11 + $0xa60] sm:$0xff]
    %v7159 = vld [vmem:[#allocation11 + $0xa68] sm:$0xff]
    %v7160 = vld [vmem:[#allocation11 + $0xa70] sm:$0xff]
    %v7161 = vld [vmem:[#allocation11 + $0xa78] sm:$0xff]
    %v7162 = vld [vmem:[#allocation11 + $0xa80] sm:$0xff]
    %v7163 = vld [vmem:[#allocation11 + $0xa88] sm:$0xff]
    %v7164 = vld [vmem:[#allocation11 + $0xa90] sm:$0xff]
    %v7165 = vld [vmem:[#allocation11 + $0xa98] sm:$0xff]
    %v7166 = vld [vmem:[#allocation11 + $0xaa0] sm:$0xff]
    %v7167 = vld [vmem:[#allocation11 + $0xaa8] sm:$0xff]
    %v7168 = vld [vmem:[#allocation11 + $0xab0] sm:$0xff]
    %v7169 = vld [vmem:[#allocation11 + $0xab8] sm:$0xff]
    %v7170 = vld [vmem:[#allocation11 + $0xac0] sm:$0xff]
    %v7171 = vld [vmem:[#allocation11 + $0xac8] sm:$0xff]
    %v7172 = vld [vmem:[#allocation11 + $0xad0] sm:$0xff]
    %v7173 = vld [vmem:[#allocation11 + $0xad8] sm:$0xff]
    %v7174 = vld [vmem:[#allocation11 + $0xae0] sm:$0xff]
    %v7175 = vld [vmem:[#allocation11 + $0xae8] sm:$0xff]
    %v7176 = vld [vmem:[#allocation11 + $0xaf0] sm:$0xff]
    %v7177 = vld [vmem:[#allocation11 + $0xaf8] sm:$0xff]
    %v7178 = vld [vmem:[#allocation11 + $0xb00] sm:$0xff]
    %v7179 = vld [vmem:[#allocation11 + $0xb08] sm:$0xff]
    %v7180 = vld [vmem:[#allocation11 + $0xb10] sm:$0xff]
    %v7181 = vld [vmem:[#allocation11 + $0xb18] sm:$0xff]
    %v7182 = vld [vmem:[#allocation11 + $0xb20] sm:$0xff]
    %v7183 = vld [vmem:[#allocation11 + $0xb28] sm:$0xff]
    %v7184 = vld [vmem:[#allocation11 + $0xb30] sm:$0xff]
    %v7185 = vld [vmem:[#allocation11 + $0xb38] sm:$0xff]
    %v7186 = vld [vmem:[#allocation11 + $0xb40] sm:$0xff]
    %v7187 = vld [vmem:[#allocation11 + $0xb48] sm:$0xff]
    %v7188 = vld [vmem:[#allocation11 + $0xb50] sm:$0xff]
    %v7189 = vld [vmem:[#allocation11 + $0xb58] sm:$0xff]
    %v7190 = vld [vmem:[#allocation11 + $0xb60] sm:$0xff]
    %v7191 = vld [vmem:[#allocation11 + $0xb68] sm:$0xff]
    %v7192 = vld [vmem:[#allocation11 + $0xb70] sm:$0xff]
    %v7193 = vld [vmem:[#allocation11 + $0xb78] sm:$0xff]
    %v7194 = vld [vmem:[#allocation11 + $0xb80] sm:$0xff]
    %v7195 = vld [vmem:[#allocation11 + $0xb88] sm:$0xff]
    %v7196 = vld [vmem:[#allocation11 + $0xb90] sm:$0xff]
    %v7197 = vld [vmem:[#allocation11 + $0xb98] sm:$0xff]
    %v7198 = vld [vmem:[#allocation11 + $0xba0] sm:$0xff]
    %v7199 = vld [vmem:[#allocation11 + $0xba8] sm:$0xff]
    %v7200 = vld [vmem:[#allocation11 + $0xbb0] sm:$0xff]
    %v7201 = vld [vmem:[#allocation11 + $0xbb8] sm:$0xff]
    %v7202 = vld [vmem:[#allocation11 + $0xbc0] sm:$0xff]
    %v7203 = vld [vmem:[#allocation11 + $0xbc8] sm:$0xff]
    %v7204 = vld [vmem:[#allocation11 + $0xbd0] sm:$0xff]
    %v7205 = vld [vmem:[#allocation11 + $0xbd8] sm:$0xff]
    %v7206 = vld [vmem:[#allocation11 + $0xbe0] sm:$0xff]
    %v7207 = vld [vmem:[#allocation11 + $0xbe8] sm:$0xff]
    %v7208 = vld [vmem:[#allocation11 + $0xbf0] sm:$0xff]
    %v7209 = vld [vmem:[#allocation11 + $0xbf8] sm:$0xff]
    %v7210 = vld [vmem:[#allocation11 + $0xc00] sm:$0xff]
    %v7211 = vld [vmem:[#allocation11 + $0xc08] sm:$0xff]
    %v7212 = vld [vmem:[#allocation11 + $0xc10] sm:$0xff]
    %v7213 = vld [vmem:[#allocation11 + $0xc18] sm:$0xff]
    %v7214 = vld [vmem:[#allocation11 + $0xc20] sm:$0xff]
    %v7215 = vld [vmem:[#allocation11 + $0xc28] sm:$0xff]
    %v7216 = vld [vmem:[#allocation11 + $0xc30] sm:$0xff]
    %v7217 = vld [vmem:[#allocation11 + $0xc38] sm:$0xff]
    %v7218 = vld [vmem:[#allocation11 + $0xc40] sm:$0xff]
    %v7219 = vld [vmem:[#allocation11 + $0xc48] sm:$0xff]
    %v7220 = vld [vmem:[#allocation11 + $0xc50] sm:$0xff]
    %v7221 = vld [vmem:[#allocation11 + $0xc58] sm:$0xff]
    %v7222 = vld [vmem:[#allocation11 + $0xc60] sm:$0xff]
    %v7223 = vld [vmem:[#allocation11 + $0xc68] sm:$0xff]
    %v7224 = vld [vmem:[#allocation11 + $0xc70] sm:$0xff]
    %v7225 = vld [vmem:[#allocation11 + $0xc78] sm:$0xff]
    %v7226 = vld [vmem:[#allocation11 + $0xc80] sm:$0xff]
    %v7227 = vld [vmem:[#allocation11 + $0xc88] sm:$0xff]
    %v7228 = vld [vmem:[#allocation11 + $0xc90] sm:$0xff]
    %v7229 = vld [vmem:[#allocation11 + $0xc98] sm:$0xff]
    %v7230 = vld [vmem:[#allocation11 + $0xca0] sm:$0xff]
    %v7231 = vld [vmem:[#allocation11 + $0xca8] sm:$0xff]
    %v7232 = vld [vmem:[#allocation11 + $0xcb0] sm:$0xff]
    %v7233 = vld [vmem:[#allocation11 + $0xcb8] sm:$0xff]
    %v7234 = vld [vmem:[#allocation11 + $0xcc0] sm:$0xff]
    %v7235 = vld [vmem:[#allocation11 + $0xcc8] sm:$0xff]
    %v7236 = vld [vmem:[#allocation11 + $0xcd0] sm:$0xff]
    %v7237 = vld [vmem:[#allocation11 + $0xcd8] sm:$0xff]
    %v7238 = vld [vmem:[#allocation11 + $0xce0] sm:$0xff]
    %v7239 = vld [vmem:[#allocation11 + $0xce8] sm:$0xff]
    %v7240 = vld [vmem:[#allocation11 + $0xcf0] sm:$0xff]
    %v7241 = vld [vmem:[#allocation11 + $0xcf8] sm:$0xff]
    %v7242 = vld [vmem:[#allocation11 + $0xd00] sm:$0xff]
    %v7243 = vld [vmem:[#allocation11 + $0xd08] sm:$0xff]
    %v7244 = vld [vmem:[#allocation11 + $0xd10] sm:$0xff]
    %v7245 = vld [vmem:[#allocation11 + $0xd18] sm:$0xff]
    %v7246 = vld [vmem:[#allocation11 + $0xd20] sm:$0xff]
    %v7247 = vld [vmem:[#allocation11 + $0xd28] sm:$0xff]
    %v7248 = vld [vmem:[#allocation11 + $0xd30] sm:$0xff]
    %v7249 = vld [vmem:[#allocation11 + $0xd38] sm:$0xff]
    %v7250 = vld [vmem:[#allocation11 + $0xd40] sm:$0xff]
    %v7251 = vld [vmem:[#allocation11 + $0xd48] sm:$0xff]
    %v7252 = vld [vmem:[#allocation11 + $0xd50] sm:$0xff]
    %v7253 = vld [vmem:[#allocation11 + $0xd58] sm:$0xff]
    %v7254 = vld [vmem:[#allocation11 + $0xd60] sm:$0xff]
    %v7255 = vld [vmem:[#allocation11 + $0xd68] sm:$0xff]
    %v7256 = vld [vmem:[#allocation11 + $0xd70] sm:$0xff]
    %v7257 = vld [vmem:[#allocation11 + $0xd78] sm:$0xff]
    %v7258 = vld [vmem:[#allocation11 + $0xd80] sm:$0xff]
    %v7259 = vld [vmem:[#allocation11 + $0xd88] sm:$0xff]
    %v7260 = vld [vmem:[#allocation11 + $0xd90] sm:$0xff]
    %v7261 = vld [vmem:[#allocation11 + $0xd98] sm:$0xff]
    %v7262 = vld [vmem:[#allocation11 + $0xda0] sm:$0xff]
    %v7263 = vld [vmem:[#allocation11 + $0xda8] sm:$0xff]
    %v7264 = vld [vmem:[#allocation11 + $0xdb0] sm:$0xff]
    %v7265 = vld [vmem:[#allocation11 + $0xdb8] sm:$0xff]
    %v7266 = vld [vmem:[#allocation11 + $0xdc0] sm:$0xff]
    %v7267 = vld [vmem:[#allocation11 + $0xdc8] sm:$0xff]
    %v7268 = vld [vmem:[#allocation11 + $0xdd0] sm:$0xff]
    %v7269 = vld [vmem:[#allocation11 + $0xdd8] sm:$0xff]
    %v7270 = vld [vmem:[#allocation11 + $0xde0] sm:$0xff]
    %v7271 = vld [vmem:[#allocation11 + $0xde8] sm:$0xff]
    %v7272 = vld [vmem:[#allocation11 + $0xdf0] sm:$0xff]
    %v7273 = vld [vmem:[#allocation11 + $0xdf8] sm:$0xff]
    %v7274 = vld [vmem:[#allocation11 + $0xe00] sm:$0xff]
    %v7275 = vld [vmem:[#allocation11 + $0xe08] sm:$0xff]
    %v7276 = vld [vmem:[#allocation11 + $0xe10] sm:$0xff]
    %v7277 = vld [vmem:[#allocation11 + $0xe18] sm:$0xff]
    %v7278 = vld [vmem:[#allocation11 + $0xe20] sm:$0xff]
    %v7279 = vld [vmem:[#allocation11 + $0xe28] sm:$0xff]
    %v7280 = vld [vmem:[#allocation11 + $0xe30] sm:$0xff]
    %v7281 = vld [vmem:[#allocation11 + $0xe38] sm:$0xff]
    %v7282 = vld [vmem:[#allocation11 + $0xe40] sm:$0xff]
    %v7283 = vld [vmem:[#allocation11 + $0xe48] sm:$0xff]
    %v7284 = vld [vmem:[#allocation11 + $0xe50] sm:$0xff]
    %v7285 = vld [vmem:[#allocation11 + $0xe58] sm:$0xff]
    %v7286 = vld [vmem:[#allocation11 + $0xe60] sm:$0xff]
    %v7287 = vld [vmem:[#allocation11 + $0xe68] sm:$0xff]
    %v7288 = vld [vmem:[#allocation11 + $0xe70] sm:$0xff]
    %v7289 = vld [vmem:[#allocation11 + $0xe78] sm:$0xff]
    %v7290 = vld [vmem:[#allocation11 + $0xe80] sm:$0xff]
    %v7291 = vld [vmem:[#allocation11 + $0xe88] sm:$0xff]
    %v7292 = vld [vmem:[#allocation11 + $0xe90] sm:$0xff]
    %v7293 = vld [vmem:[#allocation11 + $0xe98] sm:$0xff]
    %v7294 = vld [vmem:[#allocation11 + $0xea0] sm:$0xff]
    %v7295 = vld [vmem:[#allocation11 + $0xea8] sm:$0xff]
    %v7296 = vld [vmem:[#allocation11 + $0xeb0] sm:$0xff]
    %v7297 = vld [vmem:[#allocation11 + $0xeb8] sm:$0xff]
    %v7298 = vld [vmem:[#allocation11 + $0xec0] sm:$0xff]
    %v7299 = vld [vmem:[#allocation11 + $0xec8] sm:$0xff]
    %v7300 = vld [vmem:[#allocation11 + $0xed0] sm:$0xff]
    %v7301 = vld [vmem:[#allocation11 + $0xed8] sm:$0xff]
    %v7302 = vld [vmem:[#allocation11 + $0xee0] sm:$0xff]
    %v7303 = vld [vmem:[#allocation11 + $0xee8] sm:$0xff]
    %v7304 = vld [vmem:[#allocation11 + $0xef0] sm:$0xff]
    %v7305 = vld [vmem:[#allocation11 + $0xef8] sm:$0xff]
    %v7306 = vld [vmem:[#allocation11 + $0xf00] sm:$0xff]
    %v7307 = vld [vmem:[#allocation11 + $0xf08] sm:$0xff]
    %v7308 = vld [vmem:[#allocation11 + $0xf10] sm:$0xff]
    %v7309 = vld [vmem:[#allocation11 + $0xf18] sm:$0xff]
    %v7310 = vld [vmem:[#allocation11 + $0xf20] sm:$0xff]
    %v7311 = vld [vmem:[#allocation11 + $0xf28] sm:$0xff]
    %v7312 = vld [vmem:[#allocation11 + $0xf30] sm:$0xff]
    %v7313 = vld [vmem:[#allocation11 + $0xf38] sm:$0xff]
    %v7314 = vld [vmem:[#allocation11 + $0xf40] sm:$0xff]
    %v7315 = vld [vmem:[#allocation11 + $0xf48] sm:$0xff]
    %v7316 = vld [vmem:[#allocation11 + $0xf50] sm:$0xff]
    %v7317 = vld [vmem:[#allocation11 + $0xf58] sm:$0xff]
    %v7318 = vld [vmem:[#allocation11 + $0xf60] sm:$0xff]
    %v7319 = vld [vmem:[#allocation11 + $0xf68] sm:$0xff]
    %v7320 = vld [vmem:[#allocation11 + $0xf70] sm:$0xff]
    %v7321 = vld [vmem:[#allocation11 + $0xf78] sm:$0xff]
    %v7322 = vld [vmem:[#allocation11 + $0xf80] sm:$0xff]
    %v7323 = vld [vmem:[#allocation11 + $0xf88] sm:$0xff]
    %v7324 = vld [vmem:[#allocation11 + $0xf90] sm:$0xff]
    %v7325 = vld [vmem:[#allocation11 + $0xf98] sm:$0xff]
    %v7326 = vld [vmem:[#allocation11 + $0xfa0] sm:$0xff]
    %v7327 = vld [vmem:[#allocation11 + $0xfa8] sm:$0xff]
    %v7328 = vld [vmem:[#allocation11 + $0xfb0] sm:$0xff]
    %v7329 = vld [vmem:[#allocation11 + $0xfb8] sm:$0xff]
    %v7330 = vld [vmem:[#allocation11 + $0xfc0] sm:$0xff]
    %v7331 = vld [vmem:[#allocation11 + $0xfc8] sm:$0xff]
    %v7332 = vld [vmem:[#allocation11 + $0xfd0] sm:$0xff]
    %v7333 = vld [vmem:[#allocation11 + $0xfd8] sm:$0xff]
    %v7334 = vld [vmem:[#allocation11 + $0xfe0] sm:$0xff]
    %v7335 = vld [vmem:[#allocation11 + $0xfe8] sm:$0xff]
    %v7336 = vld [vmem:[#allocation11 + $0xff0] sm:$0xff]
    %v7337 = vld [vmem:[#allocation11 + $0xff8] sm:$0xff]
    %v7338 = vld [vmem:[#allocation13] sm:$0xff]
    %v7340 = vlaneseq
    %v7341 = vshrl.u32 %v7340, 7
    %v7342 = vsub.s32 0, %v7341
    %v7343 = vrot.slane %v7338, %v7342
    %v7344 = vlaneseq
    %v7345 = vshrl.u32 %v7344, 7
    %v7346 = vsub.s32 1, %v7345
    %v7347 = vrot.slane %v7338, %v7346
    %v7348 = vlaneseq
    %v7349 = vshrl.u32 %v7348, 7
    %v7350 = vsub.s32 2, %v7349
    %v7351 = vrot.slane %v7338, %v7350
    %v7352 = vlaneseq
    %v7353 = vshrl.u32 %v7352, 7
    %v7354 = vsub.s32 3, %v7353
    %v7355 = vrot.slane %v7338, %v7354
    %v7356 = vlaneseq
    %v7357 = vshrl.u32 %v7356, 7
    %v7358 = vsub.s32 4, %v7357
    %v7359 = vrot.slane %v7338, %v7358
    %v7360 = vlaneseq
    %v7361 = vshrl.u32 %v7360, 7
    %v7362 = vsub.s32 5, %v7361
    %v7363 = vrot.slane %v7338, %v7362
    %v7364 = vlaneseq
    %v7365 = vshrl.u32 %v7364, 7
    %v7366 = vsub.s32 6, %v7365
    %v7367 = vrot.slane %v7338, %v7366
    %v7368 = vlaneseq
    %v7369 = vshrl.u32 %v7368, 7
    %v7370 = vsub.s32 7, %v7369
    %v7371 = vrot.slane %v7338, %v7370
    %v7892 = vunpack.c.l.b16 %v6826
    %v7893 = vunpack.c.h.b16 %v6826
    %v7894 = vunpack.c.l.b16 %v6827
    %v7895 = vunpack.c.h.b16 %v6827
    %v7896 = vunpack.c.l.b16 %v6828
    %v7897 = vunpack.c.h.b16 %v6828
    %v7898 = vunpack.c.l.b16 %v6829
    %v7899 = vunpack.c.h.b16 %v6829
    %v7900 = vunpack.c.l.b16 %v6830
    %v7901 = vunpack.c.h.b16 %v6830
    %v7902 = vunpack.c.l.b16 %v6831
    %v7903 = vunpack.c.h.b16 %v6831
    %v7904 = vunpack.c.l.b16 %v6832
    %v7905 = vunpack.c.h.b16 %v6832
    %v7906 = vunpack.c.l.b16 %v6833
    %v7907 = vunpack.c.h.b16 %v6833
    %v7908 = vunpack.c.l.b16 %v6834
    %v7909 = vunpack.c.h.b16 %v6834
    %v7910 = vunpack.c.l.b16 %v6835
    %v7911 = vunpack.c.h.b16 %v6835
    %v7912 = vunpack.c.l.b16 %v6836
    %v7913 = vunpack.c.h.b16 %v6836
    %v7914 = vunpack.c.l.b16 %v6837
    %v7915 = vunpack.c.h.b16 %v6837
    %v7916 = vunpack.c.l.b16 %v6838
    %v7917 = vunpack.c.h.b16 %v6838
    %v7918 = vunpack.c.l.b16 %v6839
    %v7919 = vunpack.c.h.b16 %v6839
    %v7920 = vunpack.c.l.b16 %v6840
    %v7921 = vunpack.c.h.b16 %v6840
    %v7922 = vunpack.c.l.b16 %v6841
    %v7923 = vunpack.c.h.b16 %v6841
    %v7924 = vunpack.c.l.b16 %v6842
    %v7925 = vunpack.c.h.b16 %v6842
    %v7926 = vunpack.c.l.b16 %v6843
    %v7927 = vunpack.c.h.b16 %v6843
    %v7928 = vunpack.c.l.b16 %v6844
    %v7929 = vunpack.c.h.b16 %v6844
    %v7930 = vunpack.c.l.b16 %v6845
    %v7931 = vunpack.c.h.b16 %v6845
    %v7932 = vunpack.c.l.b16 %v6846
    %v7933 = vunpack.c.h.b16 %v6846
    %v7934 = vunpack.c.l.b16 %v6847
    %v7935 = vunpack.c.h.b16 %v6847
    %v7936 = vunpack.c.l.b16 %v6848
    %v7937 = vunpack.c.h.b16 %v6848
    %v7938 = vunpack.c.l.b16 %v6849
    %v7939 = vunpack.c.h.b16 %v6849
    %v7940 = vunpack.c.l.b16 %v6850
    %v7941 = vunpack.c.h.b16 %v6850
    %v7942 = vunpack.c.l.b16 %v6851
    %v7943 = vunpack.c.h.b16 %v6851
    %v7944 = vunpack.c.l.b16 %v6852
    %v7945 = vunpack.c.h.b16 %v6852
    %v7946 = vunpack.c.l.b16 %v6853
    %v7947 = vunpack.c.h.b16 %v6853
    %v7948 = vunpack.c.l.b16 %v6854
    %v7949 = vunpack.c.h.b16 %v6854
    %v7950 = vunpack.c.l.b16 %v6855
    %v7951 = vunpack.c.h.b16 %v6855
    %v7952 = vunpack.c.l.b16 %v6856
    %v7953 = vunpack.c.h.b16 %v6856
    %v7954 = vunpack.c.l.b16 %v6857
    %v7955 = vunpack.c.h.b16 %v6857
    %v7956 = vunpack.c.l.b16 %v6858
    %v7957 = vunpack.c.h.b16 %v6858
    %v7958 = vunpack.c.l.b16 %v6859
    %v7959 = vunpack.c.h.b16 %v6859
    %v7960 = vunpack.c.l.b16 %v6860
    %v7961 = vunpack.c.h.b16 %v6860
    %v7962 = vunpack.c.l.b16 %v6861
    %v7963 = vunpack.c.h.b16 %v6861
    %v7964 = vunpack.c.l.b16 %v6862
    %v7965 = vunpack.c.h.b16 %v6862
    %v7966 = vunpack.c.l.b16 %v6863
    %v7967 = vunpack.c.h.b16 %v6863
    %v7968 = vunpack.c.l.b16 %v6864
    %v7969 = vunpack.c.h.b16 %v6864
    %v7970 = vunpack.c.l.b16 %v6865
    %v7971 = vunpack.c.h.b16 %v6865
    %v7972 = vunpack.c.l.b16 %v6866
    %v7973 = vunpack.c.h.b16 %v6866
    %v7974 = vunpack.c.l.b16 %v6867
    %v7975 = vunpack.c.h.b16 %v6867
    %v7976 = vunpack.c.l.b16 %v6868
    %v7977 = vunpack.c.h.b16 %v6868
    %v7978 = vunpack.c.l.b16 %v6869
    %v7979 = vunpack.c.h.b16 %v6869
    %v7980 = vunpack.c.l.b16 %v6870
    %v7981 = vunpack.c.h.b16 %v6870
    %v7982 = vunpack.c.l.b16 %v6871
    %v7983 = vunpack.c.h.b16 %v6871
    %v7984 = vunpack.c.l.b16 %v6872
    %v7985 = vunpack.c.h.b16 %v6872
    %v7986 = vunpack.c.l.b16 %v6873
    %v7987 = vunpack.c.h.b16 %v6873
    %v7988 = vunpack.c.l.b16 %v6874
    %v7989 = vunpack.c.h.b16 %v6874
    %v7990 = vunpack.c.l.b16 %v6875
    %v7991 = vunpack.c.h.b16 %v6875
    %v7992 = vunpack.c.l.b16 %v6876
    %v7993 = vunpack.c.h.b16 %v6876
    %v7994 = vunpack.c.l.b16 %v6877
    %v7995 = vunpack.c.h.b16 %v6877
    %v7996 = vunpack.c.l.b16 %v6878
    %v7997 = vunpack.c.h.b16 %v6878
    %v7998 = vunpack.c.l.b16 %v6879
    %v7999 = vunpack.c.h.b16 %v6879
    %v8000 = vunpack.c.l.b16 %v6880
    %v8001 = vunpack.c.h.b16 %v6880
    %v8002 = vunpack.c.l.b16 %v6881
    %v8003 = vunpack.c.h.b16 %v6881
    %v8004 = vunpack.c.l.b16 %v6882
    %v8005 = vunpack.c.h.b16 %v6882
    %v8006 = vunpack.c.l.b16 %v6883
    %v8007 = vunpack.c.h.b16 %v6883
    %v8008 = vunpack.c.l.b16 %v6884
    %v8009 = vunpack.c.h.b16 %v6884
    %v8010 = vunpack.c.l.b16 %v6885
    %v8011 = vunpack.c.h.b16 %v6885
    %v8012 = vunpack.c.l.b16 %v6886
    %v8013 = vunpack.c.h.b16 %v6886
    %v8014 = vunpack.c.l.b16 %v6887
    %v8015 = vunpack.c.h.b16 %v6887
    %v8016 = vunpack.c.l.b16 %v6888
    %v8017 = vunpack.c.h.b16 %v6888
    %v8018 = vunpack.c.l.b16 %v6889
    %v8019 = vunpack.c.h.b16 %v6889
    %v8020 = vunpack.c.l.b16 %v6890
    %v8021 = vunpack.c.h.b16 %v6890
    %v8022 = vunpack.c.l.b16 %v6891
    %v8023 = vunpack.c.h.b16 %v6891
    %v8024 = vunpack.c.l.b16 %v6892
    %v8025 = vunpack.c.h.b16 %v6892
    %v8026 = vunpack.c.l.b16 %v6893
    %v8027 = vunpack.c.h.b16 %v6893
    %v8028 = vunpack.c.l.b16 %v6894
    %v8029 = vunpack.c.h.b16 %v6894
    %v8030 = vunpack.c.l.b16 %v6895
    %v8031 = vunpack.c.h.b16 %v6895
    %v8032 = vunpack.c.l.b16 %v6896
    %v8033 = vunpack.c.h.b16 %v6896
    %v8034 = vunpack.c.l.b16 %v6897
    %v8035 = vunpack.c.h.b16 %v6897
    %v8036 = vunpack.c.l.b16 %v6898
    %v8037 = vunpack.c.h.b16 %v6898
    %v8038 = vunpack.c.l.b16 %v6899
    %v8039 = vunpack.c.h.b16 %v6899
    %v8040 = vunpack.c.l.b16 %v6900
    %v8041 = vunpack.c.h.b16 %v6900
    %v8042 = vunpack.c.l.b16 %v6901
    %v8043 = vunpack.c.h.b16 %v6901
    %v8044 = vunpack.c.l.b16 %v6902
    %v8045 = vunpack.c.h.b16 %v6902
    %v8046 = vunpack.c.l.b16 %v6903
    %v8047 = vunpack.c.h.b16 %v6903
    %v8048 = vunpack.c.l.b16 %v6904
    %v8049 = vunpack.c.h.b16 %v6904
    %v8050 = vunpack.c.l.b16 %v6905
    %v8051 = vunpack.c.h.b16 %v6905
    %v8052 = vunpack.c.l.b16 %v6906
    %v8053 = vunpack.c.h.b16 %v6906
    %v8054 = vunpack.c.l.b16 %v6907
    %v8055 = vunpack.c.h.b16 %v6907
    %v8056 = vunpack.c.l.b16 %v6908
    %v8057 = vunpack.c.h.b16 %v6908
    %v8058 = vunpack.c.l.b16 %v6909
    %v8059 = vunpack.c.h.b16 %v6909
    %v8060 = vunpack.c.l.b16 %v6910
    %v8061 = vunpack.c.h.b16 %v6910
    %v8062 = vunpack.c.l.b16 %v6911
    %v8063 = vunpack.c.h.b16 %v6911
    %v8064 = vunpack.c.l.b16 %v6912
    %v8065 = vunpack.c.h.b16 %v6912
    %v8066 = vunpack.c.l.b16 %v6913
    %v8067 = vunpack.c.h.b16 %v6913
    %v8068 = vunpack.c.l.b16 %v6914
    %v8069 = vunpack.c.h.b16 %v6914
    %v8070 = vunpack.c.l.b16 %v6915
    %v8071 = vunpack.c.h.b16 %v6915
    %v8072 = vunpack.c.l.b16 %v6916
    %v8073 = vunpack.c.h.b16 %v6916
    %v8074 = vunpack.c.l.b16 %v6917
    %v8075 = vunpack.c.h.b16 %v6917
    %v8076 = vunpack.c.l.b16 %v6918
    %v8077 = vunpack.c.h.b16 %v6918
    %v8078 = vunpack.c.l.b16 %v6919
    %v8079 = vunpack.c.h.b16 %v6919
    %v8080 = vunpack.c.l.b16 %v6920
    %v8081 = vunpack.c.h.b16 %v6920
    %v8082 = vunpack.c.l.b16 %v6921
    %v8083 = vunpack.c.h.b16 %v6921
    %v8084 = vunpack.c.l.b16 %v6922
    %v8085 = vunpack.c.h.b16 %v6922
    %v8086 = vunpack.c.l.b16 %v6923
    %v8087 = vunpack.c.h.b16 %v6923
    %v8088 = vunpack.c.l.b16 %v6924
    %v8089 = vunpack.c.h.b16 %v6924
    %v8090 = vunpack.c.l.b16 %v6925
    %v8091 = vunpack.c.h.b16 %v6925
    %v8092 = vunpack.c.l.b16 %v6926
    %v8093 = vunpack.c.h.b16 %v6926
    %v8094 = vunpack.c.l.b16 %v6927
    %v8095 = vunpack.c.h.b16 %v6927
    %v8096 = vunpack.c.l.b16 %v6928
    %v8097 = vunpack.c.h.b16 %v6928
    %v8098 = vunpack.c.l.b16 %v6929
    %v8099 = vunpack.c.h.b16 %v6929
    %v8100 = vunpack.c.l.b16 %v6930
    %v8101 = vunpack.c.h.b16 %v6930
    %v8102 = vunpack.c.l.b16 %v6931
    %v8103 = vunpack.c.h.b16 %v6931
    %v8104 = vunpack.c.l.b16 %v6932
    %v8105 = vunpack.c.h.b16 %v6932
    %v8106 = vunpack.c.l.b16 %v6933
    %v8107 = vunpack.c.h.b16 %v6933
    %v8108 = vunpack.c.l.b16 %v6934
    %v8109 = vunpack.c.h.b16 %v6934
    %v8110 = vunpack.c.l.b16 %v6935
    %v8111 = vunpack.c.h.b16 %v6935
    %v8112 = vunpack.c.l.b16 %v6936
    %v8113 = vunpack.c.h.b16 %v6936
    %v8114 = vunpack.c.l.b16 %v6937
    %v8115 = vunpack.c.h.b16 %v6937
    %v8116 = vunpack.c.l.b16 %v6938
    %v8117 = vunpack.c.h.b16 %v6938
    %v8118 = vunpack.c.l.b16 %v6939
    %v8119 = vunpack.c.h.b16 %v6939
    %v8120 = vunpack.c.l.b16 %v6940
    %v8121 = vunpack.c.h.b16 %v6940
    %v8122 = vunpack.c.l.b16 %v6941
    %v8123 = vunpack.c.h.b16 %v6941
    %v8124 = vunpack.c.l.b16 %v6942
    %v8125 = vunpack.c.h.b16 %v6942
    %v8126 = vunpack.c.l.b16 %v6943
    %v8127 = vunpack.c.h.b16 %v6943
    %v8128 = vunpack.c.l.b16 %v6944
    %v8129 = vunpack.c.h.b16 %v6944
    %v8130 = vunpack.c.l.b16 %v6945
    %v8131 = vunpack.c.h.b16 %v6945
    %v8132 = vunpack.c.l.b16 %v6946
    %v8133 = vunpack.c.h.b16 %v6946
    %v8134 = vunpack.c.l.b16 %v6947
    %v8135 = vunpack.c.h.b16 %v6947
    %v8136 = vunpack.c.l.b16 %v6948
    %v8137 = vunpack.c.h.b16 %v6948
    %v8138 = vunpack.c.l.b16 %v6949
    %v8139 = vunpack.c.h.b16 %v6949
    %v8140 = vunpack.c.l.b16 %v6950
    %v8141 = vunpack.c.h.b16 %v6950
    %v8142 = vunpack.c.l.b16 %v6951
    %v8143 = vunpack.c.h.b16 %v6951
    %v8144 = vunpack.c.l.b16 %v6952
    %v8145 = vunpack.c.h.b16 %v6952
    %v8146 = vunpack.c.l.b16 %v6953
    %v8147 = vunpack.c.h.b16 %v6953
    %v8148 = vunpack.c.l.b16 %v6954
    %v8149 = vunpack.c.h.b16 %v6954
    %v8150 = vunpack.c.l.b16 %v6955
    %v8151 = vunpack.c.h.b16 %v6955
    %v8152 = vunpack.c.l.b16 %v6956
    %v8153 = vunpack.c.h.b16 %v6956
    %v8154 = vunpack.c.l.b16 %v6957
    %v8155 = vunpack.c.h.b16 %v6957
    %v8156 = vunpack.c.l.b16 %v6958
    %v8157 = vunpack.c.h.b16 %v6958
    %v8158 = vunpack.c.l.b16 %v6959
    %v8159 = vunpack.c.h.b16 %v6959
    %v8160 = vunpack.c.l.b16 %v6960
    %v8161 = vunpack.c.h.b16 %v6960
    %v8162 = vunpack.c.l.b16 %v6961
    %v8163 = vunpack.c.h.b16 %v6961
    %v8164 = vunpack.c.l.b16 %v6962
    %v8165 = vunpack.c.h.b16 %v6962
    %v8166 = vunpack.c.l.b16 %v6963
    %v8167 = vunpack.c.h.b16 %v6963
    %v8168 = vunpack.c.l.b16 %v6964
    %v8169 = vunpack.c.h.b16 %v6964
    %v8170 = vunpack.c.l.b16 %v6965
    %v8171 = vunpack.c.h.b16 %v6965
    %v8172 = vunpack.c.l.b16 %v6966
    %v8173 = vunpack.c.h.b16 %v6966
    %v8174 = vunpack.c.l.b16 %v6967
    %v8175 = vunpack.c.h.b16 %v6967
    %v8176 = vunpack.c.l.b16 %v6968
    %v8177 = vunpack.c.h.b16 %v6968
    %v8178 = vunpack.c.l.b16 %v6969
    %v8179 = vunpack.c.h.b16 %v6969
    %v8180 = vunpack.c.l.b16 %v6970
    %v8181 = vunpack.c.h.b16 %v6970
    %v8182 = vunpack.c.l.b16 %v6971
    %v8183 = vunpack.c.h.b16 %v6971
    %v8184 = vunpack.c.l.b16 %v6972
    %v8185 = vunpack.c.h.b16 %v6972
    %v8186 = vunpack.c.l.b16 %v6973
    %v8187 = vunpack.c.h.b16 %v6973
    %v8188 = vunpack.c.l.b16 %v6974
    %v8189 = vunpack.c.h.b16 %v6974
    %v8190 = vunpack.c.l.b16 %v6975
    %v8191 = vunpack.c.h.b16 %v6975
    %v8192 = vunpack.c.l.b16 %v6976
    %v8193 = vunpack.c.h.b16 %v6976
    %v8194 = vunpack.c.l.b16 %v6977
    %v8195 = vunpack.c.h.b16 %v6977
    %v8196 = vunpack.c.l.b16 %v6978
    %v8197 = vunpack.c.h.b16 %v6978
    %v8198 = vunpack.c.l.b16 %v6979
    %v8199 = vunpack.c.h.b16 %v6979
    %v8200 = vunpack.c.l.b16 %v6980
    %v8201 = vunpack.c.h.b16 %v6980
    %v8202 = vunpack.c.l.b16 %v6981
    %v8203 = vunpack.c.h.b16 %v6981
    %v8204 = vunpack.c.l.b16 %v6982
    %v8205 = vunpack.c.h.b16 %v6982
    %v8206 = vunpack.c.l.b16 %v6983
    %v8207 = vunpack.c.h.b16 %v6983
    %v8208 = vunpack.c.l.b16 %v6984
    %v8209 = vunpack.c.h.b16 %v6984
    %v8210 = vunpack.c.l.b16 %v6985
    %v8211 = vunpack.c.h.b16 %v6985
    %v8212 = vunpack.c.l.b16 %v6986
    %v8213 = vunpack.c.h.b16 %v6986
    %v8214 = vunpack.c.l.b16 %v6987
    %v8215 = vunpack.c.h.b16 %v6987
    %v8216 = vunpack.c.l.b16 %v6988
    %v8217 = vunpack.c.h.b16 %v6988
    %v8218 = vunpack.c.l.b16 %v6989
    %v8219 = vunpack.c.h.b16 %v6989
    %v8220 = vunpack.c.l.b16 %v6990
    %v8221 = vunpack.c.h.b16 %v6990
    %v8222 = vunpack.c.l.b16 %v6991
    %v8223 = vunpack.c.h.b16 %v6991
    %v8224 = vunpack.c.l.b16 %v6992
    %v8225 = vunpack.c.h.b16 %v6992
    %v8226 = vunpack.c.l.b16 %v6993
    %v8227 = vunpack.c.h.b16 %v6993
    %v8228 = vunpack.c.l.b16 %v6994
    %v8229 = vunpack.c.h.b16 %v6994
    %v8230 = vunpack.c.l.b16 %v6995
    %v8231 = vunpack.c.h.b16 %v6995
    %v8232 = vunpack.c.l.b16 %v6996
    %v8233 = vunpack.c.h.b16 %v6996
    %v8234 = vunpack.c.l.b16 %v6997
    %v8235 = vunpack.c.h.b16 %v6997
    %v8236 = vunpack.c.l.b16 %v6998
    %v8237 = vunpack.c.h.b16 %v6998
    %v8238 = vunpack.c.l.b16 %v6999
    %v8239 = vunpack.c.h.b16 %v6999
    %v8240 = vunpack.c.l.b16 %v7000
    %v8241 = vunpack.c.h.b16 %v7000
    %v8242 = vunpack.c.l.b16 %v7001
    %v8243 = vunpack.c.h.b16 %v7001
    %v8244 = vunpack.c.l.b16 %v7002
    %v8245 = vunpack.c.h.b16 %v7002
    %v8246 = vunpack.c.l.b16 %v7003
    %v8247 = vunpack.c.h.b16 %v7003
    %v8248 = vunpack.c.l.b16 %v7004
    %v8249 = vunpack.c.h.b16 %v7004
    %v8250 = vunpack.c.l.b16 %v7005
    %v8251 = vunpack.c.h.b16 %v7005
    %v8252 = vunpack.c.l.b16 %v7006
    %v8253 = vunpack.c.h.b16 %v7006
    %v8254 = vunpack.c.l.b16 %v7007
    %v8255 = vunpack.c.h.b16 %v7007
    %v8256 = vunpack.c.l.b16 %v7008
    %v8257 = vunpack.c.h.b16 %v7008
    %v8258 = vunpack.c.l.b16 %v7009
    %v8259 = vunpack.c.h.b16 %v7009
    %v8260 = vunpack.c.l.b16 %v7010
    %v8261 = vunpack.c.h.b16 %v7010
    %v8262 = vunpack.c.l.b16 %v7011
    %v8263 = vunpack.c.h.b16 %v7011
    %v8264 = vunpack.c.l.b16 %v7012
    %v8265 = vunpack.c.h.b16 %v7012
    %v8266 = vunpack.c.l.b16 %v7013
    %v8267 = vunpack.c.h.b16 %v7013
    %v8268 = vunpack.c.l.b16 %v7014
    %v8269 = vunpack.c.h.b16 %v7014
    %v8270 = vunpack.c.l.b16 %v7015
    %v8271 = vunpack.c.h.b16 %v7015
    %v8272 = vunpack.c.l.b16 %v7016
    %v8273 = vunpack.c.h.b16 %v7016
    %v8274 = vunpack.c.l.b16 %v7017
    %v8275 = vunpack.c.h.b16 %v7017
    %v8276 = vunpack.c.l.b16 %v7018
    %v8277 = vunpack.c.h.b16 %v7018
    %v8278 = vunpack.c.l.b16 %v7019
    %v8279 = vunpack.c.h.b16 %v7019
    %v8280 = vunpack.c.l.b16 %v7020
    %v8281 = vunpack.c.h.b16 %v7020
    %v8282 = vunpack.c.l.b16 %v7021
    %v8283 = vunpack.c.h.b16 %v7021
    %v8284 = vunpack.c.l.b16 %v7022
    %v8285 = vunpack.c.h.b16 %v7022
    %v8286 = vunpack.c.l.b16 %v7023
    %v8287 = vunpack.c.h.b16 %v7023
    %v8288 = vunpack.c.l.b16 %v7024
    %v8289 = vunpack.c.h.b16 %v7024
    %v8290 = vunpack.c.l.b16 %v7025
    %v8291 = vunpack.c.h.b16 %v7025
    %v8292 = vunpack.c.l.b16 %v7026
    %v8293 = vunpack.c.h.b16 %v7026
    %v8294 = vunpack.c.l.b16 %v7027
    %v8295 = vunpack.c.h.b16 %v7027
    %v8296 = vunpack.c.l.b16 %v7028
    %v8297 = vunpack.c.h.b16 %v7028
    %v8298 = vunpack.c.l.b16 %v7029
    %v8299 = vunpack.c.h.b16 %v7029
    %v8300 = vunpack.c.l.b16 %v7030
    %v8301 = vunpack.c.h.b16 %v7030
    %v8302 = vunpack.c.l.b16 %v7031
    %v8303 = vunpack.c.h.b16 %v7031
    %v8304 = vunpack.c.l.b16 %v7032
    %v8305 = vunpack.c.h.b16 %v7032
    %v8306 = vunpack.c.l.b16 %v7033
    %v8307 = vunpack.c.h.b16 %v7033
    %v8308 = vunpack.c.l.b16 %v7034
    %v8309 = vunpack.c.h.b16 %v7034
    %v8310 = vunpack.c.l.b16 %v7035
    %v8311 = vunpack.c.h.b16 %v7035
    %v8312 = vunpack.c.l.b16 %v7036
    %v8313 = vunpack.c.h.b16 %v7036
    %v8314 = vunpack.c.l.b16 %v7037
    %v8315 = vunpack.c.h.b16 %v7037
    %v8316 = vunpack.c.l.b16 %v7038
    %v8317 = vunpack.c.h.b16 %v7038
    %v8318 = vunpack.c.l.b16 %v7039
    %v8319 = vunpack.c.h.b16 %v7039
    %v8320 = vunpack.c.l.b16 %v7040
    %v8321 = vunpack.c.h.b16 %v7040
    %v8322 = vunpack.c.l.b16 %v7041
    %v8323 = vunpack.c.h.b16 %v7041
    %v8324 = vunpack.c.l.b16 %v7042
    %v8325 = vunpack.c.h.b16 %v7042
    %v8326 = vunpack.c.l.b16 %v7043
    %v8327 = vunpack.c.h.b16 %v7043
    %v8328 = vunpack.c.l.b16 %v7044
    %v8329 = vunpack.c.h.b16 %v7044
    %v8330 = vunpack.c.l.b16 %v7045
    %v8331 = vunpack.c.h.b16 %v7045
    %v8332 = vunpack.c.l.b16 %v7046
    %v8333 = vunpack.c.h.b16 %v7046
    %v8334 = vunpack.c.l.b16 %v7047
    %v8335 = vunpack.c.h.b16 %v7047
    %v8336 = vunpack.c.l.b16 %v7048
    %v8337 = vunpack.c.h.b16 %v7048
    %v8338 = vunpack.c.l.b16 %v7049
    %v8339 = vunpack.c.h.b16 %v7049
    %v8340 = vunpack.c.l.b16 %v7050
    %v8341 = vunpack.c.h.b16 %v7050
    %v8342 = vunpack.c.l.b16 %v7051
    %v8343 = vunpack.c.h.b16 %v7051
    %v8344 = vunpack.c.l.b16 %v7052
    %v8345 = vunpack.c.h.b16 %v7052
    %v8346 = vunpack.c.l.b16 %v7053
    %v8347 = vunpack.c.h.b16 %v7053
    %v8348 = vunpack.c.l.b16 %v7054
    %v8349 = vunpack.c.h.b16 %v7054
    %v8350 = vunpack.c.l.b16 %v7055
    %v8351 = vunpack.c.h.b16 %v7055
    %v8352 = vunpack.c.l.b16 %v7056
    %v8353 = vunpack.c.h.b16 %v7056
    %v8354 = vunpack.c.l.b16 %v7057
    %v8355 = vunpack.c.h.b16 %v7057
    %v8356 = vunpack.c.l.b16 %v7058
    %v8357 = vunpack.c.h.b16 %v7058
    %v8358 = vunpack.c.l.b16 %v7059
    %v8359 = vunpack.c.h.b16 %v7059
    %v8360 = vunpack.c.l.b16 %v7060
    %v8361 = vunpack.c.h.b16 %v7060
    %v8362 = vunpack.c.l.b16 %v7061
    %v8363 = vunpack.c.h.b16 %v7061
    %v8364 = vunpack.c.l.b16 %v7062
    %v8365 = vunpack.c.h.b16 %v7062
    %v8366 = vunpack.c.l.b16 %v7063
    %v8367 = vunpack.c.h.b16 %v7063
    %v8368 = vunpack.c.l.b16 %v7064
    %v8369 = vunpack.c.h.b16 %v7064
    %v8370 = vunpack.c.l.b16 %v7065
    %v8371 = vunpack.c.h.b16 %v7065
    %v8372 = vunpack.c.l.b16 %v7066
    %v8373 = vunpack.c.h.b16 %v7066
    %v8374 = vunpack.c.l.b16 %v7067
    %v8375 = vunpack.c.h.b16 %v7067
    %v8376 = vunpack.c.l.b16 %v7068
    %v8377 = vunpack.c.h.b16 %v7068
    %v8378 = vunpack.c.l.b16 %v7069
    %v8379 = vunpack.c.h.b16 %v7069
    %v8380 = vunpack.c.l.b16 %v7070
    %v8381 = vunpack.c.h.b16 %v7070
    %v8382 = vunpack.c.l.b16 %v7071
    %v8383 = vunpack.c.h.b16 %v7071
    %v8384 = vunpack.c.l.b16 %v7072
    %v8385 = vunpack.c.h.b16 %v7072
    %v8386 = vunpack.c.l.b16 %v7073
    %v8387 = vunpack.c.h.b16 %v7073
    %v8388 = vunpack.c.l.b16 %v7074
    %v8389 = vunpack.c.h.b16 %v7074
    %v8390 = vunpack.c.l.b16 %v7075
    %v8391 = vunpack.c.h.b16 %v7075
    %v8392 = vunpack.c.l.b16 %v7076
    %v8393 = vunpack.c.h.b16 %v7076
    %v8394 = vunpack.c.l.b16 %v7077
    %v8395 = vunpack.c.h.b16 %v7077
    %v8396 = vunpack.c.l.b16 %v7078
    %v8397 = vunpack.c.h.b16 %v7078
    %v8398 = vunpack.c.l.b16 %v7079
    %v8399 = vunpack.c.h.b16 %v7079
    %v8400 = vunpack.c.l.b16 %v7080
    %v8401 = vunpack.c.h.b16 %v7080
    %v8402 = vunpack.c.l.b16 %v7081
    %v8403 = vunpack.c.h.b16 %v7081
    %v8404 = vunpack.c.l.b16 %v7082
    %v8405 = vunpack.c.h.b16 %v7082
    %v8406 = vunpack.c.l.b16 %v7083
    %v8407 = vunpack.c.h.b16 %v7083
    %v8408 = vunpack.c.l.b16 %v7084
    %v8409 = vunpack.c.h.b16 %v7084
    %v8410 = vunpack.c.l.b16 %v7085
    %v8411 = vunpack.c.h.b16 %v7085
    %v8412 = vunpack.c.l.b16 %v7086
    %v8413 = vunpack.c.h.b16 %v7086
    %v8414 = vunpack.c.l.b16 %v7087
    %v8415 = vunpack.c.h.b16 %v7087
    %v8416 = vunpack.c.l.b16 %v7088
    %v8417 = vunpack.c.h.b16 %v7088
    %v8418 = vunpack.c.l.b16 %v7089
    %v8419 = vunpack.c.h.b16 %v7089
    %v8420 = vunpack.c.l.b16 %v7090
    %v8421 = vunpack.c.h.b16 %v7090
    %v8422 = vunpack.c.l.b16 %v7091
    %v8423 = vunpack.c.h.b16 %v7091
    %v8424 = vunpack.c.l.b16 %v7092
    %v8425 = vunpack.c.h.b16 %v7092
    %v8426 = vunpack.c.l.b16 %v7093
    %v8427 = vunpack.c.h.b16 %v7093
    %v8428 = vunpack.c.l.b16 %v7094
    %v8429 = vunpack.c.h.b16 %v7094
    %v8430 = vunpack.c.l.b16 %v7095
    %v8431 = vunpack.c.h.b16 %v7095
    %v8432 = vunpack.c.l.b16 %v7096
    %v8433 = vunpack.c.h.b16 %v7096
    %v8434 = vunpack.c.l.b16 %v7097
    %v8435 = vunpack.c.h.b16 %v7097
    %v8436 = vunpack.c.l.b16 %v7098
    %v8437 = vunpack.c.h.b16 %v7098
    %v8438 = vunpack.c.l.b16 %v7099
    %v8439 = vunpack.c.h.b16 %v7099
    %v8440 = vunpack.c.l.b16 %v7100
    %v8441 = vunpack.c.h.b16 %v7100
    %v8442 = vunpack.c.l.b16 %v7101
    %v8443 = vunpack.c.h.b16 %v7101
    %v8444 = vunpack.c.l.b16 %v7102
    %v8445 = vunpack.c.h.b16 %v7102
    %v8446 = vunpack.c.l.b16 %v7103
    %v8447 = vunpack.c.h.b16 %v7103
    %v8448 = vunpack.c.l.b16 %v7104
    %v8449 = vunpack.c.h.b16 %v7104
    %v8450 = vunpack.c.l.b16 %v7105
    %v8451 = vunpack.c.h.b16 %v7105
    %v8452 = vunpack.c.l.b16 %v7106
    %v8453 = vunpack.c.h.b16 %v7106
    %v8454 = vunpack.c.l.b16 %v7107
    %v8455 = vunpack.c.h.b16 %v7107
    %v8456 = vunpack.c.l.b16 %v7108
    %v8457 = vunpack.c.h.b16 %v7108
    %v8458 = vunpack.c.l.b16 %v7109
    %v8459 = vunpack.c.h.b16 %v7109
    %v8460 = vunpack.c.l.b16 %v7110
    %v8461 = vunpack.c.h.b16 %v7110
    %v8462 = vunpack.c.l.b16 %v7111
    %v8463 = vunpack.c.h.b16 %v7111
    %v8464 = vunpack.c.l.b16 %v7112
    %v8465 = vunpack.c.h.b16 %v7112
    %v8466 = vunpack.c.l.b16 %v7113
    %v8467 = vunpack.c.h.b16 %v7113
    %v8468 = vunpack.c.l.b16 %v7114
    %v8469 = vunpack.c.h.b16 %v7114
    %v8470 = vunpack.c.l.b16 %v7115
    %v8471 = vunpack.c.h.b16 %v7115
    %v8472 = vunpack.c.l.b16 %v7116
    %v8473 = vunpack.c.h.b16 %v7116
    %v8474 = vunpack.c.l.b16 %v7117
    %v8475 = vunpack.c.h.b16 %v7117
    %v8476 = vunpack.c.l.b16 %v7118
    %v8477 = vunpack.c.h.b16 %v7118
    %v8478 = vunpack.c.l.b16 %v7119
    %v8479 = vunpack.c.h.b16 %v7119
    %v8480 = vunpack.c.l.b16 %v7120
    %v8481 = vunpack.c.h.b16 %v7120
    %v8482 = vunpack.c.l.b16 %v7121
    %v8483 = vunpack.c.h.b16 %v7121
    %v8484 = vunpack.c.l.b16 %v7122
    %v8485 = vunpack.c.h.b16 %v7122
    %v8486 = vunpack.c.l.b16 %v7123
    %v8487 = vunpack.c.h.b16 %v7123
    %v8488 = vunpack.c.l.b16 %v7124
    %v8489 = vunpack.c.h.b16 %v7124
    %v8490 = vunpack.c.l.b16 %v7125
    %v8491 = vunpack.c.h.b16 %v7125
    %v8492 = vunpack.c.l.b16 %v7126
    %v8493 = vunpack.c.h.b16 %v7126
    %v8494 = vunpack.c.l.b16 %v7127
    %v8495 = vunpack.c.h.b16 %v7127
    %v8496 = vunpack.c.l.b16 %v7128
    %v8497 = vunpack.c.h.b16 %v7128
    %v8498 = vunpack.c.l.b16 %v7129
    %v8499 = vunpack.c.h.b16 %v7129
    %v8500 = vunpack.c.l.b16 %v7130
    %v8501 = vunpack.c.h.b16 %v7130
    %v8502 = vunpack.c.l.b16 %v7131
    %v8503 = vunpack.c.h.b16 %v7131
    %v8504 = vunpack.c.l.b16 %v7132
    %v8505 = vunpack.c.h.b16 %v7132
    %v8506 = vunpack.c.l.b16 %v7133
    %v8507 = vunpack.c.h.b16 %v7133
    %v8508 = vunpack.c.l.b16 %v7134
    %v8509 = vunpack.c.h.b16 %v7134
    %v8510 = vunpack.c.l.b16 %v7135
    %v8511 = vunpack.c.h.b16 %v7135
    %v8512 = vunpack.c.l.b16 %v7136
    %v8513 = vunpack.c.h.b16 %v7136
    %v8514 = vunpack.c.l.b16 %v7137
    %v8515 = vunpack.c.h.b16 %v7137
    %v8516 = vunpack.c.l.b16 %v7138
    %v8517 = vunpack.c.h.b16 %v7138
    %v8518 = vunpack.c.l.b16 %v7139
    %v8519 = vunpack.c.h.b16 %v7139
    %v8520 = vunpack.c.l.b16 %v7140
    %v8521 = vunpack.c.h.b16 %v7140
    %v8522 = vunpack.c.l.b16 %v7141
    %v8523 = vunpack.c.h.b16 %v7141
    %v8524 = vunpack.c.l.b16 %v7142
    %v8525 = vunpack.c.h.b16 %v7142
    %v8526 = vunpack.c.l.b16 %v7143
    %v8527 = vunpack.c.h.b16 %v7143
    %v8528 = vunpack.c.l.b16 %v7144
    %v8529 = vunpack.c.h.b16 %v7144
    %v8530 = vunpack.c.l.b16 %v7145
    %v8531 = vunpack.c.h.b16 %v7145
    %v8532 = vunpack.c.l.b16 %v7146
    %v8533 = vunpack.c.h.b16 %v7146
    %v8534 = vunpack.c.l.b16 %v7147
    %v8535 = vunpack.c.h.b16 %v7147
    %v8536 = vunpack.c.l.b16 %v7148
    %v8537 = vunpack.c.h.b16 %v7148
    %v8538 = vunpack.c.l.b16 %v7149
    %v8539 = vunpack.c.h.b16 %v7149
    %v8540 = vunpack.c.l.b16 %v7150
    %v8541 = vunpack.c.h.b16 %v7150
    %v8542 = vunpack.c.l.b16 %v7151
    %v8543 = vunpack.c.h.b16 %v7151
    %v8544 = vunpack.c.l.b16 %v7152
    %v8545 = vunpack.c.h.b16 %v7152
    %v8546 = vunpack.c.l.b16 %v7153
    %v8547 = vunpack.c.h.b16 %v7153
    %v8548 = vunpack.c.l.b16 %v7154
    %v8549 = vunpack.c.h.b16 %v7154
    %v8550 = vunpack.c.l.b16 %v7155
    %v8551 = vunpack.c.h.b16 %v7155
    %v8552 = vunpack.c.l.b16 %v7156
    %v8553 = vunpack.c.h.b16 %v7156
    %v8554 = vunpack.c.l.b16 %v7157
    %v8555 = vunpack.c.h.b16 %v7157
    %v8556 = vunpack.c.l.b16 %v7158
    %v8557 = vunpack.c.h.b16 %v7158
    %v8558 = vunpack.c.l.b16 %v7159
    %v8559 = vunpack.c.h.b16 %v7159
    %v8560 = vunpack.c.l.b16 %v7160
    %v8561 = vunpack.c.h.b16 %v7160
    %v8562 = vunpack.c.l.b16 %v7161
    %v8563 = vunpack.c.h.b16 %v7161
    %v8564 = vunpack.c.l.b16 %v7162
    %v8565 = vunpack.c.h.b16 %v7162
    %v8566 = vunpack.c.l.b16 %v7163
    %v8567 = vunpack.c.h.b16 %v7163
    %v8568 = vunpack.c.l.b16 %v7164
    %v8569 = vunpack.c.h.b16 %v7164
    %v8570 = vunpack.c.l.b16 %v7165
    %v8571 = vunpack.c.h.b16 %v7165
    %v8572 = vunpack.c.l.b16 %v7166
    %v8573 = vunpack.c.h.b16 %v7166
    %v8574 = vunpack.c.l.b16 %v7167
    %v8575 = vunpack.c.h.b16 %v7167
    %v8576 = vunpack.c.l.b16 %v7168
    %v8577 = vunpack.c.h.b16 %v7168
    %v8578 = vunpack.c.l.b16 %v7169
    %v8579 = vunpack.c.h.b16 %v7169
    %v8580 = vunpack.c.l.b16 %v7170
    %v8581 = vunpack.c.h.b16 %v7170
    %v8582 = vunpack.c.l.b16 %v7171
    %v8583 = vunpack.c.h.b16 %v7171
    %v8584 = vunpack.c.l.b16 %v7172
    %v8585 = vunpack.c.h.b16 %v7172
    %v8586 = vunpack.c.l.b16 %v7173
    %v8587 = vunpack.c.h.b16 %v7173
    %v8588 = vunpack.c.l.b16 %v7174
    %v8589 = vunpack.c.h.b16 %v7174
    %v8590 = vunpack.c.l.b16 %v7175
    %v8591 = vunpack.c.h.b16 %v7175
    %v8592 = vunpack.c.l.b16 %v7176
    %v8593 = vunpack.c.h.b16 %v7176
    %v8594 = vunpack.c.l.b16 %v7177
    %v8595 = vunpack.c.h.b16 %v7177
    %v8596 = vunpack.c.l.b16 %v7178
    %v8597 = vunpack.c.h.b16 %v7178
    %v8598 = vunpack.c.l.b16 %v7179
    %v8599 = vunpack.c.h.b16 %v7179
    %v8600 = vunpack.c.l.b16 %v7180
    %v8601 = vunpack.c.h.b16 %v7180
    %v8602 = vunpack.c.l.b16 %v7181
    %v8603 = vunpack.c.h.b16 %v7181
    %v8604 = vunpack.c.l.b16 %v7182
    %v8605 = vunpack.c.h.b16 %v7182
    %v8606 = vunpack.c.l.b16 %v7183
    %v8607 = vunpack.c.h.b16 %v7183
    %v8608 = vunpack.c.l.b16 %v7184
    %v8609 = vunpack.c.h.b16 %v7184
    %v8610 = vunpack.c.l.b16 %v7185
    %v8611 = vunpack.c.h.b16 %v7185
    %v8612 = vunpack.c.l.b16 %v7186
    %v8613 = vunpack.c.h.b16 %v7186
    %v8614 = vunpack.c.l.b16 %v7187
    %v8615 = vunpack.c.h.b16 %v7187
    %v8616 = vunpack.c.l.b16 %v7188
    %v8617 = vunpack.c.h.b16 %v7188
    %v8618 = vunpack.c.l.b16 %v7189
    %v8619 = vunpack.c.h.b16 %v7189
    %v8620 = vunpack.c.l.b16 %v7190
    %v8621 = vunpack.c.h.b16 %v7190
    %v8622 = vunpack.c.l.b16 %v7191
    %v8623 = vunpack.c.h.b16 %v7191
    %v8624 = vunpack.c.l.b16 %v7192
    %v8625 = vunpack.c.h.b16 %v7192
    %v8626 = vunpack.c.l.b16 %v7193
    %v8627 = vunpack.c.h.b16 %v7193
    %v8628 = vunpack.c.l.b16 %v7194
    %v8629 = vunpack.c.h.b16 %v7194
    %v8630 = vunpack.c.l.b16 %v7195
    %v8631 = vunpack.c.h.b16 %v7195
    %v8632 = vunpack.c.l.b16 %v7196
    %v8633 = vunpack.c.h.b16 %v7196
    %v8634 = vunpack.c.l.b16 %v7197
    %v8635 = vunpack.c.h.b16 %v7197
    %v8636 = vunpack.c.l.b16 %v7198
    %v8637 = vunpack.c.h.b16 %v7198
    %v8638 = vunpack.c.l.b16 %v7199
    %v8639 = vunpack.c.h.b16 %v7199
    %v8640 = vunpack.c.l.b16 %v7200
    %v8641 = vunpack.c.h.b16 %v7200
    %v8642 = vunpack.c.l.b16 %v7201
    %v8643 = vunpack.c.h.b16 %v7201
    %v8644 = vunpack.c.l.b16 %v7202
    %v8645 = vunpack.c.h.b16 %v7202
    %v8646 = vunpack.c.l.b16 %v7203
    %v8647 = vunpack.c.h.b16 %v7203
    %v8648 = vunpack.c.l.b16 %v7204
    %v8649 = vunpack.c.h.b16 %v7204
    %v8650 = vunpack.c.l.b16 %v7205
    %v8651 = vunpack.c.h.b16 %v7205
    %v8652 = vunpack.c.l.b16 %v7206
    %v8653 = vunpack.c.h.b16 %v7206
    %v8654 = vunpack.c.l.b16 %v7207
    %v8655 = vunpack.c.h.b16 %v7207
    %v8656 = vunpack.c.l.b16 %v7208
    %v8657 = vunpack.c.h.b16 %v7208
    %v8658 = vunpack.c.l.b16 %v7209
    %v8659 = vunpack.c.h.b16 %v7209
    %v8660 = vunpack.c.l.b16 %v7210
    %v8661 = vunpack.c.h.b16 %v7210
    %v8662 = vunpack.c.l.b16 %v7211
    %v8663 = vunpack.c.h.b16 %v7211
    %v8664 = vunpack.c.l.b16 %v7212
    %v8665 = vunpack.c.h.b16 %v7212
    %v8666 = vunpack.c.l.b16 %v7213
    %v8667 = vunpack.c.h.b16 %v7213
    %v8668 = vunpack.c.l.b16 %v7214
    %v8669 = vunpack.c.h.b16 %v7214
    %v8670 = vunpack.c.l.b16 %v7215
    %v8671 = vunpack.c.h.b16 %v7215
    %v8672 = vunpack.c.l.b16 %v7216
    %v8673 = vunpack.c.h.b16 %v7216
    %v8674 = vunpack.c.l.b16 %v7217
    %v8675 = vunpack.c.h.b16 %v7217
    %v8676 = vunpack.c.l.b16 %v7218
    %v8677 = vunpack.c.h.b16 %v7218
    %v8678 = vunpack.c.l.b16 %v7219
    %v8679 = vunpack.c.h.b16 %v7219
    %v8680 = vunpack.c.l.b16 %v7220
    %v8681 = vunpack.c.h.b16 %v7220
    %v8682 = vunpack.c.l.b16 %v7221
    %v8683 = vunpack.c.h.b16 %v7221
    %v8684 = vunpack.c.l.b16 %v7222
    %v8685 = vunpack.c.h.b16 %v7222
    %v8686 = vunpack.c.l.b16 %v7223
    %v8687 = vunpack.c.h.b16 %v7223
    %v8688 = vunpack.c.l.b16 %v7224
    %v8689 = vunpack.c.h.b16 %v7224
    %v8690 = vunpack.c.l.b16 %v7225
    %v8691 = vunpack.c.h.b16 %v7225
    %v8692 = vunpack.c.l.b16 %v7226
    %v8693 = vunpack.c.h.b16 %v7226
    %v8694 = vunpack.c.l.b16 %v7227
    %v8695 = vunpack.c.h.b16 %v7227
    %v8696 = vunpack.c.l.b16 %v7228
    %v8697 = vunpack.c.h.b16 %v7228
    %v8698 = vunpack.c.l.b16 %v7229
    %v8699 = vunpack.c.h.b16 %v7229
    %v8700 = vunpack.c.l.b16 %v7230
    %v8701 = vunpack.c.h.b16 %v7230
    %v8702 = vunpack.c.l.b16 %v7231
    %v8703 = vunpack.c.h.b16 %v7231
    %v8704 = vunpack.c.l.b16 %v7232
    %v8705 = vunpack.c.h.b16 %v7232
    %v8706 = vunpack.c.l.b16 %v7233
    %v8707 = vunpack.c.h.b16 %v7233
    %v8708 = vunpack.c.l.b16 %v7234
    %v8709 = vunpack.c.h.b16 %v7234
    %v8710 = vunpack.c.l.b16 %v7235
    %v8711 = vunpack.c.h.b16 %v7235
    %v8712 = vunpack.c.l.b16 %v7236
    %v8713 = vunpack.c.h.b16 %v7236
    %v8714 = vunpack.c.l.b16 %v7237
    %v8715 = vunpack.c.h.b16 %v7237
    %v8716 = vunpack.c.l.b16 %v7238
    %v8717 = vunpack.c.h.b16 %v7238
    %v8718 = vunpack.c.l.b16 %v7239
    %v8719 = vunpack.c.h.b16 %v7239
    %v8720 = vunpack.c.l.b16 %v7240
    %v8721 = vunpack.c.h.b16 %v7240
    %v8722 = vunpack.c.l.b16 %v7241
    %v8723 = vunpack.c.h.b16 %v7241
    %v8724 = vunpack.c.l.b16 %v7242
    %v8725 = vunpack.c.h.b16 %v7242
    %v8726 = vunpack.c.l.b16 %v7243
    %v8727 = vunpack.c.h.b16 %v7243
    %v8728 = vunpack.c.l.b16 %v7244
    %v8729 = vunpack.c.h.b16 %v7244
    %v8730 = vunpack.c.l.b16 %v7245
    %v8731 = vunpack.c.h.b16 %v7245
    %v8732 = vunpack.c.l.b16 %v7246
    %v8733 = vunpack.c.h.b16 %v7246
    %v8734 = vunpack.c.l.b16 %v7247
    %v8735 = vunpack.c.h.b16 %v7247
    %v8736 = vunpack.c.l.b16 %v7248
    %v8737 = vunpack.c.h.b16 %v7248
    %v8738 = vunpack.c.l.b16 %v7249
    %v8739 = vunpack.c.h.b16 %v7249
    %v8740 = vunpack.c.l.b16 %v7250
    %v8741 = vunpack.c.h.b16 %v7250
    %v8742 = vunpack.c.l.b16 %v7251
    %v8743 = vunpack.c.h.b16 %v7251
    %v8744 = vunpack.c.l.b16 %v7252
    %v8745 = vunpack.c.h.b16 %v7252
    %v8746 = vunpack.c.l.b16 %v7253
    %v8747 = vunpack.c.h.b16 %v7253
    %v8748 = vunpack.c.l.b16 %v7254
    %v8749 = vunpack.c.h.b16 %v7254
    %v8750 = vunpack.c.l.b16 %v7255
    %v8751 = vunpack.c.h.b16 %v7255
    %v8752 = vunpack.c.l.b16 %v7256
    %v8753 = vunpack.c.h.b16 %v7256
    %v8754 = vunpack.c.l.b16 %v7257
    %v8755 = vunpack.c.h.b16 %v7257
    %v8756 = vunpack.c.l.b16 %v7258
    %v8757 = vunpack.c.h.b16 %v7258
    %v8758 = vunpack.c.l.b16 %v7259
    %v8759 = vunpack.c.h.b16 %v7259
    %v8760 = vunpack.c.l.b16 %v7260
    %v8761 = vunpack.c.h.b16 %v7260
    %v8762 = vunpack.c.l.b16 %v7261
    %v8763 = vunpack.c.h.b16 %v7261
    %v8764 = vunpack.c.l.b16 %v7262
    %v8765 = vunpack.c.h.b16 %v7262
    %v8766 = vunpack.c.l.b16 %v7263
    %v8767 = vunpack.c.h.b16 %v7263
    %v8768 = vunpack.c.l.b16 %v7264
    %v8769 = vunpack.c.h.b16 %v7264
    %v8770 = vunpack.c.l.b16 %v7265
    %v8771 = vunpack.c.h.b16 %v7265
    %v8772 = vunpack.c.l.b16 %v7266
    %v8773 = vunpack.c.h.b16 %v7266
    %v8774 = vunpack.c.l.b16 %v7267
    %v8775 = vunpack.c.h.b16 %v7267
    %v8776 = vunpack.c.l.b16 %v7268
    %v8777 = vunpack.c.h.b16 %v7268
    %v8778 = vunpack.c.l.b16 %v7269
    %v8779 = vunpack.c.h.b16 %v7269
    %v8780 = vunpack.c.l.b16 %v7270
    %v8781 = vunpack.c.h.b16 %v7270
    %v8782 = vunpack.c.l.b16 %v7271
    %v8783 = vunpack.c.h.b16 %v7271
    %v8784 = vunpack.c.l.b16 %v7272
    %v8785 = vunpack.c.h.b16 %v7272
    %v8786 = vunpack.c.l.b16 %v7273
    %v8787 = vunpack.c.h.b16 %v7273
    %v8788 = vunpack.c.l.b16 %v7274
    %v8789 = vunpack.c.h.b16 %v7274
    %v8790 = vunpack.c.l.b16 %v7275
    %v8791 = vunpack.c.h.b16 %v7275
    %v8792 = vunpack.c.l.b16 %v7276
    %v8793 = vunpack.c.h.b16 %v7276
    %v8794 = vunpack.c.l.b16 %v7277
    %v8795 = vunpack.c.h.b16 %v7277
    %v8796 = vunpack.c.l.b16 %v7278
    %v8797 = vunpack.c.h.b16 %v7278
    %v8798 = vunpack.c.l.b16 %v7279
    %v8799 = vunpack.c.h.b16 %v7279
    %v8800 = vunpack.c.l.b16 %v7280
    %v8801 = vunpack.c.h.b16 %v7280
    %v8802 = vunpack.c.l.b16 %v7281
    %v8803 = vunpack.c.h.b16 %v7281
    %v8804 = vunpack.c.l.b16 %v7282
    %v8805 = vunpack.c.h.b16 %v7282
    %v8806 = vunpack.c.l.b16 %v7283
    %v8807 = vunpack.c.h.b16 %v7283
    %v8808 = vunpack.c.l.b16 %v7284
    %v8809 = vunpack.c.h.b16 %v7284
    %v8810 = vunpack.c.l.b16 %v7285
    %v8811 = vunpack.c.h.b16 %v7285
    %v8812 = vunpack.c.l.b16 %v7286
    %v8813 = vunpack.c.h.b16 %v7286
    %v8814 = vunpack.c.l.b16 %v7287
    %v8815 = vunpack.c.h.b16 %v7287
    %v8816 = vunpack.c.l.b16 %v7288
    %v8817 = vunpack.c.h.b16 %v7288
    %v8818 = vunpack.c.l.b16 %v7289
    %v8819 = vunpack.c.h.b16 %v7289
    %v8820 = vunpack.c.l.b16 %v7290
    %v8821 = vunpack.c.h.b16 %v7290
    %v8822 = vunpack.c.l.b16 %v7291
    %v8823 = vunpack.c.h.b16 %v7291
    %v8824 = vunpack.c.l.b16 %v7292
    %v8825 = vunpack.c.h.b16 %v7292
    %v8826 = vunpack.c.l.b16 %v7293
    %v8827 = vunpack.c.h.b16 %v7293
    %v8828 = vunpack.c.l.b16 %v7294
    %v8829 = vunpack.c.h.b16 %v7294
    %v8830 = vunpack.c.l.b16 %v7295
    %v8831 = vunpack.c.h.b16 %v7295
    %v8832 = vunpack.c.l.b16 %v7296
    %v8833 = vunpack.c.h.b16 %v7296
    %v8834 = vunpack.c.l.b16 %v7297
    %v8835 = vunpack.c.h.b16 %v7297
    %v8836 = vunpack.c.l.b16 %v7298
    %v8837 = vunpack.c.h.b16 %v7298
    %v8838 = vunpack.c.l.b16 %v7299
    %v8839 = vunpack.c.h.b16 %v7299
    %v8840 = vunpack.c.l.b16 %v7300
    %v8841 = vunpack.c.h.b16 %v7300
    %v8842 = vunpack.c.l.b16 %v7301
    %v8843 = vunpack.c.h.b16 %v7301
    %v8844 = vunpack.c.l.b16 %v7302
    %v8845 = vunpack.c.h.b16 %v7302
    %v8846 = vunpack.c.l.b16 %v7303
    %v8847 = vunpack.c.h.b16 %v7303
    %v8848 = vunpack.c.l.b16 %v7304
    %v8849 = vunpack.c.h.b16 %v7304
    %v8850 = vunpack.c.l.b16 %v7305
    %v8851 = vunpack.c.h.b16 %v7305
    %v8852 = vunpack.c.l.b16 %v7306
    %v8853 = vunpack.c.h.b16 %v7306
    %v8854 = vunpack.c.l.b16 %v7307
    %v8855 = vunpack.c.h.b16 %v7307
    %v8856 = vunpack.c.l.b16 %v7308
    %v8857 = vunpack.c.h.b16 %v7308
    %v8858 = vunpack.c.l.b16 %v7309
    %v8859 = vunpack.c.h.b16 %v7309
    %v8860 = vunpack.c.l.b16 %v7310
    %v8861 = vunpack.c.h.b16 %v7310
    %v8862 = vunpack.c.l.b16 %v7311
    %v8863 = vunpack.c.h.b16 %v7311
    %v8864 = vunpack.c.l.b16 %v7312
    %v8865 = vunpack.c.h.b16 %v7312
    %v8866 = vunpack.c.l.b16 %v7313
    %v8867 = vunpack.c.h.b16 %v7313
    %v8868 = vunpack.c.l.b16 %v7314
    %v8869 = vunpack.c.h.b16 %v7314
    %v8870 = vunpack.c.l.b16 %v7315
    %v8871 = vunpack.c.h.b16 %v7315
    %v8872 = vunpack.c.l.b16 %v7316
    %v8873 = vunpack.c.h.b16 %v7316
    %v8874 = vunpack.c.l.b16 %v7317
    %v8875 = vunpack.c.h.b16 %v7317
    %v8876 = vunpack.c.l.b16 %v7318
    %v8877 = vunpack.c.h.b16 %v7318
    %v8878 = vunpack.c.l.b16 %v7319
    %v8879 = vunpack.c.h.b16 %v7319
    %v8880 = vunpack.c.l.b16 %v7320
    %v8881 = vunpack.c.h.b16 %v7320
    %v8882 = vunpack.c.l.b16 %v7321
    %v8883 = vunpack.c.h.b16 %v7321
    %v8884 = vunpack.c.l.b16 %v7322
    %v8885 = vunpack.c.h.b16 %v7322
    %v8886 = vunpack.c.l.b16 %v7323
    %v8887 = vunpack.c.h.b16 %v7323
    %v8888 = vunpack.c.l.b16 %v7324
    %v8889 = vunpack.c.h.b16 %v7324
    %v8890 = vunpack.c.l.b16 %v7325
    %v8891 = vunpack.c.h.b16 %v7325
    %v8892 = vunpack.c.l.b16 %v7326
    %v8893 = vunpack.c.h.b16 %v7326
    %v8894 = vunpack.c.l.b16 %v7327
    %v8895 = vunpack.c.h.b16 %v7327
    %v8896 = vunpack.c.l.b16 %v7328
    %v8897 = vunpack.c.h.b16 %v7328
    %v8898 = vunpack.c.l.b16 %v7329
    %v8899 = vunpack.c.h.b16 %v7329
    %v8900 = vunpack.c.l.b16 %v7330
    %v8901 = vunpack.c.h.b16 %v7330
    %v8902 = vunpack.c.l.b16 %v7331
    %v8903 = vunpack.c.h.b16 %v7331
    %v8904 = vunpack.c.l.b16 %v7332
    %v8905 = vunpack.c.h.b16 %v7332
    %v8906 = vunpack.c.l.b16 %v7333
    %v8907 = vunpack.c.h.b16 %v7333
    %v8908 = vunpack.c.l.b16 %v7334
    %v8909 = vunpack.c.h.b16 %v7334
    %v8910 = vunpack.c.l.b16 %v7335
    %v8911 = vunpack.c.h.b16 %v7335
    %v8912 = vunpack.c.l.b16 %v7336
    %v8913 = vunpack.c.h.b16 %v7336
    %v8914 = vunpack.c.l.b16 %v7337
    %v8915 = vunpack.c.h.b16 %v7337
    %v8916 = vpack.c.b16 %v7900, %v7892
    %v8917 = vpack.c.b16 %v7901, %v7893
    %v8918 = vpack.c.b16 %v7902, %v7894
    %v8919 = vpack.c.b16 %v7903, %v7895
    %v8920 = vpack.c.b16 %v7904, %v7896
    %v8921 = vpack.c.b16 %v7905, %v7897
    %v8922 = vpack.c.b16 %v7906, %v7898
    %v8923 = vpack.c.b16 %v7907, %v7899
    %v8924 = vpack.c.b16 %v7916, %v7908
    %v8925 = vpack.c.b16 %v7917, %v7909
    %v8926 = vpack.c.b16 %v7918, %v7910
    %v8927 = vpack.c.b16 %v7919, %v7911
    %v8928 = vpack.c.b16 %v7920, %v7912
    %v8929 = vpack.c.b16 %v7921, %v7913
    %v8930 = vpack.c.b16 %v7922, %v7914
    %v8931 = vpack.c.b16 %v7923, %v7915
    %v8932 = vpack.c.b16 %v7932, %v7924
    %v8933 = vpack.c.b16 %v7933, %v7925
    %v8934 = vpack.c.b16 %v7934, %v7926
    %v8935 = vpack.c.b16 %v7935, %v7927
    %v8936 = vpack.c.b16 %v7936, %v7928
    %v8937 = vpack.c.b16 %v7937, %v7929
    %v8938 = vpack.c.b16 %v7938, %v7930
    %v8939 = vpack.c.b16 %v7939, %v7931
    %v8940 = vpack.c.b16 %v7948, %v7940
    %v8941 = vpack.c.b16 %v7949, %v7941
    %v8942 = vpack.c.b16 %v7950, %v7942
    %v8943 = vpack.c.b16 %v7951, %v7943
    %v8944 = vpack.c.b16 %v7952, %v7944
    %v8945 = vpack.c.b16 %v7953, %v7945
    %v8946 = vpack.c.b16 %v7954, %v7946
    %v8947 = vpack.c.b16 %v7955, %v7947
    %v8948 = vpack.c.b16 %v7964, %v7956
    %v8949 = vpack.c.b16 %v7965, %v7957
    %v8950 = vpack.c.b16 %v7966, %v7958
    %v8951 = vpack.c.b16 %v7967, %v7959
    %v8952 = vpack.c.b16 %v7968, %v7960
    %v8953 = vpack.c.b16 %v7969, %v7961
    %v8954 = vpack.c.b16 %v7970, %v7962
    %v8955 = vpack.c.b16 %v7971, %v7963
    %v8956 = vpack.c.b16 %v7980, %v7972
    %v8957 = vpack.c.b16 %v7981, %v7973
    %v8958 = vpack.c.b16 %v7982, %v7974
    %v8959 = vpack.c.b16 %v7983, %v7975
    %v8960 = vpack.c.b16 %v7984, %v7976
    %v8961 = vpack.c.b16 %v7985, %v7977
    %v8962 = vpack.c.b16 %v7986, %v7978
    %v8963 = vpack.c.b16 %v7987, %v7979
    %v8964 = vpack.c.b16 %v7996, %v7988
    %v8965 = vpack.c.b16 %v7997, %v7989
    %v8966 = vpack.c.b16 %v7998, %v7990
    %v8967 = vpack.c.b16 %v7999, %v7991
    %v8968 = vpack.c.b16 %v8000, %v7992
    %v8969 = vpack.c.b16 %v8001, %v7993
    %v8970 = vpack.c.b16 %v8002, %v7994
    %v8971 = vpack.c.b16 %v8003, %v7995
    %v8972 = vpack.c.b16 %v8012, %v8004
    %v8973 = vpack.c.b16 %v8013, %v8005
    %v8974 = vpack.c.b16 %v8014, %v8006
    %v8975 = vpack.c.b16 %v8015, %v8007
    %v8976 = vpack.c.b16 %v8016, %v8008
    %v8977 = vpack.c.b16 %v8017, %v8009
    %v8978 = vpack.c.b16 %v8018, %v8010
    %v8979 = vpack.c.b16 %v8019, %v8011
    %v8980 = vpack.c.b16 %v8028, %v8020
    %v8981 = vpack.c.b16 %v8029, %v8021
    %v8982 = vpack.c.b16 %v8030, %v8022
    %v8983 = vpack.c.b16 %v8031, %v8023
    %v8984 = vpack.c.b16 %v8032, %v8024
    %v8985 = vpack.c.b16 %v8033, %v8025
    %v8986 = vpack.c.b16 %v8034, %v8026
    %v8987 = vpack.c.b16 %v8035, %v8027
    %v8988 = vpack.c.b16 %v8044, %v8036
    %v8989 = vpack.c.b16 %v8045, %v8037
    %v8990 = vpack.c.b16 %v8046, %v8038
    %v8991 = vpack.c.b16 %v8047, %v8039
    %v8992 = vpack.c.b16 %v8048, %v8040
    %v8993 = vpack.c.b16 %v8049, %v8041
    %v8994 = vpack.c.b16 %v8050, %v8042
    %v8995 = vpack.c.b16 %v8051, %v8043
    %v8996 = vpack.c.b16 %v8060, %v8052
    %v8997 = vpack.c.b16 %v8061, %v8053
    %v8998 = vpack.c.b16 %v8062, %v8054
    %v8999 = vpack.c.b16 %v8063, %v8055
    %v9000 = vpack.c.b16 %v8064, %v8056
    %v9001 = vpack.c.b16 %v8065, %v8057
    %v9002 = vpack.c.b16 %v8066, %v8058
    %v9003 = vpack.c.b16 %v8067, %v8059
    %v9004 = vpack.c.b16 %v8076, %v8068
    %v9005 = vpack.c.b16 %v8077, %v8069
    %v9006 = vpack.c.b16 %v8078, %v8070
    %v9007 = vpack.c.b16 %v8079, %v8071
    %v9008 = vpack.c.b16 %v8080, %v8072
    %v9009 = vpack.c.b16 %v8081, %v8073
    %v9010 = vpack.c.b16 %v8082, %v8074
    %v9011 = vpack.c.b16 %v8083, %v8075
    %v9012 = vpack.c.b16 %v8092, %v8084
    %v9013 = vpack.c.b16 %v8093, %v8085
    %v9014 = vpack.c.b16 %v8094, %v8086
    %v9015 = vpack.c.b16 %v8095, %v8087
    %v9016 = vpack.c.b16 %v8096, %v8088
    %v9017 = vpack.c.b16 %v8097, %v8089
    %v9018 = vpack.c.b16 %v8098, %v8090
    %v9019 = vpack.c.b16 %v8099, %v8091
    %v9020 = vpack.c.b16 %v8108, %v8100
    %v9021 = vpack.c.b16 %v8109, %v8101
    %v9022 = vpack.c.b16 %v8110, %v8102
    %v9023 = vpack.c.b16 %v8111, %v8103
    %v9024 = vpack.c.b16 %v8112, %v8104
    %v9025 = vpack.c.b16 %v8113, %v8105
    %v9026 = vpack.c.b16 %v8114, %v8106
    %v9027 = vpack.c.b16 %v8115, %v8107
    %v9028 = vpack.c.b16 %v8124, %v8116
    %v9029 = vpack.c.b16 %v8125, %v8117
    %v9030 = vpack.c.b16 %v8126, %v8118
    %v9031 = vpack.c.b16 %v8127, %v8119
    %v9032 = vpack.c.b16 %v8128, %v8120
    %v9033 = vpack.c.b16 %v8129, %v8121
    %v9034 = vpack.c.b16 %v8130, %v8122
    %v9035 = vpack.c.b16 %v8131, %v8123
    %v9036 = vpack.c.b16 %v8140, %v8132
    %v9037 = vpack.c.b16 %v8141, %v8133
    %v9038 = vpack.c.b16 %v8142, %v8134
    %v9039 = vpack.c.b16 %v8143, %v8135
    %v9040 = vpack.c.b16 %v8144, %v8136
    %v9041 = vpack.c.b16 %v8145, %v8137
    %v9042 = vpack.c.b16 %v8146, %v8138
    %v9043 = vpack.c.b16 %v8147, %v8139
    %v9044 = vpack.c.b16 %v8156, %v8148
    %v9045 = vpack.c.b16 %v8157, %v8149
    %v9046 = vpack.c.b16 %v8158, %v8150
    %v9047 = vpack.c.b16 %v8159, %v8151
    %v9048 = vpack.c.b16 %v8160, %v8152
    %v9049 = vpack.c.b16 %v8161, %v8153
    %v9050 = vpack.c.b16 %v8162, %v8154
    %v9051 = vpack.c.b16 %v8163, %v8155
    %v9052 = vpack.c.b16 %v8172, %v8164
    %v9053 = vpack.c.b16 %v8173, %v8165
    %v9054 = vpack.c.b16 %v8174, %v8166
    %v9055 = vpack.c.b16 %v8175, %v8167
    %v9056 = vpack.c.b16 %v8176, %v8168
    %v9057 = vpack.c.b16 %v8177, %v8169
    %v9058 = vpack.c.b16 %v8178, %v8170
    %v9059 = vpack.c.b16 %v8179, %v8171
    %v9060 = vpack.c.b16 %v8188, %v8180
    %v9061 = vpack.c.b16 %v8189, %v8181
    %v9062 = vpack.c.b16 %v8190, %v8182
    %v9063 = vpack.c.b16 %v8191, %v8183
    %v9064 = vpack.c.b16 %v8192, %v8184
    %v9065 = vpack.c.b16 %v8193, %v8185
    %v9066 = vpack.c.b16 %v8194, %v8186
    %v9067 = vpack.c.b16 %v8195, %v8187
    %v9068 = vpack.c.b16 %v8204, %v8196
    %v9069 = vpack.c.b16 %v8205, %v8197
    %v9070 = vpack.c.b16 %v8206, %v8198
    %v9071 = vpack.c.b16 %v8207, %v8199
    %v9072 = vpack.c.b16 %v8208, %v8200
    %v9073 = vpack.c.b16 %v8209, %v8201
    %v9074 = vpack.c.b16 %v8210, %v8202
    %v9075 = vpack.c.b16 %v8211, %v8203
    %v9076 = vpack.c.b16 %v8220, %v8212
    %v9077 = vpack.c.b16 %v8221, %v8213
    %v9078 = vpack.c.b16 %v8222, %v8214
    %v9079 = vpack.c.b16 %v8223, %v8215
    %v9080 = vpack.c.b16 %v8224, %v8216
    %v9081 = vpack.c.b16 %v8225, %v8217
    %v9082 = vpack.c.b16 %v8226, %v8218
    %v9083 = vpack.c.b16 %v8227, %v8219
    %v9084 = vpack.c.b16 %v8236, %v8228
    %v9085 = vpack.c.b16 %v8237, %v8229
    %v9086 = vpack.c.b16 %v8238, %v8230
    %v9087 = vpack.c.b16 %v8239, %v8231
    %v9088 = vpack.c.b16 %v8240, %v8232
    %v9089 = vpack.c.b16 %v8241, %v8233
    %v9090 = vpack.c.b16 %v8242, %v8234
    %v9091 = vpack.c.b16 %v8243, %v8235
    %v9092 = vpack.c.b16 %v8252, %v8244
    %v9093 = vpack.c.b16 %v8253, %v8245
    %v9094 = vpack.c.b16 %v8254, %v8246
    %v9095 = vpack.c.b16 %v8255, %v8247
    %v9096 = vpack.c.b16 %v8256, %v8248
    %v9097 = vpack.c.b16 %v8257, %v8249
    %v9098 = vpack.c.b16 %v8258, %v8250
    %v9099 = vpack.c.b16 %v8259, %v8251
    %v9100 = vpack.c.b16 %v8268, %v8260
    %v9101 = vpack.c.b16 %v8269, %v8261
    %v9102 = vpack.c.b16 %v8270, %v8262
    %v9103 = vpack.c.b16 %v8271, %v8263
    %v9104 = vpack.c.b16 %v8272, %v8264
    %v9105 = vpack.c.b16 %v8273, %v8265
    %v9106 = vpack.c.b16 %v8274, %v8266
    %v9107 = vpack.c.b16 %v8275, %v8267
    %v9108 = vpack.c.b16 %v8284, %v8276
    %v9109 = vpack.c.b16 %v8285, %v8277
    %v9110 = vpack.c.b16 %v8286, %v8278
    %v9111 = vpack.c.b16 %v8287, %v8279
    %v9112 = vpack.c.b16 %v8288, %v8280
    %v9113 = vpack.c.b16 %v8289, %v8281
    %v9114 = vpack.c.b16 %v8290, %v8282
    %v9115 = vpack.c.b16 %v8291, %v8283
    %v9116 = vpack.c.b16 %v8300, %v8292
    %v9117 = vpack.c.b16 %v8301, %v8293
    %v9118 = vpack.c.b16 %v8302, %v8294
    %v9119 = vpack.c.b16 %v8303, %v8295
    %v9120 = vpack.c.b16 %v8304, %v8296
    %v9121 = vpack.c.b16 %v8305, %v8297
    %v9122 = vpack.c.b16 %v8306, %v8298
    %v9123 = vpack.c.b16 %v8307, %v8299
    %v9124 = vpack.c.b16 %v8316, %v8308
    %v9125 = vpack.c.b16 %v8317, %v8309
    %v9126 = vpack.c.b16 %v8318, %v8310
    %v9127 = vpack.c.b16 %v8319, %v8311
    %v9128 = vpack.c.b16 %v8320, %v8312
    %v9129 = vpack.c.b16 %v8321, %v8313
    %v9130 = vpack.c.b16 %v8322, %v8314
    %v9131 = vpack.c.b16 %v8323, %v8315
    %v9132 = vpack.c.b16 %v8332, %v8324
    %v9133 = vpack.c.b16 %v8333, %v8325
    %v9134 = vpack.c.b16 %v8334, %v8326
    %v9135 = vpack.c.b16 %v8335, %v8327
    %v9136 = vpack.c.b16 %v8336, %v8328
    %v9137 = vpack.c.b16 %v8337, %v8329
    %v9138 = vpack.c.b16 %v8338, %v8330
    %v9139 = vpack.c.b16 %v8339, %v8331
    %v9140 = vpack.c.b16 %v8348, %v8340
    %v9141 = vpack.c.b16 %v8349, %v8341
    %v9142 = vpack.c.b16 %v8350, %v8342
    %v9143 = vpack.c.b16 %v8351, %v8343
    %v9144 = vpack.c.b16 %v8352, %v8344
    %v9145 = vpack.c.b16 %v8353, %v8345
    %v9146 = vpack.c.b16 %v8354, %v8346
    %v9147 = vpack.c.b16 %v8355, %v8347
    %v9148 = vpack.c.b16 %v8364, %v8356
    %v9149 = vpack.c.b16 %v8365, %v8357
    %v9150 = vpack.c.b16 %v8366, %v8358
    %v9151 = vpack.c.b16 %v8367, %v8359
    %v9152 = vpack.c.b16 %v8368, %v8360
    %v9153 = vpack.c.b16 %v8369, %v8361
    %v9154 = vpack.c.b16 %v8370, %v8362
    %v9155 = vpack.c.b16 %v8371, %v8363
    %v9156 = vpack.c.b16 %v8380, %v8372
    %v9157 = vpack.c.b16 %v8381, %v8373
    %v9158 = vpack.c.b16 %v8382, %v8374
    %v9159 = vpack.c.b16 %v8383, %v8375
    %v9160 = vpack.c.b16 %v8384, %v8376
    %v9161 = vpack.c.b16 %v8385, %v8377
    %v9162 = vpack.c.b16 %v8386, %v8378
    %v9163 = vpack.c.b16 %v8387, %v8379
    %v9164 = vpack.c.b16 %v8396, %v8388
    %v9165 = vpack.c.b16 %v8397, %v8389
    %v9166 = vpack.c.b16 %v8398, %v8390
    %v9167 = vpack.c.b16 %v8399, %v8391
    %v9168 = vpack.c.b16 %v8400, %v8392
    %v9169 = vpack.c.b16 %v8401, %v8393
    %v9170 = vpack.c.b16 %v8402, %v8394
    %v9171 = vpack.c.b16 %v8403, %v8395
    %v9172 = vpack.c.b16 %v8412, %v8404
    %v9173 = vpack.c.b16 %v8413, %v8405
    %v9174 = vpack.c.b16 %v8414, %v8406
    %v9175 = vpack.c.b16 %v8415, %v8407
    %v9176 = vpack.c.b16 %v8416, %v8408
    %v9177 = vpack.c.b16 %v8417, %v8409
    %v9178 = vpack.c.b16 %v8418, %v8410
    %v9179 = vpack.c.b16 %v8419, %v8411
    %v9180 = vpack.c.b16 %v8428, %v8420
    %v9181 = vpack.c.b16 %v8429, %v8421
    %v9182 = vpack.c.b16 %v8430, %v8422
    %v9183 = vpack.c.b16 %v8431, %v8423
    %v9184 = vpack.c.b16 %v8432, %v8424
    %v9185 = vpack.c.b16 %v8433, %v8425
    %v9186 = vpack.c.b16 %v8434, %v8426
    %v9187 = vpack.c.b16 %v8435, %v8427
    %v9188 = vpack.c.b16 %v8444, %v8436
    %v9189 = vpack.c.b16 %v8445, %v8437
    %v9190 = vpack.c.b16 %v8446, %v8438
    %v9191 = vpack.c.b16 %v8447, %v8439
    %v9192 = vpack.c.b16 %v8448, %v8440
    %v9193 = vpack.c.b16 %v8449, %v8441
    %v9194 = vpack.c.b16 %v8450, %v8442
    %v9195 = vpack.c.b16 %v8451, %v8443
    %v9196 = vpack.c.b16 %v8460, %v8452
    %v9197 = vpack.c.b16 %v8461, %v8453
    %v9198 = vpack.c.b16 %v8462, %v8454
    %v9199 = vpack.c.b16 %v8463, %v8455
    %v9200 = vpack.c.b16 %v8464, %v8456
    %v9201 = vpack.c.b16 %v8465, %v8457
    %v9202 = vpack.c.b16 %v8466, %v8458
    %v9203 = vpack.c.b16 %v8467, %v8459
    %v9204 = vpack.c.b16 %v8476, %v8468
    %v9205 = vpack.c.b16 %v8477, %v8469
    %v9206 = vpack.c.b16 %v8478, %v8470
    %v9207 = vpack.c.b16 %v8479, %v8471
    %v9208 = vpack.c.b16 %v8480, %v8472
    %v9209 = vpack.c.b16 %v8481, %v8473
    %v9210 = vpack.c.b16 %v8482, %v8474
    %v9211 = vpack.c.b16 %v8483, %v8475
    %v9212 = vpack.c.b16 %v8492, %v8484
    %v9213 = vpack.c.b16 %v8493, %v8485
    %v9214 = vpack.c.b16 %v8494, %v8486
    %v9215 = vpack.c.b16 %v8495, %v8487
    %v9216 = vpack.c.b16 %v8496, %v8488
    %v9217 = vpack.c.b16 %v8497, %v8489
    %v9218 = vpack.c.b16 %v8498, %v8490
    %v9219 = vpack.c.b16 %v8499, %v8491
    %v9220 = vpack.c.b16 %v8508, %v8500
    %v9221 = vpack.c.b16 %v8509, %v8501
    %v9222 = vpack.c.b16 %v8510, %v8502
    %v9223 = vpack.c.b16 %v8511, %v8503
    %v9224 = vpack.c.b16 %v8512, %v8504
    %v9225 = vpack.c.b16 %v8513, %v8505
    %v9226 = vpack.c.b16 %v8514, %v8506
    %v9227 = vpack.c.b16 %v8515, %v8507
    %v9228 = vpack.c.b16 %v8524, %v8516
    %v9229 = vpack.c.b16 %v8525, %v8517
    %v9230 = vpack.c.b16 %v8526, %v8518
    %v9231 = vpack.c.b16 %v8527, %v8519
    %v9232 = vpack.c.b16 %v8528, %v8520
    %v9233 = vpack.c.b16 %v8529, %v8521
    %v9234 = vpack.c.b16 %v8530, %v8522
    %v9235 = vpack.c.b16 %v8531, %v8523
    %v9236 = vpack.c.b16 %v8540, %v8532
    %v9237 = vpack.c.b16 %v8541, %v8533
    %v9238 = vpack.c.b16 %v8542, %v8534
    %v9239 = vpack.c.b16 %v8543, %v8535
    %v9240 = vpack.c.b16 %v8544, %v8536
    %v9241 = vpack.c.b16 %v8545, %v8537
    %v9242 = vpack.c.b16 %v8546, %v8538
    %v9243 = vpack.c.b16 %v8547, %v8539
    %v9244 = vpack.c.b16 %v8556, %v8548
    %v9245 = vpack.c.b16 %v8557, %v8549
    %v9246 = vpack.c.b16 %v8558, %v8550
    %v9247 = vpack.c.b16 %v8559, %v8551
    %v9248 = vpack.c.b16 %v8560, %v8552
    %v9249 = vpack.c.b16 %v8561, %v8553
    %v9250 = vpack.c.b16 %v8562, %v8554
    %v9251 = vpack.c.b16 %v8563, %v8555
    %v9252 = vpack.c.b16 %v8572, %v8564
    %v9253 = vpack.c.b16 %v8573, %v8565
    %v9254 = vpack.c.b16 %v8574, %v8566
    %v9255 = vpack.c.b16 %v8575, %v8567
    %v9256 = vpack.c.b16 %v8576, %v8568
    %v9257 = vpack.c.b16 %v8577, %v8569
    %v9258 = vpack.c.b16 %v8578, %v8570
    %v9259 = vpack.c.b16 %v8579, %v8571
    %v9260 = vpack.c.b16 %v8588, %v8580
    %v9261 = vpack.c.b16 %v8589, %v8581
    %v9262 = vpack.c.b16 %v8590, %v8582
    %v9263 = vpack.c.b16 %v8591, %v8583
    %v9264 = vpack.c.b16 %v8592, %v8584
    %v9265 = vpack.c.b16 %v8593, %v8585
    %v9266 = vpack.c.b16 %v8594, %v8586
    %v9267 = vpack.c.b16 %v8595, %v8587
    %v9268 = vpack.c.b16 %v8604, %v8596
    %v9269 = vpack.c.b16 %v8605, %v8597
    %v9270 = vpack.c.b16 %v8606, %v8598
    %v9271 = vpack.c.b16 %v8607, %v8599
    %v9272 = vpack.c.b16 %v8608, %v8600
    %v9273 = vpack.c.b16 %v8609, %v8601
    %v9274 = vpack.c.b16 %v8610, %v8602
    %v9275 = vpack.c.b16 %v8611, %v8603
    %v9276 = vpack.c.b16 %v8620, %v8612
    %v9277 = vpack.c.b16 %v8621, %v8613
    %v9278 = vpack.c.b16 %v8622, %v8614
    %v9279 = vpack.c.b16 %v8623, %v8615
    %v9280 = vpack.c.b16 %v8624, %v8616
    %v9281 = vpack.c.b16 %v8625, %v8617
    %v9282 = vpack.c.b16 %v8626, %v8618
    %v9283 = vpack.c.b16 %v8627, %v8619
    %v9284 = vpack.c.b16 %v8636, %v8628
    %v9285 = vpack.c.b16 %v8637, %v8629
    %v9286 = vpack.c.b16 %v8638, %v8630
    %v9287 = vpack.c.b16 %v8639, %v8631
    %v9288 = vpack.c.b16 %v8640, %v8632
    %v9289 = vpack.c.b16 %v8641, %v8633
    %v9290 = vpack.c.b16 %v8642, %v8634
    %v9291 = vpack.c.b16 %v8643, %v8635
    %v9292 = vpack.c.b16 %v8652, %v8644
    %v9293 = vpack.c.b16 %v8653, %v8645
    %v9294 = vpack.c.b16 %v8654, %v8646
    %v9295 = vpack.c.b16 %v8655, %v8647
    %v9296 = vpack.c.b16 %v8656, %v8648
    %v9297 = vpack.c.b16 %v8657, %v8649
    %v9298 = vpack.c.b16 %v8658, %v8650
    %v9299 = vpack.c.b16 %v8659, %v8651
    %v9300 = vpack.c.b16 %v8668, %v8660
    %v9301 = vpack.c.b16 %v8669, %v8661
    %v9302 = vpack.c.b16 %v8670, %v8662
    %v9303 = vpack.c.b16 %v8671, %v8663
    %v9304 = vpack.c.b16 %v8672, %v8664
    %v9305 = vpack.c.b16 %v8673, %v8665
    %v9306 = vpack.c.b16 %v8674, %v8666
    %v9307 = vpack.c.b16 %v8675, %v8667
    %v9308 = vpack.c.b16 %v8684, %v8676
    %v9309 = vpack.c.b16 %v8685, %v8677
    %v9310 = vpack.c.b16 %v8686, %v8678
    %v9311 = vpack.c.b16 %v8687, %v8679
    %v9312 = vpack.c.b16 %v8688, %v8680
    %v9313 = vpack.c.b16 %v8689, %v8681
    %v9314 = vpack.c.b16 %v8690, %v8682
    %v9315 = vpack.c.b16 %v8691, %v8683
    %v9316 = vpack.c.b16 %v8700, %v8692
    %v9317 = vpack.c.b16 %v8701, %v8693
    %v9318 = vpack.c.b16 %v8702, %v8694
    %v9319 = vpack.c.b16 %v8703, %v8695
    %v9320 = vpack.c.b16 %v8704, %v8696
    %v9321 = vpack.c.b16 %v8705, %v8697
    %v9322 = vpack.c.b16 %v8706, %v8698
    %v9323 = vpack.c.b16 %v8707, %v8699
    %v9324 = vpack.c.b16 %v8716, %v8708
    %v9325 = vpack.c.b16 %v8717, %v8709
    %v9326 = vpack.c.b16 %v8718, %v8710
    %v9327 = vpack.c.b16 %v8719, %v8711
    %v9328 = vpack.c.b16 %v8720, %v8712
    %v9329 = vpack.c.b16 %v8721, %v8713
    %v9330 = vpack.c.b16 %v8722, %v8714
    %v9331 = vpack.c.b16 %v8723, %v8715
    %v9332 = vpack.c.b16 %v8732, %v8724
    %v9333 = vpack.c.b16 %v8733, %v8725
    %v9334 = vpack.c.b16 %v8734, %v8726
    %v9335 = vpack.c.b16 %v8735, %v8727
    %v9336 = vpack.c.b16 %v8736, %v8728
    %v9337 = vpack.c.b16 %v8737, %v8729
    %v9338 = vpack.c.b16 %v8738, %v8730
    %v9339 = vpack.c.b16 %v8739, %v8731
    %v9340 = vpack.c.b16 %v8748, %v8740
    %v9341 = vpack.c.b16 %v8749, %v8741
    %v9342 = vpack.c.b16 %v8750, %v8742
    %v9343 = vpack.c.b16 %v8751, %v8743
    %v9344 = vpack.c.b16 %v8752, %v8744
    %v9345 = vpack.c.b16 %v8753, %v8745
    %v9346 = vpack.c.b16 %v8754, %v8746
    %v9347 = vpack.c.b16 %v8755, %v8747
    %v9348 = vpack.c.b16 %v8764, %v8756
    %v9349 = vpack.c.b16 %v8765, %v8757
    %v9350 = vpack.c.b16 %v8766, %v8758
    %v9351 = vpack.c.b16 %v8767, %v8759
    %v9352 = vpack.c.b16 %v8768, %v8760
    %v9353 = vpack.c.b16 %v8769, %v8761
    %v9354 = vpack.c.b16 %v8770, %v8762
    %v9355 = vpack.c.b16 %v8771, %v8763
    %v9356 = vpack.c.b16 %v8780, %v8772
    %v9357 = vpack.c.b16 %v8781, %v8773
    %v9358 = vpack.c.b16 %v8782, %v8774
    %v9359 = vpack.c.b16 %v8783, %v8775
    %v9360 = vpack.c.b16 %v8784, %v8776
    %v9361 = vpack.c.b16 %v8785, %v8777
    %v9362 = vpack.c.b16 %v8786, %v8778
    %v9363 = vpack.c.b16 %v8787, %v8779
    %v9364 = vpack.c.b16 %v8796, %v8788
    %v9365 = vpack.c.b16 %v8797, %v8789
    %v9366 = vpack.c.b16 %v8798, %v8790
    %v9367 = vpack.c.b16 %v8799, %v8791
    %v9368 = vpack.c.b16 %v8800, %v8792
    %v9369 = vpack.c.b16 %v8801, %v8793
    %v9370 = vpack.c.b16 %v8802, %v8794
    %v9371 = vpack.c.b16 %v8803, %v8795
    %v9372 = vpack.c.b16 %v8812, %v8804
    %v9373 = vpack.c.b16 %v8813, %v8805
    %v9374 = vpack.c.b16 %v8814, %v8806
    %v9375 = vpack.c.b16 %v8815, %v8807
    %v9376 = vpack.c.b16 %v8816, %v8808
    %v9377 = vpack.c.b16 %v8817, %v8809
    %v9378 = vpack.c.b16 %v8818, %v8810
    %v9379 = vpack.c.b16 %v8819, %v8811
    %v9380 = vpack.c.b16 %v8828, %v8820
    %v9381 = vpack.c.b16 %v8829, %v8821
    %v9382 = vpack.c.b16 %v8830, %v8822
    %v9383 = vpack.c.b16 %v8831, %v8823
    %v9384 = vpack.c.b16 %v8832, %v8824
    %v9385 = vpack.c.b16 %v8833, %v8825
    %v9386 = vpack.c.b16 %v8834, %v8826
    %v9387 = vpack.c.b16 %v8835, %v8827
    %v9388 = vpack.c.b16 %v8844, %v8836
    %v9389 = vpack.c.b16 %v8845, %v8837
    %v9390 = vpack.c.b16 %v8846, %v8838
    %v9391 = vpack.c.b16 %v8847, %v8839
    %v9392 = vpack.c.b16 %v8848, %v8840
    %v9393 = vpack.c.b16 %v8849, %v8841
    %v9394 = vpack.c.b16 %v8850, %v8842
    %v9395 = vpack.c.b16 %v8851, %v8843
    %v9396 = vpack.c.b16 %v8860, %v8852
    %v9397 = vpack.c.b16 %v8861, %v8853
    %v9398 = vpack.c.b16 %v8862, %v8854
    %v9399 = vpack.c.b16 %v8863, %v8855
    %v9400 = vpack.c.b16 %v8864, %v8856
    %v9401 = vpack.c.b16 %v8865, %v8857
    %v9402 = vpack.c.b16 %v8866, %v8858
    %v9403 = vpack.c.b16 %v8867, %v8859
    %v9404 = vpack.c.b16 %v8876, %v8868
    %v9405 = vpack.c.b16 %v8877, %v8869
    %v9406 = vpack.c.b16 %v8878, %v8870
    %v9407 = vpack.c.b16 %v8879, %v8871
    %v9408 = vpack.c.b16 %v8880, %v8872
    %v9409 = vpack.c.b16 %v8881, %v8873
    %v9410 = vpack.c.b16 %v8882, %v8874
    %v9411 = vpack.c.b16 %v8883, %v8875
    %v9412 = vpack.c.b16 %v8892, %v8884
    %v9413 = vpack.c.b16 %v8893, %v8885
    %v9414 = vpack.c.b16 %v8894, %v8886
    %v9415 = vpack.c.b16 %v8895, %v8887
    %v9416 = vpack.c.b16 %v8896, %v8888
    %v9417 = vpack.c.b16 %v8897, %v8889
    %v9418 = vpack.c.b16 %v8898, %v8890
    %v9419 = vpack.c.b16 %v8899, %v8891
    %v9420 = vpack.c.b16 %v8908, %v8900
    %v9421 = vpack.c.b16 %v8909, %v8901
    %v9422 = vpack.c.b16 %v8910, %v8902
    %v9423 = vpack.c.b16 %v8911, %v8903
    %v9424 = vpack.c.b16 %v8912, %v8904
    %v9425 = vpack.c.b16 %v8913, %v8905
    %v9426 = vpack.c.b16 %v8914, %v8906
    %v9427 = vpack.c.b16 %v8915, %v8907
    %9940 = vmatprep.subr.bf16.mxu0 %v8917
    %9941 = vmatpush1.bf16.msra.mxu0 %v8916
    %9942 = vmatprep.subr.bf16.mxu0 %v8925
    %9943 = vmatpush1.bf16.msra.mxu0 %v8924
    %9944 = vmatprep.subr.bf16.mxu0 %v8933
    %9945 = vmatpush1.bf16.msra.mxu0 %v8932
    %9946 = vmatprep.subr.bf16.mxu0 %v8941
    %9947 = vmatpush1.bf16.msra.mxu0 %v8940
    %9948 = vmatprep.subr.bf16.mxu0 %v8949
    %9949 = vmatpush1.bf16.msra.mxu0 %v8948
    %9950 = vmatprep.subr.bf16.mxu0 %v8957
    %9951 = vmatpush1.bf16.msra.mxu0 %v8956
    %9952 = vmatprep.subr.bf16.mxu0 %v8965
    %9953 = vmatpush1.bf16.msra.mxu0 %v8964
    %9954 = vmatprep.subr.bf16.mxu0 %v8973
    %9955 = vmatpush1.bf16.msra.mxu0 %v8972
    %9956 = vmatprep.subr.bf16.mxu0 %v8981
    %9957 = vmatpush1.bf16.msra.mxu0 %v8980
    %9958 = vmatprep.subr.bf16.mxu0 %v8989
    %9959 = vmatpush1.bf16.msra.mxu0 %v8988
    %9960 = vmatprep.subr.bf16.mxu0 %v8997
    %9961 = vmatpush1.bf16.msra.mxu0 %v8996
    %9962 = vmatprep.subr.bf16.mxu0 %v9005
    %9963 = vmatpush1.bf16.msra.mxu0 %v9004
    %9964 = vmatprep.subr.bf16.mxu0 %v9013
    %9965 = vmatpush1.bf16.msra.mxu0 %v9012
    %9966 = vmatprep.subr.bf16.mxu0 %v9021
    %9967 = vmatpush1.bf16.msra.mxu0 %v9020
    %9968 = vmatprep.subr.bf16.mxu0 %v9029
    %9969 = vmatpush1.bf16.msra.mxu0 %v9028
    %9970 = vmatprep.subr.bf16.mxu0 %v9037
    %9971 = vmatpush1.bf16.msra.mxu0 %v9036
    %9972 = vmatprep.mubr.bf16.mxu0 %v6819
    %9973 = vmatmul.mubr.bf16.gmra.mrb[0].mxu0 %v6818
    %v9974 = vpop.f32.mrb[0].mxu0
    %v9975 = vadd.f32 %v7343, %v9974
    %v9976 = vpop.f32.mrb[0].mxu0
    %v9977 = vadd.f32 %v7347, %v9976
    %v9978 = vpop.f32.mrb[0].mxu0
    %v9979 = vpop.f32.mrb[0].mxu0
    %9980 = vdwg.mxu0
    %9981 = vmatprep.subr.bf16.mxu0 %v9045
    %9982 = vmatpush1.bf16.msra.mxu0 %v9044
    %9983 = vmatprep.subr.bf16.mxu0 %v9053
    %9984 = vmatpush1.bf16.msra.mxu0 %v9052
    %9985 = vmatprep.subr.bf16.mxu0 %v9061
    %9986 = vmatpush1.bf16.msra.mxu0 %v9060
    %9987 = vmatprep.subr.bf16.mxu0 %v9069
    %9988 = vmatpush1.bf16.msra.mxu0 %v9068
    %9989 = vmatprep.subr.bf16.mxu0 %v9077
    %9990 = vmatpush1.bf16.msra.mxu0 %v9076
    %9991 = vmatprep.subr.bf16.mxu0 %v9085
    %9992 = vmatpush1.bf16.msra.mxu0 %v9084
    %9993 = vmatprep.subr.bf16.mxu0 %v9093
    %9994 = vmatpush1.bf16.msra.mxu0 %v9092
    %9995 = vmatprep.subr.bf16.mxu0 %v9101
    %9996 = vmatpush1.bf16.msra.mxu0 %v9100
    %9997 = vmatprep.subr.bf16.mxu0 %v9109
    %9998 = vmatpush1.bf16.msra.mxu0 %v9108
    %9999 = vmatprep.subr.bf16.mxu0 %v9117
    %10000 = vmatpush1.bf16.msra.mxu0 %v9116
    %10001 = vmatprep.subr.bf16.mxu0 %v9125
    %10002 = vmatpush1.bf16.msra.mxu0 %v9124
    %10003 = vmatprep.subr.bf16.mxu0 %v9133
    %10004 = vmatpush1.bf16.msra.mxu0 %v9132
    %10005 = vmatprep.subr.bf16.mxu0 %v9141
    %10006 = vmatpush1.bf16.msra.mxu0 %v9140
    %10007 = vmatprep.subr.bf16.mxu0 %v9149
    %10008 = vmatpush1.bf16.msra.mxu0 %v9148
    %10009 = vmatprep.subr.bf16.mxu0 %v9157
    %10010 = vmatpush1.bf16.msra.mxu0 %v9156
    %10011 = vmatprep.subr.bf16.mxu0 %v9165
    %10012 = vmatpush1.bf16.msra.mxu0 %v9164
    %10013 = vmatprep.mubr.bf16.mxu0 %v6821
    %10014 = vmatmul.mubr.bf16.gmra.mrb[0].mxu0 %v6820
    %v10015 = vpop.f32.mrb[0].mxu0
    %v10016 = vadd.f32 %v9975, %v10015
    %v10017 = vpop.f32.mrb[0].mxu0
    %v10018 = vadd.f32 %v9977, %v10017
    %v10019 = vpop.f32.mrb[0].mxu0
    %v10020 = vpop.f32.mrb[0].mxu0
    %10021 = vdwg.mxu0
    %10022 = vmatprep.subr.bf16.mxu0 %v9173
    %10023 = vmatpush1.bf16.msra.mxu0 %v9172
    %10024 = vmatprep.subr.bf16.mxu0 %v9181
    %10025 = vmatpush1.bf16.msra.mxu0 %v9180
    %10026 = vmatprep.subr.bf16.mxu0 %v9189
    %10027 = vmatpush1.bf16.msra.mxu0 %v9188
    %10028 = vmatprep.subr.bf16.mxu0 %v9197
    %10029 = vmatpush1.bf16.msra.mxu0 %v9196
    %10030 = vmatprep.subr.bf16.mxu0 %v9205
    %10031 = vmatpush1.bf16.msra.mxu0 %v9204
    %10032 = vmatprep.subr.bf16.mxu0 %v9213
    %10033 = vmatpush1.bf16.msra.mxu0 %v9212
    %10034 = vmatprep.subr.bf16.mxu0 %v9221
    %10035 = vmatpush1.bf16.msra.mxu0 %v9220
    %10036 = vmatprep.subr.bf16.mxu0 %v9229
    %10037 = vmatpush1.bf16.msra.mxu0 %v9228
    %10038 = vmatprep.subr.bf16.mxu0 %v9237
    %10039 = vmatpush1.bf16.msra.mxu0 %v9236
    %10040 = vmatprep.subr.bf16.mxu0 %v9245
    %10041 = vmatpush1.bf16.msra.mxu0 %v9244
    %10042 = vmatprep.subr.bf16.mxu0 %v9253
    %10043 = vmatpush1.bf16.msra.mxu0 %v9252
    %10044 = vmatprep.subr.bf16.mxu0 %v9261
    %10045 = vmatpush1.bf16.msra.mxu0 %v9260
    %10046 = vmatprep.subr.bf16.mxu0 %v9269
    %10047 = vmatpush1.bf16.msra.mxu0 %v9268
    %10048 = vmatprep.subr.bf16.mxu0 %v9277
    %10049 = vmatpush1.bf16.msra.mxu0 %v9276
    %10050 = vmatprep.subr.bf16.mxu0 %v9285
    %10051 = vmatpush1.bf16.msra.mxu0 %v9284
    %10052 = vmatprep.subr.bf16.mxu0 %v9293
    %10053 = vmatpush1.bf16.msra.mxu0 %v9292
    %10054 = vmatprep.mubr.bf16.mxu0 %v6823
    %10055 = vmatmul.mubr.bf16.gmra.mrb[0].mxu0 %v6822
    %v10056 = vpop.f32.mrb[0].mxu0
    %v10057 = vadd.f32 %v10016, %v10056
    %v10058 = vpop.f32.mrb[0].mxu0
    %v10059 = vadd.f32 %v10018, %v10058
    %v10060 = vpop.f32.mrb[0].mxu0
    %v10061 = vpop.f32.mrb[0].mxu0
    %10062 = vdwg.mxu0
    %10063 = vmatprep.subr.bf16.mxu0 %v9301
    %10064 = vmatpush1.bf16.msra.mxu0 %v9300
    %10065 = vmatprep.subr.bf16.mxu0 %v9309
    %10066 = vmatpush1.bf16.msra.mxu0 %v9308
    %10067 = vmatprep.subr.bf16.mxu0 %v9317
    %10068 = vmatpush1.bf16.msra.mxu0 %v9316
    %10069 = vmatprep.subr.bf16.mxu0 %v9325
    %10070 = vmatpush1.bf16.msra.mxu0 %v9324
    %10071 = vmatprep.subr.bf16.mxu0 %v9333
    %10072 = vmatpush1.bf16.msra.mxu0 %v9332
    %10073 = vmatprep.subr.bf16.mxu0 %v9341
    %10074 = vmatpush1.bf16.msra.mxu0 %v9340
    %10075 = vmatprep.subr.bf16.mxu0 %v9349
    %10076 = vmatpush1.bf16.msra.mxu0 %v9348
    %10077 = vmatprep.subr.bf16.mxu0 %v9357
    %10078 = vmatpush1.bf16.msra.mxu0 %v9356
    %10079 = vmatprep.subr.bf16.mxu0 %v9365
    %10080 = vmatpush1.bf16.msra.mxu0 %v9364
    %10081 = vmatprep.subr.bf16.mxu0 %v9373
    %10082 = vmatpush1.bf16.msra.mxu0 %v9372
    %10083 = vmatprep.subr.bf16.mxu0 %v9381
    %10084 = vmatpush1.bf16.msra.mxu0 %v9380
    %10085 = vmatprep.subr.bf16.mxu0 %v9389
    %10086 = vmatpush1.bf16.msra.mxu0 %v9388
    %10087 = vmatprep.subr.bf16.mxu0 %v9397
    %10088 = vmatpush1.bf16.msra.mxu0 %v9396
    %10089 = vmatprep.subr.bf16.mxu0 %v9405
    %10090 = vmatpush1.bf16.msra.mxu0 %v9404
    %10091 = vmatprep.subr.bf16.mxu0 %v9413
    %10092 = vmatpush1.bf16.msra.mxu0 %v9412
    %10093 = vmatprep.subr.bf16.mxu0 %v9421
    %10094 = vmatpush1.bf16.msra.mxu0 %v9420
    %10095 = vmatprep.mubr.bf16.mxu0 %v6825
    %10096 = vmatmul.mubr.bf16.gmra.mrb[0].mxu0 %v6824
    %v10097 = vpop.f32.mrb[0].mxu0
    %v10098 = vadd.f32 %v10057, %v10097
    %v10099 = vpop.f32.mrb[0].mxu0
    %v10100 = vadd.f32 %v10059, %v10099
    %v10101 = vpop.f32.mrb[0].mxu0
    %v10102 = vpop.f32.mrb[0].mxu0
    %10103 = vdwg.mxu0
    %10104 = vmatprep.subr.bf16.mxu0 %v8919
    %10105 = vmatpush1.bf16.msra.mxu0 %v8918
    %10106 = vmatprep.subr.bf16.mxu0 %v8927
    %10107 = vmatpush1.bf16.msra.mxu0 %v8926
    %10108 = vmatprep.subr.bf16.mxu0 %v8935
    %10109 = vmatpush1.bf16.msra.mxu0 %v8934
    %10110 = vmatprep.subr.bf16.mxu0 %v8943
    %10111 = vmatpush1.bf16.msra.mxu0 %v8942
    %10112 = vmatprep.subr.bf16.mxu0 %v8951
    %10113 = vmatpush1.bf16.msra.mxu0 %v8950
    %10114 = vmatprep.subr.bf16.mxu0 %v8959
    %10115 = vmatpush1.bf16.msra.mxu0 %v8958
    %10116 = vmatprep.subr.bf16.mxu0 %v8967
    %10117 = vmatpush1.bf16.msra.mxu0 %v8966
    %10118 = vmatprep.subr.bf16.mxu0 %v8975
    %10119 = vmatpush1.bf16.msra.mxu0 %v8974
    %10120 = vmatprep.subr.bf16.mxu0 %v8983
    %10121 = vmatpush1.bf16.msra.mxu0 %v8982
    %10122 = vmatprep.subr.bf16.mxu0 %v8991
    %10123 = vmatpush1.bf16.msra.mxu0 %v8990
    %10124 = vmatprep.subr.bf16.mxu0 %v8999
    %10125 = vmatpush1.bf16.msra.mxu0 %v8998
    %10126 = vmatprep.subr.bf16.mxu0 %v9007
    %10127 = vmatpush1.bf16.msra.mxu0 %v9006
    %10128 = vmatprep.subr.bf16.mxu0 %v9015
    %10129 = vmatpush1.bf16.msra.mxu0 %v9014
    %10130 = vmatprep.subr.bf16.mxu0 %v9023
    %10131 = vmatpush1.bf16.msra.mxu0 %v9022
    %10132 = vmatprep.subr.bf16.mxu0 %v9031
    %10133 = vmatpush1.bf16.msra.mxu0 %v9030
    %10134 = vmatprep.subr.bf16.mxu0 %v9039
    %10135 = vmatpush1.bf16.msra.mxu0 %v9038
    %10136 = vmatprep.mubr.bf16.mxu0 %v6819
    %10137 = vmatmul.mubr.bf16.gmra.mrb[0].mxu0 %v6818
    %v10138 = vpop.f32.mrb[0].mxu0
    %v10139 = vadd.f32 %v7351, %v10138
    %v10140 = vpop.f32.mrb[0].mxu0
    %v10141 = vadd.f32 %v7355, %v10140
    %v10142 = vpop.f32.mrb[0].mxu0
    %v10143 = vpop.f32.mrb[0].mxu0
    %10144 = vdwg.mxu0
    %10145 = vmatprep.subr.bf16.mxu0 %v9047
    %10146 = vmatpush1.bf16.msra.mxu0 %v9046
    %10147 = vmatprep.subr.bf16.mxu0 %v9055
    %10148 = vmatpush1.bf16.msra.mxu0 %v9054
    %10149 = vmatprep.subr.bf16.mxu0 %v9063
    %10150 = vmatpush1.bf16.msra.mxu0 %v9062
    %10151 = vmatprep.subr.bf16.mxu0 %v9071
    %10152 = vmatpush1.bf16.msra.mxu0 %v9070
    %10153 = vmatprep.subr.bf16.mxu0 %v9079
    %10154 = vmatpush1.bf16.msra.mxu0 %v9078
    %10155 = vmatprep.subr.bf16.mxu0 %v9087
    %10156 = vmatpush1.bf16.msra.mxu0 %v9086
    %10157 = vmatprep.subr.bf16.mxu0 %v9095
    %10158 = vmatpush1.bf16.msra.mxu0 %v9094
    %10159 = vmatprep.subr.bf16.mxu0 %v9103
    %10160 = vmatpush1.bf16.msra.mxu0 %v9102
    %10161 = vmatprep.subr.bf16.mxu0 %v9111
    %10162 = vmatpush1.bf16.msra.mxu0 %v9110
    %10163 = vmatprep.subr.bf16.mxu0 %v9119
    %10164 = vmatpush1.bf16.msra.mxu0 %v9118
    %10165 = vmatprep.subr.bf16.mxu0 %v9127
    %10166 = vmatpush1.bf16.msra.mxu0 %v9126
    %10167 = vmatprep.subr.bf16.mxu0 %v9135
    %10168 = vmatpush1.bf16.msra.mxu0 %v9134
    %10169 = vmatprep.subr.bf16.mxu0 %v9143
    %10170 = vmatpush1.bf16.msra.mxu0 %v9142
    %10171 = vmatprep.subr.bf16.mxu0 %v9151
    %10172 = vmatpush1.bf16.msra.mxu0 %v9150
    %10173 = vmatprep.subr.bf16.mxu0 %v9159
    %10174 = vmatpush1.bf16.msra.mxu0 %v9158
    %10175 = vmatprep.subr.bf16.mxu0 %v9167
    %10176 = vmatpush1.bf16.msra.mxu0 %v9166
    %10177 = vmatprep.mubr.bf16.mxu0 %v6821
    %10178 = vmatmul.mubr.bf16.gmra.mrb[0].mxu0 %v6820
    %v10179 = vpop.f32.mrb[0].mxu0
    %v10180 = vadd.f32 %v10139, %v10179
    %v10181 = vpop.f32.mrb[0].mxu0
    %v10182 = vadd.f32 %v10141, %v10181
    %v10183 = vpop.f32.mrb[0].mxu0
    %v10184 = vpop.f32.mrb[0].mxu0
    %10185 = vdwg.mxu0
    %10186 = vmatprep.subr.bf16.mxu0 %v9175
    %10187 = vmatpush1.bf16.msra.mxu0 %v9174
    %10188 = vmatprep.subr.bf16.mxu0 %v9183
    %10189 = vmatpush1.bf16.msra.mxu0 %v9182
    %10190 = vmatprep.subr.bf16.mxu0 %v9191
    %10191 = vmatpush1.bf16.msra.mxu0 %v9190
    %10192 = vmatprep.subr.bf16.mxu0 %v9199
    %10193 = vmatpush1.bf16.msra.mxu0 %v9198
    %10194 = vmatprep.subr.bf16.mxu0 %v9207
    %10195 = vmatpush1.bf16.msra.mxu0 %v9206
    %10196 = vmatprep.subr.bf16.mxu0 %v9215
    %10197 = vmatpush1.bf16.msra.mxu0 %v9214
    %10198 = vmatprep.subr.bf16.mxu0 %v9223
    %10199 = vmatpush1.bf16.msra.mxu0 %v9222
    %10200 = vmatprep.subr.bf16.mxu0 %v9231
    %10201 = vmatpush1.bf16.msra.mxu0 %v9230
    %10202 = vmatprep.subr.bf16.mxu0 %v9239
    %10203 = vmatpush1.bf16.msra.mxu0 %v9238
    %10204 = vmatprep.subr.bf16.mxu0 %v9247
    %10205 = vmatpush1.bf16.msra.mxu0 %v9246
    %10206 = vmatprep.subr.bf16.mxu0 %v9255
    %10207 = vmatpush1.bf16.msra.mxu0 %v9254
    %10208 = vmatprep.subr.bf16.mxu0 %v9263
    %10209 = vmatpush1.bf16.msra.mxu0 %v9262
    %10210 = vmatprep.subr.bf16.mxu0 %v9271
    %10211 = vmatpush1.bf16.msra.mxu0 %v9270
    %10212 = vmatprep.subr.bf16.mxu0 %v9279
    %10213 = vmatpush1.bf16.msra.mxu0 %v9278
    %10214 = vmatprep.subr.bf16.mxu0 %v9287
    %10215 = vmatpush1.bf16.msra.mxu0 %v9286
    %10216 = vmatprep.subr.bf16.mxu0 %v9295
    %10217 = vmatpush1.bf16.msra.mxu0 %v9294
    %10218 = vmatprep.mubr.bf16.mxu0 %v6823
    %10219 = vmatmul.mubr.bf16.gmra.mrb[0].mxu0 %v6822
    %v10220 = vpop.f32.mrb[0].mxu0
    %v10221 = vadd.f32 %v10180, %v10220
    %v10222 = vpop.f32.mrb[0].mxu0
    %v10223 = vadd.f32 %v10182, %v10222
    %v10224 = vpop.f32.mrb[0].mxu0
    %v10225 = vpop.f32.mrb[0].mxu0
    %10226 = vdwg.mxu0
    %10227 = vmatprep.subr.bf16.mxu0 %v9303
    %10228 = vmatpush1.bf16.msra.mxu0 %v9302
    %10229 = vmatprep.subr.bf16.mxu0 %v9311
    %10230 = vmatpush1.bf16.msra.mxu0 %v9310
    %10231 = vmatprep.subr.bf16.mxu0 %v9319
    %10232 = vmatpush1.bf16.msra.mxu0 %v9318
    %10233 = vmatprep.subr.bf16.mxu0 %v9327
    %10234 = vmatpush1.bf16.msra.mxu0 %v9326
    %10235 = vmatprep.subr.bf16.mxu0 %v9335
    %10236 = vmatpush1.bf16.msra.mxu0 %v9334
    %10237 = vmatprep.subr.bf16.mxu0 %v9343
    %10238 = vmatpush1.bf16.msra.mxu0 %v9342
    %10239 = vmatprep.subr.bf16.mxu0 %v9351
    %10240 = vmatpush1.bf16.msra.mxu0 %v9350
    %10241 = vmatprep.subr.bf16.mxu0 %v9359
    %10242 = vmatpush1.bf16.msra.mxu0 %v9358
    %10243 = vmatprep.subr.bf16.mxu0 %v9367
    %10244 = vmatpush1.bf16.msra.mxu0 %v9366
    %10245 = vmatprep.subr.bf16.mxu0 %v9375
    %10246 = vmatpush1.bf16.msra.mxu0 %v9374
    %10247 = vmatprep.subr.bf16.mxu0 %v9383
    %10248 = vmatpush1.bf16.msra.mxu0 %v9382
    %10249 = vmatprep.subr.bf16.mxu0 %v9391
    %10250 = vmatpush1.bf16.msra.mxu0 %v9390
    %10251 = vmatprep.subr.bf16.mxu0 %v9399
    %10252 = vmatpush1.bf16.msra.mxu0 %v9398
    %10253 = vmatprep.subr.bf16.mxu0 %v9407
    %10254 = vmatpush1.bf16.msra.mxu0 %v9406
    %10255 = vmatprep.subr.bf16.mxu0 %v9415
    %10256 = vmatpush1.bf16.msra.mxu0 %v9414
    %10257 = vmatprep.subr.bf16.mxu0 %v9423
    %10258 = vmatpush1.bf16.msra.mxu0 %v9422
    %10259 = vmatprep.mubr.bf16.mxu0 %v6825
    %10260 = vmatmul.mubr.bf16.gmra.mrb[0].mxu0 %v6824
    %v10261 = vpop.f32.mrb[0].mxu0
    %v10262 = vadd.f32 %v10221, %v10261
    %v10263 = vpop.f32.mrb[0].mxu0
    %v10264 = vadd.f32 %v10223, %v10263
    %v10265 = vpop.f32.mrb[0].mxu0
    %v10266 = vpop.f32.mrb[0].mxu0
    %10267 = vdwg.mxu0
    %10268 = vmatprep.subr.bf16.mxu0 %v8921
    %10269 = vmatpush1.bf16.msra.mxu0 %v8920
    %10270 = vmatprep.subr.bf16.mxu0 %v8929
    %10271 = vmatpush1.bf16.msra.mxu0 %v8928
    %10272 = vmatprep.subr.bf16.mxu0 %v8937
    %10273 = vmatpush1.bf16.msra.mxu0 %v8936
    %10274 = vmatprep.subr.bf16.mxu0 %v8945
    %10275 = vmatpush1.bf16.msra.mxu0 %v8944
    %10276 = vmatprep.subr.bf16.mxu0 %v8953
    %10277 = vmatpush1.bf16.msra.mxu0 %v8952
    %10278 = vmatprep.subr.bf16.mxu0 %v8961
    %10279 = vmatpush1.bf16.msra.mxu0 %v8960
    %10280 = vmatprep.subr.bf16.mxu0 %v8969
    %10281 = vmatpush1.bf16.msra.mxu0 %v8968
    %10282 = vmatprep.subr.bf16.mxu0 %v8977
    %10283 = vmatpush1.bf16.msra.mxu0 %v8976
    %10284 = vmatprep.subr.bf16.mxu0 %v8985
    %10285 = vmatpush1.bf16.msra.mxu0 %v8984
    %10286 = vmatprep.subr.bf16.mxu0 %v8993
    %10287 = vmatpush1.bf16.msra.mxu0 %v8992
    %10288 = vmatprep.subr.bf16.mxu0 %v9001
    %10289 = vmatpush1.bf16.msra.mxu0 %v9000
    %10290 = vmatprep.subr.bf16.mxu0 %v9009
    %10291 = vmatpush1.bf16.msra.mxu0 %v9008
    %10292 = vmatprep.subr.bf16.mxu0 %v9017
    %10293 = vmatpush1.bf16.msra.mxu0 %v9016
    %10294 = vmatprep.subr.bf16.mxu0 %v9025
    %10295 = vmatpush1.bf16.msra.mxu0 %v9024
    %10296 = vmatprep.subr.bf16.mxu0 %v9033
    %10297 = vmatpush1.bf16.msra.mxu0 %v9032
    %10298 = vmatprep.subr.bf16.mxu0 %v9041
    %10299 = vmatpush1.bf16.msra.mxu0 %v9040
    %10300 = vmatprep.mubr.bf16.mxu0 %v6819
    %10301 = vmatmul.mubr.bf16.gmra.mrb[0].mxu0 %v6818
    %v10302 = vpop.f32.mrb[0].mxu0
    %v10303 = vadd.f32 %v7359, %v10302
    %v10304 = vpop.f32.mrb[0].mxu0
    %v10305 = vadd.f32 %v7363, %v10304
    %v10306 = vpop.f32.mrb[0].mxu0
    %v10307 = vpop.f32.mrb[0].mxu0
    %10308 = vdwg.mxu0
    %10309 = vmatprep.subr.bf16.mxu0 %v9049
    %10310 = vmatpush1.bf16.msra.mxu0 %v9048
    %10311 = vmatprep.subr.bf16.mxu0 %v9057
    %10312 = vmatpush1.bf16.msra.mxu0 %v9056
    %10313 = vmatprep.subr.bf16.mxu0 %v9065
    %10314 = vmatpush1.bf16.msra.mxu0 %v9064
    %10315 = vmatprep.subr.bf16.mxu0 %v9073
    %10316 = vmatpush1.bf16.msra.mxu0 %v9072
    %10317 = vmatprep.subr.bf16.mxu0 %v9081
    %10318 = vmatpush1.bf16.msra.mxu0 %v9080
    %10319 = vmatprep.subr.bf16.mxu0 %v9089
    %10320 = vmatpush1.bf16.msra.mxu0 %v9088
    %10321 = vmatprep.subr.bf16.mxu0 %v9097
    %10322 = vmatpush1.bf16.msra.mxu0 %v9096
    %10323 = vmatprep.subr.bf16.mxu0 %v9105
    %10324 = vmatpush1.bf16.msra.mxu0 %v9104
    %10325 = vmatprep.subr.bf16.mxu0 %v9113
    %10326 = vmatpush1.bf16.msra.mxu0 %v9112
    %10327 = vmatprep.subr.bf16.mxu0 %v9121
    %10328 = vmatpush1.bf16.msra.mxu0 %v9120
    %10329 = vmatprep.subr.bf16.mxu0 %v9129
    %10330 = vmatpush1.bf16.msra.mxu0 %v9128
    %10331 = vmatprep.subr.bf16.mxu0 %v9137
    %10332 = vmatpush1.bf16.msra.mxu0 %v9136
    %10333 = vmatprep.subr.bf16.mxu0 %v9145
    %10334 = vmatpush1.bf16.msra.mxu0 %v9144
    %10335 = vmatprep.subr.bf16.mxu0 %v9153
    %10336 = vmatpush1.bf16.msra.mxu0 %v9152
    %10337 = vmatprep.subr.bf16.mxu0 %v9161
    %10338 = vmatpush1.bf16.msra.mxu0 %v9160
    %10339 = vmatprep.subr.bf16.mxu0 %v9169
    %10340 = vmatpush1.bf16.msra.mxu0 %v9168
    %10341 = vmatprep.mubr.bf16.mxu0 %v6821
    %10342 = vmatmul.mubr.bf16.gmra.mrb[0].mxu0 %v6820
    %v10343 = vpop.f32.mrb[0].mxu0
    %v10344 = vadd.f32 %v10303, %v10343
    %v10345 = vpop.f32.mrb[0].mxu0
    %v10346 = vadd.f32 %v10305, %v10345
    %v10347 = vpop.f32.mrb[0].mxu0
    %v10348 = vpop.f32.mrb[0].mxu0
    %10349 = vdwg.mxu0
    %10350 = vmatprep.subr.bf16.mxu0 %v9177
    %10351 = vmatpush1.bf16.msra.mxu0 %v9176
    %10352 = vmatprep.subr.bf16.mxu0 %v9185
    %10353 = vmatpush1.bf16.msra.mxu0 %v9184
    %10354 = vmatprep.subr.bf16.mxu0 %v9193
    %10355 = vmatpush1.bf16.msra.mxu0 %v9192
    %10356 = vmatprep.subr.bf16.mxu0 %v9201
    %10357 = vmatpush1.bf16.msra.mxu0 %v9200
    %10358 = vmatprep.subr.bf16.mxu0 %v9209
    %10359 = vmatpush1.bf16.msra.mxu0 %v9208
    %10360 = vmatprep.subr.bf16.mxu0 %v9217
    %10361 = vmatpush1.bf16.msra.mxu0 %v9216
    %10362 = vmatprep.subr.bf16.mxu0 %v9225
    %10363 = vmatpush1.bf16.msra.mxu0 %v9224
    %10364 = vmatprep.subr.bf16.mxu0 %v9233
    %10365 = vmatpush1.bf16.msra.mxu0 %v9232
    %10366 = vmatprep.subr.bf16.mxu0 %v9241
    %10367 = vmatpush1.bf16.msra.mxu0 %v9240
    %10368 = vmatprep.subr.bf16.mxu0 %v9249
    %10369 = vmatpush1.bf16.msra.mxu0 %v9248
    %10370 = vmatprep.subr.bf16.mxu0 %v9257
    %10371 = vmatpush1.bf16.msra.mxu0 %v9256
    %10372 = vmatprep.subr.bf16.mxu0 %v9265
    %10373 = vmatpush1.bf16.msra.mxu0 %v9264
    %10374 = vmatprep.subr.bf16.mxu0 %v9273
    %10375 = vmatpush1.bf16.msra.mxu0 %v9272
    %10376 = vmatprep.subr.bf16.mxu0 %v9281
    %10377 = vmatpush1.bf16.msra.mxu0 %v9280
    %10378 = vmatprep.subr.bf16.mxu0 %v9289
    %10379 = vmatpush1.bf16.msra.mxu0 %v9288
    %10380 = vmatprep.subr.bf16.mxu0 %v9297
    %10381 = vmatpush1.bf16.msra.mxu0 %v9296
    %10382 = vmatprep.mubr.bf16.mxu0 %v6823
    %10383 = vmatmul.mubr.bf16.gmra.mrb[0].mxu0 %v6822
    %v10384 = vpop.f32.mrb[0].mxu0
    %v10385 = vadd.f32 %v10344, %v10384
    %v10386 = vpop.f32.mrb[0].mxu0
    %v10387 = vadd.f32 %v10346, %v10386
    %v10388 = vpop.f32.mrb[0].mxu0
    %v10389 = vpop.f32.mrb[0].mxu0
    %10390 = vdwg.mxu0
    %10391 = vmatprep.subr.bf16.mxu0 %v9305
    %10392 = vmatpush1.bf16.msra.mxu0 %v9304
    %10393 = vmatprep.subr.bf16.mxu0 %v9313
    %10394 = vmatpush1.bf16.msra.mxu0 %v9312
    %10395 = vmatprep.subr.bf16.mxu0 %v9321
    %10396 = vmatpush1.bf16.msra.mxu0 %v9320
    %10397 = vmatprep.subr.bf16.mxu0 %v9329
    %10398 = vmatpush1.bf16.msra.mxu0 %v9328
    %10399 = vmatprep.subr.bf16.mxu0 %v9337
    %10400 = vmatpush1.bf16.msra.mxu0 %v9336
    %10401 = vmatprep.subr.bf16.mxu0 %v9345
    %10402 = vmatpush1.bf16.msra.mxu0 %v9344
    %10403 = vmatprep.subr.bf16.mxu0 %v9353
    %10404 = vmatpush1.bf16.msra.mxu0 %v9352
    %10405 = vmatprep.subr.bf16.mxu0 %v9361
    %10406 = vmatpush1.bf16.msra.mxu0 %v9360
    %10407 = vmatprep.subr.bf16.mxu0 %v9369
    %10408 = vmatpush1.bf16.msra.mxu0 %v9368
    %10409 = vmatprep.subr.bf16.mxu0 %v9377
    %10410 = vmatpush1.bf16.msra.mxu0 %v9376
    %10411 = vmatprep.subr.bf16.mxu0 %v9385
    %10412 = vmatpush1.bf16.msra.mxu0 %v9384
    %10413 = vmatprep.subr.bf16.mxu0 %v9393
    %10414 = vmatpush1.bf16.msra.mxu0 %v9392
    %10415 = vmatprep.subr.bf16.mxu0 %v9401
    %10416 = vmatpush1.bf16.msra.mxu0 %v9400
    %10417 = vmatprep.subr.bf16.mxu0 %v9409
    %10418 = vmatpush1.bf16.msra.mxu0 %v9408
    %10419 = vmatprep.subr.bf16.mxu0 %v9417
    %10420 = vmatpush1.bf16.msra.mxu0 %v9416
    %10421 = vmatprep.subr.bf16.mxu0 %v9425
    %10422 = vmatpush1.bf16.msra.mxu0 %v9424
    %10423 = vmatprep.mubr.bf16.mxu0 %v6825
    %10424 = vmatmul.mubr.bf16.gmra.mrb[0].mxu0 %v6824
    %v10425 = vpop.f32.mrb[0].mxu0
    %v10426 = vadd.f32 %v10385, %v10425
    %v10427 = vpop.f32.mrb[0].mxu0
    %v10428 = vadd.f32 %v10387, %v10427
    %v10429 = vpop.f32.mrb[0].mxu0
    %v10430 = vpop.f32.mrb[0].mxu0
    %10431 = vdwg.mxu0
    %10432 = vmatprep.subr.bf16.mxu0 %v8923
    %10433 = vmatpush1.bf16.msra.mxu0 %v8922
    %10434 = vmatprep.subr.bf16.mxu0 %v8931
    %10435 = vmatpush1.bf16.msra.mxu0 %v8930
    %10436 = vmatprep.subr.bf16.mxu0 %v8939
    %10437 = vmatpush1.bf16.msra.mxu0 %v8938
    %10438 = vmatprep.subr.bf16.mxu0 %v8947
    %10439 = vmatpush1.bf16.msra.mxu0 %v8946
    %10440 = vmatprep.subr.bf16.mxu0 %v8955
    %10441 = vmatpush1.bf16.msra.mxu0 %v8954
    %10442 = vmatprep.subr.bf16.mxu0 %v8963
    %10443 = vmatpush1.bf16.msra.mxu0 %v8962
    %10444 = vmatprep.subr.bf16.mxu0 %v8971
    %10445 = vmatpush1.bf16.msra.mxu0 %v8970
    %10446 = vmatprep.subr.bf16.mxu0 %v8979
    %10447 = vmatpush1.bf16.msra.mxu0 %v8978
    %10448 = vmatprep.subr.bf16.mxu0 %v8987
    %10449 = vmatpush1.bf16.msra.mxu0 %v8986
    %10450 = vmatprep.subr.bf16.mxu0 %v8995
    %10451 = vmatpush1.bf16.msra.mxu0 %v8994
    %10452 = vmatprep.subr.bf16.mxu0 %v9003
    %10453 = vmatpush1.bf16.msra.mxu0 %v9002
    %10454 = vmatprep.subr.bf16.mxu0 %v9011
    %10455 = vmatpush1.bf16.msra.mxu0 %v9010
    %10456 = vmatprep.subr.bf16.mxu0 %v9019
    %10457 = vmatpush1.bf16.msra.mxu0 %v9018
    %10458 = vmatprep.subr.bf16.mxu0 %v9027
    %10459 = vmatpush1.bf16.msra.mxu0 %v9026
    %10460 = vmatprep.subr.bf16.mxu0 %v9035
    %10461 = vmatpush1.bf16.msra.mxu0 %v9034
    %10462 = vmatprep.subr.bf16.mxu0 %v9043
    %10463 = vmatpush1.bf16.msra.mxu0 %v9042
    %10464 = vmatprep.mubr.bf16.mxu0 %v6819
    %10465 = vmatmul.mubr.bf16.gmra.mrb[0].mxu0 %v6818
    %v10466 = vpop.f32.mrb[0].mxu0
    %v10467 = vadd.f32 %v7367, %v10466
    %v10468 = vpop.f32.mrb[0].mxu0
    %v10469 = vadd.f32 %v7371, %v10468
    %v10470 = vpop.f32.mrb[0].mxu0
    %v10471 = vpop.f32.mrb[0].mxu0
    %10472 = vdwg.mxu0
    %10473 = vmatprep.subr.bf16.mxu0 %v9051
    %10474 = vmatpush1.bf16.msra.mxu0 %v9050
    %10475 = vmatprep.subr.bf16.mxu0 %v9059
    %10476 = vmatpush1.bf16.msra.mxu0 %v9058
    %10477 = vmatprep.subr.bf16.mxu0 %v9067
    %10478 = vmatpush1.bf16.msra.mxu0 %v9066
    %10479 = vmatprep.subr.bf16.mxu0 %v9075
    %10480 = vmatpush1.bf16.msra.mxu0 %v9074
    %10481 = vmatprep.subr.bf16.mxu0 %v9083
    %10482 = vmatpush1.bf16.msra.mxu0 %v9082
    %10483 = vmatprep.subr.bf16.mxu0 %v9091
    %10484 = vmatpush1.bf16.msra.mxu0 %v9090
    %10485 = vmatprep.subr.bf16.mxu0 %v9099
    %10486 = vmatpush1.bf16.msra.mxu0 %v9098
    %10487 = vmatprep.subr.bf16.mxu0 %v9107
    %10488 = vmatpush1.bf16.msra.mxu0 %v9106
    %10489 = vmatprep.subr.bf16.mxu0 %v9115
    %10490 = vmatpush1.bf16.msra.mxu0 %v9114
    %10491 = vmatprep.subr.bf16.mxu0 %v9123
    %10492 = vmatpush1.bf16.msra.mxu0 %v9122
    %10493 = vmatprep.subr.bf16.mxu0 %v9131
    %10494 = vmatpush1.bf16.msra.mxu0 %v9130
    %10495 = vmatprep.subr.bf16.mxu0 %v9139
    %10496 = vmatpush1.bf16.msra.mxu0 %v9138
    %10497 = vmatprep.subr.bf16.mxu0 %v9147
    %10498 = vmatpush1.bf16.msra.mxu0 %v9146
    %10499 = vmatprep.subr.bf16.mxu0 %v9155
    %10500 = vmatpush1.bf16.msra.mxu0 %v9154
    %10501 = vmatprep.subr.bf16.mxu0 %v9163
    %10502 = vmatpush1.bf16.msra.mxu0 %v9162
    %10503 = vmatprep.subr.bf16.mxu0 %v9171
    %10504 = vmatpush1.bf16.msra.mxu0 %v9170
    %10505 = vmatprep.mubr.bf16.mxu0 %v6821
    %10506 = vmatmul.mubr.bf16.gmra.mrb[0].mxu0 %v6820
    %v10507 = vpop.f32.mrb[0].mxu0
    %v10508 = vadd.f32 %v10467, %v10507
    %v10509 = vpop.f32.mrb[0].mxu0
    %v10510 = vadd.f32 %v10469, %v10509
    %v10511 = vpop.f32.mrb[0].mxu0
    %v10512 = vpop.f32.mrb[0].mxu0
    %10513 = vdwg.mxu0
    %10514 = vmatprep.subr.bf16.mxu0 %v9179
    %10515 = vmatpush1.bf16.msra.mxu0 %v9178
    %10516 = vmatprep.subr.bf16.mxu0 %v9187
    %10517 = vmatpush1.bf16.msra.mxu0 %v9186
    %10518 = vmatprep.subr.bf16.mxu0 %v9195
    %10519 = vmatpush1.bf16.msra.mxu0 %v9194
    %10520 = vmatprep.subr.bf16.mxu0 %v9203
    %10521 = vmatpush1.bf16.msra.mxu0 %v9202
    %10522 = vmatprep.subr.bf16.mxu0 %v9211
    %10523 = vmatpush1.bf16.msra.mxu0 %v9210
    %10524 = vmatprep.subr.bf16.mxu0 %v9219
    %10525 = vmatpush1.bf16.msra.mxu0 %v9218
    %10526 = vmatprep.subr.bf16.mxu0 %v9227
    %10527 = vmatpush1.bf16.msra.mxu0 %v9226
    %10528 = vmatprep.subr.bf16.mxu0 %v9235
    %10529 = vmatpush1.bf16.msra.mxu0 %v9234
    %10530 = vmatprep.subr.bf16.mxu0 %v9243
    %10531 = vmatpush1.bf16.msra.mxu0 %v9242
    %10532 = vmatprep.subr.bf16.mxu0 %v9251
    %10533 = vmatpush1.bf16.msra.mxu0 %v9250
    %10534 = vmatprep.subr.bf16.mxu0 %v9259
    %10535 = vmatpush1.bf16.msra.mxu0 %v9258
    %10536 = vmatprep.subr.bf16.mxu0 %v9267
    %10537 = vmatpush1.bf16.msra.mxu0 %v9266
    %10538 = vmatprep.subr.bf16.mxu0 %v9275
    %10539 = vmatpush1.bf16.msra.mxu0 %v9274
    %10540 = vmatprep.subr.bf16.mxu0 %v9283
    %10541 = vmatpush1.bf16.msra.mxu0 %v9282
    %10542 = vmatprep.subr.bf16.mxu0 %v9291
    %10543 = vmatpush1.bf16.msra.mxu0 %v9290
    %10544 = vmatprep.subr.bf16.mxu0 %v9299
    %10545 = vmatpush1.bf16.msra.mxu0 %v9298
    %10546 = vmatprep.mubr.bf16.mxu0 %v6823
    %10547 = vmatmul.mubr.bf16.gmra.mrb[0].mxu0 %v6822
    %v10548 = vpop.f32.mrb[0].mxu0
    %v10549 = vadd.f32 %v10508, %v10548
    %v10550 = vpop.f32.mrb[0].mxu0
    %v10551 = vadd.f32 %v10510, %v10550
    %v10552 = vpop.f32.mrb[0].mxu0
    %v10553 = vpop.f32.mrb[0].mxu0
    %10554 = vdwg.mxu0
    %10555 = vmatprep.subr.bf16.mxu0 %v9307
    %10556 = vmatpush1.bf16.msra.mxu0 %v9306
    %10557 = vmatprep.subr.bf16.mxu0 %v9315
    %10558 = vmatpush1.bf16.msra.mxu0 %v9314
    %10559 = vmatprep.subr.bf16.mxu0 %v9323
    %10560 = vmatpush1.bf16.msra.mxu0 %v9322
    %10561 = vmatprep.subr.bf16.mxu0 %v9331
    %10562 = vmatpush1.bf16.msra.mxu0 %v9330
    %10563 = vmatprep.subr.bf16.mxu0 %v9339
    %10564 = vmatpush1.bf16.msra.mxu0 %v9338
    %10565 = vmatprep.subr.bf16.mxu0 %v9347
    %10566 = vmatpush1.bf16.msra.mxu0 %v9346
    %10567 = vmatprep.subr.bf16.mxu0 %v9355
    %10568 = vmatpush1.bf16.msra.mxu0 %v9354
    %10569 = vmatprep.subr.bf16.mxu0 %v9363
    %10570 = vmatpush1.bf16.msra.mxu0 %v9362
    %10571 = vmatprep.subr.bf16.mxu0 %v9371
    %10572 = vmatpush1.bf16.msra.mxu0 %v9370
    %10573 = vmatprep.subr.bf16.mxu0 %v9379
    %10574 = vmatpush1.bf16.msra.mxu0 %v9378
    %10575 = vmatprep.subr.bf16.mxu0 %v9387
    %10576 = vmatpush1.bf16.msra.mxu0 %v9386
    %10577 = vmatprep.subr.bf16.mxu0 %v9395
    %10578 = vmatpush1.bf16.msra.mxu0 %v9394
    %10579 = vmatprep.subr.bf16.mxu0 %v9403
    %10580 = vmatpush1.bf16.msra.mxu0 %v9402
    %10581 = vmatprep.subr.bf16.mxu0 %v9411
    %10582 = vmatpush1.bf16.msra.mxu0 %v9410
    %10583 = vmatprep.subr.bf16.mxu0 %v9419
    %10584 = vmatpush1.bf16.msra.mxu0 %v9418
    %10585 = vmatprep.subr.bf16.mxu0 %v9427
    %10586 = vmatpush1.bf16.msra.mxu0 %v9426
    %10587 = vmatprep.mubr.bf16.mxu0 %v6825
    %10588 = vmatmul.mubr.bf16.gmra.mrb[0].mxu0 %v6824
    %v10589 = vpop.f32.mrb[0].mxu0
    %v10590 = vadd.f32 %v10549, %v10589
    %v10591 = vpop.f32.mrb[0].mxu0
    %v10592 = vadd.f32 %v10551, %v10591
    %v10593 = vpop.f32.mrb[0].mxu0
    %v10594 = vpop.f32.mrb[0].mxu0
    %10595 = vdwg.mxu0
    %v10596 = vmax.f32 %v10098, 0.0
    %v10597 = vmax.f32 %v10100, 0.0
    %v10598 = vmax.f32 %v10262, 0.0
    %v10599 = vmax.f32 %v10264, 0.0
    %v10600 = vmax.f32 %v10426, 0.0
    %v10601 = vmax.f32 %v10428, 0.0
    %v10602 = vmax.f32 %v10590, 0.0
    %v10603 = vmax.f32 %v10592, 0.0
    %v10604 = vpack.c.bf16 %v10596, %v10596
    %v10605 = vpack.c.bf16 %v10597, %v10597
    %v10606 = vpack.c.bf16 %v10598, %v10598
    %v10607 = vpack.c.bf16 %v10599, %v10599
    %v10608 = vpack.c.bf16 %v10600, %v10600
    %v10609 = vpack.c.bf16 %v10601, %v10601
    %v10610 = vpack.c.bf16 %v10602, %v10602
    %v10611 = vpack.c.bf16 %v10603, %v10603
    %v10612 = vld [vmem:[#allocation14] sm:$0xff]
    %v10613 = vld [vmem:[#allocation14 + $0x8] sm:$0xff]
    %v10614 = vld [vmem:[#allocation14 + $0x10] sm:$0xff]
    %v10615 = vld [vmem:[#allocation14 + $0x18] sm:$0xff]
    %v10616 = vld [vmem:[#allocation14 + $0x20] sm:$0xff]
    %v10617 = vld [vmem:[#allocation14 + $0x28] sm:$0xff]
    %v10618 = vld [vmem:[#allocation14 + $0x30] sm:$0xff]
    %v10619 = vld [vmem:[#allocation14 + $0x38] sm:$0xff]
    %v10620 = vld [vmem:[#allocation14 + $0x40] sm:$0xff]
    %v10621 = vld [vmem:[#allocation14 + $0x48] sm:$0xff]
    %v10622 = vld [vmem:[#allocation14 + $0x50] sm:$0xff]
    %v10623 = vld [vmem:[#allocation14 + $0x58] sm:$0xff]
    %v10624 = vld [vmem:[#allocation14 + $0x60] sm:$0xff]
    %v10625 = vld [vmem:[#allocation14 + $0x68] sm:$0xff]
    %v10626 = vld [vmem:[#allocation14 + $0x70] sm:$0xff]
    %v10627 = vld [vmem:[#allocation14 + $0x78] sm:$0xff]
    %v10628 = vld [vmem:[#allocation14 + $0x80] sm:$0xff]
    %v10629 = vld [vmem:[#allocation14 + $0x88] sm:$0xff]
    %v10630 = vld [vmem:[#allocation14 + $0x90] sm:$0xff]
    %v10631 = vld [vmem:[#allocation14 + $0x98] sm:$0xff]
    %v10632 = vld [vmem:[#allocation14 + $0xa0] sm:$0xff]
    %v10633 = vld [vmem:[#allocation14 + $0xa8] sm:$0xff]
    %v10634 = vld [vmem:[#allocation14 + $0xb0] sm:$0xff]
    %v10635 = vld [vmem:[#allocation14 + $0xb8] sm:$0xff]
    %v10636 = vld [vmem:[#allocation14 + $0xc0] sm:$0xff]
    %v10637 = vld [vmem:[#allocation14 + $0xc8] sm:$0xff]
    %v10638 = vld [vmem:[#allocation14 + $0xd0] sm:$0xff]
    %v10639 = vld [vmem:[#allocation14 + $0xd8] sm:$0xff]
    %v10640 = vld [vmem:[#allocation14 + $0xe0] sm:$0xff]
    %v10641 = vld [vmem:[#allocation14 + $0xe8] sm:$0xff]
    %v10642 = vld [vmem:[#allocation14 + $0xf0] sm:$0xff]
    %v10643 = vld [vmem:[#allocation14 + $0xf8] sm:$0xff]
    %v10644 = vld [vmem:[#allocation14 + $0x100] sm:$0xff]
    %v10645 = vld [vmem:[#allocation14 + $0x108] sm:$0xff]
    %v10646 = vld [vmem:[#allocation14 + $0x110] sm:$0xff]
    %v10647 = vld [vmem:[#allocation14 + $0x118] sm:$0xff]
    %v10648 = vld [vmem:[#allocation14 + $0x120] sm:$0xff]
    %v10649 = vld [vmem:[#allocation14 + $0x128] sm:$0xff]
    %v10650 = vld [vmem:[#allocation14 + $0x130] sm:$0xff]
    %v10651 = vld [vmem:[#allocation14 + $0x138] sm:$0xff]
    %v10652 = vld [vmem:[#allocation14 + $0x140] sm:$0xff]
    %v10653 = vld [vmem:[#allocation14 + $0x148] sm:$0xff]
    %v10654 = vld [vmem:[#allocation14 + $0x150] sm:$0xff]
    %v10655 = vld [vmem:[#allocation14 + $0x158] sm:$0xff]
    %v10656 = vld [vmem:[#allocation14 + $0x160] sm:$0xff]
    %v10657 = vld [vmem:[#allocation14 + $0x168] sm:$0xff]
    %v10658 = vld [vmem:[#allocation14 + $0x170] sm:$0xff]
    %v10659 = vld [vmem:[#allocation14 + $0x178] sm:$0xff]
    %v10660 = vld [vmem:[#allocation14 + $0x180] sm:$0xff]
    %v10661 = vld [vmem:[#allocation14 + $0x188] sm:$0xff]
    %v10662 = vld [vmem:[#allocation14 + $0x190] sm:$0xff]
    %v10663 = vld [vmem:[#allocation14 + $0x198] sm:$0xff]
    %v10664 = vld [vmem:[#allocation14 + $0x1a0] sm:$0xff]
    %v10665 = vld [vmem:[#allocation14 + $0x1a8] sm:$0xff]
    %v10666 = vld [vmem:[#allocation14 + $0x1b0] sm:$0xff]
    %v10667 = vld [vmem:[#allocation14 + $0x1b8] sm:$0xff]
    %v10668 = vld [vmem:[#allocation14 + $0x1c0] sm:$0xff]
    %v10669 = vld [vmem:[#allocation14 + $0x1c8] sm:$0xff]
    %v10670 = vld [vmem:[#allocation14 + $0x1d0] sm:$0xff]
    %v10671 = vld [vmem:[#allocation14 + $0x1d8] sm:$0xff]
    %v10672 = vld [vmem:[#allocation14 + $0x1e0] sm:$0xff]
    %v10673 = vld [vmem:[#allocation14 + $0x1e8] sm:$0xff]
    %v10674 = vld [vmem:[#allocation14 + $0x1f0] sm:$0xff]
    %v10675 = vld [vmem:[#allocation14 + $0x1f8] sm:$0xff]
    %v10676 = vld [vmem:[#allocation14 + $0x200] sm:$0xff]
    %v10677 = vld [vmem:[#allocation14 + $0x208] sm:$0xff]
    %v10678 = vld [vmem:[#allocation14 + $0x210] sm:$0xff]
    %v10679 = vld [vmem:[#allocation14 + $0x218] sm:$0xff]
    %v10680 = vld [vmem:[#allocation14 + $0x220] sm:$0xff]
    %v10681 = vld [vmem:[#allocation14 + $0x228] sm:$0xff]
    %v10682 = vld [vmem:[#allocation14 + $0x230] sm:$0xff]
    %v10683 = vld [vmem:[#allocation14 + $0x238] sm:$0xff]
    %v10684 = vld [vmem:[#allocation14 + $0x240] sm:$0xff]
    %v10685 = vld [vmem:[#allocation14 + $0x248] sm:$0xff]
    %v10686 = vld [vmem:[#allocation14 + $0x250] sm:$0xff]
    %v10687 = vld [vmem:[#allocation14 + $0x258] sm:$0xff]
    %v10688 = vld [vmem:[#allocation14 + $0x260] sm:$0xff]
    %v10689 = vld [vmem:[#allocation14 + $0x268] sm:$0xff]
    %v10690 = vld [vmem:[#allocation14 + $0x270] sm:$0xff]
    %v10691 = vld [vmem:[#allocation14 + $0x278] sm:$0xff]
    %v10692 = vld [vmem:[#allocation14 + $0x280] sm:$0xff]
    %v10693 = vld [vmem:[#allocation14 + $0x288] sm:$0xff]
    %v10694 = vld [vmem:[#allocation14 + $0x290] sm:$0xff]
    %v10695 = vld [vmem:[#allocation14 + $0x298] sm:$0xff]
    %v10696 = vld [vmem:[#allocation14 + $0x2a0] sm:$0xff]
    %v10697 = vld [vmem:[#allocation14 + $0x2a8] sm:$0xff]
    %v10698 = vld [vmem:[#allocation14 + $0x2b0] sm:$0xff]
    %v10699 = vld [vmem:[#allocation14 + $0x2b8] sm:$0xff]
    %v10700 = vld [vmem:[#allocation14 + $0x2c0] sm:$0xff]
    %v10701 = vld [vmem:[#allocation14 + $0x2c8] sm:$0xff]
    %v10702 = vld [vmem:[#allocation14 + $0x2d0] sm:$0xff]
    %v10703 = vld [vmem:[#allocation14 + $0x2d8] sm:$0xff]
    %v10704 = vld [vmem:[#allocation14 + $0x2e0] sm:$0xff]
    %v10705 = vld [vmem:[#allocation14 + $0x2e8] sm:$0xff]
    %v10706 = vld [vmem:[#allocation14 + $0x2f0] sm:$0xff]
    %v10707 = vld [vmem:[#allocation14 + $0x2f8] sm:$0xff]
    %v10708 = vld [vmem:[#allocation14 + $0x300] sm:$0xff]
    %v10709 = vld [vmem:[#allocation14 + $0x308] sm:$0xff]
    %v10710 = vld [vmem:[#allocation14 + $0x310] sm:$0xff]
    %v10711 = vld [vmem:[#allocation14 + $0x318] sm:$0xff]
    %v10712 = vld [vmem:[#allocation14 + $0x320] sm:$0xff]
    %v10713 = vld [vmem:[#allocation14 + $0x328] sm:$0xff]
    %v10714 = vld [vmem:[#allocation14 + $0x330] sm:$0xff]
    %v10715 = vld [vmem:[#allocation14 + $0x338] sm:$0xff]
    %v10716 = vld [vmem:[#allocation14 + $0x340] sm:$0xff]
    %v10717 = vld [vmem:[#allocation14 + $0x348] sm:$0xff]
    %v10718 = vld [vmem:[#allocation14 + $0x350] sm:$0xff]
    %v10719 = vld [vmem:[#allocation14 + $0x358] sm:$0xff]
    %v10720 = vld [vmem:[#allocation14 + $0x360] sm:$0xff]
    %v10721 = vld [vmem:[#allocation14 + $0x368] sm:$0xff]
    %v10722 = vld [vmem:[#allocation14 + $0x370] sm:$0xff]
    %v10723 = vld [vmem:[#allocation14 + $0x378] sm:$0xff]
    %v10724 = vld [vmem:[#allocation14 + $0x380] sm:$0xff]
    %v10725 = vld [vmem:[#allocation14 + $0x388] sm:$0xff]
    %v10726 = vld [vmem:[#allocation14 + $0x390] sm:$0xff]
    %v10727 = vld [vmem:[#allocation14 + $0x398] sm:$0xff]
    %v10728 = vld [vmem:[#allocation14 + $0x3a0] sm:$0xff]
    %v10729 = vld [vmem:[#allocation14 + $0x3a8] sm:$0xff]
    %v10730 = vld [vmem:[#allocation14 + $0x3b0] sm:$0xff]
    %v10731 = vld [vmem:[#allocation14 + $0x3b8] sm:$0xff]
    %v10732 = vld [vmem:[#allocation14 + $0x3c0] sm:$0xff]
    %v10733 = vld [vmem:[#allocation14 + $0x3c8] sm:$0xff]
    %v10734 = vld [vmem:[#allocation14 + $0x3d0] sm:$0xff]
    %v10735 = vld [vmem:[#allocation14 + $0x3d8] sm:$0xff]
    %v10736 = vld [vmem:[#allocation14 + $0x3e0] sm:$0xff]
    %v10737 = vld [vmem:[#allocation14 + $0x3e8] sm:$0xff]
    %v10738 = vld [vmem:[#allocation14 + $0x3f0] sm:$0xff]
    %v10739 = vld [vmem:[#allocation14 + $0x3f8] sm:$0xff]
    %v10740 = vld [vmem:[#allocation14 + $0x400] sm:$0xff]
    %v10741 = vld [vmem:[#allocation14 + $0x408] sm:$0xff]
    %v10742 = vld [vmem:[#allocation14 + $0x410] sm:$0xff]
    %v10743 = vld [vmem:[#allocation14 + $0x418] sm:$0xff]
    %v10744 = vld [vmem:[#allocation14 + $0x420] sm:$0xff]
    %v10745 = vld [vmem:[#allocation14 + $0x428] sm:$0xff]
    %v10746 = vld [vmem:[#allocation14 + $0x430] sm:$0xff]
    %v10747 = vld [vmem:[#allocation14 + $0x438] sm:$0xff]
    %v10748 = vld [vmem:[#allocation14 + $0x440] sm:$0xff]
    %v10749 = vld [vmem:[#allocation14 + $0x448] sm:$0xff]
    %v10750 = vld [vmem:[#allocation14 + $0x450] sm:$0xff]
    %v10751 = vld [vmem:[#allocation14 + $0x458] sm:$0xff]
    %v10752 = vld [vmem:[#allocation14 + $0x460] sm:$0xff]
    %v10753 = vld [vmem:[#allocation14 + $0x468] sm:$0xff]
    %v10754 = vld [vmem:[#allocation14 + $0x470] sm:$0xff]
    %v10755 = vld [vmem:[#allocation14 + $0x478] sm:$0xff]
    %v10756 = vld [vmem:[#allocation14 + $0x480] sm:$0xff]
    %v10757 = vld [vmem:[#allocation14 + $0x488] sm:$0xff]
    %v10758 = vld [vmem:[#allocation14 + $0x490] sm:$0xff]
    %v10759 = vld [vmem:[#allocation14 + $0x498] sm:$0xff]
    %v10760 = vld [vmem:[#allocation14 + $0x4a0] sm:$0xff]
    %v10761 = vld [vmem:[#allocation14 + $0x4a8] sm:$0xff]
    %v10762 = vld [vmem:[#allocation14 + $0x4b0] sm:$0xff]
    %v10763 = vld [vmem:[#allocation14 + $0x4b8] sm:$0xff]
    %v10764 = vld [vmem:[#allocation14 + $0x4c0] sm:$0xff]
    %v10765 = vld [vmem:[#allocation14 + $0x4c8] sm:$0xff]
    %v10766 = vld [vmem:[#allocation14 + $0x4d0] sm:$0xff]
    %v10767 = vld [vmem:[#allocation14 + $0x4d8] sm:$0xff]
    %v10768 = vld [vmem:[#allocation14 + $0x4e0] sm:$0xff]
    %v10769 = vld [vmem:[#allocation14 + $0x4e8] sm:$0xff]
    %v10770 = vld [vmem:[#allocation14 + $0x4f0] sm:$0xff]
    %v10771 = vld [vmem:[#allocation14 + $0x4f8] sm:$0xff]
    %v10772 = vld [vmem:[#allocation14 + $0x500] sm:$0xff]
    %v10773 = vld [vmem:[#allocation14 + $0x508] sm:$0xff]
    %v10774 = vld [vmem:[#allocation14 + $0x510] sm:$0xff]
    %v10775 = vld [vmem:[#allocation14 + $0x518] sm:$0xff]
    %v10776 = vld [vmem:[#allocation14 + $0x520] sm:$0xff]
    %v10777 = vld [vmem:[#allocation14 + $0x528] sm:$0xff]
    %v10778 = vld [vmem:[#allocation14 + $0x530] sm:$0xff]
    %v10779 = vld [vmem:[#allocation14 + $0x538] sm:$0xff]
    %v10780 = vld [vmem:[#allocation14 + $0x540] sm:$0xff]
    %v10781 = vld [vmem:[#allocation14 + $0x548] sm:$0xff]
    %v10782 = vld [vmem:[#allocation14 + $0x550] sm:$0xff]
    %v10783 = vld [vmem:[#allocation14 + $0x558] sm:$0xff]
    %v10784 = vld [vmem:[#allocation14 + $0x560] sm:$0xff]
    %v10785 = vld [vmem:[#allocation14 + $0x568] sm:$0xff]
    %v10786 = vld [vmem:[#allocation14 + $0x570] sm:$0xff]
    %v10787 = vld [vmem:[#allocation14 + $0x578] sm:$0xff]
    %v10788 = vld [vmem:[#allocation14 + $0x580] sm:$0xff]
    %v10789 = vld [vmem:[#allocation14 + $0x588] sm:$0xff]
    %v10790 = vld [vmem:[#allocation14 + $0x590] sm:$0xff]
    %v10791 = vld [vmem:[#allocation14 + $0x598] sm:$0xff]
    %v10792 = vld [vmem:[#allocation14 + $0x5a0] sm:$0xff]
    %v10793 = vld [vmem:[#allocation14 + $0x5a8] sm:$0xff]
    %v10794 = vld [vmem:[#allocation14 + $0x5b0] sm:$0xff]
    %v10795 = vld [vmem:[#allocation14 + $0x5b8] sm:$0xff]
    %v10796 = vld [vmem:[#allocation14 + $0x5c0] sm:$0xff]
    %v10797 = vld [vmem:[#allocation14 + $0x5c8] sm:$0xff]
    %v10798 = vld [vmem:[#allocation14 + $0x5d0] sm:$0xff]
    %v10799 = vld [vmem:[#allocation14 + $0x5d8] sm:$0xff]
    %v10800 = vld [vmem:[#allocation14 + $0x5e0] sm:$0xff]
    %v10801 = vld [vmem:[#allocation14 + $0x5e8] sm:$0xff]
    %v10802 = vld [vmem:[#allocation14 + $0x5f0] sm:$0xff]
    %v10803 = vld [vmem:[#allocation14 + $0x5f8] sm:$0xff]
    %v10804 = vld [vmem:[#allocation14 + $0x600] sm:$0xff]
    %v10805 = vld [vmem:[#allocation14 + $0x608] sm:$0xff]
    %v10806 = vld [vmem:[#allocation14 + $0x610] sm:$0xff]
    %v10807 = vld [vmem:[#allocation14 + $0x618] sm:$0xff]
    %v10808 = vld [vmem:[#allocation14 + $0x620] sm:$0xff]
    %v10809 = vld [vmem:[#allocation14 + $0x628] sm:$0xff]
    %v10810 = vld [vmem:[#allocation14 + $0x630] sm:$0xff]
    %v10811 = vld [vmem:[#allocation14 + $0x638] sm:$0xff]
    %v10812 = vld [vmem:[#allocation14 + $0x640] sm:$0xff]
    %v10813 = vld [vmem:[#allocation14 + $0x648] sm:$0xff]
    %v10814 = vld [vmem:[#allocation14 + $0x650] sm:$0xff]
    %v10815 = vld [vmem:[#allocation14 + $0x658] sm:$0xff]
    %v10816 = vld [vmem:[#allocation14 + $0x660] sm:$0xff]
    %v10817 = vld [vmem:[#allocation14 + $0x668] sm:$0xff]
    %v10818 = vld [vmem:[#allocation14 + $0x670] sm:$0xff]
    %v10819 = vld [vmem:[#allocation14 + $0x678] sm:$0xff]
    %v10820 = vld [vmem:[#allocation14 + $0x680] sm:$0xff]
    %v10821 = vld [vmem:[#allocation14 + $0x688] sm:$0xff]
    %v10822 = vld [vmem:[#allocation14 + $0x690] sm:$0xff]
    %v10823 = vld [vmem:[#allocation14 + $0x698] sm:$0xff]
    %v10824 = vld [vmem:[#allocation14 + $0x6a0] sm:$0xff]
    %v10825 = vld [vmem:[#allocation14 + $0x6a8] sm:$0xff]
    %v10826 = vld [vmem:[#allocation14 + $0x6b0] sm:$0xff]
    %v10827 = vld [vmem:[#allocation14 + $0x6b8] sm:$0xff]
    %v10828 = vld [vmem:[#allocation14 + $0x6c0] sm:$0xff]
    %v10829 = vld [vmem:[#allocation14 + $0x6c8] sm:$0xff]
    %v10830 = vld [vmem:[#allocation14 + $0x6d0] sm:$0xff]
    %v10831 = vld [vmem:[#allocation14 + $0x6d8] sm:$0xff]
    %v10832 = vld [vmem:[#allocation14 + $0x6e0] sm:$0xff]
    %v10833 = vld [vmem:[#allocation14 + $0x6e8] sm:$0xff]
    %v10834 = vld [vmem:[#allocation14 + $0x6f0] sm:$0xff]
    %v10835 = vld [vmem:[#allocation14 + $0x6f8] sm:$0xff]
    %v10836 = vld [vmem:[#allocation14 + $0x700] sm:$0xff]
    %v10837 = vld [vmem:[#allocation14 + $0x708] sm:$0xff]
    %v10838 = vld [vmem:[#allocation14 + $0x710] sm:$0xff]
    %v10839 = vld [vmem:[#allocation14 + $0x718] sm:$0xff]
    %v10840 = vld [vmem:[#allocation14 + $0x720] sm:$0xff]
    %v10841 = vld [vmem:[#allocation14 + $0x728] sm:$0xff]
    %v10842 = vld [vmem:[#allocation14 + $0x730] sm:$0xff]
    %v10843 = vld [vmem:[#allocation14 + $0x738] sm:$0xff]
    %v10844 = vld [vmem:[#allocation14 + $0x740] sm:$0xff]
    %v10845 = vld [vmem:[#allocation14 + $0x748] sm:$0xff]
    %v10846 = vld [vmem:[#allocation14 + $0x750] sm:$0xff]
    %v10847 = vld [vmem:[#allocation14 + $0x758] sm:$0xff]
    %v10848 = vld [vmem:[#allocation14 + $0x760] sm:$0xff]
    %v10849 = vld [vmem:[#allocation14 + $0x768] sm:$0xff]
    %v10850 = vld [vmem:[#allocation14 + $0x770] sm:$0xff]
    %v10851 = vld [vmem:[#allocation14 + $0x778] sm:$0xff]
    %v10852 = vld [vmem:[#allocation14 + $0x780] sm:$0xff]
    %v10853 = vld [vmem:[#allocation14 + $0x788] sm:$0xff]
    %v10854 = vld [vmem:[#allocation14 + $0x790] sm:$0xff]
    %v10855 = vld [vmem:[#allocation14 + $0x798] sm:$0xff]
    %v10856 = vld [vmem:[#allocation14 + $0x7a0] sm:$0xff]
    %v10857 = vld [vmem:[#allocation14 + $0x7a8] sm:$0xff]
    %v10858 = vld [vmem:[#allocation14 + $0x7b0] sm:$0xff]
    %v10859 = vld [vmem:[#allocation14 + $0x7b8] sm:$0xff]
    %v10860 = vld [vmem:[#allocation14 + $0x7c0] sm:$0xff]
    %v10861 = vld [vmem:[#allocation14 + $0x7c8] sm:$0xff]
    %v10862 = vld [vmem:[#allocation14 + $0x7d0] sm:$0xff]
    %v10863 = vld [vmem:[#allocation14 + $0x7d8] sm:$0xff]
    %v10864 = vld [vmem:[#allocation14 + $0x7e0] sm:$0xff]
    %v10865 = vld [vmem:[#allocation14 + $0x7e8] sm:$0xff]
    %v10866 = vld [vmem:[#allocation14 + $0x7f0] sm:$0xff]
    %v10867 = vld [vmem:[#allocation14 + $0x7f8] sm:$0xff]
    %v10868 = vld [vmem:[#allocation14 + $0x800] sm:$0xff]
    %v10869 = vld [vmem:[#allocation14 + $0x808] sm:$0xff]
    %v10870 = vld [vmem:[#allocation14 + $0x810] sm:$0xff]
    %v10871 = vld [vmem:[#allocation14 + $0x818] sm:$0xff]
    %v10872 = vld [vmem:[#allocation14 + $0x820] sm:$0xff]
    %v10873 = vld [vmem:[#allocation14 + $0x828] sm:$0xff]
    %v10874 = vld [vmem:[#allocation14 + $0x830] sm:$0xff]
    %v10875 = vld [vmem:[#allocation14 + $0x838] sm:$0xff]
    %v10876 = vld [vmem:[#allocation14 + $0x840] sm:$0xff]
    %v10877 = vld [vmem:[#allocation14 + $0x848] sm:$0xff]
    %v10878 = vld [vmem:[#allocation14 + $0x850] sm:$0xff]
    %v10879 = vld [vmem:[#allocation14 + $0x858] sm:$0xff]
    %v10880 = vld [vmem:[#allocation14 + $0x860] sm:$0xff]
    %v10881 = vld [vmem:[#allocation14 + $0x868] sm:$0xff]
    %v10882 = vld [vmem:[#allocation14 + $0x870] sm:$0xff]
    %v10883 = vld [vmem:[#allocation14 + $0x878] sm:$0xff]
    %v10884 = vld [vmem:[#allocation14 + $0x880] sm:$0xff]
    %v10885 = vld [vmem:[#allocation14 + $0x888] sm:$0xff]
    %v10886 = vld [vmem:[#allocation14 + $0x890] sm:$0xff]
    %v10887 = vld [vmem:[#allocation14 + $0x898] sm:$0xff]
    %v10888 = vld [vmem:[#allocation14 + $0x8a0] sm:$0xff]
    %v10889 = vld [vmem:[#allocation14 + $0x8a8] sm:$0xff]
    %v10890 = vld [vmem:[#allocation14 + $0x8b0] sm:$0xff]
    %v10891 = vld [vmem:[#allocation14 + $0x8b8] sm:$0xff]
    %v10892 = vld [vmem:[#allocation14 + $0x8c0] sm:$0xff]
    %v10893 = vld [vmem:[#allocation14 + $0x8c8] sm:$0xff]
    %v10894 = vld [vmem:[#allocation14 + $0x8d0] sm:$0xff]
    %v10895 = vld [vmem:[#allocation14 + $0x8d8] sm:$0xff]
    %v10896 = vld [vmem:[#allocation14 + $0x8e0] sm:$0xff]
    %v10897 = vld [vmem:[#allocation14 + $0x8e8] sm:$0xff]
    %v10898 = vld [vmem:[#allocation14 + $0x8f0] sm:$0xff]
    %v10899 = vld [vmem:[#allocation14 + $0x8f8] sm:$0xff]
    %v10900 = vld [vmem:[#allocation14 + $0x900] sm:$0xff]
    %v10901 = vld [vmem:[#allocation14 + $0x908] sm:$0xff]
    %v10902 = vld [vmem:[#allocation14 + $0x910] sm:$0xff]
    %v10903 = vld [vmem:[#allocation14 + $0x918] sm:$0xff]
    %v10904 = vld [vmem:[#allocation14 + $0x920] sm:$0xff]
    %v10905 = vld [vmem:[#allocation14 + $0x928] sm:$0xff]
    %v10906 = vld [vmem:[#allocation14 + $0x930] sm:$0xff]
    %v10907 = vld [vmem:[#allocation14 + $0x938] sm:$0xff]
    %v10908 = vld [vmem:[#allocation14 + $0x940] sm:$0xff]
    %v10909 = vld [vmem:[#allocation14 + $0x948] sm:$0xff]
    %v10910 = vld [vmem:[#allocation14 + $0x950] sm:$0xff]
    %v10911 = vld [vmem:[#allocation14 + $0x958] sm:$0xff]
    %v10912 = vld [vmem:[#allocation14 + $0x960] sm:$0xff]
    %v10913 = vld [vmem:[#allocation14 + $0x968] sm:$0xff]
    %v10914 = vld [vmem:[#allocation14 + $0x970] sm:$0xff]
    %v10915 = vld [vmem:[#allocation14 + $0x978] sm:$0xff]
    %v10916 = vld [vmem:[#allocation14 + $0x980] sm:$0xff]
    %v10917 = vld [vmem:[#allocation14 + $0x988] sm:$0xff]
    %v10918 = vld [vmem:[#allocation14 + $0x990] sm:$0xff]
    %v10919 = vld [vmem:[#allocation14 + $0x998] sm:$0xff]
    %v10920 = vld [vmem:[#allocation14 + $0x9a0] sm:$0xff]
    %v10921 = vld [vmem:[#allocation14 + $0x9a8] sm:$0xff]
    %v10922 = vld [vmem:[#allocation14 + $0x9b0] sm:$0xff]
    %v10923 = vld [vmem:[#allocation14 + $0x9b8] sm:$0xff]
    %v10924 = vld [vmem:[#allocation14 + $0x9c0] sm:$0xff]
    %v10925 = vld [vmem:[#allocation14 + $0x9c8] sm:$0xff]
    %v10926 = vld [vmem:[#allocation14 + $0x9d0] sm:$0xff]
    %v10927 = vld [vmem:[#allocation14 + $0x9d8] sm:$0xff]
    %v10928 = vld [vmem:[#allocation14 + $0x9e0] sm:$0xff]
    %v10929 = vld [vmem:[#allocation14 + $0x9e8] sm:$0xff]
    %v10930 = vld [vmem:[#allocation14 + $0x9f0] sm:$0xff]
    %v10931 = vld [vmem:[#allocation14 + $0x9f8] sm:$0xff]
    %v10932 = vld [vmem:[#allocation14 + $0xa00] sm:$0xff]
    %v10933 = vld [vmem:[#allocation14 + $0xa08] sm:$0xff]
    %v10934 = vld [vmem:[#allocation14 + $0xa10] sm:$0xff]
    %v10935 = vld [vmem:[#allocation14 + $0xa18] sm:$0xff]
    %v10936 = vld [vmem:[#allocation14 + $0xa20] sm:$0xff]
    %v10937 = vld [vmem:[#allocation14 + $0xa28] sm:$0xff]
    %v10938 = vld [vmem:[#allocation14 + $0xa30] sm:$0xff]
    %v10939 = vld [vmem:[#allocation14 + $0xa38] sm:$0xff]
    %v10940 = vld [vmem:[#allocation14 + $0xa40] sm:$0xff]
    %v10941 = vld [vmem:[#allocation14 + $0xa48] sm:$0xff]
    %v10942 = vld [vmem:[#allocation14 + $0xa50] sm:$0xff]
    %v10943 = vld [vmem:[#allocation14 + $0xa58] sm:$0xff]
    %v10944 = vld [vmem:[#allocation14 + $0xa60] sm:$0xff]
    %v10945 = vld [vmem:[#allocation14 + $0xa68] sm:$0xff]
    %v10946 = vld [vmem:[#allocation14 + $0xa70] sm:$0xff]
    %v10947 = vld [vmem:[#allocation14 + $0xa78] sm:$0xff]
    %v10948 = vld [vmem:[#allocation14 + $0xa80] sm:$0xff]
    %v10949 = vld [vmem:[#allocation14 + $0xa88] sm:$0xff]
    %v10950 = vld [vmem:[#allocation14 + $0xa90] sm:$0xff]
    %v10951 = vld [vmem:[#allocation14 + $0xa98] sm:$0xff]
    %v10952 = vld [vmem:[#allocation14 + $0xaa0] sm:$0xff]
    %v10953 = vld [vmem:[#allocation14 + $0xaa8] sm:$0xff]
    %v10954 = vld [vmem:[#allocation14 + $0xab0] sm:$0xff]
    %v10955 = vld [vmem:[#allocation14 + $0xab8] sm:$0xff]
    %v10956 = vld [vmem:[#allocation14 + $0xac0] sm:$0xff]
    %v10957 = vld [vmem:[#allocation14 + $0xac8] sm:$0xff]
    %v10958 = vld [vmem:[#allocation14 + $0xad0] sm:$0xff]
    %v10959 = vld [vmem:[#allocation14 + $0xad8] sm:$0xff]
    %v10960 = vld [vmem:[#allocation14 + $0xae0] sm:$0xff]
    %v10961 = vld [vmem:[#allocation14 + $0xae8] sm:$0xff]
    %v10962 = vld [vmem:[#allocation14 + $0xaf0] sm:$0xff]
    %v10963 = vld [vmem:[#allocation14 + $0xaf8] sm:$0xff]
    %v10964 = vld [vmem:[#allocation14 + $0xb00] sm:$0xff]
    %v10965 = vld [vmem:[#allocation14 + $0xb08] sm:$0xff]
    %v10966 = vld [vmem:[#allocation14 + $0xb10] sm:$0xff]
    %v10967 = vld [vmem:[#allocation14 + $0xb18] sm:$0xff]
    %v10968 = vld [vmem:[#allocation14 + $0xb20] sm:$0xff]
    %v10969 = vld [vmem:[#allocation14 + $0xb28] sm:$0xff]
    %v10970 = vld [vmem:[#allocation14 + $0xb30] sm:$0xff]
    %v10971 = vld [vmem:[#allocation14 + $0xb38] sm:$0xff]
    %v10972 = vld [vmem:[#allocation14 + $0xb40] sm:$0xff]
    %v10973 = vld [vmem:[#allocation14 + $0xb48] sm:$0xff]
    %v10974 = vld [vmem:[#allocation14 + $0xb50] sm:$0xff]
    %v10975 = vld [vmem:[#allocation14 + $0xb58] sm:$0xff]
    %v10976 = vld [vmem:[#allocation14 + $0xb60] sm:$0xff]
    %v10977 = vld [vmem:[#allocation14 + $0xb68] sm:$0xff]
    %v10978 = vld [vmem:[#allocation14 + $0xb70] sm:$0xff]
    %v10979 = vld [vmem:[#allocation14 + $0xb78] sm:$0xff]
    %v10980 = vld [vmem:[#allocation14 + $0xb80] sm:$0xff]
    %v10981 = vld [vmem:[#allocation14 + $0xb88] sm:$0xff]
    %v10982 = vld [vmem:[#allocation14 + $0xb90] sm:$0xff]
    %v10983 = vld [vmem:[#allocation14 + $0xb98] sm:$0xff]
    %v10984 = vld [vmem:[#allocation14 + $0xba0] sm:$0xff]
    %v10985 = vld [vmem:[#allocation14 + $0xba8] sm:$0xff]
    %v10986 = vld [vmem:[#allocation14 + $0xbb0] sm:$0xff]
    %v10987 = vld [vmem:[#allocation14 + $0xbb8] sm:$0xff]
    %v10988 = vld [vmem:[#allocation14 + $0xbc0] sm:$0xff]
    %v10989 = vld [vmem:[#allocation14 + $0xbc8] sm:$0xff]
    %v10990 = vld [vmem:[#allocation14 + $0xbd0] sm:$0xff]
    %v10991 = vld [vmem:[#allocation14 + $0xbd8] sm:$0xff]
    %v10992 = vld [vmem:[#allocation14 + $0xbe0] sm:$0xff]
    %v10993 = vld [vmem:[#allocation14 + $0xbe8] sm:$0xff]
    %v10994 = vld [vmem:[#allocation14 + $0xbf0] sm:$0xff]
    %v10995 = vld [vmem:[#allocation14 + $0xbf8] sm:$0xff]
    %v10996 = vld [vmem:[#allocation16] sm:$0x3f]
    %v10998 = vlaneseq
    %v10999 = vshrl.u32 %v10998, 7
    %v11000 = vsub.s32 0, %v10999
    %v11001 = vrot.slane %v10996, %v11000
    %v11002 = vlaneseq
    %v11003 = vshrl.u32 %v11002, 7
    %v11004 = vsub.s32 1, %v11003
    %v11005 = vrot.slane %v10996, %v11004
    %v11006 = vlaneseq
    %v11007 = vshrl.u32 %v11006, 7
    %v11008 = vsub.s32 2, %v11007
    %v11009 = vrot.slane %v10996, %v11008
    %v11010 = vlaneseq
    %v11011 = vshrl.u32 %v11010, 7
    %v11012 = vsub.s32 3, %v11011
    %v11013 = vrot.slane %v10996, %v11012
    %v11014 = vlaneseq
    %v11015 = vshrl.u32 %v11014, 7
    %v11016 = vsub.s32 4, %v11015
    %v11017 = vrot.slane %v10996, %v11016
    %v11018 = vlaneseq
    %v11019 = vshrl.u32 %v11018, 7
    %v11020 = vsub.s32 5, %v11019
    %v11021 = vrot.slane %v10996, %v11020
    %v11412 = vunpack.c.l.b16 %v10612
    %v11413 = vunpack.c.h.b16 %v10612
    %v11414 = vunpack.c.l.b16 %v10613
    %v11415 = vunpack.c.h.b16 %v10613
    %v11416 = vunpack.c.l.b16 %v10614
    %v11417 = vunpack.c.h.b16 %v10614
    %v11418 = vunpack.c.l.b16 %v10615
    %v11419 = vunpack.c.h.b16 %v10615
    %v11420 = vunpack.c.l.b16 %v10616
    %v11421 = vunpack.c.h.b16 %v10616
    %v11422 = vunpack.c.l.b16 %v10617
    %v11423 = vunpack.c.h.b16 %v10617
    %v11424 = vunpack.c.l.b16 %v10618
    %v11425 = vunpack.c.h.b16 %v10618
    %v11426 = vunpack.c.l.b16 %v10619
    %v11427 = vunpack.c.h.b16 %v10619
    %v11428 = vunpack.c.l.b16 %v10620
    %v11429 = vunpack.c.h.b16 %v10620
    %v11430 = vunpack.c.l.b16 %v10621
    %v11431 = vunpack.c.h.b16 %v10621
    %v11432 = vunpack.c.l.b16 %v10622
    %v11433 = vunpack.c.h.b16 %v10622
    %v11434 = vunpack.c.l.b16 %v10623
    %v11435 = vunpack.c.h.b16 %v10623
    %v11436 = vunpack.c.l.b16 %v10624
    %v11437 = vunpack.c.h.b16 %v10624
    %v11438 = vunpack.c.l.b16 %v10625
    %v11439 = vunpack.c.h.b16 %v10625
    %v11440 = vunpack.c.l.b16 %v10626
    %v11441 = vunpack.c.h.b16 %v10626
    %v11442 = vunpack.c.l.b16 %v10627
    %v11443 = vunpack.c.h.b16 %v10627
    %v11444 = vunpack.c.l.b16 %v10628
    %v11445 = vunpack.c.h.b16 %v10628
    %v11446 = vunpack.c.l.b16 %v10629
    %v11447 = vunpack.c.h.b16 %v10629
    %v11448 = vunpack.c.l.b16 %v10630
    %v11449 = vunpack.c.h.b16 %v10630
    %v11450 = vunpack.c.l.b16 %v10631
    %v11451 = vunpack.c.h.b16 %v10631
    %v11452 = vunpack.c.l.b16 %v10632
    %v11453 = vunpack.c.h.b16 %v10632
    %v11454 = vunpack.c.l.b16 %v10633
    %v11455 = vunpack.c.h.b16 %v10633
    %v11456 = vunpack.c.l.b16 %v10634
    %v11457 = vunpack.c.h.b16 %v10634
    %v11458 = vunpack.c.l.b16 %v10635
    %v11459 = vunpack.c.h.b16 %v10635
    %v11460 = vunpack.c.l.b16 %v10636
    %v11461 = vunpack.c.h.b16 %v10636
    %v11462 = vunpack.c.l.b16 %v10637
    %v11463 = vunpack.c.h.b16 %v10637
    %v11464 = vunpack.c.l.b16 %v10638
    %v11465 = vunpack.c.h.b16 %v10638
    %v11466 = vunpack.c.l.b16 %v10639
    %v11467 = vunpack.c.h.b16 %v10639
    %v11468 = vunpack.c.l.b16 %v10640
    %v11469 = vunpack.c.h.b16 %v10640
    %v11470 = vunpack.c.l.b16 %v10641
    %v11471 = vunpack.c.h.b16 %v10641
    %v11472 = vunpack.c.l.b16 %v10642
    %v11473 = vunpack.c.h.b16 %v10642
    %v11474 = vunpack.c.l.b16 %v10643
    %v11475 = vunpack.c.h.b16 %v10643
    %v11476 = vunpack.c.l.b16 %v10644
    %v11477 = vunpack.c.h.b16 %v10644
    %v11478 = vunpack.c.l.b16 %v10645
    %v11479 = vunpack.c.h.b16 %v10645
    %v11480 = vunpack.c.l.b16 %v10646
    %v11481 = vunpack.c.h.b16 %v10646
    %v11482 = vunpack.c.l.b16 %v10647
    %v11483 = vunpack.c.h.b16 %v10647
    %v11484 = vunpack.c.l.b16 %v10648
    %v11485 = vunpack.c.h.b16 %v10648
    %v11486 = vunpack.c.l.b16 %v10649
    %v11487 = vunpack.c.h.b16 %v10649
    %v11488 = vunpack.c.l.b16 %v10650
    %v11489 = vunpack.c.h.b16 %v10650
    %v11490 = vunpack.c.l.b16 %v10651
    %v11491 = vunpack.c.h.b16 %v10651
    %v11492 = vunpack.c.l.b16 %v10652
    %v11493 = vunpack.c.h.b16 %v10652
    %v11494 = vunpack.c.l.b16 %v10653
    %v11495 = vunpack.c.h.b16 %v10653
    %v11496 = vunpack.c.l.b16 %v10654
    %v11497 = vunpack.c.h.b16 %v10654
    %v11498 = vunpack.c.l.b16 %v10655
    %v11499 = vunpack.c.h.b16 %v10655
    %v11500 = vunpack.c.l.b16 %v10656
    %v11501 = vunpack.c.h.b16 %v10656
    %v11502 = vunpack.c.l.b16 %v10657
    %v11503 = vunpack.c.h.b16 %v10657
    %v11504 = vunpack.c.l.b16 %v10658
    %v11505 = vunpack.c.h.b16 %v10658
    %v11506 = vunpack.c.l.b16 %v10659
    %v11507 = vunpack.c.h.b16 %v10659
    %v11508 = vunpack.c.l.b16 %v10660
    %v11509 = vunpack.c.h.b16 %v10660
    %v11510 = vunpack.c.l.b16 %v10661
    %v11511 = vunpack.c.h.b16 %v10661
    %v11512 = vunpack.c.l.b16 %v10662
    %v11513 = vunpack.c.h.b16 %v10662
    %v11514 = vunpack.c.l.b16 %v10663
    %v11515 = vunpack.c.h.b16 %v10663
    %v11516 = vunpack.c.l.b16 %v10664
    %v11517 = vunpack.c.h.b16 %v10664
    %v11518 = vunpack.c.l.b16 %v10665
    %v11519 = vunpack.c.h.b16 %v10665
    %v11520 = vunpack.c.l.b16 %v10666
    %v11521 = vunpack.c.h.b16 %v10666
    %v11522 = vunpack.c.l.b16 %v10667
    %v11523 = vunpack.c.h.b16 %v10667
    %v11524 = vunpack.c.l.b16 %v10668
    %v11525 = vunpack.c.h.b16 %v10668
    %v11526 = vunpack.c.l.b16 %v10669
    %v11527 = vunpack.c.h.b16 %v10669
    %v11528 = vunpack.c.l.b16 %v10670
    %v11529 = vunpack.c.h.b16 %v10670
    %v11530 = vunpack.c.l.b16 %v10671
    %v11531 = vunpack.c.h.b16 %v10671
    %v11532 = vunpack.c.l.b16 %v10672
    %v11533 = vunpack.c.h.b16 %v10672
    %v11534 = vunpack.c.l.b16 %v10673
    %v11535 = vunpack.c.h.b16 %v10673
    %v11536 = vunpack.c.l.b16 %v10674
    %v11537 = vunpack.c.h.b16 %v10674
    %v11538 = vunpack.c.l.b16 %v10675
    %v11539 = vunpack.c.h.b16 %v10675
    %v11540 = vunpack.c.l.b16 %v10676
    %v11541 = vunpack.c.h.b16 %v10676
    %v11542 = vunpack.c.l.b16 %v10677
    %v11543 = vunpack.c.h.b16 %v10677
    %v11544 = vunpack.c.l.b16 %v10678
    %v11545 = vunpack.c.h.b16 %v10678
    %v11546 = vunpack.c.l.b16 %v10679
    %v11547 = vunpack.c.h.b16 %v10679
    %v11548 = vunpack.c.l.b16 %v10680
    %v11549 = vunpack.c.h.b16 %v10680
    %v11550 = vunpack.c.l.b16 %v10681
    %v11551 = vunpack.c.h.b16 %v10681
    %v11552 = vunpack.c.l.b16 %v10682
    %v11553 = vunpack.c.h.b16 %v10682
    %v11554 = vunpack.c.l.b16 %v10683
    %v11555 = vunpack.c.h.b16 %v10683
    %v11556 = vunpack.c.l.b16 %v10684
    %v11557 = vunpack.c.h.b16 %v10684
    %v11558 = vunpack.c.l.b16 %v10685
    %v11559 = vunpack.c.h.b16 %v10685
    %v11560 = vunpack.c.l.b16 %v10686
    %v11561 = vunpack.c.h.b16 %v10686
    %v11562 = vunpack.c.l.b16 %v10687
    %v11563 = vunpack.c.h.b16 %v10687
    %v11564 = vunpack.c.l.b16 %v10688
    %v11565 = vunpack.c.h.b16 %v10688
    %v11566 = vunpack.c.l.b16 %v10689
    %v11567 = vunpack.c.h.b16 %v10689
    %v11568 = vunpack.c.l.b16 %v10690
    %v11569 = vunpack.c.h.b16 %v10690
    %v11570 = vunpack.c.l.b16 %v10691
    %v11571 = vunpack.c.h.b16 %v10691
    %v11572 = vunpack.c.l.b16 %v10692
    %v11573 = vunpack.c.h.b16 %v10692
    %v11574 = vunpack.c.l.b16 %v10693
    %v11575 = vunpack.c.h.b16 %v10693
    %v11576 = vunpack.c.l.b16 %v10694
    %v11577 = vunpack.c.h.b16 %v10694
    %v11578 = vunpack.c.l.b16 %v10695
    %v11579 = vunpack.c.h.b16 %v10695
    %v11580 = vunpack.c.l.b16 %v10696
    %v11581 = vunpack.c.h.b16 %v10696
    %v11582 = vunpack.c.l.b16 %v10697
    %v11583 = vunpack.c.h.b16 %v10697
    %v11584 = vunpack.c.l.b16 %v10698
    %v11585 = vunpack.c.h.b16 %v10698
    %v11586 = vunpack.c.l.b16 %v10699
    %v11587 = vunpack.c.h.b16 %v10699
    %v11588 = vunpack.c.l.b16 %v10700
    %v11589 = vunpack.c.h.b16 %v10700
    %v11590 = vunpack.c.l.b16 %v10701
    %v11591 = vunpack.c.h.b16 %v10701
    %v11592 = vunpack.c.l.b16 %v10702
    %v11593 = vunpack.c.h.b16 %v10702
    %v11594 = vunpack.c.l.b16 %v10703
    %v11595 = vunpack.c.h.b16 %v10703
    %v11596 = vunpack.c.l.b16 %v10704
    %v11597 = vunpack.c.h.b16 %v10704
    %v11598 = vunpack.c.l.b16 %v10705
    %v11599 = vunpack.c.h.b16 %v10705
    %v11600 = vunpack.c.l.b16 %v10706
    %v11601 = vunpack.c.h.b16 %v10706
    %v11602 = vunpack.c.l.b16 %v10707
    %v11603 = vunpack.c.h.b16 %v10707
    %v11604 = vunpack.c.l.b16 %v10708
    %v11605 = vunpack.c.h.b16 %v10708
    %v11606 = vunpack.c.l.b16 %v10709
    %v11607 = vunpack.c.h.b16 %v10709
    %v11608 = vunpack.c.l.b16 %v10710
    %v11609 = vunpack.c.h.b16 %v10710
    %v11610 = vunpack.c.l.b16 %v10711
    %v11611 = vunpack.c.h.b16 %v10711
    %v11612 = vunpack.c.l.b16 %v10712
    %v11613 = vunpack.c.h.b16 %v10712
    %v11614 = vunpack.c.l.b16 %v10713
    %v11615 = vunpack.c.h.b16 %v10713
    %v11616 = vunpack.c.l.b16 %v10714
    %v11617 = vunpack.c.h.b16 %v10714
    %v11618 = vunpack.c.l.b16 %v10715
    %v11619 = vunpack.c.h.b16 %v10715
    %v11620 = vunpack.c.l.b16 %v10716
    %v11621 = vunpack.c.h.b16 %v10716
    %v11622 = vunpack.c.l.b16 %v10717
    %v11623 = vunpack.c.h.b16 %v10717
    %v11624 = vunpack.c.l.b16 %v10718
    %v11625 = vunpack.c.h.b16 %v10718
    %v11626 = vunpack.c.l.b16 %v10719
    %v11627 = vunpack.c.h.b16 %v10719
    %v11628 = vunpack.c.l.b16 %v10720
    %v11629 = vunpack.c.h.b16 %v10720
    %v11630 = vunpack.c.l.b16 %v10721
    %v11631 = vunpack.c.h.b16 %v10721
    %v11632 = vunpack.c.l.b16 %v10722
    %v11633 = vunpack.c.h.b16 %v10722
    %v11634 = vunpack.c.l.b16 %v10723
    %v11635 = vunpack.c.h.b16 %v10723
    %v11636 = vunpack.c.l.b16 %v10724
    %v11637 = vunpack.c.h.b16 %v10724
    %v11638 = vunpack.c.l.b16 %v10725
    %v11639 = vunpack.c.h.b16 %v10725
    %v11640 = vunpack.c.l.b16 %v10726
    %v11641 = vunpack.c.h.b16 %v10726
    %v11642 = vunpack.c.l.b16 %v10727
    %v11643 = vunpack.c.h.b16 %v10727
    %v11644 = vunpack.c.l.b16 %v10728
    %v11645 = vunpack.c.h.b16 %v10728
    %v11646 = vunpack.c.l.b16 %v10729
    %v11647 = vunpack.c.h.b16 %v10729
    %v11648 = vunpack.c.l.b16 %v10730
    %v11649 = vunpack.c.h.b16 %v10730
    %v11650 = vunpack.c.l.b16 %v10731
    %v11651 = vunpack.c.h.b16 %v10731
    %v11652 = vunpack.c.l.b16 %v10732
    %v11653 = vunpack.c.h.b16 %v10732
    %v11654 = vunpack.c.l.b16 %v10733
    %v11655 = vunpack.c.h.b16 %v10733
    %v11656 = vunpack.c.l.b16 %v10734
    %v11657 = vunpack.c.h.b16 %v10734
    %v11658 = vunpack.c.l.b16 %v10735
    %v11659 = vunpack.c.h.b16 %v10735
    %v11660 = vunpack.c.l.b16 %v10736
    %v11661 = vunpack.c.h.b16 %v10736
    %v11662 = vunpack.c.l.b16 %v10737
    %v11663 = vunpack.c.h.b16 %v10737
    %v11664 = vunpack.c.l.b16 %v10738
    %v11665 = vunpack.c.h.b16 %v10738
    %v11666 = vunpack.c.l.b16 %v10739
    %v11667 = vunpack.c.h.b16 %v10739
    %v11668 = vunpack.c.l.b16 %v10740
    %v11669 = vunpack.c.h.b16 %v10740
    %v11670 = vunpack.c.l.b16 %v10741
    %v11671 = vunpack.c.h.b16 %v10741
    %v11672 = vunpack.c.l.b16 %v10742
    %v11673 = vunpack.c.h.b16 %v10742
    %v11674 = vunpack.c.l.b16 %v10743
    %v11675 = vunpack.c.h.b16 %v10743
    %v11676 = vunpack.c.l.b16 %v10744
    %v11677 = vunpack.c.h.b16 %v10744
    %v11678 = vunpack.c.l.b16 %v10745
    %v11679 = vunpack.c.h.b16 %v10745
    %v11680 = vunpack.c.l.b16 %v10746
    %v11681 = vunpack.c.h.b16 %v10746
    %v11682 = vunpack.c.l.b16 %v10747
    %v11683 = vunpack.c.h.b16 %v10747
    %v11684 = vunpack.c.l.b16 %v10748
    %v11685 = vunpack.c.h.b16 %v10748
    %v11686 = vunpack.c.l.b16 %v10749
    %v11687 = vunpack.c.h.b16 %v10749
    %v11688 = vunpack.c.l.b16 %v10750
    %v11689 = vunpack.c.h.b16 %v10750
    %v11690 = vunpack.c.l.b16 %v10751
    %v11691 = vunpack.c.h.b16 %v10751
    %v11692 = vunpack.c.l.b16 %v10752
    %v11693 = vunpack.c.h.b16 %v10752
    %v11694 = vunpack.c.l.b16 %v10753
    %v11695 = vunpack.c.h.b16 %v10753
    %v11696 = vunpack.c.l.b16 %v10754
    %v11697 = vunpack.c.h.b16 %v10754
    %v11698 = vunpack.c.l.b16 %v10755
    %v11699 = vunpack.c.h.b16 %v10755
    %v11700 = vunpack.c.l.b16 %v10756
    %v11701 = vunpack.c.h.b16 %v10756
    %v11702 = vunpack.c.l.b16 %v10757
    %v11703 = vunpack.c.h.b16 %v10757
    %v11704 = vunpack.c.l.b16 %v10758
    %v11705 = vunpack.c.h.b16 %v10758
    %v11706 = vunpack.c.l.b16 %v10759
    %v11707 = vunpack.c.h.b16 %v10759
    %v11708 = vunpack.c.l.b16 %v10760
    %v11709 = vunpack.c.h.b16 %v10760
    %v11710 = vunpack.c.l.b16 %v10761
    %v11711 = vunpack.c.h.b16 %v10761
    %v11712 = vunpack.c.l.b16 %v10762
    %v11713 = vunpack.c.h.b16 %v10762
    %v11714 = vunpack.c.l.b16 %v10763
    %v11715 = vunpack.c.h.b16 %v10763
    %v11716 = vunpack.c.l.b16 %v10764
    %v11717 = vunpack.c.h.b16 %v10764
    %v11718 = vunpack.c.l.b16 %v10765
    %v11719 = vunpack.c.h.b16 %v10765
    %v11720 = vunpack.c.l.b16 %v10766
    %v11721 = vunpack.c.h.b16 %v10766
    %v11722 = vunpack.c.l.b16 %v10767
    %v11723 = vunpack.c.h.b16 %v10767
    %v11724 = vunpack.c.l.b16 %v10768
    %v11725 = vunpack.c.h.b16 %v10768
    %v11726 = vunpack.c.l.b16 %v10769
    %v11727 = vunpack.c.h.b16 %v10769
    %v11728 = vunpack.c.l.b16 %v10770
    %v11729 = vunpack.c.h.b16 %v10770
    %v11730 = vunpack.c.l.b16 %v10771
    %v11731 = vunpack.c.h.b16 %v10771
    %v11732 = vunpack.c.l.b16 %v10772
    %v11733 = vunpack.c.h.b16 %v10772
    %v11734 = vunpack.c.l.b16 %v10773
    %v11735 = vunpack.c.h.b16 %v10773
    %v11736 = vunpack.c.l.b16 %v10774
    %v11737 = vunpack.c.h.b16 %v10774
    %v11738 = vunpack.c.l.b16 %v10775
    %v11739 = vunpack.c.h.b16 %v10775
    %v11740 = vunpack.c.l.b16 %v10776
    %v11741 = vunpack.c.h.b16 %v10776
    %v11742 = vunpack.c.l.b16 %v10777
    %v11743 = vunpack.c.h.b16 %v10777
    %v11744 = vunpack.c.l.b16 %v10778
    %v11745 = vunpack.c.h.b16 %v10778
    %v11746 = vunpack.c.l.b16 %v10779
    %v11747 = vunpack.c.h.b16 %v10779
    %v11748 = vunpack.c.l.b16 %v10780
    %v11749 = vunpack.c.h.b16 %v10780
    %v11750 = vunpack.c.l.b16 %v10781
    %v11751 = vunpack.c.h.b16 %v10781
    %v11752 = vunpack.c.l.b16 %v10782
    %v11753 = vunpack.c.h.b16 %v10782
    %v11754 = vunpack.c.l.b16 %v10783
    %v11755 = vunpack.c.h.b16 %v10783
    %v11756 = vunpack.c.l.b16 %v10784
    %v11757 = vunpack.c.h.b16 %v10784
    %v11758 = vunpack.c.l.b16 %v10785
    %v11759 = vunpack.c.h.b16 %v10785
    %v11760 = vunpack.c.l.b16 %v10786
    %v11761 = vunpack.c.h.b16 %v10786
    %v11762 = vunpack.c.l.b16 %v10787
    %v11763 = vunpack.c.h.b16 %v10787
    %v11764 = vunpack.c.l.b16 %v10788
    %v11765 = vunpack.c.h.b16 %v10788
    %v11766 = vunpack.c.l.b16 %v10789
    %v11767 = vunpack.c.h.b16 %v10789
    %v11768 = vunpack.c.l.b16 %v10790
    %v11769 = vunpack.c.h.b16 %v10790
    %v11770 = vunpack.c.l.b16 %v10791
    %v11771 = vunpack.c.h.b16 %v10791
    %v11772 = vunpack.c.l.b16 %v10792
    %v11773 = vunpack.c.h.b16 %v10792
    %v11774 = vunpack.c.l.b16 %v10793
    %v11775 = vunpack.c.h.b16 %v10793
    %v11776 = vunpack.c.l.b16 %v10794
    %v11777 = vunpack.c.h.b16 %v10794
    %v11778 = vunpack.c.l.b16 %v10795
    %v11779 = vunpack.c.h.b16 %v10795
    %v11780 = vunpack.c.l.b16 %v10796
    %v11781 = vunpack.c.h.b16 %v10796
    %v11782 = vunpack.c.l.b16 %v10797
    %v11783 = vunpack.c.h.b16 %v10797
    %v11784 = vunpack.c.l.b16 %v10798
    %v11785 = vunpack.c.h.b16 %v10798
    %v11786 = vunpack.c.l.b16 %v10799
    %v11787 = vunpack.c.h.b16 %v10799
    %v11788 = vunpack.c.l.b16 %v10800
    %v11789 = vunpack.c.h.b16 %v10800
    %v11790 = vunpack.c.l.b16 %v10801
    %v11791 = vunpack.c.h.b16 %v10801
    %v11792 = vunpack.c.l.b16 %v10802
    %v11793 = vunpack.c.h.b16 %v10802
    %v11794 = vunpack.c.l.b16 %v10803
    %v11795 = vunpack.c.h.b16 %v10803
    %v11796 = vunpack.c.l.b16 %v10804
    %v11797 = vunpack.c.h.b16 %v10804
    %v11798 = vunpack.c.l.b16 %v10805
    %v11799 = vunpack.c.h.b16 %v10805
    %v11800 = vunpack.c.l.b16 %v10806
    %v11801 = vunpack.c.h.b16 %v10806
    %v11802 = vunpack.c.l.b16 %v10807
    %v11803 = vunpack.c.h.b16 %v10807
    %v11804 = vunpack.c.l.b16 %v10808
    %v11805 = vunpack.c.h.b16 %v10808
    %v11806 = vunpack.c.l.b16 %v10809
    %v11807 = vunpack.c.h.b16 %v10809
    %v11808 = vunpack.c.l.b16 %v10810
    %v11809 = vunpack.c.h.b16 %v10810
    %v11810 = vunpack.c.l.b16 %v10811
    %v11811 = vunpack.c.h.b16 %v10811
    %v11812 = vunpack.c.l.b16 %v10812
    %v11813 = vunpack.c.h.b16 %v10812
    %v11814 = vunpack.c.l.b16 %v10813
    %v11815 = vunpack.c.h.b16 %v10813
    %v11816 = vunpack.c.l.b16 %v10814
    %v11817 = vunpack.c.h.b16 %v10814
    %v11818 = vunpack.c.l.b16 %v10815
    %v11819 = vunpack.c.h.b16 %v10815
    %v11820 = vunpack.c.l.b16 %v10816
    %v11821 = vunpack.c.h.b16 %v10816
    %v11822 = vunpack.c.l.b16 %v10817
    %v11823 = vunpack.c.h.b16 %v10817
    %v11824 = vunpack.c.l.b16 %v10818
    %v11825 = vunpack.c.h.b16 %v10818
    %v11826 = vunpack.c.l.b16 %v10819
    %v11827 = vunpack.c.h.b16 %v10819
    %v11828 = vunpack.c.l.b16 %v10820
    %v11829 = vunpack.c.h.b16 %v10820
    %v11830 = vunpack.c.l.b16 %v10821
    %v11831 = vunpack.c.h.b16 %v10821
    %v11832 = vunpack.c.l.b16 %v10822
    %v11833 = vunpack.c.h.b16 %v10822
    %v11834 = vunpack.c.l.b16 %v10823
    %v11835 = vunpack.c.h.b16 %v10823
    %v11836 = vunpack.c.l.b16 %v10824
    %v11837 = vunpack.c.h.b16 %v10824
    %v11838 = vunpack.c.l.b16 %v10825
    %v11839 = vunpack.c.h.b16 %v10825
    %v11840 = vunpack.c.l.b16 %v10826
    %v11841 = vunpack.c.h.b16 %v10826
    %v11842 = vunpack.c.l.b16 %v10827
    %v11843 = vunpack.c.h.b16 %v10827
    %v11844 = vunpack.c.l.b16 %v10828
    %v11845 = vunpack.c.h.b16 %v10828
    %v11846 = vunpack.c.l.b16 %v10829
    %v11847 = vunpack.c.h.b16 %v10829
    %v11848 = vunpack.c.l.b16 %v10830
    %v11849 = vunpack.c.h.b16 %v10830
    %v11850 = vunpack.c.l.b16 %v10831
    %v11851 = vunpack.c.h.b16 %v10831
    %v11852 = vunpack.c.l.b16 %v10832
    %v11853 = vunpack.c.h.b16 %v10832
    %v11854 = vunpack.c.l.b16 %v10833
    %v11855 = vunpack.c.h.b16 %v10833
    %v11856 = vunpack.c.l.b16 %v10834
    %v11857 = vunpack.c.h.b16 %v10834
    %v11858 = vunpack.c.l.b16 %v10835
    %v11859 = vunpack.c.h.b16 %v10835
    %v11860 = vunpack.c.l.b16 %v10836
    %v11861 = vunpack.c.h.b16 %v10836
    %v11862 = vunpack.c.l.b16 %v10837
    %v11863 = vunpack.c.h.b16 %v10837
    %v11864 = vunpack.c.l.b16 %v10838
    %v11865 = vunpack.c.h.b16 %v10838
    %v11866 = vunpack.c.l.b16 %v10839
    %v11867 = vunpack.c.h.b16 %v10839
    %v11868 = vunpack.c.l.b16 %v10840
    %v11869 = vunpack.c.h.b16 %v10840
    %v11870 = vunpack.c.l.b16 %v10841
    %v11871 = vunpack.c.h.b16 %v10841
    %v11872 = vunpack.c.l.b16 %v10842
    %v11873 = vunpack.c.h.b16 %v10842
    %v11874 = vunpack.c.l.b16 %v10843
    %v11875 = vunpack.c.h.b16 %v10843
    %v11876 = vunpack.c.l.b16 %v10844
    %v11877 = vunpack.c.h.b16 %v10844
    %v11878 = vunpack.c.l.b16 %v10845
    %v11879 = vunpack.c.h.b16 %v10845
    %v11880 = vunpack.c.l.b16 %v10846
    %v11881 = vunpack.c.h.b16 %v10846
    %v11882 = vunpack.c.l.b16 %v10847
    %v11883 = vunpack.c.h.b16 %v10847
    %v11884 = vunpack.c.l.b16 %v10848
    %v11885 = vunpack.c.h.b16 %v10848
    %v11886 = vunpack.c.l.b16 %v10849
    %v11887 = vunpack.c.h.b16 %v10849
    %v11888 = vunpack.c.l.b16 %v10850
    %v11889 = vunpack.c.h.b16 %v10850
    %v11890 = vunpack.c.l.b16 %v10851
    %v11891 = vunpack.c.h.b16 %v10851
    %v11892 = vunpack.c.l.b16 %v10852
    %v11893 = vunpack.c.h.b16 %v10852
    %v11894 = vunpack.c.l.b16 %v10853
    %v11895 = vunpack.c.h.b16 %v10853
    %v11896 = vunpack.c.l.b16 %v10854
    %v11897 = vunpack.c.h.b16 %v10854
    %v11898 = vunpack.c.l.b16 %v10855
    %v11899 = vunpack.c.h.b16 %v10855
    %v11900 = vunpack.c.l.b16 %v10856
    %v11901 = vunpack.c.h.b16 %v10856
    %v11902 = vunpack.c.l.b16 %v10857
    %v11903 = vunpack.c.h.b16 %v10857
    %v11904 = vunpack.c.l.b16 %v10858
    %v11905 = vunpack.c.h.b16 %v10858
    %v11906 = vunpack.c.l.b16 %v10859
    %v11907 = vunpack.c.h.b16 %v10859
    %v11908 = vunpack.c.l.b16 %v10860
    %v11909 = vunpack.c.h.b16 %v10860
    %v11910 = vunpack.c.l.b16 %v10861
    %v11911 = vunpack.c.h.b16 %v10861
    %v11912 = vunpack.c.l.b16 %v10862
    %v11913 = vunpack.c.h.b16 %v10862
    %v11914 = vunpack.c.l.b16 %v10863
    %v11915 = vunpack.c.h.b16 %v10863
    %v11916 = vunpack.c.l.b16 %v10864
    %v11917 = vunpack.c.h.b16 %v10864
    %v11918 = vunpack.c.l.b16 %v10865
    %v11919 = vunpack.c.h.b16 %v10865
    %v11920 = vunpack.c.l.b16 %v10866
    %v11921 = vunpack.c.h.b16 %v10866
    %v11922 = vunpack.c.l.b16 %v10867
    %v11923 = vunpack.c.h.b16 %v10867
    %v11924 = vunpack.c.l.b16 %v10868
    %v11925 = vunpack.c.h.b16 %v10868
    %v11926 = vunpack.c.l.b16 %v10869
    %v11927 = vunpack.c.h.b16 %v10869
    %v11928 = vunpack.c.l.b16 %v10870
    %v11929 = vunpack.c.h.b16 %v10870
    %v11930 = vunpack.c.l.b16 %v10871
    %v11931 = vunpack.c.h.b16 %v10871
    %v11932 = vunpack.c.l.b16 %v10872
    %v11933 = vunpack.c.h.b16 %v10872
    %v11934 = vunpack.c.l.b16 %v10873
    %v11935 = vunpack.c.h.b16 %v10873
    %v11936 = vunpack.c.l.b16 %v10874
    %v11937 = vunpack.c.h.b16 %v10874
    %v11938 = vunpack.c.l.b16 %v10875
    %v11939 = vunpack.c.h.b16 %v10875
    %v11940 = vunpack.c.l.b16 %v10876
    %v11941 = vunpack.c.h.b16 %v10876
    %v11942 = vunpack.c.l.b16 %v10877
    %v11943 = vunpack.c.h.b16 %v10877
    %v11944 = vunpack.c.l.b16 %v10878
    %v11945 = vunpack.c.h.b16 %v10878
    %v11946 = vunpack.c.l.b16 %v10879
    %v11947 = vunpack.c.h.b16 %v10879
    %v11948 = vunpack.c.l.b16 %v10880
    %v11949 = vunpack.c.h.b16 %v10880
    %v11950 = vunpack.c.l.b16 %v10881
    %v11951 = vunpack.c.h.b16 %v10881
    %v11952 = vunpack.c.l.b16 %v10882
    %v11953 = vunpack.c.h.b16 %v10882
    %v11954 = vunpack.c.l.b16 %v10883
    %v11955 = vunpack.c.h.b16 %v10883
    %v11956 = vunpack.c.l.b16 %v10884
    %v11957 = vunpack.c.h.b16 %v10884
    %v11958 = vunpack.c.l.b16 %v10885
    %v11959 = vunpack.c.h.b16 %v10885
    %v11960 = vunpack.c.l.b16 %v10886
    %v11961 = vunpack.c.h.b16 %v10886
    %v11962 = vunpack.c.l.b16 %v10887
    %v11963 = vunpack.c.h.b16 %v10887
    %v11964 = vunpack.c.l.b16 %v10888
    %v11965 = vunpack.c.h.b16 %v10888
    %v11966 = vunpack.c.l.b16 %v10889
    %v11967 = vunpack.c.h.b16 %v10889
    %v11968 = vunpack.c.l.b16 %v10890
    %v11969 = vunpack.c.h.b16 %v10890
    %v11970 = vunpack.c.l.b16 %v10891
    %v11971 = vunpack.c.h.b16 %v10891
    %v11972 = vunpack.c.l.b16 %v10892
    %v11973 = vunpack.c.h.b16 %v10892
    %v11974 = vunpack.c.l.b16 %v10893
    %v11975 = vunpack.c.h.b16 %v10893
    %v11976 = vunpack.c.l.b16 %v10894
    %v11977 = vunpack.c.h.b16 %v10894
    %v11978 = vunpack.c.l.b16 %v10895
    %v11979 = vunpack.c.h.b16 %v10895
    %v11980 = vunpack.c.l.b16 %v10896
    %v11981 = vunpack.c.h.b16 %v10896
    %v11982 = vunpack.c.l.b16 %v10897
    %v11983 = vunpack.c.h.b16 %v10897
    %v11984 = vunpack.c.l.b16 %v10898
    %v11985 = vunpack.c.h.b16 %v10898
    %v11986 = vunpack.c.l.b16 %v10899
    %v11987 = vunpack.c.h.b16 %v10899
    %v11988 = vunpack.c.l.b16 %v10900
    %v11989 = vunpack.c.h.b16 %v10900
    %v11990 = vunpack.c.l.b16 %v10901
    %v11991 = vunpack.c.h.b16 %v10901
    %v11992 = vunpack.c.l.b16 %v10902
    %v11993 = vunpack.c.h.b16 %v10902
    %v11994 = vunpack.c.l.b16 %v10903
    %v11995 = vunpack.c.h.b16 %v10903
    %v11996 = vunpack.c.l.b16 %v10904
    %v11997 = vunpack.c.h.b16 %v10904
    %v11998 = vunpack.c.l.b16 %v10905
    %v11999 = vunpack.c.h.b16 %v10905
    %v12000 = vunpack.c.l.b16 %v10906
    %v12001 = vunpack.c.h.b16 %v10906
    %v12002 = vunpack.c.l.b16 %v10907
    %v12003 = vunpack.c.h.b16 %v10907
    %v12004 = vunpack.c.l.b16 %v10908
    %v12005 = vunpack.c.h.b16 %v10908
    %v12006 = vunpack.c.l.b16 %v10909
    %v12007 = vunpack.c.h.b16 %v10909
    %v12008 = vunpack.c.l.b16 %v10910
    %v12009 = vunpack.c.h.b16 %v10910
    %v12010 = vunpack.c.l.b16 %v10911
    %v12011 = vunpack.c.h.b16 %v10911
    %v12012 = vunpack.c.l.b16 %v10912
    %v12013 = vunpack.c.h.b16 %v10912
    %v12014 = vunpack.c.l.b16 %v10913
    %v12015 = vunpack.c.h.b16 %v10913
    %v12016 = vunpack.c.l.b16 %v10914
    %v12017 = vunpack.c.h.b16 %v10914
    %v12018 = vunpack.c.l.b16 %v10915
    %v12019 = vunpack.c.h.b16 %v10915
    %v12020 = vunpack.c.l.b16 %v10916
    %v12021 = vunpack.c.h.b16 %v10916
    %v12022 = vunpack.c.l.b16 %v10917
    %v12023 = vunpack.c.h.b16 %v10917
    %v12024 = vunpack.c.l.b16 %v10918
    %v12025 = vunpack.c.h.b16 %v10918
    %v12026 = vunpack.c.l.b16 %v10919
    %v12027 = vunpack.c.h.b16 %v10919
    %v12028 = vunpack.c.l.b16 %v10920
    %v12029 = vunpack.c.h.b16 %v10920
    %v12030 = vunpack.c.l.b16 %v10921
    %v12031 = vunpack.c.h.b16 %v10921
    %v12032 = vunpack.c.l.b16 %v10922
    %v12033 = vunpack.c.h.b16 %v10922
    %v12034 = vunpack.c.l.b16 %v10923
    %v12035 = vunpack.c.h.b16 %v10923
    %v12036 = vunpack.c.l.b16 %v10924
    %v12037 = vunpack.c.h.b16 %v10924
    %v12038 = vunpack.c.l.b16 %v10925
    %v12039 = vunpack.c.h.b16 %v10925
    %v12040 = vunpack.c.l.b16 %v10926
    %v12041 = vunpack.c.h.b16 %v10926
    %v12042 = vunpack.c.l.b16 %v10927
    %v12043 = vunpack.c.h.b16 %v10927
    %v12044 = vunpack.c.l.b16 %v10928
    %v12045 = vunpack.c.h.b16 %v10928
    %v12046 = vunpack.c.l.b16 %v10929
    %v12047 = vunpack.c.h.b16 %v10929
    %v12048 = vunpack.c.l.b16 %v10930
    %v12049 = vunpack.c.h.b16 %v10930
    %v12050 = vunpack.c.l.b16 %v10931
    %v12051 = vunpack.c.h.b16 %v10931
    %v12052 = vunpack.c.l.b16 %v10932
    %v12053 = vunpack.c.h.b16 %v10932
    %v12054 = vunpack.c.l.b16 %v10933
    %v12055 = vunpack.c.h.b16 %v10933
    %v12056 = vunpack.c.l.b16 %v10934
    %v12057 = vunpack.c.h.b16 %v10934
    %v12058 = vunpack.c.l.b16 %v10935
    %v12059 = vunpack.c.h.b16 %v10935
    %v12060 = vunpack.c.l.b16 %v10936
    %v12061 = vunpack.c.h.b16 %v10936
    %v12062 = vunpack.c.l.b16 %v10937
    %v12063 = vunpack.c.h.b16 %v10937
    %v12064 = vunpack.c.l.b16 %v10938
    %v12065 = vunpack.c.h.b16 %v10938
    %v12066 = vunpack.c.l.b16 %v10939
    %v12067 = vunpack.c.h.b16 %v10939
    %v12068 = vunpack.c.l.b16 %v10940
    %v12069 = vunpack.c.h.b16 %v10940
    %v12070 = vunpack.c.l.b16 %v10941
    %v12071 = vunpack.c.h.b16 %v10941
    %v12072 = vunpack.c.l.b16 %v10942
    %v12073 = vunpack.c.h.b16 %v10942
    %v12074 = vunpack.c.l.b16 %v10943
    %v12075 = vunpack.c.h.b16 %v10943
    %v12076 = vunpack.c.l.b16 %v10944
    %v12077 = vunpack.c.h.b16 %v10944
    %v12078 = vunpack.c.l.b16 %v10945
    %v12079 = vunpack.c.h.b16 %v10945
    %v12080 = vunpack.c.l.b16 %v10946
    %v12081 = vunpack.c.h.b16 %v10946
    %v12082 = vunpack.c.l.b16 %v10947
    %v12083 = vunpack.c.h.b16 %v10947
    %v12084 = vunpack.c.l.b16 %v10948
    %v12085 = vunpack.c.h.b16 %v10948
    %v12086 = vunpack.c.l.b16 %v10949
    %v12087 = vunpack.c.h.b16 %v10949
    %v12088 = vunpack.c.l.b16 %v10950
    %v12089 = vunpack.c.h.b16 %v10950
    %v12090 = vunpack.c.l.b16 %v10951
    %v12091 = vunpack.c.h.b16 %v10951
    %v12092 = vunpack.c.l.b16 %v10952
    %v12093 = vunpack.c.h.b16 %v10952
    %v12094 = vunpack.c.l.b16 %v10953
    %v12095 = vunpack.c.h.b16 %v10953
    %v12096 = vunpack.c.l.b16 %v10954
    %v12097 = vunpack.c.h.b16 %v10954
    %v12098 = vunpack.c.l.b16 %v10955
    %v12099 = vunpack.c.h.b16 %v10955
    %v12100 = vunpack.c.l.b16 %v10956
    %v12101 = vunpack.c.h.b16 %v10956
    %v12102 = vunpack.c.l.b16 %v10957
    %v12103 = vunpack.c.h.b16 %v10957
    %v12104 = vunpack.c.l.b16 %v10958
    %v12105 = vunpack.c.h.b16 %v10958
    %v12106 = vunpack.c.l.b16 %v10959
    %v12107 = vunpack.c.h.b16 %v10959
    %v12108 = vunpack.c.l.b16 %v10960
    %v12109 = vunpack.c.h.b16 %v10960
    %v12110 = vunpack.c.l.b16 %v10961
    %v12111 = vunpack.c.h.b16 %v10961
    %v12112 = vunpack.c.l.b16 %v10962
    %v12113 = vunpack.c.h.b16 %v10962
    %v12114 = vunpack.c.l.b16 %v10963
    %v12115 = vunpack.c.h.b16 %v10963
    %v12116 = vunpack.c.l.b16 %v10964
    %v12117 = vunpack.c.h.b16 %v10964
    %v12118 = vunpack.c.l.b16 %v10965
    %v12119 = vunpack.c.h.b16 %v10965
    %v12120 = vunpack.c.l.b16 %v10966
    %v12121 = vunpack.c.h.b16 %v10966
    %v12122 = vunpack.c.l.b16 %v10967
    %v12123 = vunpack.c.h.b16 %v10967
    %v12124 = vunpack.c.l.b16 %v10968
    %v12125 = vunpack.c.h.b16 %v10968
    %v12126 = vunpack.c.l.b16 %v10969
    %v12127 = vunpack.c.h.b16 %v10969
    %v12128 = vunpack.c.l.b16 %v10970
    %v12129 = vunpack.c.h.b16 %v10970
    %v12130 = vunpack.c.l.b16 %v10971
    %v12131 = vunpack.c.h.b16 %v10971
    %v12132 = vunpack.c.l.b16 %v10972
    %v12133 = vunpack.c.h.b16 %v10972
    %v12134 = vunpack.c.l.b16 %v10973
    %v12135 = vunpack.c.h.b16 %v10973
    %v12136 = vunpack.c.l.b16 %v10974
    %v12137 = vunpack.c.h.b16 %v10974
    %v12138 = vunpack.c.l.b16 %v10975
    %v12139 = vunpack.c.h.b16 %v10975
    %v12140 = vunpack.c.l.b16 %v10976
    %v12141 = vunpack.c.h.b16 %v10976
    %v12142 = vunpack.c.l.b16 %v10977
    %v12143 = vunpack.c.h.b16 %v10977
    %v12144 = vunpack.c.l.b16 %v10978
    %v12145 = vunpack.c.h.b16 %v10978
    %v12146 = vunpack.c.l.b16 %v10979
    %v12147 = vunpack.c.h.b16 %v10979
    %v12148 = vunpack.c.l.b16 %v10980
    %v12149 = vunpack.c.h.b16 %v10980
    %v12150 = vunpack.c.l.b16 %v10981
    %v12151 = vunpack.c.h.b16 %v10981
    %v12152 = vunpack.c.l.b16 %v10982
    %v12153 = vunpack.c.h.b16 %v10982
    %v12154 = vunpack.c.l.b16 %v10983
    %v12155 = vunpack.c.h.b16 %v10983
    %v12156 = vunpack.c.l.b16 %v10984
    %v12157 = vunpack.c.h.b16 %v10984
    %v12158 = vunpack.c.l.b16 %v10985
    %v12159 = vunpack.c.h.b16 %v10985
    %v12160 = vunpack.c.l.b16 %v10986
    %v12161 = vunpack.c.h.b16 %v10986
    %v12162 = vunpack.c.l.b16 %v10987
    %v12163 = vunpack.c.h.b16 %v10987
    %v12164 = vunpack.c.l.b16 %v10988
    %v12165 = vunpack.c.h.b16 %v10988
    %v12166 = vunpack.c.l.b16 %v10989
    %v12167 = vunpack.c.h.b16 %v10989
    %v12168 = vunpack.c.l.b16 %v10990
    %v12169 = vunpack.c.h.b16 %v10990
    %v12170 = vunpack.c.l.b16 %v10991
    %v12171 = vunpack.c.h.b16 %v10991
    %v12172 = vunpack.c.l.b16 %v10992
    %v12173 = vunpack.c.h.b16 %v10992
    %v12174 = vunpack.c.l.b16 %v10993
    %v12175 = vunpack.c.h.b16 %v10993
    %v12176 = vunpack.c.l.b16 %v10994
    %v12177 = vunpack.c.h.b16 %v10994
    %v12178 = vunpack.c.l.b16 %v10995
    %v12179 = vunpack.c.h.b16 %v10995
    %v12180 = vpack.c.b16 %v11418, %v11412
    %v12181 = vpack.c.b16 %v11419, %v11413
    %v12182 = vpack.c.b16 %v11420, %v11414
    %v12183 = vpack.c.b16 %v11421, %v11415
    %v12184 = vpack.c.b16 %v11422, %v11416
    %v12185 = vpack.c.b16 %v11423, %v11417
    %v12186 = vpack.c.b16 %v11430, %v11424
    %v12187 = vpack.c.b16 %v11431, %v11425
    %v12188 = vpack.c.b16 %v11432, %v11426
    %v12189 = vpack.c.b16 %v11433, %v11427
    %v12190 = vpack.c.b16 %v11434, %v11428
    %v12191 = vpack.c.b16 %v11435, %v11429
    %v12192 = vpack.c.b16 %v11442, %v11436
    %v12193 = vpack.c.b16 %v11443, %v11437
    %v12194 = vpack.c.b16 %v11444, %v11438
    %v12195 = vpack.c.b16 %v11445, %v11439
    %v12196 = vpack.c.b16 %v11446, %v11440
    %v12197 = vpack.c.b16 %v11447, %v11441
    %v12198 = vpack.c.b16 %v11454, %v11448
    %v12199 = vpack.c.b16 %v11455, %v11449
    %v12200 = vpack.c.b16 %v11456, %v11450
    %v12201 = vpack.c.b16 %v11457, %v11451
    %v12202 = vpack.c.b16 %v11458, %v11452
    %v12203 = vpack.c.b16 %v11459, %v11453
    %v12204 = vpack.c.b16 %v11466, %v11460
    %v12205 = vpack.c.b16 %v11467, %v11461
    %v12206 = vpack.c.b16 %v11468, %v11462
    %v12207 = vpack.c.b16 %v11469, %v11463
    %v12208 = vpack.c.b16 %v11470, %v11464
    %v12209 = vpack.c.b16 %v11471, %v11465
    %v12210 = vpack.c.b16 %v11478, %v11472
    %v12211 = vpack.c.b16 %v11479, %v11473
    %v12212 = vpack.c.b16 %v11480, %v11474
    %v12213 = vpack.c.b16 %v11481, %v11475
    %v12214 = vpack.c.b16 %v11482, %v11476
    %v12215 = vpack.c.b16 %v11483, %v11477
    %v12216 = vpack.c.b16 %v11490, %v11484
    %v12217 = vpack.c.b16 %v11491, %v11485
    %v12218 = vpack.c.b16 %v11492, %v11486
    %v12219 = vpack.c.b16 %v11493, %v11487
    %v12220 = vpack.c.b16 %v11494, %v11488
    %v12221 = vpack.c.b16 %v11495, %v11489
    %v12222 = vpack.c.b16 %v11502, %v11496
    %v12223 = vpack.c.b16 %v11503, %v11497
    %v12224 = vpack.c.b16 %v11504, %v11498
    %v12225 = vpack.c.b16 %v11505, %v11499
    %v12226 = vpack.c.b16 %v11506, %v11500
    %v12227 = vpack.c.b16 %v11507, %v11501
    %v12228 = vpack.c.b16 %v11514, %v11508
    %v12229 = vpack.c.b16 %v11515, %v11509
    %v12230 = vpack.c.b16 %v11516, %v11510
    %v12231 = vpack.c.b16 %v11517, %v11511
    %v12232 = vpack.c.b16 %v11518, %v11512
    %v12233 = vpack.c.b16 %v11519, %v11513
    %v12234 = vpack.c.b16 %v11526, %v11520
    %v12235 = vpack.c.b16 %v11527, %v11521
    %v12236 = vpack.c.b16 %v11528, %v11522
    %v12237 = vpack.c.b16 %v11529, %v11523
    %v12238 = vpack.c.b16 %v11530, %v11524
    %v12239 = vpack.c.b16 %v11531, %v11525
    %v12240 = vpack.c.b16 %v11538, %v11532
    %v12241 = vpack.c.b16 %v11539, %v11533
    %v12242 = vpack.c.b16 %v11540, %v11534
    %v12243 = vpack.c.b16 %v11541, %v11535
    %v12244 = vpack.c.b16 %v11542, %v11536
    %v12245 = vpack.c.b16 %v11543, %v11537
    %v12246 = vpack.c.b16 %v11550, %v11544
    %v12247 = vpack.c.b16 %v11551, %v11545
    %v12248 = vpack.c.b16 %v11552, %v11546
    %v12249 = vpack.c.b16 %v11553, %v11547
    %v12250 = vpack.c.b16 %v11554, %v11548
    %v12251 = vpack.c.b16 %v11555, %v11549
    %v12252 = vpack.c.b16 %v11562, %v11556
    %v12253 = vpack.c.b16 %v11563, %v11557
    %v12254 = vpack.c.b16 %v11564, %v11558
    %v12255 = vpack.c.b16 %v11565, %v11559
    %v12256 = vpack.c.b16 %v11566, %v11560
    %v12257 = vpack.c.b16 %v11567, %v11561
    %v12258 = vpack.c.b16 %v11574, %v11568
    %v12259 = vpack.c.b16 %v11575, %v11569
    %v12260 = vpack.c.b16 %v11576, %v11570
    %v12261 = vpack.c.b16 %v11577, %v11571
    %v12262 = vpack.c.b16 %v11578, %v11572
    %v12263 = vpack.c.b16 %v11579, %v11573
    %v12264 = vpack.c.b16 %v11586, %v11580
    %v12265 = vpack.c.b16 %v11587, %v11581
    %v12266 = vpack.c.b16 %v11588, %v11582
    %v12267 = vpack.c.b16 %v11589, %v11583
    %v12268 = vpack.c.b16 %v11590, %v11584
    %v12269 = vpack.c.b16 %v11591, %v11585
    %v12270 = vpack.c.b16 %v11598, %v11592
    %v12271 = vpack.c.b16 %v11599, %v11593
    %v12272 = vpack.c.b16 %v11600, %v11594
    %v12273 = vpack.c.b16 %v11601, %v11595
    %v12274 = vpack.c.b16 %v11602, %v11596
    %v12275 = vpack.c.b16 %v11603, %v11597
    %v12276 = vpack.c.b16 %v11610, %v11604
    %v12277 = vpack.c.b16 %v11611, %v11605
    %v12278 = vpack.c.b16 %v11612, %v11606
    %v12279 = vpack.c.b16 %v11613, %v11607
    %v12280 = vpack.c.b16 %v11614, %v11608
    %v12281 = vpack.c.b16 %v11615, %v11609
    %v12282 = vpack.c.b16 %v11622, %v11616
    %v12283 = vpack.c.b16 %v11623, %v11617
    %v12284 = vpack.c.b16 %v11624, %v11618
    %v12285 = vpack.c.b16 %v11625, %v11619
    %v12286 = vpack.c.b16 %v11626, %v11620
    %v12287 = vpack.c.b16 %v11627, %v11621
    %v12288 = vpack.c.b16 %v11634, %v11628
    %v12289 = vpack.c.b16 %v11635, %v11629
    %v12290 = vpack.c.b16 %v11636, %v11630
    %v12291 = vpack.c.b16 %v11637, %v11631
    %v12292 = vpack.c.b16 %v11638, %v11632
    %v12293 = vpack.c.b16 %v11639, %v11633
    %v12294 = vpack.c.b16 %v11646, %v11640
    %v12295 = vpack.c.b16 %v11647, %v11641
    %v12296 = vpack.c.b16 %v11648, %v11642
    %v12297 = vpack.c.b16 %v11649, %v11643
    %v12298 = vpack.c.b16 %v11650, %v11644
    %v12299 = vpack.c.b16 %v11651, %v11645
    %v12300 = vpack.c.b16 %v11658, %v11652
    %v12301 = vpack.c.b16 %v11659, %v11653
    %v12302 = vpack.c.b16 %v11660, %v11654
    %v12303 = vpack.c.b16 %v11661, %v11655
    %v12304 = vpack.c.b16 %v11662, %v11656
    %v12305 = vpack.c.b16 %v11663, %v11657
    %v12306 = vpack.c.b16 %v11670, %v11664
    %v12307 = vpack.c.b16 %v11671, %v11665
    %v12308 = vpack.c.b16 %v11672, %v11666
    %v12309 = vpack.c.b16 %v11673, %v11667
    %v12310 = vpack.c.b16 %v11674, %v11668
    %v12311 = vpack.c.b16 %v11675, %v11669
    %v12312 = vpack.c.b16 %v11682, %v11676
    %v12313 = vpack.c.b16 %v11683, %v11677
    %v12314 = vpack.c.b16 %v11684, %v11678
    %v12315 = vpack.c.b16 %v11685, %v11679
    %v12316 = vpack.c.b16 %v11686, %v11680
    %v12317 = vpack.c.b16 %v11687, %v11681
    %v12318 = vpack.c.b16 %v11694, %v11688
    %v12319 = vpack.c.b16 %v11695, %v11689
    %v12320 = vpack.c.b16 %v11696, %v11690
    %v12321 = vpack.c.b16 %v11697, %v11691
    %v12322 = vpack.c.b16 %v11698, %v11692
    %v12323 = vpack.c.b16 %v11699, %v11693
    %v12324 = vpack.c.b16 %v11706, %v11700
    %v12325 = vpack.c.b16 %v11707, %v11701
    %v12326 = vpack.c.b16 %v11708, %v11702
    %v12327 = vpack.c.b16 %v11709, %v11703
    %v12328 = vpack.c.b16 %v11710, %v11704
    %v12329 = vpack.c.b16 %v11711, %v11705
    %v12330 = vpack.c.b16 %v11718, %v11712
    %v12331 = vpack.c.b16 %v11719, %v11713
    %v12332 = vpack.c.b16 %v11720, %v11714
    %v12333 = vpack.c.b16 %v11721, %v11715
    %v12334 = vpack.c.b16 %v11722, %v11716
    %v12335 = vpack.c.b16 %v11723, %v11717
    %v12336 = vpack.c.b16 %v11730, %v11724
    %v12337 = vpack.c.b16 %v11731, %v11725
    %v12338 = vpack.c.b16 %v11732, %v11726
    %v12339 = vpack.c.b16 %v11733, %v11727
    %v12340 = vpack.c.b16 %v11734, %v11728
    %v12341 = vpack.c.b16 %v11735, %v11729
    %v12342 = vpack.c.b16 %v11742, %v11736
    %v12343 = vpack.c.b16 %v11743, %v11737
    %v12344 = vpack.c.b16 %v11744, %v11738
    %v12345 = vpack.c.b16 %v11745, %v11739
    %v12346 = vpack.c.b16 %v11746, %v11740
    %v12347 = vpack.c.b16 %v11747, %v11741
    %v12348 = vpack.c.b16 %v11754, %v11748
    %v12349 = vpack.c.b16 %v11755, %v11749
    %v12350 = vpack.c.b16 %v11756, %v11750
    %v12351 = vpack.c.b16 %v11757, %v11751
    %v12352 = vpack.c.b16 %v11758, %v11752
    %v12353 = vpack.c.b16 %v11759, %v11753
    %v12354 = vpack.c.b16 %v11766, %v11760
    %v12355 = vpack.c.b16 %v11767, %v11761
    %v12356 = vpack.c.b16 %v11768, %v11762
    %v12357 = vpack.c.b16 %v11769, %v11763
    %v12358 = vpack.c.b16 %v11770, %v11764
    %v12359 = vpack.c.b16 %v11771, %v11765
    %v12360 = vpack.c.b16 %v11778, %v11772
    %v12361 = vpack.c.b16 %v11779, %v11773
    %v12362 = vpack.c.b16 %v11780, %v11774
    %v12363 = vpack.c.b16 %v11781, %v11775
    %v12364 = vpack.c.b16 %v11782, %v11776
    %v12365 = vpack.c.b16 %v11783, %v11777
    %v12366 = vpack.c.b16 %v11790, %v11784
    %v12367 = vpack.c.b16 %v11791, %v11785
    %v12368 = vpack.c.b16 %v11792, %v11786
    %v12369 = vpack.c.b16 %v11793, %v11787
    %v12370 = vpack.c.b16 %v11794, %v11788
    %v12371 = vpack.c.b16 %v11795, %v11789
    %v12372 = vpack.c.b16 %v11802, %v11796
    %v12373 = vpack.c.b16 %v11803, %v11797
    %v12374 = vpack.c.b16 %v11804, %v11798
    %v12375 = vpack.c.b16 %v11805, %v11799
    %v12376 = vpack.c.b16 %v11806, %v11800
    %v12377 = vpack.c.b16 %v11807, %v11801
    %v12378 = vpack.c.b16 %v11814, %v11808
    %v12379 = vpack.c.b16 %v11815, %v11809
    %v12380 = vpack.c.b16 %v11816, %v11810
    %v12381 = vpack.c.b16 %v11817, %v11811
    %v12382 = vpack.c.b16 %v11818, %v11812
    %v12383 = vpack.c.b16 %v11819, %v11813
    %v12384 = vpack.c.b16 %v11826, %v11820
    %v12385 = vpack.c.b16 %v11827, %v11821
    %v12386 = vpack.c.b16 %v11828, %v11822
    %v12387 = vpack.c.b16 %v11829, %v11823
    %v12388 = vpack.c.b16 %v11830, %v11824
    %v12389 = vpack.c.b16 %v11831, %v11825
    %v12390 = vpack.c.b16 %v11838, %v11832
    %v12391 = vpack.c.b16 %v11839, %v11833
    %v12392 = vpack.c.b16 %v11840, %v11834
    %v12393 = vpack.c.b16 %v11841, %v11835
    %v12394 = vpack.c.b16 %v11842, %v11836
    %v12395 = vpack.c.b16 %v11843, %v11837
    %v12396 = vpack.c.b16 %v11850, %v11844
    %v12397 = vpack.c.b16 %v11851, %v11845
    %v12398 = vpack.c.b16 %v11852, %v11846
    %v12399 = vpack.c.b16 %v11853, %v11847
    %v12400 = vpack.c.b16 %v11854, %v11848
    %v12401 = vpack.c.b16 %v11855, %v11849
    %v12402 = vpack.c.b16 %v11862, %v11856
    %v12403 = vpack.c.b16 %v11863, %v11857
    %v12404 = vpack.c.b16 %v11864, %v11858
    %v12405 = vpack.c.b16 %v11865, %v11859
    %v12406 = vpack.c.b16 %v11866, %v11860
    %v12407 = vpack.c.b16 %v11867, %v11861
    %v12408 = vpack.c.b16 %v11874, %v11868
    %v12409 = vpack.c.b16 %v11875, %v11869
    %v12410 = vpack.c.b16 %v11876, %v11870
    %v12411 = vpack.c.b16 %v11877, %v11871
    %v12412 = vpack.c.b16 %v11878, %v11872
    %v12413 = vpack.c.b16 %v11879, %v11873
    %v12414 = vpack.c.b16 %v11886, %v11880
    %v12415 = vpack.c.b16 %v11887, %v11881
    %v12416 = vpack.c.b16 %v11888, %v11882
    %v12417 = vpack.c.b16 %v11889, %v11883
    %v12418 = vpack.c.b16 %v11890, %v11884
    %v12419 = vpack.c.b16 %v11891, %v11885
    %v12420 = vpack.c.b16 %v11898, %v11892
    %v12421 = vpack.c.b16 %v11899, %v11893
    %v12422 = vpack.c.b16 %v11900, %v11894
    %v12423 = vpack.c.b16 %v11901, %v11895
    %v12424 = vpack.c.b16 %v11902, %v11896
    %v12425 = vpack.c.b16 %v11903, %v11897
    %v12426 = vpack.c.b16 %v11910, %v11904
    %v12427 = vpack.c.b16 %v11911, %v11905
    %v12428 = vpack.c.b16 %v11912, %v11906
    %v12429 = vpack.c.b16 %v11913, %v11907
    %v12430 = vpack.c.b16 %v11914, %v11908
    %v12431 = vpack.c.b16 %v11915, %v11909
    %v12432 = vpack.c.b16 %v11922, %v11916
    %v12433 = vpack.c.b16 %v11923, %v11917
    %v12434 = vpack.c.b16 %v11924, %v11918
    %v12435 = vpack.c.b16 %v11925, %v11919
    %v12436 = vpack.c.b16 %v11926, %v11920
    %v12437 = vpack.c.b16 %v11927, %v11921
    %v12438 = vpack.c.b16 %v11934, %v11928
    %v12439 = vpack.c.b16 %v11935, %v11929
    %v12440 = vpack.c.b16 %v11936, %v11930
    %v12441 = vpack.c.b16 %v11937, %v11931
    %v12442 = vpack.c.b16 %v11938, %v11932
    %v12443 = vpack.c.b16 %v11939, %v11933
    %v12444 = vpack.c.b16 %v11946, %v11940
    %v12445 = vpack.c.b16 %v11947, %v11941
    %v12446 = vpack.c.b16 %v11948, %v11942
    %v12447 = vpack.c.b16 %v11949, %v11943
    %v12448 = vpack.c.b16 %v11950, %v11944
    %v12449 = vpack.c.b16 %v11951, %v11945
    %v12450 = vpack.c.b16 %v11958, %v11952
    %v12451 = vpack.c.b16 %v11959, %v11953
    %v12452 = vpack.c.b16 %v11960, %v11954
    %v12453 = vpack.c.b16 %v11961, %v11955
    %v12454 = vpack.c.b16 %v11962, %v11956
    %v12455 = vpack.c.b16 %v11963, %v11957
    %v12456 = vpack.c.b16 %v11970, %v11964
    %v12457 = vpack.c.b16 %v11971, %v11965
    %v12458 = vpack.c.b16 %v11972, %v11966
    %v12459 = vpack.c.b16 %v11973, %v11967
    %v12460 = vpack.c.b16 %v11974, %v11968
    %v12461 = vpack.c.b16 %v11975, %v11969
    %v12462 = vpack.c.b16 %v11982, %v11976
    %v12463 = vpack.c.b16 %v11983, %v11977
    %v12464 = vpack.c.b16 %v11984, %v11978
    %v12465 = vpack.c.b16 %v11985, %v11979
    %v12466 = vpack.c.b16 %v11986, %v11980
    %v12467 = vpack.c.b16 %v11987, %v11981
    %v12468 = vpack.c.b16 %v11994, %v11988
    %v12469 = vpack.c.b16 %v11995, %v11989
    %v12470 = vpack.c.b16 %v11996, %v11990
    %v12471 = vpack.c.b16 %v11997, %v11991
    %v12472 = vpack.c.b16 %v11998, %v11992
    %v12473 = vpack.c.b16 %v11999, %v11993
    %v12474 = vpack.c.b16 %v12006, %v12000
    %v12475 = vpack.c.b16 %v12007, %v12001
    %v12476 = vpack.c.b16 %v12008, %v12002
    %v12477 = vpack.c.b16 %v12009, %v12003
    %v12478 = vpack.c.b16 %v12010, %v12004
    %v12479 = vpack.c.b16 %v12011, %v12005
    %v12480 = vpack.c.b16 %v12018, %v12012
    %v12481 = vpack.c.b16 %v12019, %v12013
    %v12482 = vpack.c.b16 %v12020, %v12014
    %v12483 = vpack.c.b16 %v12021, %v12015
    %v12484 = vpack.c.b16 %v12022, %v12016
    %v12485 = vpack.c.b16 %v12023, %v12017
    %v12486 = vpack.c.b16 %v12030, %v12024
    %v12487 = vpack.c.b16 %v12031, %v12025
    %v12488 = vpack.c.b16 %v12032, %v12026
    %v12489 = vpack.c.b16 %v12033, %v12027
    %v12490 = vpack.c.b16 %v12034, %v12028
    %v12491 = vpack.c.b16 %v12035, %v12029
    %v12492 = vpack.c.b16 %v12042, %v12036
    %v12493 = vpack.c.b16 %v12043, %v12037
    %v12494 = vpack.c.b16 %v12044, %v12038
    %v12495 = vpack.c.b16 %v12045, %v12039
    %v12496 = vpack.c.b16 %v12046, %v12040
    %v12497 = vpack.c.b16 %v12047, %v12041
    %v12498 = vpack.c.b16 %v12054, %v12048
    %v12499 = vpack.c.b16 %v12055, %v12049
    %v12500 = vpack.c.b16 %v12056, %v12050
    %v12501 = vpack.c.b16 %v12057, %v12051
    %v12502 = vpack.c.b16 %v12058, %v12052
    %v12503 = vpack.c.b16 %v12059, %v12053
    %v12504 = vpack.c.b16 %v12066, %v12060
    %v12505 = vpack.c.b16 %v12067, %v12061
    %v12506 = vpack.c.b16 %v12068, %v12062
    %v12507 = vpack.c.b16 %v12069, %v12063
    %v12508 = vpack.c.b16 %v12070, %v12064
    %v12509 = vpack.c.b16 %v12071, %v12065
    %v12510 = vpack.c.b16 %v12078, %v12072
    %v12511 = vpack.c.b16 %v12079, %v12073
    %v12512 = vpack.c.b16 %v12080, %v12074
    %v12513 = vpack.c.b16 %v12081, %v12075
    %v12514 = vpack.c.b16 %v12082, %v12076
    %v12515 = vpack.c.b16 %v12083, %v12077
    %v12516 = vpack.c.b16 %v12090, %v12084
    %v12517 = vpack.c.b16 %v12091, %v12085
    %v12518 = vpack.c.b16 %v12092, %v12086
    %v12519 = vpack.c.b16 %v12093, %v12087
    %v12520 = vpack.c.b16 %v12094, %v12088
    %v12521 = vpack.c.b16 %v12095, %v12089
    %v12522 = vpack.c.b16 %v12102, %v12096
    %v12523 = vpack.c.b16 %v12103, %v12097
    %v12524 = vpack.c.b16 %v12104, %v12098
    %v12525 = vpack.c.b16 %v12105, %v12099
    %v12526 = vpack.c.b16 %v12106, %v12100
    %v12527 = vpack.c.b16 %v12107, %v12101
    %v12528 = vpack.c.b16 %v12114, %v12108
    %v12529 = vpack.c.b16 %v12115, %v12109
    %v12530 = vpack.c.b16 %v12116, %v12110
    %v12531 = vpack.c.b16 %v12117, %v12111
    %v12532 = vpack.c.b16 %v12118, %v12112
    %v12533 = vpack.c.b16 %v12119, %v12113
    %v12534 = vpack.c.b16 %v12126, %v12120
    %v12535 = vpack.c.b16 %v12127, %v12121
    %v12536 = vpack.c.b16 %v12128, %v12122
    %v12537 = vpack.c.b16 %v12129, %v12123
    %v12538 = vpack.c.b16 %v12130, %v12124
    %v12539 = vpack.c.b16 %v12131, %v12125
    %v12540 = vpack.c.b16 %v12138, %v12132
    %v12541 = vpack.c.b16 %v12139, %v12133
    %v12542 = vpack.c.b16 %v12140, %v12134
    %v12543 = vpack.c.b16 %v12141, %v12135
    %v12544 = vpack.c.b16 %v12142, %v12136
    %v12545 = vpack.c.b16 %v12143, %v12137
    %v12546 = vpack.c.b16 %v12150, %v12144
    %v12547 = vpack.c.b16 %v12151, %v12145
    %v12548 = vpack.c.b16 %v12152, %v12146
    %v12549 = vpack.c.b16 %v12153, %v12147
    %v12550 = vpack.c.b16 %v12154, %v12148
    %v12551 = vpack.c.b16 %v12155, %v12149
    %v12552 = vpack.c.b16 %v12162, %v12156
    %v12553 = vpack.c.b16 %v12163, %v12157
    %v12554 = vpack.c.b16 %v12164, %v12158
    %v12555 = vpack.c.b16 %v12165, %v12159
    %v12556 = vpack.c.b16 %v12166, %v12160
    %v12557 = vpack.c.b16 %v12167, %v12161
    %v12558 = vpack.c.b16 %v12174, %v12168
    %v12559 = vpack.c.b16 %v12175, %v12169
    %v12560 = vpack.c.b16 %v12176, %v12170
    %v12561 = vpack.c.b16 %v12177, %v12171
    %v12562 = vpack.c.b16 %v12178, %v12172
    %v12563 = vpack.c.b16 %v12179, %v12173
    %12948 = vmatprep.subr.bf16.mxu0 %v12181
    %12949 = vmatpush1.bf16.msra.mxu0 %v12180
    %12950 = vmatprep.subr.bf16.mxu0 %v12187
    %12951 = vmatpush1.bf16.msra.mxu0 %v12186
    %12952 = vmatprep.subr.bf16.mxu0 %v12193
    %12953 = vmatpush1.bf16.msra.mxu0 %v12192
    %12954 = vmatprep.subr.bf16.mxu0 %v12199
    %12955 = vmatpush1.bf16.msra.mxu0 %v12198
    %12956 = vmatprep.subr.bf16.mxu0 %v12205
    %12957 = vmatpush1.bf16.msra.mxu0 %v12204
    %12958 = vmatprep.subr.bf16.mxu0 %v12211
    %12959 = vmatpush1.bf16.msra.mxu0 %v12210
    %12960 = vmatprep.subr.bf16.mxu0 %v12217
    %12961 = vmatpush1.bf16.msra.mxu0 %v12216
    %12962 = vmatprep.subr.bf16.mxu0 %v12223
    %12963 = vmatpush1.bf16.msra.mxu0 %v12222
    %12964 = vmatprep.subr.bf16.mxu0 %v12229
    %12965 = vmatpush1.bf16.msra.mxu0 %v12228
    %12966 = vmatprep.subr.bf16.mxu0 %v12235
    %12967 = vmatpush1.bf16.msra.mxu0 %v12234
    %12968 = vmatprep.subr.bf16.mxu0 %v12241
    %12969 = vmatpush1.bf16.msra.mxu0 %v12240
    %12970 = vmatprep.subr.bf16.mxu0 %v12247
    %12971 = vmatpush1.bf16.msra.mxu0 %v12246
    %12972 = vmatprep.subr.bf16.mxu0 %v12253
    %12973 = vmatpush1.bf16.msra.mxu0 %v12252
    %12974 = vmatprep.subr.bf16.mxu0 %v12259
    %12975 = vmatpush1.bf16.msra.mxu0 %v12258
    %12976 = vmatprep.subr.bf16.mxu0 %v12265
    %12977 = vmatpush1.bf16.msra.mxu0 %v12264
    %12978 = vmatprep.subr.bf16.mxu0 %v12271
    %12979 = vmatpush1.bf16.msra.mxu0 %v12270
    %12980 = vmatprep.mubr.bf16.mxu0 %v10605
    %12981 = vmatmul.mubr.bf16.gmra.mrb[0].mxu0 %v10604
    %v12982 = vpop.f32.mrb[0].mxu0
    %v12983 = vadd.f32 %v11001, %v12982
    %v12984 = vpop.f32.mrb[0].mxu0
    %v12985 = vadd.f32 %v11005, %v12984
    %v12986 = vpop.f32.mrb[0].mxu0
    %v12987 = vpop.f32.mrb[0].mxu0
    %12988 = vdwg.mxu0
    %12989 = vmatprep.subr.bf16.mxu0 %v12277
    %12990 = vmatpush1.bf16.msra.mxu0 %v12276
    %12991 = vmatprep.subr.bf16.mxu0 %v12283
    %12992 = vmatpush1.bf16.msra.mxu0 %v12282
    %12993 = vmatprep.subr.bf16.mxu0 %v12289
    %12994 = vmatpush1.bf16.msra.mxu0 %v12288
    %12995 = vmatprep.subr.bf16.mxu0 %v12295
    %12996 = vmatpush1.bf16.msra.mxu0 %v12294
    %12997 = vmatprep.subr.bf16.mxu0 %v12301
    %12998 = vmatpush1.bf16.msra.mxu0 %v12300
    %12999 = vmatprep.subr.bf16.mxu0 %v12307
    %13000 = vmatpush1.bf16.msra.mxu0 %v12306
    %13001 = vmatprep.subr.bf16.mxu0 %v12313
    %13002 = vmatpush1.bf16.msra.mxu0 %v12312
    %13003 = vmatprep.subr.bf16.mxu0 %v12319
    %13004 = vmatpush1.bf16.msra.mxu0 %v12318
    %13005 = vmatprep.subr.bf16.mxu0 %v12325
    %13006 = vmatpush1.bf16.msra.mxu0 %v12324
    %13007 = vmatprep.subr.bf16.mxu0 %v12331
    %13008 = vmatpush1.bf16.msra.mxu0 %v12330
    %13009 = vmatprep.subr.bf16.mxu0 %v12337
    %13010 = vmatpush1.bf16.msra.mxu0 %v12336
    %13011 = vmatprep.subr.bf16.mxu0 %v12343
    %13012 = vmatpush1.bf16.msra.mxu0 %v12342
    %13013 = vmatprep.subr.bf16.mxu0 %v12349
    %13014 = vmatpush1.bf16.msra.mxu0 %v12348
    %13015 = vmatprep.subr.bf16.mxu0 %v12355
    %13016 = vmatpush1.bf16.msra.mxu0 %v12354
    %13017 = vmatprep.subr.bf16.mxu0 %v12361
    %13018 = vmatpush1.bf16.msra.mxu0 %v12360
    %13019 = vmatprep.subr.bf16.mxu0 %v12367
    %13020 = vmatpush1.bf16.msra.mxu0 %v12366
    %13021 = vmatprep.mubr.bf16.mxu0 %v10607
    %13022 = vmatmul.mubr.bf16.gmra.mrb[0].mxu0 %v10606
    %v13023 = vpop.f32.mrb[0].mxu0
    %v13024 = vadd.f32 %v12983, %v13023
    %v13025 = vpop.f32.mrb[0].mxu0
    %v13026 = vadd.f32 %v12985, %v13025
    %v13027 = vpop.f32.mrb[0].mxu0
    %v13028 = vpop.f32.mrb[0].mxu0
    %13029 = vdwg.mxu0
    %13030 = vmatprep.subr.bf16.mxu0 %v12373
    %13031 = vmatpush1.bf16.msra.mxu0 %v12372
    %13032 = vmatprep.subr.bf16.mxu0 %v12379
    %13033 = vmatpush1.bf16.msra.mxu0 %v12378
    %13034 = vmatprep.subr.bf16.mxu0 %v12385
    %13035 = vmatpush1.bf16.msra.mxu0 %v12384
    %13036 = vmatprep.subr.bf16.mxu0 %v12391
    %13037 = vmatpush1.bf16.msra.mxu0 %v12390
    %13038 = vmatprep.subr.bf16.mxu0 %v12397
    %13039 = vmatpush1.bf16.msra.mxu0 %v12396
    %13040 = vmatprep.subr.bf16.mxu0 %v12403
    %13041 = vmatpush1.bf16.msra.mxu0 %v12402
    %13042 = vmatprep.subr.bf16.mxu0 %v12409
    %13043 = vmatpush1.bf16.msra.mxu0 %v12408
    %13044 = vmatprep.subr.bf16.mxu0 %v12415
    %13045 = vmatpush1.bf16.msra.mxu0 %v12414
    %13046 = vmatprep.subr.bf16.mxu0 %v12421
    %13047 = vmatpush1.bf16.msra.mxu0 %v12420
    %13048 = vmatprep.subr.bf16.mxu0 %v12427
    %13049 = vmatpush1.bf16.msra.mxu0 %v12426
    %13050 = vmatprep.subr.bf16.mxu0 %v12433
    %13051 = vmatpush1.bf16.msra.mxu0 %v12432
    %13052 = vmatprep.subr.bf16.mxu0 %v12439
    %13053 = vmatpush1.bf16.msra.mxu0 %v12438
    %13054 = vmatprep.subr.bf16.mxu0 %v12445
    %13055 = vmatpush1.bf16.msra.mxu0 %v12444
    %13056 = vmatprep.subr.bf16.mxu0 %v12451
    %13057 = vmatpush1.bf16.msra.mxu0 %v12450
    %13058 = vmatprep.subr.bf16.mxu0 %v12457
    %13059 = vmatpush1.bf16.msra.mxu0 %v12456
    %13060 = vmatprep.subr.bf16.mxu0 %v12463
    %13061 = vmatpush1.bf16.msra.mxu0 %v12462
    %13062 = vmatprep.mubr.bf16.mxu0 %v10609
    %13063 = vmatmul.mubr.bf16.gmra.mrb[0].mxu0 %v10608
    %v13064 = vpop.f32.mrb[0].mxu0
    %v13065 = vadd.f32 %v13024, %v13064
    %v13066 = vpop.f32.mrb[0].mxu0
    %v13067 = vadd.f32 %v13026, %v13066
    %v13068 = vpop.f32.mrb[0].mxu0
    %v13069 = vpop.f32.mrb[0].mxu0
    %13070 = vdwg.mxu0
    %13071 = vmatprep.subr.bf16.mxu0 %v12469
    %13072 = vmatpush1.bf16.msra.mxu0 %v12468
    %13073 = vmatprep.subr.bf16.mxu0 %v12475
    %13074 = vmatpush1.bf16.msra.mxu0 %v12474
    %13075 = vmatprep.subr.bf16.mxu0 %v12481
    %13076 = vmatpush1.bf16.msra.mxu0 %v12480
    %13077 = vmatprep.subr.bf16.mxu0 %v12487
    %13078 = vmatpush1.bf16.msra.mxu0 %v12486
    %13079 = vmatprep.subr.bf16.mxu0 %v12493
    %13080 = vmatpush1.bf16.msra.mxu0 %v12492
    %13081 = vmatprep.subr.bf16.mxu0 %v12499
    %13082 = vmatpush1.bf16.msra.mxu0 %v12498
    %13083 = vmatprep.subr.bf16.mxu0 %v12505
    %13084 = vmatpush1.bf16.msra.mxu0 %v12504
    %13085 = vmatprep.subr.bf16.mxu0 %v12511
    %13086 = vmatpush1.bf16.msra.mxu0 %v12510
    %13087 = vmatprep.subr.bf16.mxu0 %v12517
    %13088 = vmatpush1.bf16.msra.mxu0 %v12516
    %13089 = vmatprep.subr.bf16.mxu0 %v12523
    %13090 = vmatpush1.bf16.msra.mxu0 %v12522
    %13091 = vmatprep.subr.bf16.mxu0 %v12529
    %13092 = vmatpush1.bf16.msra.mxu0 %v12528
    %13093 = vmatprep.subr.bf16.mxu0 %v12535
    %13094 = vmatpush1.bf16.msra.mxu0 %v12534
    %13095 = vmatprep.subr.bf16.mxu0 %v12541
    %13096 = vmatpush1.bf16.msra.mxu0 %v12540
    %13097 = vmatprep.subr.bf16.mxu0 %v12547
    %13098 = vmatpush1.bf16.msra.mxu0 %v12546
    %13099 = vmatprep.subr.bf16.mxu0 %v12553
    %13100 = vmatpush1.bf16.msra.mxu0 %v12552
    %13101 = vmatprep.subr.bf16.mxu0 %v12559
    %13102 = vmatpush1.bf16.msra.mxu0 %v12558
    %13103 = vmatprep.mubr.bf16.mxu0 %v10611
    %13104 = vmatmul.mubr.bf16.gmra.mrb[0].mxu0 %v10610
    %v13105 = vpop.f32.mrb[0].mxu0
    %v13106 = vadd.f32 %v13065, %v13105
    %v13107 = vpop.f32.mrb[0].mxu0
    %v13108 = vadd.f32 %v13067, %v13107
    %v13109 = vpop.f32.mrb[0].mxu0
    %v13110 = vpop.f32.mrb[0].mxu0
    %13111 = vdwg.mxu0
    %13112 = vmatprep.subr.bf16.mxu0 %v12183
    %13113 = vmatpush1.bf16.msra.mxu0 %v12182
    %13114 = vmatprep.subr.bf16.mxu0 %v12189
    %13115 = vmatpush1.bf16.msra.mxu0 %v12188
    %13116 = vmatprep.subr.bf16.mxu0 %v12195
    %13117 = vmatpush1.bf16.msra.mxu0 %v12194
    %13118 = vmatprep.subr.bf16.mxu0 %v12201
    %13119 = vmatpush1.bf16.msra.mxu0 %v12200
    %13120 = vmatprep.subr.bf16.mxu0 %v12207
    %13121 = vmatpush1.bf16.msra.mxu0 %v12206
    %13122 = vmatprep.subr.bf16.mxu0 %v12213
    %13123 = vmatpush1.bf16.msra.mxu0 %v12212
    %13124 = vmatprep.subr.bf16.mxu0 %v12219
    %13125 = vmatpush1.bf16.msra.mxu0 %v12218
    %13126 = vmatprep.subr.bf16.mxu0 %v12225
    %13127 = vmatpush1.bf16.msra.mxu0 %v12224
    %13128 = vmatprep.subr.bf16.mxu0 %v12231
    %13129 = vmatpush1.bf16.msra.mxu0 %v12230
    %13130 = vmatprep.subr.bf16.mxu0 %v12237
    %13131 = vmatpush1.bf16.msra.mxu0 %v12236
    %13132 = vmatprep.subr.bf16.mxu0 %v12243
    %13133 = vmatpush1.bf16.msra.mxu0 %v12242
    %13134 = vmatprep.subr.bf16.mxu0 %v12249
    %13135 = vmatpush1.bf16.msra.mxu0 %v12248
    %13136 = vmatprep.subr.bf16.mxu0 %v12255
    %13137 = vmatpush1.bf16.msra.mxu0 %v12254
    %13138 = vmatprep.subr.bf16.mxu0 %v12261
    %13139 = vmatpush1.bf16.msra.mxu0 %v12260
    %13140 = vmatprep.subr.bf16.mxu0 %v12267
    %13141 = vmatpush1.bf16.msra.mxu0 %v12266
    %13142 = vmatprep.subr.bf16.mxu0 %v12273
    %13143 = vmatpush1.bf16.msra.mxu0 %v12272
    %13144 = vmatprep.mubr.bf16.mxu0 %v10605
    %13145 = vmatmul.mubr.bf16.gmra.mrb[0].mxu0 %v10604
    %v13146 = vpop.f32.mrb[0].mxu0
    %v13147 = vadd.f32 %v11009, %v13146
    %v13148 = vpop.f32.mrb[0].mxu0
    %v13149 = vadd.f32 %v11013, %v13148
    %v13150 = vpop.f32.mrb[0].mxu0
    %v13151 = vpop.f32.mrb[0].mxu0
    %13152 = vdwg.mxu0
    %13153 = vmatprep.subr.bf16.mxu0 %v12279
    %13154 = vmatpush1.bf16.msra.mxu0 %v12278
    %13155 = vmatprep.subr.bf16.mxu0 %v12285
    %13156 = vmatpush1.bf16.msra.mxu0 %v12284
    %13157 = vmatprep.subr.bf16.mxu0 %v12291
    %13158 = vmatpush1.bf16.msra.mxu0 %v12290
    %13159 = vmatprep.subr.bf16.mxu0 %v12297
    %13160 = vmatpush1.bf16.msra.mxu0 %v12296
    %13161 = vmatprep.subr.bf16.mxu0 %v12303
    %13162 = vmatpush1.bf16.msra.mxu0 %v12302
    %13163 = vmatprep.subr.bf16.mxu0 %v12309
    %13164 = vmatpush1.bf16.msra.mxu0 %v12308
    %13165 = vmatprep.subr.bf16.mxu0 %v12315
    %13166 = vmatpush1.bf16.msra.mxu0 %v12314
    %13167 = vmatprep.subr.bf16.mxu0 %v12321
    %13168 = vmatpush1.bf16.msra.mxu0 %v12320
    %13169 = vmatprep.subr.bf16.mxu0 %v12327
    %13170 = vmatpush1.bf16.msra.mxu0 %v12326
    %13171 = vmatprep.subr.bf16.mxu0 %v12333
    %13172 = vmatpush1.bf16.msra.mxu0 %v12332
    %13173 = vmatprep.subr.bf16.mxu0 %v12339
    %13174 = vmatpush1.bf16.msra.mxu0 %v12338
    %13175 = vmatprep.subr.bf16.mxu0 %v12345
    %13176 = vmatpush1.bf16.msra.mxu0 %v12344
    %13177 = vmatprep.subr.bf16.mxu0 %v12351
    %13178 = vmatpush1.bf16.msra.mxu0 %v12350
    %13179 = vmatprep.subr.bf16.mxu0 %v12357
    %13180 = vmatpush1.bf16.msra.mxu0 %v12356
    %13181 = vmatprep.subr.bf16.mxu0 %v12363
    %13182 = vmatpush1.bf16.msra.mxu0 %v12362
    %13183 = vmatprep.subr.bf16.mxu0 %v12369
    %13184 = vmatpush1.bf16.msra.mxu0 %v12368
    %13185 = vmatprep.mubr.bf16.mxu0 %v10607
    %13186 = vmatmul.mubr.bf16.gmra.mrb[0].mxu0 %v10606
    %v13187 = vpop.f32.mrb[0].mxu0
    %v13188 = vadd.f32 %v13147, %v13187
    %v13189 = vpop.f32.mrb[0].mxu0
    %v13190 = vadd.f32 %v13149, %v13189
    %v13191 = vpop.f32.mrb[0].mxu0
    %v13192 = vpop.f32.mrb[0].mxu0
    %13193 = vdwg.mxu0
    %13194 = vmatprep.subr.bf16.mxu0 %v12375
    %13195 = vmatpush1.bf16.msra.mxu0 %v12374
    %13196 = vmatprep.subr.bf16.mxu0 %v12381
    %13197 = vmatpush1.bf16.msra.mxu0 %v12380
    %13198 = vmatprep.subr.bf16.mxu0 %v12387
    %13199 = vmatpush1.bf16.msra.mxu0 %v12386
    %13200 = vmatprep.subr.bf16.mxu0 %v12393
    %13201 = vmatpush1.bf16.msra.mxu0 %v12392
    %13202 = vmatprep.subr.bf16.mxu0 %v12399
    %13203 = vmatpush1.bf16.msra.mxu0 %v12398
    %13204 = vmatprep.subr.bf16.mxu0 %v12405
    %13205 = vmatpush1.bf16.msra.mxu0 %v12404
    %13206 = vmatprep.subr.bf16.mxu0 %v12411
    %13207 = vmatpush1.bf16.msra.mxu0 %v12410
    %13208 = vmatprep.subr.bf16.mxu0 %v12417
    %13209 = vmatpush1.bf16.msra.mxu0 %v12416
    %13210 = vmatprep.subr.bf16.mxu0 %v12423
    %13211 = vmatpush1.bf16.msra.mxu0 %v12422
    %13212 = vmatprep.subr.bf16.mxu0 %v12429
    %13213 = vmatpush1.bf16.msra.mxu0 %v12428
    %13214 = vmatprep.subr.bf16.mxu0 %v12435
    %13215 = vmatpush1.bf16.msra.mxu0 %v12434
    %13216 = vmatprep.subr.bf16.mxu0 %v12441
    %13217 = vmatpush1.bf16.msra.mxu0 %v12440
    %13218 = vmatprep.subr.bf16.mxu0 %v12447
    %13219 = vmatpush1.bf16.msra.mxu0 %v12446
    %13220 = vmatprep.subr.bf16.mxu0 %v12453
    %13221 = vmatpush1.bf16.msra.mxu0 %v12452
    %13222 = vmatprep.subr.bf16.mxu0 %v12459
    %13223 = vmatpush1.bf16.msra.mxu0 %v12458
    %13224 = vmatprep.subr.bf16.mxu0 %v12465
    %13225 = vmatpush1.bf16.msra.mxu0 %v12464
    %13226 = vmatprep.mubr.bf16.mxu0 %v10609
    %13227 = vmatmul.mubr.bf16.gmra.mrb[0].mxu0 %v10608
    %v13228 = vpop.f32.mrb[0].mxu0
    %v13229 = vadd.f32 %v13188, %v13228
    %v13230 = vpop.f32.mrb[0].mxu0
    %v13231 = vadd.f32 %v13190, %v13230
    %v13232 = vpop.f32.mrb[0].mxu0
    %v13233 = vpop.f32.mrb[0].mxu0
    %13234 = vdwg.mxu0
    %13235 = vmatprep.subr.bf16.mxu0 %v12471
    %13236 = vmatpush1.bf16.msra.mxu0 %v12470
    %13237 = vmatprep.subr.bf16.mxu0 %v12477
    %13238 = vmatpush1.bf16.msra.mxu0 %v12476
    %13239 = vmatprep.subr.bf16.mxu0 %v12483
    %13240 = vmatpush1.bf16.msra.mxu0 %v12482
    %13241 = vmatprep.subr.bf16.mxu0 %v12489
    %13242 = vmatpush1.bf16.msra.mxu0 %v12488
    %13243 = vmatprep.subr.bf16.mxu0 %v12495
    %13244 = vmatpush1.bf16.msra.mxu0 %v12494
    %13245 = vmatprep.subr.bf16.mxu0 %v12501
    %13246 = vmatpush1.bf16.msra.mxu0 %v12500
    %13247 = vmatprep.subr.bf16.mxu0 %v12507
    %13248 = vmatpush1.bf16.msra.mxu0 %v12506
    %13249 = vmatprep.subr.bf16.mxu0 %v12513
    %13250 = vmatpush1.bf16.msra.mxu0 %v12512
    %13251 = vmatprep.subr.bf16.mxu0 %v12519
    %13252 = vmatpush1.bf16.msra.mxu0 %v12518
    %13253 = vmatprep.subr.bf16.mxu0 %v12525
    %13254 = vmatpush1.bf16.msra.mxu0 %v12524
    %13255 = vmatprep.subr.bf16.mxu0 %v12531
    %13256 = vmatpush1.bf16.msra.mxu0 %v12530
    %13257 = vmatprep.subr.bf16.mxu0 %v12537
    %13258 = vmatpush1.bf16.msra.mxu0 %v12536
    %13259 = vmatprep.subr.bf16.mxu0 %v12543
    %13260 = vmatpush1.bf16.msra.mxu0 %v12542
    %13261 = vmatprep.subr.bf16.mxu0 %v12549
    %13262 = vmatpush1.bf16.msra.mxu0 %v12548
    %13263 = vmatprep.subr.bf16.mxu0 %v12555
    %13264 = vmatpush1.bf16.msra.mxu0 %v12554
    %13265 = vmatprep.subr.bf16.mxu0 %v12561
    %13266 = vmatpush1.bf16.msra.mxu0 %v12560
    %13267 = vmatprep.mubr.bf16.mxu0 %v10611
    %13268 = vmatmul.mubr.bf16.gmra.mrb[0].mxu0 %v10610
    %v13269 = vpop.f32.mrb[0].mxu0
    %v13270 = vadd.f32 %v13229, %v13269
    %v13271 = vpop.f32.mrb[0].mxu0
    %v13272 = vadd.f32 %v13231, %v13271
    %v13273 = vpop.f32.mrb[0].mxu0
    %v13274 = vpop.f32.mrb[0].mxu0
    %13275 = vdwg.mxu0
    %13276 = vmatprep.subr.bf16.mxu0 %v12185
    %13277 = vmatpush1.bf16.msra.mxu0 %v12184
    %13278 = vmatprep.subr.bf16.mxu0 %v12191
    %13279 = vmatpush1.bf16.msra.mxu0 %v12190
    %13280 = vmatprep.subr.bf16.mxu0 %v12197
    %13281 = vmatpush1.bf16.msra.mxu0 %v12196
    %13282 = vmatprep.subr.bf16.mxu0 %v12203
    %13283 = vmatpush1.bf16.msra.mxu0 %v12202
    %13284 = vmatprep.subr.bf16.mxu0 %v12209
    %13285 = vmatpush1.bf16.msra.mxu0 %v12208
    %13286 = vmatprep.subr.bf16.mxu0 %v12215
    %13287 = vmatpush1.bf16.msra.mxu0 %v12214
    %13288 = vmatprep.subr.bf16.mxu0 %v12221
    %13289 = vmatpush1.bf16.msra.mxu0 %v12220
    %13290 = vmatprep.subr.bf16.mxu0 %v12227
    %13291 = vmatpush1.bf16.msra.mxu0 %v12226
    %13292 = vmatprep.subr.bf16.mxu0 %v12233
    %13293 = vmatpush1.bf16.msra.mxu0 %v12232
    %13294 = vmatprep.subr.bf16.mxu0 %v12239
    %13295 = vmatpush1.bf16.msra.mxu0 %v12238
    %13296 = vmatprep.subr.bf16.mxu0 %v12245
    %13297 = vmatpush1.bf16.msra.mxu0 %v12244
    %13298 = vmatprep.subr.bf16.mxu0 %v12251
    %13299 = vmatpush1.bf16.msra.mxu0 %v12250
    %13300 = vmatprep.subr.bf16.mxu0 %v12257
    %13301 = vmatpush1.bf16.msra.mxu0 %v12256
    %13302 = vmatprep.subr.bf16.mxu0 %v12263
    %13303 = vmatpush1.bf16.msra.mxu0 %v12262
    %13304 = vmatprep.subr.bf16.mxu0 %v12269
    %13305 = vmatpush1.bf16.msra.mxu0 %v12268
    %13306 = vmatprep.subr.bf16.mxu0 %v12275
    %13307 = vmatpush1.bf16.msra.mxu0 %v12274
    %13308 = vmatprep.mubr.bf16.mxu0 %v10605
    %13309 = vmatmul.mubr.bf16.gmra.mrb[0].mxu0 %v10604
    %v13310 = vpop.f32.mrb[0].mxu0
    %v13311 = vadd.f32 %v11017, %v13310
    %v13312 = vpop.f32.mrb[0].mxu0
    %v13313 = vadd.f32 %v11021, %v13312
    %v13314 = vpop.f32.mrb[0].mxu0
    %v13315 = vpop.f32.mrb[0].mxu0
    %13316 = vdwg.mxu0
    %13317 = vmatprep.subr.bf16.mxu0 %v12281
    %13318 = vmatpush1.bf16.msra.mxu0 %v12280
    %13319 = vmatprep.subr.bf16.mxu0 %v12287
    %13320 = vmatpush1.bf16.msra.mxu0 %v12286
    %13321 = vmatprep.subr.bf16.mxu0 %v12293
    %13322 = vmatpush1.bf16.msra.mxu0 %v12292
    %13323 = vmatprep.subr.bf16.mxu0 %v12299
    %13324 = vmatpush1.bf16.msra.mxu0 %v12298
    %13325 = vmatprep.subr.bf16.mxu0 %v12305
    %13326 = vmatpush1.bf16.msra.mxu0 %v12304
    %13327 = vmatprep.subr.bf16.mxu0 %v12311
    %13328 = vmatpush1.bf16.msra.mxu0 %v12310
    %13329 = vmatprep.subr.bf16.mxu0 %v12317
    %13330 = vmatpush1.bf16.msra.mxu0 %v12316
    %13331 = vmatprep.subr.bf16.mxu0 %v12323
    %13332 = vmatpush1.bf16.msra.mxu0 %v12322
    %13333 = vmatprep.subr.bf16.mxu0 %v12329
    %13334 = vmatpush1.bf16.msra.mxu0 %v12328
    %13335 = vmatprep.subr.bf16.mxu0 %v12335
    %13336 = vmatpush1.bf16.msra.mxu0 %v12334
    %13337 = vmatprep.subr.bf16.mxu0 %v12341
    %13338 = vmatpush1.bf16.msra.mxu0 %v12340
    %13339 = vmatprep.subr.bf16.mxu0 %v12347
    %13340 = vmatpush1.bf16.msra.mxu0 %v12346
    %13341 = vmatprep.subr.bf16.mxu0 %v12353
    %13342 = vmatpush1.bf16.msra.mxu0 %v12352
    %13343 = vmatprep.subr.bf16.mxu0 %v12359
    %13344 = vmatpush1.bf16.msra.mxu0 %v12358
    %13345 = vmatprep.subr.bf16.mxu0 %v12365
    %13346 = vmatpush1.bf16.msra.mxu0 %v12364
    %13347 = vmatprep.subr.bf16.mxu0 %v12371
    %13348 = vmatpush1.bf16.msra.mxu0 %v12370
    %13349 = vmatprep.mubr.bf16.mxu0 %v10607
    %13350 = vmatmul.mubr.bf16.gmra.mrb[0].mxu0 %v10606
    %v13351 = vpop.f32.mrb[0].mxu0
    %v13352 = vadd.f32 %v13311, %v13351
    %v13353 = vpop.f32.mrb[0].mxu0
    %v13354 = vadd.f32 %v13313, %v13353
    %v13355 = vpop.f32.mrb[0].mxu0
    %v13356 = vpop.f32.mrb[0].mxu0
    %13357 = vdwg.mxu0
    %13358 = vmatprep.subr.bf16.mxu0 %v12377
    %13359 = vmatpush1.bf16.msra.mxu0 %v12376
    %13360 = vmatprep.subr.bf16.mxu0 %v12383
    %13361 = vmatpush1.bf16.msra.mxu0 %v12382
    %13362 = vmatprep.subr.bf16.mxu0 %v12389
    %13363 = vmatpush1.bf16.msra.mxu0 %v12388
    %13364 = vmatprep.subr.bf16.mxu0 %v12395
    %13365 = vmatpush1.bf16.msra.mxu0 %v12394
    %13366 = vmatprep.subr.bf16.mxu0 %v12401
    %13367 = vmatpush1.bf16.msra.mxu0 %v12400
    %13368 = vmatprep.subr.bf16.mxu0 %v12407
    %13369 = vmatpush1.bf16.msra.mxu0 %v12406
    %13370 = vmatprep.subr.bf16.mxu0 %v12413
    %13371 = vmatpush1.bf16.msra.mxu0 %v12412
    %13372 = vmatprep.subr.bf16.mxu0 %v12419
    %13373 = vmatpush1.bf16.msra.mxu0 %v12418
    %13374 = vmatprep.subr.bf16.mxu0 %v12425
    %13375 = vmatpush1.bf16.msra.mxu0 %v12424
    %13376 = vmatprep.subr.bf16.mxu0 %v12431
    %13377 = vmatpush1.bf16.msra.mxu0 %v12430
    %13378 = vmatprep.subr.bf16.mxu0 %v12437
    %13379 = vmatpush1.bf16.msra.mxu0 %v12436
    %13380 = vmatprep.subr.bf16.mxu0 %v12443
    %13381 = vmatpush1.bf16.msra.mxu0 %v12442
    %13382 = vmatprep.subr.bf16.mxu0 %v12449
    %13383 = vmatpush1.bf16.msra.mxu0 %v12448
    %13384 = vmatprep.subr.bf16.mxu0 %v12455
    %13385 = vmatpush1.bf16.msra.mxu0 %v12454
    %13386 = vmatprep.subr.bf16.mxu0 %v12461
    %13387 = vmatpush1.bf16.msra.mxu0 %v12460
    %13388 = vmatprep.subr.bf16.mxu0 %v12467
    %13389 = vmatpush1.bf16.msra.mxu0 %v12466
    %13390 = vmatprep.mubr.bf16.mxu0 %v10609
    %13391 = vmatmul.mubr.bf16.gmra.mrb[0].mxu0 %v10608
    %v13392 = vpop.f32.mrb[0].mxu0
    %v13393 = vadd.f32 %v13352, %v13392
    %v13394 = vpop.f32.mrb[0].mxu0
    %v13395 = vadd.f32 %v13354, %v13394
    %v13396 = vpop.f32.mrb[0].mxu0
    %v13397 = vpop.f32.mrb[0].mxu0
    %13398 = vdwg.mxu0
    %13399 = vmatprep.subr.bf16.mxu0 %v12473
    %13400 = vmatpush1.bf16.msra.mxu0 %v12472
    %13401 = vmatprep.subr.bf16.mxu0 %v12479
    %13402 = vmatpush1.bf16.msra.mxu0 %v12478
    %13403 = vmatprep.subr.bf16.mxu0 %v12485
    %13404 = vmatpush1.bf16.msra.mxu0 %v12484
    %13405 = vmatprep.subr.bf16.mxu0 %v12491
    %13406 = vmatpush1.bf16.msra.mxu0 %v12490
    %13407 = vmatprep.subr.bf16.mxu0 %v12497
    %13408 = vmatpush1.bf16.msra.mxu0 %v12496
    %13409 = vmatprep.subr.bf16.mxu0 %v12503
    %13410 = vmatpush1.bf16.msra.mxu0 %v12502
    %13411 = vmatprep.subr.bf16.mxu0 %v12509
    %13412 = vmatpush1.bf16.msra.mxu0 %v12508
    %13413 = vmatprep.subr.bf16.mxu0 %v12515
    %13414 = vmatpush1.bf16.msra.mxu0 %v12514
    %13415 = vmatprep.subr.bf16.mxu0 %v12521
    %13416 = vmatpush1.bf16.msra.mxu0 %v12520
    %13417 = vmatprep.subr.bf16.mxu0 %v12527
    %13418 = vmatpush1.bf16.msra.mxu0 %v12526
    %13419 = vmatprep.subr.bf16.mxu0 %v12533
    %13420 = vmatpush1.bf16.msra.mxu0 %v12532
    %13421 = vmatprep.subr.bf16.mxu0 %v12539
    %13422 = vmatpush1.bf16.msra.mxu0 %v12538
    %13423 = vmatprep.subr.bf16.mxu0 %v12545
    %13424 = vmatpush1.bf16.msra.mxu0 %v12544
    %13425 = vmatprep.subr.bf16.mxu0 %v12551
    %13426 = vmatpush1.bf16.msra.mxu0 %v12550
    %13427 = vmatprep.subr.bf16.mxu0 %v12557
    %13428 = vmatpush1.bf16.msra.mxu0 %v12556
    %13429 = vmatprep.subr.bf16.mxu0 %v12563
    %13430 = vmatpush1.bf16.msra.mxu0 %v12562
    %13431 = vmatprep.mubr.bf16.mxu0 %v10611
    %13432 = vmatmul.mubr.bf16.gmra.mrb[0].mxu0 %v10610
    %v13433 = vpop.f32.mrb[0].mxu0
    %v13434 = vadd.f32 %v13393, %v13433
    %v13435 = vpop.f32.mrb[0].mxu0
    %v13436 = vadd.f32 %v13395, %v13435
    %v13437 = vpop.f32.mrb[0].mxu0
    %v13438 = vpop.f32.mrb[0].mxu0
    %13439 = vdwg.mxu0
    %v13440 = vtanh.pop %v13106
    %v13441 = vtanh.pop %v13108
    %v13442 = vtanh.pop %v13270
    %v13443 = vtanh.pop %v13272
    %v13444 = vtanh.pop %v13434
    %v13445 = vtanh.pop %v13436
    %v13452 = vcombine.low %v13440, %v13441
    %v13453 = vcombine.low %v13442, %v13443
    %v13455 = vunpack.c.l.s4 1983009808
    %v13456 = vunpack.c.0.s8 %v13455
    %v13457 = vlaneseq
    %v13458 = vshrl.u32 %v13457, 7
    %v13459 = vsub.s32 %v13456, %v13458
    %v13460 = vrot.slane %v13452, %v13459
    %v13462 = vunpack.c.l.s4 1983009808
    %v13463 = vunpack.c.0.s8 %v13462
    %v13464 = vlaneseq
    %v13465 = vshrl.u32 %v13464, 7
    %v13466 = vsub.s32 %v13463, %v13465
    %v13467 = vrot.slane %v13453, %v13466
    %v13468 = vcombine.low %v13460, %v13467
    %v13469 = vcombine.low %v13444, %v13445
    %v13471 = vunpack.c.l.s4 1983009808
    %v13472 = vunpack.c.0.s8 %v13471
    %v13473 = vlaneseq
    %v13474 = vshrl.u32 %v13473, 7
    %v13475 = vsub.s32 %v13472, %v13474
    %v13476 = vrot.slane %v13469, %v13475
    %13479 = vst [vmem:[#allocation17] sm:$0xff] %v13468
    %13480 = vst [vmem:[#allocation17 + $0x8] sm:$0xf] %v13476
    // Predicated region
    $region74: #{tpu_custom_call.1} parent=1 // pred_check
      _
    $region75: #{tpu_custom_call.1} parent=1 // pred_check_branch
      %13482 = sbr.rel (0) target = $region77
    $region76: #{tpu_custom_call.1} parent=1 // pred_region
      %s13484 = ssub.s32 192, 192
      %13485 = vsyncadd [#allocation4], %s13484
      %s13487 = sshll.u32 [#allocation17], 4
      %s13488 = int_to_ptr.vmem [resolvable:$true] %s13487
      %13490 = dma.vmem_to_hbm [thread:$0]  %s13488, 192, %s9, [#allocation4]
    $region77: #{tpu_custom_call.1} parent=1 // pred_fallthru
      _
    // Predicated region
    $region78: #{tpu_custom_call.1} parent=1 // pred_check
      _
    $region79: #{tpu_custom_call.1} parent=1 // pred_check_branch
      %13492 = sbr.rel (0) target = $region81
    $region80: #{tpu_custom_call.1} parent=1 // pred_region
      %13493 = dma.done [#allocation4], 192
    $region81: #{tpu_custom_call.1} parent=1 // pred_fallthru
      _
    %13494 = vsyncpa [#allocation3], 1
    %13495 = vsyncpa [#allocation6], 1
    %13496 = vsyncpa [#allocation9], 1
    %13497 = vsyncpa [#allocation12], 1
    %13498 = vsyncpa [#allocation15], 1
    %13499 = vsyncpa [#allocation4], 1

</llo_original>
